<compile_context>
chip_gen: v7x
topology: tpu7x:2x2x1
jax: 0.10.0
libtpu: 0.0.40
codegen_flags: <defaults>
</compile_context>

<pallas_src>
import math

import jax
import jax.numpy as jnp
from jax import lax
from jax.experimental import pallas as pl
from jax.experimental.pallas import tpu as pltpu

KSIZE = 31              # conv kernel size (odd)
PAD = KSIZE // 2        # 15
GROUPS = 16


def _mish(v):
    # x * tanh(softplus(x)), numerically stable softplus (exp/log/tanh -> EUP slot)
    sp = jnp.maximum(v, 0.0) + jnp.log(1.0 + jnp.exp(-jnp.abs(v)))
    return v * jnp.tanh(sp)


def conv_pos_embed_kernel(x_ref, w1_ref, b1_ref, w2_ref, b2_ref, o_ref):
    x = x_ref[0]                      # (T, D) f32, one batch element per grid step
    T, D = x.shape

    def gconv_mish(h, w_ref, b_ref):
        # grouped Conv1d(kernel=KSIZE, padding=PAD, groups=GROUPS) written as
        # KSIZE tap matmuls with block-diagonal (D, D) weights on the MXU.
        hp = jnp.pad(h, ((PAD, PAD), (0, 0)))            # (T + 2*PAD, D) f32, zero pad
        acc = jnp.zeros((T, D), jnp.float32)
        for k in range(KSIZE):                           # static unrolled tap loop
            lhs = hp[k:k + T, :].astype(jnp.bfloat16)    # bf16 MXU operand
            acc = acc + jnp.dot(lhs, w_ref[k],           # w_ref[k]: (D, D) bf16
                                preferred_element_type=jnp.float32)
        acc = acc + b_ref[...]                           # (1, D) bias broadcast
        return _mish(acc)

    h = gconv_mish(x, w1_ref, b1_ref)
    h = gconv_mish(h, w2_ref, b2_ref)
    o_ref[0] = h.astype(o_ref.dtype)


def dense_tap_weights(w):
    """(D, D/groups, K) torch-layout grouped-conv weight -> (K, D, D) block-diagonal
    per-tap dense matrices: dense[k, cin, cout] = w[cout, cin_in_group, k] if
    group(cin) == group(cout) else 0."""
    D, cg, K = w.shape
    G = D // cg
    w_r = w.reshape(G, cg, cg, K)                 # [g, o, j, k] = w[g*cg+o, j, k]
    eye = jnp.eye(G, dtype=w.dtype)               # [a, b]
    dense = jnp.einsum("ab,bojk->kajbo", eye, w_r)  # (K, G, cg, G, cg)
    return dense.reshape(K, D, D)


def pack_params(p):
    """Pre-pack torch-layout params for the kernel (bf16 weights, (1, D) biases)."""
    return {
        "w1_dense": dense_tap_weights(p["w1"]).astype(jnp.bfloat16),
        "b1": p["b1"].reshape(1, -1).astype(jnp.float32),
        "w2_dense": dense_tap_weights(p["w2"]).astype(jnp.bfloat16),
        "b2": p["b2"].reshape(1, -1).astype(jnp.float32),
    }


def conv_position_embedding(x, packed, mask=None):
    """x: (B, T, D) f32.  packed: output of pack_params.  mask: optional (B, T) bool."""
    B, T, D = x.shape
    if mask is not None:
        x = jnp.where(mask[..., None], x, jnp.zeros((), x.dtype))

    w1d, b1 = packed["w1_dense"], packed["b1"]
    w2d, b2 = packed["w2_dense"], packed["b2"]
    K = w1d.shape[0]

    flops = 4 * B * K * T * D * D                     # 2 layers x 2*T*K*D*D (dense form)
    transcendentals = 4 * B * T * D                   # exp + tanh per layer
    bytes_accessed = 2 * B * T * D * 4 + 2 * (K * D * D * 2 + D * 4)

    out = pl.pallas_call(
        conv_pos_embed_kernel,
        out_shape=jax.ShapeDtypeStruct((B, T, D), x.dtype),
        grid_spec=pltpu.PrefetchScalarGridSpec(
            num_scalar_prefetch=0,
            grid=(B,),
            in_specs=[
                pl.BlockSpec((1, T, D), lambda b: (b, 0, 0)),   # x
                pl.BlockSpec((K, D, D), lambda b: (0, 0, 0)),   # conv1 tap weights (bf16)
                pl.BlockSpec((1, D), lambda b: (0, 0)),         # conv1 bias
                pl.BlockSpec((K, D, D), lambda b: (0, 0, 0)),   # conv2 tap weights (bf16)
                pl.BlockSpec((1, D), lambda b: (0, 0)),         # conv2 bias
            ],
            out_specs=pl.BlockSpec((1, T, D), lambda b: (b, 0, 0)),
        ),
        compiler_params=pltpu.CompilerParams(
            dimension_semantics=("parallel",),
            vmem_limit_bytes=64 * 1024 * 1024,
        ),
        cost_estimate=pl.CostEstimate(
            flops=flops,
            transcendentals=transcendentals,
            bytes_accessed=bytes_accessed,
        ),
    )(x, w1d, b1, w2d, b2)

    if mask is not None:
        out = jnp.where(mask[..., None], out, jnp.zeros((), out.dtype))
    return out


def init_params(key, dim, kernel_size=KSIZE, groups=GROUPS):
    """Torch-layout Conv1d params with the default uniform(-1/sqrt(fan_in), ...) init."""
    cg = dim // groups
    ks = jax.random.split(key, 4)
    bound = 1.0 / math.sqrt(cg * kernel_size)
    u = lambda k, shape: jax.random.uniform(k, shape, jnp.float32, -bound, bound)
    return {
        "w1": u(ks[0], (dim, cg, kernel_size)),
        "b1": u(ks[1], (dim,)),
        "w2": u(ks[2], (dim, cg, kernel_size)),
        "b2": u(ks[3], (dim,)),
    }


def reference(x, p, mask=None):
    """Pure-JAX f32 reference mirroring the PyTorch forward exactly."""
    if mask is not None:
        x = jnp.where(mask[..., None], x, 0.0)
    h = jnp.transpose(x, (0, 2, 1))                    # (B, D, T)

    def conv(v, w, b):
        y = lax.conv_general_dilated(
            v, w, window_strides=(1,), padding=[(PAD, PAD)],
            dimension_numbers=("NCH", "OIH", "NCH"),
            feature_group_count=GROUPS,
            precision=lax.Precision.HIGHEST)
        return y + b[None, :, None]

    def mish(v):
        return v * jnp.tanh(jax.nn.softplus(v))

    h = mish(conv(h, p["w1"], p["b1"]))
    h = mish(conv(h, p["w2"], p["b2"]))
    out = jnp.transpose(h, (0, 2, 1))
    if mask is not None:
        out = jnp.where(mask[..., None], out, 0.0)
    return out


if __name__ == "__main__":
    B, T, DIM = 2, 32, 128         # DIM multiple of 128 (lane-dense), T multiple of 8
    key = jax.random.PRNGKey(0)
    kx, kp = jax.random.split(key)
    x = jax.random.normal(kx, (B, T, DIM), jnp.float32)
    params = init_params(kp, DIM)
    packed = pack_params(params)

    lengths = jnp.array([T, T - 7])                       # deterministic mask
    mask = jnp.arange(T)[None, :] < lengths[:, None]      # (B, T) bool

    out = jax.block_until_ready(conv_position_embedding(x, packed, mask=mask))
    ref = reference(x, params, mask=mask)

    assert out.shape == (B, T, DIM)
    max_err = float(jnp.max(jnp.abs(out - ref)))
    assert jnp.allclose(out, ref, atol=2e-2, rtol=2e-2), max_err
    print("KERNEL_OK")
</pallas_src>

<mosaic_0001>
module attributes {stable_mosaic.version = 11 : i64} {
  func.func @conv_pos_embed_kernel(%arg0: i32, %arg1: memref<1x32x128xf32, #tpu.memory_space<vmem>>, %arg2: memref<31x128x128xbf16, #tpu.memory_space<vmem>>, %arg3: memref<1x128xf32, #tpu.memory_space<vmem>>, %arg4: memref<31x128x128xbf16, #tpu.memory_space<vmem>>, %arg5: memref<1x128xf32, #tpu.memory_space<vmem>>, %arg6: memref<1x32x128xf32, #tpu.memory_space<vmem>>) attributes {dimension_semantics = [#tpu.dimension_semantics<parallel>], iteration_bounds = array<i64: 2>, scalar_prefetch = 0 : i64, scratch_operands = 0 : i64, tpu.core_type = #tpu.core_type<tc>, window_params = [{transform_indices = @transform_0, window_bounds = array<i64: 1, 32, 128>}, {pipeline_mode = #tpu.pipeline_mode<synchronous>, transform_indices = @transform_1, window_bounds = array<i64: 31, 128, 128>}, {pipeline_mode = #tpu.pipeline_mode<synchronous>, transform_indices = @transform_2, window_bounds = array<i64: 1, 128>}, {pipeline_mode = #tpu.pipeline_mode<synchronous>, transform_indices = @transform_3, window_bounds = array<i64: 31, 128, 128>}, {pipeline_mode = #tpu.pipeline_mode<synchronous>, transform_indices = @transform_4, window_bounds = array<i64: 1, 128>}, {transform_indices = @transform_5, window_bounds = array<i64: 1, 32, 128>}]} {
    %c0 = arith.constant 0 : index
    %c0_0 = arith.constant 0 : index
    %c0_1 = arith.constant 0 : index
    %0 = vector.load %arg1[%c0, %c0_0, %c0_1] : memref<1x32x128xf32, #tpu.memory_space<vmem>>, vector<1x32x128xf32>
    %1 = vector.shape_cast %0 : vector<1x32x128xf32> to vector<32x128xf32>
    %c0_i32 = arith.constant 0 : i32
    %2 = arith.sitofp %c0_i32 : i32 to f32
    %3 = vector.broadcast %2 : f32 to vector<15x128xf32>
    %4 = tpu.concatenate %3, %1 in 0 : vector<15x128xf32>, vector<32x128xf32> -> vector<47x128xf32>
    %5 = vector.broadcast %2 : f32 to vector<15x128xf32>
    %6 = tpu.concatenate %4, %5 in 0 : vector<47x128xf32>, vector<15x128xf32> -> vector<62x128xf32>
    %cst = arith.constant 0.000000e+00 : f32
    %7 = vector.broadcast %cst : f32 to vector<32x128xf32>
    %8 = vector.extract_strided_slice %6 {offsets = [0, 0], sizes = [32, 128], strides = [1, 1]} : vector<62x128xf32> to vector<32x128xf32>
    %9 = arith.truncf %8 : vector<32x128xf32> to vector<32x128xbf16>
    %c0_2 = arith.constant 0 : index
    %c0_3 = arith.constant 0 : index
    %c0_4 = arith.constant 0 : index
    %10 = vector.load %arg2[%c0_2, %c0_3, %c0_4] : memref<31x128x128xbf16, #tpu.memory_space<vmem>>, vector<1x128x128xbf16>
    %11 = vector.shape_cast %10 : vector<1x128x128xbf16> to vector<128x128xbf16>
    %cst_5 = arith.constant dense<0.000000e+00> : vector<32x128xf32>
    %12 = tpu.matmul %9, %11, %cst_5 {dimension_numbers = #tpu.dot_dimension_numbers<[1], [0], [0], [1], [0, 0, 1, 1], [], []>} : vector<32x128xbf16>, vector<128x128xbf16>, vector<32x128xf32> -> vector<32x128xf32>
    %13 = arith.addf %7, %12 : vector<32x128xf32>
    %14 = vector.extract_strided_slice %6 {offsets = [1, 0], sizes = [32, 128], strides = [1, 1]} : vector<62x128xf32> to vector<32x128xf32>
    %15 = arith.truncf %14 : vector<32x128xf32> to vector<32x128xbf16>
    %c1 = arith.constant 1 : index
    %c0_6 = arith.constant 0 : index
    %c0_7 = arith.constant 0 : index
    %16 = vector.load %arg2[%c1, %c0_6, %c0_7] : memref<31x128x128xbf16, #tpu.memory_space<vmem>>, vector<1x128x128xbf16>
    %17 = vector.shape_cast %16 : vector<1x128x128xbf16> to vector<128x128xbf16>
    %cst_8 = arith.constant dense<0.000000e+00> : vector<32x128xf32>
    %18 = tpu.matmul %15, %17, %cst_8 {dimension_numbers = #tpu.dot_dimension_numbers<[1], [0], [0], [1], [0, 0, 1, 1], [], []>} : vector<32x128xbf16>, vector<128x128xbf16>, vector<32x128xf32> -> vector<32x128xf32>
    %19 = arith.addf %13, %18 : vector<32x128xf32>
    %20 = vector.extract_strided_slice %6 {offsets = [2, 0], sizes = [32, 128], strides = [1, 1]} : vector<62x128xf32> to vector<32x128xf32>
    %21 = arith.truncf %20 : vector<32x128xf32> to vector<32x128xbf16>
    %c2 = arith.constant 2 : index
    %c0_9 = arith.constant 0 : index
    %c0_10 = arith.constant 0 : index
    %22 = vector.load %arg2[%c2, %c0_9, %c0_10] : memref<31x128x128xbf16, #tpu.memory_space<vmem>>, vector<1x128x128xbf16>
    %23 = vector.shape_cast %22 : vector<1x128x128xbf16> to vector<128x128xbf16>
    %cst_11 = arith.constant dense<0.000000e+00> : vector<32x128xf32>
    %24 = tpu.matmul %21, %23, %cst_11 {dimension_numbers = #tpu.dot_dimension_numbers<[1], [0], [0], [1], [0, 0, 1, 1], [], []>} : vector<32x128xbf16>, vector<128x128xbf16>, vector<32x128xf32> -> vector<32x128xf32>
    %25 = arith.addf %19, %24 : vector<32x128xf32>
    %26 = vector.extract_strided_slice %6 {offsets = [3, 0], sizes = [32, 128], strides = [1, 1]} : vector<62x128xf32> to vector<32x128xf32>
    %27 = arith.truncf %26 : vector<32x128xf32> to vector<32x128xbf16>
    %c3 = arith.constant 3 : index
    %c0_12 = arith.constant 0 : index
    %c0_13 = arith.constant 0 : index
    %28 = vector.load %arg2[%c3, %c0_12, %c0_13] : memref<31x128x128xbf16, #tpu.memory_space<vmem>>, vector<1x128x128xbf16>
    %29 = vector.shape_cast %28 : vector<1x128x128xbf16> to vector<128x128xbf16>
    %cst_14 = arith.constant dense<0.000000e+00> : vector<32x128xf32>
    %30 = tpu.matmul %27, %29, %cst_14 {dimension_numbers = #tpu.dot_dimension_numbers<[1], [0], [0], [1], [0, 0, 1, 1], [], []>} : vector<32x128xbf16>, vector<128x128xbf16>, vector<32x128xf32> -> vector<32x128xf32>
    %31 = arith.addf %25, %30 : vector<32x128xf32>
    %32 = vector.extract_strided_slice %6 {offsets = [4, 0], sizes = [32, 128], strides = [1, 1]} : vector<62x128xf32> to vector<32x128xf32>
    %33 = arith.truncf %32 : vector<32x128xf32> to vector<32x128xbf16>
    %c4 = arith.constant 4 : index
    %c0_15 = arith.constant 0 : index
    %c0_16 = arith.constant 0 : index
    %34 = vector.load %arg2[%c4, %c0_15, %c0_16] : memref<31x128x128xbf16, #tpu.memory_space<vmem>>, vector<1x128x128xbf16>
    %35 = vector.shape_cast %34 : vector<1x128x128xbf16> to vector<128x128xbf16>
    %cst_17 = arith.constant dense<0.000000e+00> : vector<32x128xf32>
    %36 = tpu.matmul %33, %35, %cst_17 {dimension_numbers = #tpu.dot_dimension_numbers<[1], [0], [0], [1], [0, 0, 1, 1], [], []>} : vector<32x128xbf16>, vector<128x128xbf16>, vector<32x128xf32> -> vector<32x128xf32>
    %37 = arith.addf %31, %36 : vector<32x128xf32>
    %38 = vector.extract_strided_slice %6 {offsets = [5, 0], sizes = [32, 128], strides = [1, 1]} : vector<62x128xf32> to vector<32x128xf32>
    %39 = arith.truncf %38 : vector<32x128xf32> to vector<32x128xbf16>
    %c5 = arith.constant 5 : index
    %c0_18 = arith.constant 0 : index
    %c0_19 = arith.constant 0 : index
    %40 = vector.load %arg2[%c5, %c0_18, %c0_19] : memref<31x128x128xbf16, #tpu.memory_space<vmem>>, vector<1x128x128xbf16>
    %41 = vector.shape_cast %40 : vector<1x128x128xbf16> to vector<128x128xbf16>
    %cst_20 = arith.constant dense<0.000000e+00> : vector<32x128xf32>
    %42 = tpu.matmul %39, %41, %cst_20 {dimension_numbers = #tpu.dot_dimension_numbers<[1], [0], [0], [1], [0, 0, 1, 1], [], []>} : vector<32x128xbf16>, vector<128x128xbf16>, vector<32x128xf32> -> vector<32x128xf32>
    %43 = arith.addf %37, %42 : vector<32x128xf32>
    %44 = vector.extract_strided_slice %6 {offsets = [6, 0], sizes = [32, 128], strides = [1, 1]} : vector<62x128xf32> to vector<32x128xf32>
    %45 = arith.truncf %44 : vector<32x128xf32> to vector<32x128xbf16>
    %c6 = arith.constant 6 : index
    %c0_21 = arith.constant 0 : index
    %c0_22 = arith.constant 0 : index
    %46 = vector.load %arg2[%c6, %c0_21, %c0_22] : memref<31x128x128xbf16, #tpu.memory_space<vmem>>, vector<1x128x128xbf16>
    %47 = vector.shape_cast %46 : vector<1x128x128xbf16> to vector<128x128xbf16>
    %cst_23 = arith.constant dense<0.000000e+00> : vector<32x128xf32>
    %48 = tpu.matmul %45, %47, %cst_23 {dimension_numbers = #tpu.dot_dimension_numbers<[1], [0], [0], [1], [0, 0, 1, 1], [], []>} : vector<32x128xbf16>, vector<128x128xbf16>, vector<32x128xf32> -> vector<32x128xf32>
    %49 = arith.addf %43, %48 : vector<32x128xf32>
    %50 = vector.extract_strided_slice %6 {offsets = [7, 0], sizes = [32, 128], strides = [1, 1]} : vector<62x128xf32> to vector<32x128xf32>
    %51 = arith.truncf %50 : vector<32x128xf32> to vector<32x128xbf16>
    %c7 = arith.constant 7 : index
    %c0_24 = arith.constant 0 : index
    %c0_25 = arith.constant 0 : index
    %52 = vector.load %arg2[%c7, %c0_24, %c0_25] : memref<31x128x128xbf16, #tpu.memory_space<vmem>>, vector<1x128x128xbf16>
    %53 = vector.shape_cast %52 : vector<1x128x128xbf16> to vector<128x128xbf16>
    %cst_26 = arith.constant dense<0.000000e+00> : vector<32x128xf32>
    %54 = tpu.matmul %51, %53, %cst_26 {dimension_numbers = #tpu.dot_dimension_numbers<[1], [0], [0], [1], [0, 0, 1, 1], [], []>} : vector<32x128xbf16>, vector<128x128xbf16>, vector<32x128xf32> -> vector<32x128xf32>
    %55 = arith.addf %49, %54 : vector<32x128xf32>
    %56 = vector.extract_strided_slice %6 {offsets = [8, 0], sizes = [32, 128], strides = [1, 1]} : vector<62x128xf32> to vector<32x128xf32>
    %57 = arith.truncf %56 : vector<32x128xf32> to vector<32x128xbf16>
    %c8 = arith.constant 8 : index
    %c0_27 = arith.constant 0 : index
    %c0_28 = arith.constant 0 : index
    %58 = vector.load %arg2[%c8, %c0_27, %c0_28] : memref<31x128x128xbf16, #tpu.memory_space<vmem>>, vector<1x128x128xbf16>
    %59 = vector.shape_cast %58 : vector<1x128x128xbf16> to vector<128x128xbf16>
    %cst_29 = arith.constant dense<0.000000e+00> : vector<32x128xf32>
    %60 = tpu.matmul %57, %59, %cst_29 {dimension_numbers = #tpu.dot_dimension_numbers<[1], [0], [0], [1], [0, 0, 1, 1], [], []>} : vector<32x128xbf16>, vector<128x128xbf16>, vector<32x128xf32> -> vector<32x128xf32>
    %61 = arith.addf %55, %60 : vector<32x128xf32>
    %62 = vector.extract_strided_slice %6 {offsets = [9, 0], sizes = [32, 128], strides = [1, 1]} : vector<62x128xf32> to vector<32x128xf32>
    %63 = arith.truncf %62 : vector<32x128xf32> to vector<32x128xbf16>
    %c9 = arith.constant 9 : index
    %c0_30 = arith.constant 0 : index
    %c0_31 = arith.constant 0 : index
    %64 = vector.load %arg2[%c9, %c0_30, %c0_31] : memref<31x128x128xbf16, #tpu.memory_space<vmem>>, vector<1x128x128xbf16>
    %65 = vector.shape_cast %64 : vector<1x128x128xbf16> to vector<128x128xbf16>
    %cst_32 = arith.constant dense<0.000000e+00> : vector<32x128xf32>
    %66 = tpu.matmul %63, %65, %cst_32 {dimension_numbers = #tpu.dot_dimension_numbers<[1], [0], [0], [1], [0, 0, 1, 1], [], []>} : vector<32x128xbf16>, vector<128x128xbf16>, vector<32x128xf32> -> vector<32x128xf32>
    %67 = arith.addf %61, %66 : vector<32x128xf32>
    %68 = vector.extract_strided_slice %6 {offsets = [10, 0], sizes = [32, 128], strides = [1, 1]} : vector<62x128xf32> to vector<32x128xf32>
    %69 = arith.truncf %68 : vector<32x128xf32> to vector<32x128xbf16>
    %c10 = arith.constant 10 : index
    %c0_33 = arith.constant 0 : index
    %c0_34 = arith.constant 0 : index
    %70 = vector.load %arg2[%c10, %c0_33, %c0_34] : memref<31x128x128xbf16, #tpu.memory_space<vmem>>, vector<1x128x128xbf16>
    %71 = vector.shape_cast %70 : vector<1x128x128xbf16> to vector<128x128xbf16>
    %cst_35 = arith.constant dense<0.000000e+00> : vector<32x128xf32>
    %72 = tpu.matmul %69, %71, %cst_35 {dimension_numbers = #tpu.dot_dimension_numbers<[1], [0], [0], [1], [0, 0, 1, 1], [], []>} : vector<32x128xbf16>, vector<128x128xbf16>, vector<32x128xf32> -> vector<32x128xf32>
    %73 = arith.addf %67, %72 : vector<32x128xf32>
    %74 = vector.extract_strided_slice %6 {offsets = [11, 0], sizes = [32, 128], strides = [1, 1]} : vector<62x128xf32> to vector<32x128xf32>
    %75 = arith.truncf %74 : vector<32x128xf32> to vector<32x128xbf16>
    %c11 = arith.constant 11 : index
    %c0_36 = arith.constant 0 : index
    %c0_37 = arith.constant 0 : index
    %76 = vector.load %arg2[%c11, %c0_36, %c0_37] : memref<31x128x128xbf16, #tpu.memory_space<vmem>>, vector<1x128x128xbf16>
    %77 = vector.shape_cast %76 : vector<1x128x128xbf16> to vector<128x128xbf16>
    %cst_38 = arith.constant dense<0.000000e+00> : vector<32x128xf32>
    %78 = tpu.matmul %75, %77, %cst_38 {dimension_numbers = #tpu.dot_dimension_numbers<[1], [0], [0], [1], [0, 0, 1, 1], [], []>} : vector<32x128xbf16>, vector<128x128xbf16>, vector<32x128xf32> -> vector<32x128xf32>
    %79 = arith.addf %73, %78 : vector<32x128xf32>
    %80 = vector.extract_strided_slice %6 {offsets = [12, 0], sizes = [32, 128], strides = [1, 1]} : vector<62x128xf32> to vector<32x128xf32>
    %81 = arith.truncf %80 : vector<32x128xf32> to vector<32x128xbf16>
    %c12 = arith.constant 12 : index
    %c0_39 = arith.constant 0 : index
    %c0_40 = arith.constant 0 : index
    %82 = vector.load %arg2[%c12, %c0_39, %c0_40] : memref<31x128x128xbf16, #tpu.memory_space<vmem>>, vector<1x128x128xbf16>
    %83 = vector.shape_cast %82 : vector<1x128x128xbf16> to vector<128x128xbf16>
    %cst_41 = arith.constant dense<0.000000e+00> : vector<32x128xf32>
    %84 = tpu.matmul %81, %83, %cst_41 {dimension_numbers = #tpu.dot_dimension_numbers<[1], [0], [0], [1], [0, 0, 1, 1], [], []>} : vector<32x128xbf16>, vector<128x128xbf16>, vector<32x128xf32> -> vector<32x128xf32>
    %85 = arith.addf %79, %84 : vector<32x128xf32>
    %86 = vector.extract_strided_slice %6 {offsets = [13, 0], sizes = [32, 128], strides = [1, 1]} : vector<62x128xf32> to vector<32x128xf32>
    %87 = arith.truncf %86 : vector<32x128xf32> to vector<32x128xbf16>
    %c13 = arith.constant 13 : index
    %c0_42 = arith.constant 0 : index
    %c0_43 = arith.constant 0 : index
    %88 = vector.load %arg2[%c13, %c0_42, %c0_43] : memref<31x128x128xbf16, #tpu.memory_space<vmem>>, vector<1x128x128xbf16>
    %89 = vector.shape_cast %88 : vector<1x128x128xbf16> to vector<128x128xbf16>
    %cst_44 = arith.constant dense<0.000000e+00> : vector<32x128xf32>
    %90 = tpu.matmul %87, %89, %cst_44 {dimension_numbers = #tpu.dot_dimension_numbers<[1], [0], [0], [1], [0, 0, 1, 1], [], []>} : vector<32x128xbf16>, vector<128x128xbf16>, vector<32x128xf32> -> vector<32x128xf32>
    %91 = arith.addf %85, %90 : vector<32x128xf32>
    %92 = vector.extract_strided_slice %6 {offsets = [14, 0], sizes = [32, 128], strides = [1, 1]} : vector<62x128xf32> to vector<32x128xf32>
    %93 = arith.truncf %92 : vector<32x128xf32> to vector<32x128xbf16>
    %c14 = arith.constant 14 : index
    %c0_45 = arith.constant 0 : index
    %c0_46 = arith.constant 0 : index
    %94 = vector.load %arg2[%c14, %c0_45, %c0_46] : memref<31x128x128xbf16, #tpu.memory_space<vmem>>, vector<1x128x128xbf16>
    %95 = vector.shape_cast %94 : vector<1x128x128xbf16> to vector<128x128xbf16>
    %cst_47 = arith.constant dense<0.000000e+00> : vector<32x128xf32>
    %96 = tpu.matmul %93, %95, %cst_47 {dimension_numbers = #tpu.dot_dimension_numbers<[1], [0], [0], [1], [0, 0, 1, 1], [], []>} : vector<32x128xbf16>, vector<128x128xbf16>, vector<32x128xf32> -> vector<32x128xf32>
    %97 = arith.addf %91, %96 : vector<32x128xf32>
    %98 = vector.extract_strided_slice %6 {offsets = [15, 0], sizes = [32, 128], strides = [1, 1]} : vector<62x128xf32> to vector<32x128xf32>
    %99 = arith.truncf %98 : vector<32x128xf32> to vector<32x128xbf16>
    %c15 = arith.constant 15 : index
    %c0_48 = arith.constant 0 : index
    %c0_49 = arith.constant 0 : index
    %100 = vector.load %arg2[%c15, %c0_48, %c0_49] : memref<31x128x128xbf16, #tpu.memory_space<vmem>>, vector<1x128x128xbf16>
    %101 = vector.shape_cast %100 : vector<1x128x128xbf16> to vector<128x128xbf16>
    %cst_50 = arith.constant dense<0.000000e+00> : vector<32x128xf32>
    %102 = tpu.matmul %99, %101, %cst_50 {dimension_numbers = #tpu.dot_dimension_numbers<[1], [0], [0], [1], [0, 0, 1, 1], [], []>} : vector<32x128xbf16>, vector<128x128xbf16>, vector<32x128xf32> -> vector<32x128xf32>
    %103 = arith.addf %97, %102 : vector<32x128xf32>
    %104 = vector.extract_strided_slice %6 {offsets = [16, 0], sizes = [32, 128], strides = [1, 1]} : vector<62x128xf32> to vector<32x128xf32>
    %105 = arith.truncf %104 : vector<32x128xf32> to vector<32x128xbf16>
    %c16 = arith.constant 16 : index
    %c0_51 = arith.constant 0 : index
    %c0_52 = arith.constant 0 : index
    %106 = vector.load %arg2[%c16, %c0_51, %c0_52] : memref<31x128x128xbf16, #tpu.memory_space<vmem>>, vector<1x128x128xbf16>
    %107 = vector.shape_cast %106 : vector<1x128x128xbf16> to vector<128x128xbf16>
    %cst_53 = arith.constant dense<0.000000e+00> : vector<32x128xf32>
    %108 = tpu.matmul %105, %107, %cst_53 {dimension_numbers = #tpu.dot_dimension_numbers<[1], [0], [0], [1], [0, 0, 1, 1], [], []>} : vector<32x128xbf16>, vector<128x128xbf16>, vector<32x128xf32> -> vector<32x128xf32>
    %109 = arith.addf %103, %108 : vector<32x128xf32>
    %110 = vector.extract_strided_slice %6 {offsets = [17, 0], sizes = [32, 128], strides = [1, 1]} : vector<62x128xf32> to vector<32x128xf32>
    %111 = arith.truncf %110 : vector<32x128xf32> to vector<32x128xbf16>
    %c17 = arith.constant 17 : index
    %c0_54 = arith.constant 0 : index
    %c0_55 = arith.constant 0 : index
    %112 = vector.load %arg2[%c17, %c0_54, %c0_55] : memref<31x128x128xbf16, #tpu.memory_space<vmem>>, vector<1x128x128xbf16>
    %113 = vector.shape_cast %112 : vector<1x128x128xbf16> to vector<128x128xbf16>
    %cst_56 = arith.constant dense<0.000000e+00> : vector<32x128xf32>
    %114 = tpu.matmul %111, %113, %cst_56 {dimension_numbers = #tpu.dot_dimension_numbers<[1], [0], [0], [1], [0, 0, 1, 1], [], []>} : vector<32x128xbf16>, vector<128x128xbf16>, vector<32x128xf32> -> vector<32x128xf32>
    %115 = arith.addf %109, %114 : vector<32x128xf32>
    %116 = vector.extract_strided_slice %6 {offsets = [18, 0], sizes = [32, 128], strides = [1, 1]} : vector<62x128xf32> to vector<32x128xf32>
    %117 = arith.truncf %116 : vector<32x128xf32> to vector<32x128xbf16>
    %c18 = arith.constant 18 : index
    %c0_57 = arith.constant 0 : index
    %c0_58 = arith.constant 0 : index
    %118 = vector.load %arg2[%c18, %c0_57, %c0_58] : memref<31x128x128xbf16, #tpu.memory_space<vmem>>, vector<1x128x128xbf16>
    %119 = vector.shape_cast %118 : vector<1x128x128xbf16> to vector<128x128xbf16>
    %cst_59 = arith.constant dense<0.000000e+00> : vector<32x128xf32>
    %120 = tpu.matmul %117, %119, %cst_59 {dimension_numbers = #tpu.dot_dimension_numbers<[1], [0], [0], [1], [0, 0, 1, 1], [], []>} : vector<32x128xbf16>, vector<128x128xbf16>, vector<32x128xf32> -> vector<32x128xf32>
    %121 = arith.addf %115, %120 : vector<32x128xf32>
    %122 = vector.extract_strided_slice %6 {offsets = [19, 0], sizes = [32, 128], strides = [1, 1]} : vector<62x128xf32> to vector<32x128xf32>
    %123 = arith.truncf %122 : vector<32x128xf32> to vector<32x128xbf16>
    %c19 = arith.constant 19 : index
    %c0_60 = arith.constant 0 : index
    %c0_61 = arith.constant 0 : index
    %124 = vector.load %arg2[%c19, %c0_60, %c0_61] : memref<31x128x128xbf16, #tpu.memory_space<vmem>>, vector<1x128x128xbf16>
    %125 = vector.shape_cast %124 : vector<1x128x128xbf16> to vector<128x128xbf16>
    %cst_62 = arith.constant dense<0.000000e+00> : vector<32x128xf32>
    %126 = tpu.matmul %123, %125, %cst_62 {dimension_numbers = #tpu.dot_dimension_numbers<[1], [0], [0], [1], [0, 0, 1, 1], [], []>} : vector<32x128xbf16>, vector<128x128xbf16>, vector<32x128xf32> -> vector<32x128xf32>
    %127 = arith.addf %121, %126 : vector<32x128xf32>
    %128 = vector.extract_strided_slice %6 {offsets = [20, 0], sizes = [32, 128], strides = [1, 1]} : vector<62x128xf32> to vector<32x128xf32>
    %129 = arith.truncf %128 : vector<32x128xf32> to vector<32x128xbf16>
    %c20 = arith.constant 20 : index
    %c0_63 = arith.constant 0 : index
    %c0_64 = arith.constant 0 : index
    %130 = vector.load %arg2[%c20, %c0_63, %c0_64] : memref<31x128x128xbf16, #tpu.memory_space<vmem>>, vector<1x128x128xbf16>
    %131 = vector.shape_cast %130 : vector<1x128x128xbf16> to vector<128x128xbf16>
    %cst_65 = arith.constant dense<0.000000e+00> : vector<32x128xf32>
    %132 = tpu.matmul %129, %131, %cst_65 {dimension_numbers = #tpu.dot_dimension_numbers<[1], [0], [0], [1], [0, 0, 1, 1], [], []>} : vector<32x128xbf16>, vector<128x128xbf16>, vector<32x128xf32> -> vector<32x128xf32>
    %133 = arith.addf %127, %132 : vector<32x128xf32>
    %134 = vector.extract_strided_slice %6 {offsets = [21, 0], sizes = [32, 128], strides = [1, 1]} : vector<62x128xf32> to vector<32x128xf32>
    %135 = arith.truncf %134 : vector<32x128xf32> to vector<32x128xbf16>
    %c21 = arith.constant 21 : index
    %c0_66 = arith.constant 0 : index
    %c0_67 = arith.constant 0 : index
    %136 = vector.load %arg2[%c21, %c0_66, %c0_67] : memref<31x128x128xbf16, #tpu.memory_space<vmem>>, vector<1x128x128xbf16>
    %137 = vector.shape_cast %136 : vector<1x128x128xbf16> to vector<128x128xbf16>
    %cst_68 = arith.constant dense<0.000000e+00> : vector<32x128xf32>
    %138 = tpu.matmul %135, %137, %cst_68 {dimension_numbers = #tpu.dot_dimension_numbers<[1], [0], [0], [1], [0, 0, 1, 1], [], []>} : vector<32x128xbf16>, vector<128x128xbf16>, vector<32x128xf32> -> vector<32x128xf32>
    %139 = arith.addf %133, %138 : vector<32x128xf32>
    %140 = vector.extract_strided_slice %6 {offsets = [22, 0], sizes = [32, 128], strides = [1, 1]} : vector<62x128xf32> to vector<32x128xf32>
    %141 = arith.truncf %140 : vector<32x128xf32> to vector<32x128xbf16>
    %c22 = arith.constant 22 : index
    %c0_69 = arith.constant 0 : index
    %c0_70 = arith.constant 0 : index
    %142 = vector.load %arg2[%c22, %c0_69, %c0_70] : memref<31x128x128xbf16, #tpu.memory_space<vmem>>, vector<1x128x128xbf16>
    %143 = vector.shape_cast %142 : vector<1x128x128xbf16> to vector<128x128xbf16>
    %cst_71 = arith.constant dense<0.000000e+00> : vector<32x128xf32>
    %144 = tpu.matmul %141, %143, %cst_71 {dimension_numbers = #tpu.dot_dimension_numbers<[1], [0], [0], [1], [0, 0, 1, 1], [], []>} : vector<32x128xbf16>, vector<128x128xbf16>, vector<32x128xf32> -> vector<32x128xf32>
    %145 = arith.addf %139, %144 : vector<32x128xf32>
    %146 = vector.extract_strided_slice %6 {offsets = [23, 0], sizes = [32, 128], strides = [1, 1]} : vector<62x128xf32> to vector<32x128xf32>
    %147 = arith.truncf %146 : vector<32x128xf32> to vector<32x128xbf16>
    %c23 = arith.constant 23 : index
    %c0_72 = arith.constant 0 : index
    %c0_73 = arith.constant 0 : index
    %148 = vector.load %arg2[%c23, %c0_72, %c0_73] : memref<31x128x128xbf16, #tpu.memory_space<vmem>>, vector<1x128x128xbf16>
    %149 = vector.shape_cast %148 : vector<1x128x128xbf16> to vector<128x128xbf16>
    %cst_74 = arith.constant dense<0.000000e+00> : vector<32x128xf32>
    %150 = tpu.matmul %147, %149, %cst_74 {dimension_numbers = #tpu.dot_dimension_numbers<[1], [0], [0], [1], [0, 0, 1, 1], [], []>} : vector<32x128xbf16>, vector<128x128xbf16>, vector<32x128xf32> -> vector<32x128xf32>
    %151 = arith.addf %145, %150 : vector<32x128xf32>
    %152 = vector.extract_strided_slice %6 {offsets = [24, 0], sizes = [32, 128], strides = [1, 1]} : vector<62x128xf32> to vector<32x128xf32>
    %153 = arith.truncf %152 : vector<32x128xf32> to vector<32x128xbf16>
    %c24 = arith.constant 24 : index
    %c0_75 = arith.constant 0 : index
    %c0_76 = arith.constant 0 : index
    %154 = vector.load %arg2[%c24, %c0_75, %c0_76] : memref<31x128x128xbf16, #tpu.memory_space<vmem>>, vector<1x128x128xbf16>
    %155 = vector.shape_cast %154 : vector<1x128x128xbf16> to vector<128x128xbf16>
    %cst_77 = arith.constant dense<0.000000e+00> : vector<32x128xf32>
    %156 = tpu.matmul %153, %155, %cst_77 {dimension_numbers = #tpu.dot_dimension_numbers<[1], [0], [0], [1], [0, 0, 1, 1], [], []>} : vector<32x128xbf16>, vector<128x128xbf16>, vector<32x128xf32> -> vector<32x128xf32>
    %157 = arith.addf %151, %156 : vector<32x128xf32>
    %158 = vector.extract_strided_slice %6 {offsets = [25, 0], sizes = [32, 128], strides = [1, 1]} : vector<62x128xf32> to vector<32x128xf32>
    %159 = arith.truncf %158 : vector<32x128xf32> to vector<32x128xbf16>
    %c25 = arith.constant 25 : index
    %c0_78 = arith.constant 0 : index
    %c0_79 = arith.constant 0 : index
    %160 = vector.load %arg2[%c25, %c0_78, %c0_79] : memref<31x128x128xbf16, #tpu.memory_space<vmem>>, vector<1x128x128xbf16>
    %161 = vector.shape_cast %160 : vector<1x128x128xbf16> to vector<128x128xbf16>
    %cst_80 = arith.constant dense<0.000000e+00> : vector<32x128xf32>
    %162 = tpu.matmul %159, %161, %cst_80 {dimension_numbers = #tpu.dot_dimension_numbers<[1], [0], [0], [1], [0, 0, 1, 1], [], []>} : vector<32x128xbf16>, vector<128x128xbf16>, vector<32x128xf32> -> vector<32x128xf32>
    %163 = arith.addf %157, %162 : vector<32x128xf32>
    %164 = vector.extract_strided_slice %6 {offsets = [26, 0], sizes = [32, 128], strides = [1, 1]} : vector<62x128xf32> to vector<32x128xf32>
    %165 = arith.truncf %164 : vector<32x128xf32> to vector<32x128xbf16>
    %c26 = arith.constant 26 : index
    %c0_81 = arith.constant 0 : index
    %c0_82 = arith.constant 0 : index
    %166 = vector.load %arg2[%c26, %c0_81, %c0_82] : memref<31x128x128xbf16, #tpu.memory_space<vmem>>, vector<1x128x128xbf16>
    %167 = vector.shape_cast %166 : vector<1x128x128xbf16> to vector<128x128xbf16>
    %cst_83 = arith.constant dense<0.000000e+00> : vector<32x128xf32>
    %168 = tpu.matmul %165, %167, %cst_83 {dimension_numbers = #tpu.dot_dimension_numbers<[1], [0], [0], [1], [0, 0, 1, 1], [], []>} : vector<32x128xbf16>, vector<128x128xbf16>, vector<32x128xf32> -> vector<32x128xf32>
    %169 = arith.addf %163, %168 : vector<32x128xf32>
    %170 = vector.extract_strided_slice %6 {offsets = [27, 0], sizes = [32, 128], strides = [1, 1]} : vector<62x128xf32> to vector<32x128xf32>
    %171 = arith.truncf %170 : vector<32x128xf32> to vector<32x128xbf16>
    %c27 = arith.constant 27 : index
    %c0_84 = arith.constant 0 : index
    %c0_85 = arith.constant 0 : index
    %172 = vector.load %arg2[%c27, %c0_84, %c0_85] : memref<31x128x128xbf16, #tpu.memory_space<vmem>>, vector<1x128x128xbf16>
    %173 = vector.shape_cast %172 : vector<1x128x128xbf16> to vector<128x128xbf16>
    %cst_86 = arith.constant dense<0.000000e+00> : vector<32x128xf32>
    %174 = tpu.matmul %171, %173, %cst_86 {dimension_numbers = #tpu.dot_dimension_numbers<[1], [0], [0], [1], [0, 0, 1, 1], [], []>} : vector<32x128xbf16>, vector<128x128xbf16>, vector<32x128xf32> -> vector<32x128xf32>
    %175 = arith.addf %169, %174 : vector<32x128xf32>
    %176 = vector.extract_strided_slice %6 {offsets = [28, 0], sizes = [32, 128], strides = [1, 1]} : vector<62x128xf32> to vector<32x128xf32>
    %177 = arith.truncf %176 : vector<32x128xf32> to vector<32x128xbf16>
    %c28 = arith.constant 28 : index
    %c0_87 = arith.constant 0 : index
    %c0_88 = arith.constant 0 : index
    %178 = vector.load %arg2[%c28, %c0_87, %c0_88] : memref<31x128x128xbf16, #tpu.memory_space<vmem>>, vector<1x128x128xbf16>
    %179 = vector.shape_cast %178 : vector<1x128x128xbf16> to vector<128x128xbf16>
    %cst_89 = arith.constant dense<0.000000e+00> : vector<32x128xf32>
    %180 = tpu.matmul %177, %179, %cst_89 {dimension_numbers = #tpu.dot_dimension_numbers<[1], [0], [0], [1], [0, 0, 1, 1], [], []>} : vector<32x128xbf16>, vector<128x128xbf16>, vector<32x128xf32> -> vector<32x128xf32>
    %181 = arith.addf %175, %180 : vector<32x128xf32>
    %182 = vector.extract_strided_slice %6 {offsets = [29, 0], sizes = [32, 128], strides = [1, 1]} : vector<62x128xf32> to vector<32x128xf32>
    %183 = arith.truncf %182 : vector<32x128xf32> to vector<32x128xbf16>
    %c29 = arith.constant 29 : index
    %c0_90 = arith.constant 0 : index
    %c0_91 = arith.constant 0 : index
    %184 = vector.load %arg2[%c29, %c0_90, %c0_91] : memref<31x128x128xbf16, #tpu.memory_space<vmem>>, vector<1x128x128xbf16>
    %185 = vector.shape_cast %184 : vector<1x128x128xbf16> to vector<128x128xbf16>
    %cst_92 = arith.constant dense<0.000000e+00> : vector<32x128xf32>
    %186 = tpu.matmul %183, %185, %cst_92 {dimension_numbers = #tpu.dot_dimension_numbers<[1], [0], [0], [1], [0, 0, 1, 1], [], []>} : vector<32x128xbf16>, vector<128x128xbf16>, vector<32x128xf32> -> vector<32x128xf32>
    %187 = arith.addf %181, %186 : vector<32x128xf32>
    %188 = vector.extract_strided_slice %6 {offsets = [30, 0], sizes = [32, 128], strides = [1, 1]} : vector<62x128xf32> to vector<32x128xf32>
    %189 = arith.truncf %188 : vector<32x128xf32> to vector<32x128xbf16>
    %c30 = arith.constant 30 : index
    %c0_93 = arith.constant 0 : index
    %c0_94 = arith.constant 0 : index
    %190 = vector.load %arg2[%c30, %c0_93, %c0_94] : memref<31x128x128xbf16, #tpu.memory_space<vmem>>, vector<1x128x128xbf16>
    %191 = vector.shape_cast %190 : vector<1x128x128xbf16> to vector<128x128xbf16>
    %cst_95 = arith.constant dense<0.000000e+00> : vector<32x128xf32>
    %192 = tpu.matmul %189, %191, %cst_95 {dimension_numbers = #tpu.dot_dimension_numbers<[1], [0], [0], [1], [0, 0, 1, 1], [], []>} : vector<32x128xbf16>, vector<128x128xbf16>, vector<32x128xf32> -> vector<32x128xf32>
    %193 = arith.addf %187, %192 : vector<32x128xf32>
    %c0_96 = arith.constant 0 : index
    %c0_97 = arith.constant 0 : index
    %194 = vector.load %arg3[%c0_96, %c0_97] : memref<1x128xf32, #tpu.memory_space<vmem>>, vector<1x128xf32>
    %195 = vector.broadcast %194 : vector<1x128xf32> to vector<32x128xf32>
    %196 = arith.addf %193, %195 : vector<32x128xf32>
    %cst_98 = arith.constant 0.000000e+00 : f32
    %197 = vector.broadcast %cst_98 : f32 to vector<32x128xf32>
    %198 = arith.maximumf %196, %197 : vector<32x128xf32>
    %199 = math.absf %196 : vector<32x128xf32>
    %cst_99 = arith.constant 0.000000e+00 : f32
    %200 = vector.broadcast %cst_99 : f32 to vector<32x128xf32>
    %201 = arith.subf %200, %199 : vector<32x128xf32>
    %202 = math.exp %201 : vector<32x128xf32>
    %cst_100 = arith.constant 1.000000e+00 : f32
    %203 = vector.broadcast %cst_100 : f32 to vector<32x128xf32>
    %204 = arith.addf %203, %202 : vector<32x128xf32>
    %205 = math.log %204 : vector<32x128xf32>
    %206 = arith.addf %198, %205 : vector<32x128xf32>
    %207 = math.tanh %206 : vector<32x128xf32>
    %208 = arith.mulf %196, %207 : vector<32x128xf32>
    %c0_i32_101 = arith.constant 0 : i32
    %209 = arith.sitofp %c0_i32_101 : i32 to f32
    %210 = vector.broadcast %209 : f32 to vector<15x128xf32>
    %211 = tpu.concatenate %210, %208 in 0 : vector<15x128xf32>, vector<32x128xf32> -> vector<47x128xf32>
    %212 = vector.broadcast %209 : f32 to vector<15x128xf32>
    %213 = tpu.concatenate %211, %212 in 0 : vector<47x128xf32>, vector<15x128xf32> -> vector<62x128xf32>
    %cst_102 = arith.constant 0.000000e+00 : f32
    %214 = vector.broadcast %cst_102 : f32 to vector<32x128xf32>
    %215 = vector.extract_strided_slice %213 {offsets = [0, 0], sizes = [32, 128], strides = [1, 1]} : vector<62x128xf32> to vector<32x128xf32>
    %216 = arith.truncf %215 : vector<32x128xf32> to vector<32x128xbf16>
    %c0_103 = arith.constant 0 : index
    %c0_104 = arith.constant 0 : index
    %c0_105 = arith.constant 0 : index
    %217 = vector.load %arg4[%c0_103, %c0_104, %c0_105] : memref<31x128x128xbf16, #tpu.memory_space<vmem>>, vector<1x128x128xbf16>
    %218 = vector.shape_cast %217 : vector<1x128x128xbf16> to vector<128x128xbf16>
    %cst_106 = arith.constant dense<0.000000e+00> : vector<32x128xf32>
    %219 = tpu.matmul %216, %218, %cst_106 {dimension_numbers = #tpu.dot_dimension_numbers<[1], [0], [0], [1], [0, 0, 1, 1], [], []>} : vector<32x128xbf16>, vector<128x128xbf16>, vector<32x128xf32> -> vector<32x128xf32>
    %220 = arith.addf %214, %219 : vector<32x128xf32>
    %221 = vector.extract_strided_slice %213 {offsets = [1, 0], sizes = [32, 128], strides = [1, 1]} : vector<62x128xf32> to vector<32x128xf32>
    %222 = arith.truncf %221 : vector<32x128xf32> to vector<32x128xbf16>
    %c1_107 = arith.constant 1 : index
    %c0_108 = arith.constant 0 : index
    %c0_109 = arith.constant 0 : index
    %223 = vector.load %arg4[%c1_107, %c0_108, %c0_109] : memref<31x128x128xbf16, #tpu.memory_space<vmem>>, vector<1x128x128xbf16>
    %224 = vector.shape_cast %223 : vector<1x128x128xbf16> to vector<128x128xbf16>
    %cst_110 = arith.constant dense<0.000000e+00> : vector<32x128xf32>
    %225 = tpu.matmul %222, %224, %cst_110 {dimension_numbers = #tpu.dot_dimension_numbers<[1], [0], [0], [1], [0, 0, 1, 1], [], []>} : vector<32x128xbf16>, vector<128x128xbf16>, vector<32x128xf32> -> vector<32x128xf32>
    %226 = arith.addf %220, %225 : vector<32x128xf32>
    %227 = vector.extract_strided_slice %213 {offsets = [2, 0], sizes = [32, 128], strides = [1, 1]} : vector<62x128xf32> to vector<32x128xf32>
    %228 = arith.truncf %227 : vector<32x128xf32> to vector<32x128xbf16>
    %c2_111 = arith.constant 2 : index
    %c0_112 = arith.constant 0 : index
    %c0_113 = arith.constant 0 : index
    %229 = vector.load %arg4[%c2_111, %c0_112, %c0_113] : memref<31x128x128xbf16, #tpu.memory_space<vmem>>, vector<1x128x128xbf16>
    %230 = vector.shape_cast %229 : vector<1x128x128xbf16> to vector<128x128xbf16>
    %cst_114 = arith.constant dense<0.000000e+00> : vector<32x128xf32>
    %231 = tpu.matmul %228, %230, %cst_114 {dimension_numbers = #tpu.dot_dimension_numbers<[1], [0], [0], [1], [0, 0, 1, 1], [], []>} : vector<32x128xbf16>, vector<128x128xbf16>, vector<32x128xf32> -> vector<32x128xf32>
    %232 = arith.addf %226, %231 : vector<32x128xf32>
    %233 = vector.extract_strided_slice %213 {offsets = [3, 0], sizes = [32, 128], strides = [1, 1]} : vector<62x128xf32> to vector<32x128xf32>
    %234 = arith.truncf %233 : vector<32x128xf32> to vector<32x128xbf16>
    %c3_115 = arith.constant 3 : index
    %c0_116 = arith.constant 0 : index
    %c0_117 = arith.constant 0 : index
    %235 = vector.load %arg4[%c3_115, %c0_116, %c0_117] : memref<31x128x128xbf16, #tpu.memory_space<vmem>>, vector<1x128x128xbf16>
    %236 = vector.shape_cast %235 : vector<1x128x128xbf16> to vector<128x128xbf16>
    %cst_118 = arith.constant dense<0.000000e+00> : vector<32x128xf32>
    %237 = tpu.matmul %234, %236, %cst_118 {dimension_numbers = #tpu.dot_dimension_numbers<[1], [0], [0], [1], [0, 0, 1, 1], [], []>} : vector<32x128xbf16>, vector<128x128xbf16>, vector<32x128xf32> -> vector<32x128xf32>
    %238 = arith.addf %232, %237 : vector<32x128xf32>
    %239 = vector.extract_strided_slice %213 {offsets = [4, 0], sizes = [32, 128], strides = [1, 1]} : vector<62x128xf32> to vector<32x128xf32>
    %240 = arith.truncf %239 : vector<32x128xf32> to vector<32x128xbf16>
    %c4_119 = arith.constant 4 : index
    %c0_120 = arith.constant 0 : index
    %c0_121 = arith.constant 0 : index
    %241 = vector.load %arg4[%c4_119, %c0_120, %c0_121] : memref<31x128x128xbf16, #tpu.memory_space<vmem>>, vector<1x128x128xbf16>
    %242 = vector.shape_cast %241 : vector<1x128x128xbf16> to vector<128x128xbf16>
    %cst_122 = arith.constant dense<0.000000e+00> : vector<32x128xf32>
    %243 = tpu.matmul %240, %242, %cst_122 {dimension_numbers = #tpu.dot_dimension_numbers<[1], [0], [0], [1], [0, 0, 1, 1], [], []>} : vector<32x128xbf16>, vector<128x128xbf16>, vector<32x128xf32> -> vector<32x128xf32>
    %244 = arith.addf %238, %243 : vector<32x128xf32>
    %245 = vector.extract_strided_slice %213 {offsets = [5, 0], sizes = [32, 128], strides = [1, 1]} : vector<62x128xf32> to vector<32x128xf32>
    %246 = arith.truncf %245 : vector<32x128xf32> to vector<32x128xbf16>
    %c5_123 = arith.constant 5 : index
    %c0_124 = arith.constant 0 : index
    %c0_125 = arith.constant 0 : index
    %247 = vector.load %arg4[%c5_123, %c0_124, %c0_125] : memref<31x128x128xbf16, #tpu.memory_space<vmem>>, vector<1x128x128xbf16>
    %248 = vector.shape_cast %247 : vector<1x128x128xbf16> to vector<128x128xbf16>
    %cst_126 = arith.constant dense<0.000000e+00> : vector<32x128xf32>
    %249 = tpu.matmul %246, %248, %cst_126 {dimension_numbers = #tpu.dot_dimension_numbers<[1], [0], [0], [1], [0, 0, 1, 1], [], []>} : vector<32x128xbf16>, vector<128x128xbf16>, vector<32x128xf32> -> vector<32x128xf32>
    %250 = arith.addf %244, %249 : vector<32x128xf32>
    %251 = vector.extract_strided_slice %213 {offsets = [6, 0], sizes = [32, 128], strides = [1, 1]} : vector<62x128xf32> to vector<32x128xf32>
    %252 = arith.truncf %251 : vector<32x128xf32> to vector<32x128xbf16>
    %c6_127 = arith.constant 6 : index
    %c0_128 = arith.constant 0 : index
    %c0_129 = arith.constant 0 : index
    %253 = vector.load %arg4[%c6_127, %c0_128, %c0_129] : memref<31x128x128xbf16, #tpu.memory_space<vmem>>, vector<1x128x128xbf16>
    %254 = vector.shape_cast %253 : vector<1x128x128xbf16> to vector<128x128xbf16>
    %cst_130 = arith.constant dense<0.000000e+00> : vector<32x128xf32>
    %255 = tpu.matmul %252, %254, %cst_130 {dimension_numbers = #tpu.dot_dimension_numbers<[1], [0], [0], [1], [0, 0, 1, 1], [], []>} : vector<32x128xbf16>, vector<128x128xbf16>, vector<32x128xf32> -> vector<32x128xf32>
    %256 = arith.addf %250, %255 : vector<32x128xf32>
    %257 = vector.extract_strided_slice %213 {offsets = [7, 0], sizes = [32, 128], strides = [1, 1]} : vector<62x128xf32> to vector<32x128xf32>
    %258 = arith.truncf %257 : vector<32x128xf32> to vector<32x128xbf16>
    %c7_131 = arith.constant 7 : index
    %c0_132 = arith.constant 0 : index
    %c0_133 = arith.constant 0 : index
    %259 = vector.load %arg4[%c7_131, %c0_132, %c0_133] : memref<31x128x128xbf16, #tpu.memory_space<vmem>>, vector<1x128x128xbf16>
    %260 = vector.shape_cast %259 : vector<1x128x128xbf16> to vector<128x128xbf16>
    %cst_134 = arith.constant dense<0.000000e+00> : vector<32x128xf32>
    %261 = tpu.matmul %258, %260, %cst_134 {dimension_numbers = #tpu.dot_dimension_numbers<[1], [0], [0], [1], [0, 0, 1, 1], [], []>} : vector<32x128xbf16>, vector<128x128xbf16>, vector<32x128xf32> -> vector<32x128xf32>
    %262 = arith.addf %256, %261 : vector<32x128xf32>
    %263 = vector.extract_strided_slice %213 {offsets = [8, 0], sizes = [32, 128], strides = [1, 1]} : vector<62x128xf32> to vector<32x128xf32>
    %264 = arith.truncf %263 : vector<32x128xf32> to vector<32x128xbf16>
    %c8_135 = arith.constant 8 : index
    %c0_136 = arith.constant 0 : index
    %c0_137 = arith.constant 0 : index
    %265 = vector.load %arg4[%c8_135, %c0_136, %c0_137] : memref<31x128x128xbf16, #tpu.memory_space<vmem>>, vector<1x128x128xbf16>
    %266 = vector.shape_cast %265 : vector<1x128x128xbf16> to vector<128x128xbf16>
    %cst_138 = arith.constant dense<0.000000e+00> : vector<32x128xf32>
    %267 = tpu.matmul %264, %266, %cst_138 {dimension_numbers = #tpu.dot_dimension_numbers<[1], [0], [0], [1], [0, 0, 1, 1], [], []>} : vector<32x128xbf16>, vector<128x128xbf16>, vector<32x128xf32> -> vector<32x128xf32>
    %268 = arith.addf %262, %267 : vector<32x128xf32>
    %269 = vector.extract_strided_slice %213 {offsets = [9, 0], sizes = [32, 128], strides = [1, 1]} : vector<62x128xf32> to vector<32x128xf32>
    %270 = arith.truncf %269 : vector<32x128xf32> to vector<32x128xbf16>
    %c9_139 = arith.constant 9 : index
    %c0_140 = arith.constant 0 : index
    %c0_141 = arith.constant 0 : index
    %271 = vector.load %arg4[%c9_139, %c0_140, %c0_141] : memref<31x128x128xbf16, #tpu.memory_space<vmem>>, vector<1x128x128xbf16>
    %272 = vector.shape_cast %271 : vector<1x128x128xbf16> to vector<128x128xbf16>
    %cst_142 = arith.constant dense<0.000000e+00> : vector<32x128xf32>
    %273 = tpu.matmul %270, %272, %cst_142 {dimension_numbers = #tpu.dot_dimension_numbers<[1], [0], [0], [1], [0, 0, 1, 1], [], []>} : vector<32x128xbf16>, vector<128x128xbf16>, vector<32x128xf32> -> vector<32x128xf32>
    %274 = arith.addf %268, %273 : vector<32x128xf32>
    %275 = vector.extract_strided_slice %213 {offsets = [10, 0], sizes = [32, 128], strides = [1, 1]} : vector<62x128xf32> to vector<32x128xf32>
    %276 = arith.truncf %275 : vector<32x128xf32> to vector<32x128xbf16>
    %c10_143 = arith.constant 10 : index
    %c0_144 = arith.constant 0 : index
    %c0_145 = arith.constant 0 : index
    %277 = vector.load %arg4[%c10_143, %c0_144, %c0_145] : memref<31x128x128xbf16, #tpu.memory_space<vmem>>, vector<1x128x128xbf16>
    %278 = vector.shape_cast %277 : vector<1x128x128xbf16> to vector<128x128xbf16>
    %cst_146 = arith.constant dense<0.000000e+00> : vector<32x128xf32>
    %279 = tpu.matmul %276, %278, %cst_146 {dimension_numbers = #tpu.dot_dimension_numbers<[1], [0], [0], [1], [0, 0, 1, 1], [], []>} : vector<32x128xbf16>, vector<128x128xbf16>, vector<32x128xf32> -> vector<32x128xf32>
    %280 = arith.addf %274, %279 : vector<32x128xf32>
    %281 = vector.extract_strided_slice %213 {offsets = [11, 0], sizes = [32, 128], strides = [1, 1]} : vector<62x128xf32> to vector<32x128xf32>
    %282 = arith.truncf %281 : vector<32x128xf32> to vector<32x128xbf16>
    %c11_147 = arith.constant 11 : index
    %c0_148 = arith.constant 0 : index
    %c0_149 = arith.constant 0 : index
    %283 = vector.load %arg4[%c11_147, %c0_148, %c0_149] : memref<31x128x128xbf16, #tpu.memory_space<vmem>>, vector<1x128x128xbf16>
    %284 = vector.shape_cast %283 : vector<1x128x128xbf16> to vector<128x128xbf16>
    %cst_150 = arith.constant dense<0.000000e+00> : vector<32x128xf32>
    %285 = tpu.matmul %282, %284, %cst_150 {dimension_numbers = #tpu.dot_dimension_numbers<[1], [0], [0], [1], [0, 0, 1, 1], [], []>} : vector<32x128xbf16>, vector<128x128xbf16>, vector<32x128xf32> -> vector<32x128xf32>
    %286 = arith.addf %280, %285 : vector<32x128xf32>
    %287 = vector.extract_strided_slice %213 {offsets = [12, 0], sizes = [32, 128], strides = [1, 1]} : vector<62x128xf32> to vector<32x128xf32>
    %288 = arith.truncf %287 : vector<32x128xf32> to vector<32x128xbf16>
    %c12_151 = arith.constant 12 : index
    %c0_152 = arith.constant 0 : index
    %c0_153 = arith.constant 0 : index
    %289 = vector.load %arg4[%c12_151, %c0_152, %c0_153] : memref<31x128x128xbf16, #tpu.memory_space<vmem>>, vector<1x128x128xbf16>
    %290 = vector.shape_cast %289 : vector<1x128x128xbf16> to vector<128x128xbf16>
    %cst_154 = arith.constant dense<0.000000e+00> : vector<32x128xf32>
    %291 = tpu.matmul %288, %290, %cst_154 {dimension_numbers = #tpu.dot_dimension_numbers<[1], [0], [0], [1], [0, 0, 1, 1], [], []>} : vector<32x128xbf16>, vector<128x128xbf16>, vector<32x128xf32> -> vector<32x128xf32>
    %292 = arith.addf %286, %291 : vector<32x128xf32>
    %293 = vector.extract_strided_slice %213 {offsets = [13, 0], sizes = [32, 128], strides = [1, 1]} : vector<62x128xf32> to vector<32x128xf32>
    %294 = arith.truncf %293 : vector<32x128xf32> to vector<32x128xbf16>
    %c13_155 = arith.constant 13 : index
    %c0_156 = arith.constant 0 : index
    %c0_157 = arith.constant 0 : index
    %295 = vector.load %arg4[%c13_155, %c0_156, %c0_157] : memref<31x128x128xbf16, #tpu.memory_space<vmem>>, vector<1x128x128xbf16>
    %296 = vector.shape_cast %295 : vector<1x128x128xbf16> to vector<128x128xbf16>
    %cst_158 = arith.constant dense<0.000000e+00> : vector<32x128xf32>
    %297 = tpu.matmul %294, %296, %cst_158 {dimension_numbers = #tpu.dot_dimension_numbers<[1], [0], [0], [1], [0, 0, 1, 1], [], []>} : vector<32x128xbf16>, vector<128x128xbf16>, vector<32x128xf32> -> vector<32x128xf32>
    %298 = arith.addf %292, %297 : vector<32x128xf32>
    %299 = vector.extract_strided_slice %213 {offsets = [14, 0], sizes = [32, 128], strides = [1, 1]} : vector<62x128xf32> to vector<32x128xf32>
    %300 = arith.truncf %299 : vector<32x128xf32> to vector<32x128xbf16>
    %c14_159 = arith.constant 14 : index
    %c0_160 = arith.constant 0 : index
    %c0_161 = arith.constant 0 : index
    %301 = vector.load %arg4[%c14_159, %c0_160, %c0_161] : memref<31x128x128xbf16, #tpu.memory_space<vmem>>, vector<1x128x128xbf16>
    %302 = vector.shape_cast %301 : vector<1x128x128xbf16> to vector<128x128xbf16>
    %cst_162 = arith.constant dense<0.000000e+00> : vector<32x128xf32>
    %303 = tpu.matmul %300, %302, %cst_162 {dimension_numbers = #tpu.dot_dimension_numbers<[1], [0], [0], [1], [0, 0, 1, 1], [], []>} : vector<32x128xbf16>, vector<128x128xbf16>, vector<32x128xf32> -> vector<32x128xf32>
    %304 = arith.addf %298, %303 : vector<32x128xf32>
    %305 = vector.extract_strided_slice %213 {offsets = [15, 0], sizes = [32, 128], strides = [1, 1]} : vector<62x128xf32> to vector<32x128xf32>
    %306 = arith.truncf %305 : vector<32x128xf32> to vector<32x128xbf16>
    %c15_163 = arith.constant 15 : index
    %c0_164 = arith.constant 0 : index
    %c0_165 = arith.constant 0 : index
    %307 = vector.load %arg4[%c15_163, %c0_164, %c0_165] : memref<31x128x128xbf16, #tpu.memory_space<vmem>>, vector<1x128x128xbf16>
    %308 = vector.shape_cast %307 : vector<1x128x128xbf16> to vector<128x128xbf16>
    %cst_166 = arith.constant dense<0.000000e+00> : vector<32x128xf32>
    %309 = tpu.matmul %306, %308, %cst_166 {dimension_numbers = #tpu.dot_dimension_numbers<[1], [0], [0], [1], [0, 0, 1, 1], [], []>} : vector<32x128xbf16>, vector<128x128xbf16>, vector<32x128xf32> -> vector<32x128xf32>
    %310 = arith.addf %304, %309 : vector<32x128xf32>
    %311 = vector.extract_strided_slice %213 {offsets = [16, 0], sizes = [32, 128], strides = [1, 1]} : vector<62x128xf32> to vector<32x128xf32>
    %312 = arith.truncf %311 : vector<32x128xf32> to vector<32x128xbf16>
    %c16_167 = arith.constant 16 : index
    %c0_168 = arith.constant 0 : index
    %c0_169 = arith.constant 0 : index
    %313 = vector.load %arg4[%c16_167, %c0_168, %c0_169] : memref<31x128x128xbf16, #tpu.memory_space<vmem>>, vector<1x128x128xbf16>
    %314 = vector.shape_cast %313 : vector<1x128x128xbf16> to vector<128x128xbf16>
    %cst_170 = arith.constant dense<0.000000e+00> : vector<32x128xf32>
    %315 = tpu.matmul %312, %314, %cst_170 {dimension_numbers = #tpu.dot_dimension_numbers<[1], [0], [0], [1], [0, 0, 1, 1], [], []>} : vector<32x128xbf16>, vector<128x128xbf16>, vector<32x128xf32> -> vector<32x128xf32>
    %316 = arith.addf %310, %315 : vector<32x128xf32>
    %317 = vector.extract_strided_slice %213 {offsets = [17, 0], sizes = [32, 128], strides = [1, 1]} : vector<62x128xf32> to vector<32x128xf32>
    %318 = arith.truncf %317 : vector<32x128xf32> to vector<32x128xbf16>
    %c17_171 = arith.constant 17 : index
    %c0_172 = arith.constant 0 : index
    %c0_173 = arith.constant 0 : index
    %319 = vector.load %arg4[%c17_171, %c0_172, %c0_173] : memref<31x128x128xbf16, #tpu.memory_space<vmem>>, vector<1x128x128xbf16>
    %320 = vector.shape_cast %319 : vector<1x128x128xbf16> to vector<128x128xbf16>
    %cst_174 = arith.constant dense<0.000000e+00> : vector<32x128xf32>
    %321 = tpu.matmul %318, %320, %cst_174 {dimension_numbers = #tpu.dot_dimension_numbers<[1], [0], [0], [1], [0, 0, 1, 1], [], []>} : vector<32x128xbf16>, vector<128x128xbf16>, vector<32x128xf32> -> vector<32x128xf32>
    %322 = arith.addf %316, %321 : vector<32x128xf32>
    %323 = vector.extract_strided_slice %213 {offsets = [18, 0], sizes = [32, 128], strides = [1, 1]} : vector<62x128xf32> to vector<32x128xf32>
    %324 = arith.truncf %323 : vector<32x128xf32> to vector<32x128xbf16>
    %c18_175 = arith.constant 18 : index
    %c0_176 = arith.constant 0 : index
    %c0_177 = arith.constant 0 : index
    %325 = vector.load %arg4[%c18_175, %c0_176, %c0_177] : memref<31x128x128xbf16, #tpu.memory_space<vmem>>, vector<1x128x128xbf16>
    %326 = vector.shape_cast %325 : vector<1x128x128xbf16> to vector<128x128xbf16>
    %cst_178 = arith.constant dense<0.000000e+00> : vector<32x128xf32>
    %327 = tpu.matmul %324, %326, %cst_178 {dimension_numbers = #tpu.dot_dimension_numbers<[1], [0], [0], [1], [0, 0, 1, 1], [], []>} : vector<32x128xbf16>, vector<128x128xbf16>, vector<32x128xf32> -> vector<32x128xf32>
    %328 = arith.addf %322, %327 : vector<32x128xf32>
    %329 = vector.extract_strided_slice %213 {offsets = [19, 0], sizes = [32, 128], strides = [1, 1]} : vector<62x128xf32> to vector<32x128xf32>
    %330 = arith.truncf %329 : vector<32x128xf32> to vector<32x128xbf16>
    %c19_179 = arith.constant 19 : index
    %c0_180 = arith.constant 0 : index
    %c0_181 = arith.constant 0 : index
    %331 = vector.load %arg4[%c19_179, %c0_180, %c0_181] : memref<31x128x128xbf16, #tpu.memory_space<vmem>>, vector<1x128x128xbf16>
    %332 = vector.shape_cast %331 : vector<1x128x128xbf16> to vector<128x128xbf16>
    %cst_182 = arith.constant dense<0.000000e+00> : vector<32x128xf32>
    %333 = tpu.matmul %330, %332, %cst_182 {dimension_numbers = #tpu.dot_dimension_numbers<[1], [0], [0], [1], [0, 0, 1, 1], [], []>} : vector<32x128xbf16>, vector<128x128xbf16>, vector<32x128xf32> -> vector<32x128xf32>
    %334 = arith.addf %328, %333 : vector<32x128xf32>
    %335 = vector.extract_strided_slice %213 {offsets = [20, 0], sizes = [32, 128], strides = [1, 1]} : vector<62x128xf32> to vector<32x128xf32>
    %336 = arith.truncf %335 : vector<32x128xf32> to vector<32x128xbf16>
    %c20_183 = arith.constant 20 : index
    %c0_184 = arith.constant 0 : index
    %c0_185 = arith.constant 0 : index
    %337 = vector.load %arg4[%c20_183, %c0_184, %c0_185] : memref<31x128x128xbf16, #tpu.memory_space<vmem>>, vector<1x128x128xbf16>
    %338 = vector.shape_cast %337 : vector<1x128x128xbf16> to vector<128x128xbf16>
    %cst_186 = arith.constant dense<0.000000e+00> : vector<32x128xf32>
    %339 = tpu.matmul %336, %338, %cst_186 {dimension_numbers = #tpu.dot_dimension_numbers<[1], [0], [0], [1], [0, 0, 1, 1], [], []>} : vector<32x128xbf16>, vector<128x128xbf16>, vector<32x128xf32> -> vector<32x128xf32>
    %340 = arith.addf %334, %339 : vector<32x128xf32>
    %341 = vector.extract_strided_slice %213 {offsets = [21, 0], sizes = [32, 128], strides = [1, 1]} : vector<62x128xf32> to vector<32x128xf32>
    %342 = arith.truncf %341 : vector<32x128xf32> to vector<32x128xbf16>
    %c21_187 = arith.constant 21 : index
    %c0_188 = arith.constant 0 : index
    %c0_189 = arith.constant 0 : index
    %343 = vector.load %arg4[%c21_187, %c0_188, %c0_189] : memref<31x128x128xbf16, #tpu.memory_space<vmem>>, vector<1x128x128xbf16>
    %344 = vector.shape_cast %343 : vector<1x128x128xbf16> to vector<128x128xbf16>
    %cst_190 = arith.constant dense<0.000000e+00> : vector<32x128xf32>
    %345 = tpu.matmul %342, %344, %cst_190 {dimension_numbers = #tpu.dot_dimension_numbers<[1], [0], [0], [1], [0, 0, 1, 1], [], []>} : vector<32x128xbf16>, vector<128x128xbf16>, vector<32x128xf32> -> vector<32x128xf32>
    %346 = arith.addf %340, %345 : vector<32x128xf32>
    %347 = vector.extract_strided_slice %213 {offsets = [22, 0], sizes = [32, 128], strides = [1, 1]} : vector<62x128xf32> to vector<32x128xf32>
    %348 = arith.truncf %347 : vector<32x128xf32> to vector<32x128xbf16>
    %c22_191 = arith.constant 22 : index
    %c0_192 = arith.constant 0 : index
    %c0_193 = arith.constant 0 : index
    %349 = vector.load %arg4[%c22_191, %c0_192, %c0_193] : memref<31x128x128xbf16, #tpu.memory_space<vmem>>, vector<1x128x128xbf16>
    %350 = vector.shape_cast %349 : vector<1x128x128xbf16> to vector<128x128xbf16>
    %cst_194 = arith.constant dense<0.000000e+00> : vector<32x128xf32>
    %351 = tpu.matmul %348, %350, %cst_194 {dimension_numbers = #tpu.dot_dimension_numbers<[1], [0], [0], [1], [0, 0, 1, 1], [], []>} : vector<32x128xbf16>, vector<128x128xbf16>, vector<32x128xf32> -> vector<32x128xf32>
    %352 = arith.addf %346, %351 : vector<32x128xf32>
    %353 = vector.extract_strided_slice %213 {offsets = [23, 0], sizes = [32, 128], strides = [1, 1]} : vector<62x128xf32> to vector<32x128xf32>
    %354 = arith.truncf %353 : vector<32x128xf32> to vector<32x128xbf16>
    %c23_195 = arith.constant 23 : index
    %c0_196 = arith.constant 0 : index
    %c0_197 = arith.constant 0 : index
    %355 = vector.load %arg4[%c23_195, %c0_196, %c0_197] : memref<31x128x128xbf16, #tpu.memory_space<vmem>>, vector<1x128x128xbf16>
    %356 = vector.shape_cast %355 : vector<1x128x128xbf16> to vector<128x128xbf16>
    %cst_198 = arith.constant dense<0.000000e+00> : vector<32x128xf32>
    %357 = tpu.matmul %354, %356, %cst_198 {dimension_numbers = #tpu.dot_dimension_numbers<[1], [0], [0], [1], [0, 0, 1, 1], [], []>} : vector<32x128xbf16>, vector<128x128xbf16>, vector<32x128xf32> -> vector<32x128xf32>
    %358 = arith.addf %352, %357 : vector<32x128xf32>
    %359 = vector.extract_strided_slice %213 {offsets = [24, 0], sizes = [32, 128], strides = [1, 1]} : vector<62x128xf32> to vector<32x128xf32>
    %360 = arith.truncf %359 : vector<32x128xf32> to vector<32x128xbf16>
    %c24_199 = arith.constant 24 : index
    %c0_200 = arith.constant 0 : index
    %c0_201 = arith.constant 0 : index
    %361 = vector.load %arg4[%c24_199, %c0_200, %c0_201] : memref<31x128x128xbf16, #tpu.memory_space<vmem>>, vector<1x128x128xbf16>
    %362 = vector.shape_cast %361 : vector<1x128x128xbf16> to vector<128x128xbf16>
    %cst_202 = arith.constant dense<0.000000e+00> : vector<32x128xf32>
    %363 = tpu.matmul %360, %362, %cst_202 {dimension_numbers = #tpu.dot_dimension_numbers<[1], [0], [0], [1], [0, 0, 1, 1], [], []>} : vector<32x128xbf16>, vector<128x128xbf16>, vector<32x128xf32> -> vector<32x128xf32>
    %364 = arith.addf %358, %363 : vector<32x128xf32>
    %365 = vector.extract_strided_slice %213 {offsets = [25, 0], sizes = [32, 128], strides = [1, 1]} : vector<62x128xf32> to vector<32x128xf32>
    %366 = arith.truncf %365 : vector<32x128xf32> to vector<32x128xbf16>
    %c25_203 = arith.constant 25 : index
    %c0_204 = arith.constant 0 : index
    %c0_205 = arith.constant 0 : index
    %367 = vector.load %arg4[%c25_203, %c0_204, %c0_205] : memref<31x128x128xbf16, #tpu.memory_space<vmem>>, vector<1x128x128xbf16>
    %368 = vector.shape_cast %367 : vector<1x128x128xbf16> to vector<128x128xbf16>
    %cst_206 = arith.constant dense<0.000000e+00> : vector<32x128xf32>
    %369 = tpu.matmul %366, %368, %cst_206 {dimension_numbers = #tpu.dot_dimension_numbers<[1], [0], [0], [1], [0, 0, 1, 1], [], []>} : vector<32x128xbf16>, vector<128x128xbf16>, vector<32x128xf32> -> vector<32x128xf32>
    %370 = arith.addf %364, %369 : vector<32x128xf32>
    %371 = vector.extract_strided_slice %213 {offsets = [26, 0], sizes = [32, 128], strides = [1, 1]} : vector<62x128xf32> to vector<32x128xf32>
    %372 = arith.truncf %371 : vector<32x128xf32> to vector<32x128xbf16>
    %c26_207 = arith.constant 26 : index
    %c0_208 = arith.constant 0 : index
    %c0_209 = arith.constant 0 : index
    %373 = vector.load %arg4[%c26_207, %c0_208, %c0_209] : memref<31x128x128xbf16, #tpu.memory_space<vmem>>, vector<1x128x128xbf16>
    %374 = vector.shape_cast %373 : vector<1x128x128xbf16> to vector<128x128xbf16>
    %cst_210 = arith.constant dense<0.000000e+00> : vector<32x128xf32>
    %375 = tpu.matmul %372, %374, %cst_210 {dimension_numbers = #tpu.dot_dimension_numbers<[1], [0], [0], [1], [0, 0, 1, 1], [], []>} : vector<32x128xbf16>, vector<128x128xbf16>, vector<32x128xf32> -> vector<32x128xf32>
    %376 = arith.addf %370, %375 : vector<32x128xf32>
    %377 = vector.extract_strided_slice %213 {offsets = [27, 0], sizes = [32, 128], strides = [1, 1]} : vector<62x128xf32> to vector<32x128xf32>
    %378 = arith.truncf %377 : vector<32x128xf32> to vector<32x128xbf16>
    %c27_211 = arith.constant 27 : index
    %c0_212 = arith.constant 0 : index
    %c0_213 = arith.constant 0 : index
    %379 = vector.load %arg4[%c27_211, %c0_212, %c0_213] : memref<31x128x128xbf16, #tpu.memory_space<vmem>>, vector<1x128x128xbf16>
    %380 = vector.shape_cast %379 : vector<1x128x128xbf16> to vector<128x128xbf16>
    %cst_214 = arith.constant dense<0.000000e+00> : vector<32x128xf32>
    %381 = tpu.matmul %378, %380, %cst_214 {dimension_numbers = #tpu.dot_dimension_numbers<[1], [0], [0], [1], [0, 0, 1, 1], [], []>} : vector<32x128xbf16>, vector<128x128xbf16>, vector<32x128xf32> -> vector<32x128xf32>
    %382 = arith.addf %376, %381 : vector<32x128xf32>
    %383 = vector.extract_strided_slice %213 {offsets = [28, 0], sizes = [32, 128], strides = [1, 1]} : vector<62x128xf32> to vector<32x128xf32>
    %384 = arith.truncf %383 : vector<32x128xf32> to vector<32x128xbf16>
    %c28_215 = arith.constant 28 : index
    %c0_216 = arith.constant 0 : index
    %c0_217 = arith.constant 0 : index
    %385 = vector.load %arg4[%c28_215, %c0_216, %c0_217] : memref<31x128x128xbf16, #tpu.memory_space<vmem>>, vector<1x128x128xbf16>
    %386 = vector.shape_cast %385 : vector<1x128x128xbf16> to vector<128x128xbf16>
    %cst_218 = arith.constant dense<0.000000e+00> : vector<32x128xf32>
    %387 = tpu.matmul %384, %386, %cst_218 {dimension_numbers = #tpu.dot_dimension_numbers<[1], [0], [0], [1], [0, 0, 1, 1], [], []>} : vector<32x128xbf16>, vector<128x128xbf16>, vector<32x128xf32> -> vector<32x128xf32>
    %388 = arith.addf %382, %387 : vector<32x128xf32>
    %389 = vector.extract_strided_slice %213 {offsets = [29, 0], sizes = [32, 128], strides = [1, 1]} : vector<62x128xf32> to vector<32x128xf32>
    %390 = arith.truncf %389 : vector<32x128xf32> to vector<32x128xbf16>
    %c29_219 = arith.constant 29 : index
    %c0_220 = arith.constant 0 : index
    %c0_221 = arith.constant 0 : index
    %391 = vector.load %arg4[%c29_219, %c0_220, %c0_221] : memref<31x128x128xbf16, #tpu.memory_space<vmem>>, vector<1x128x128xbf16>
    %392 = vector.shape_cast %391 : vector<1x128x128xbf16> to vector<128x128xbf16>
    %cst_222 = arith.constant dense<0.000000e+00> : vector<32x128xf32>
    %393 = tpu.matmul %390, %392, %cst_222 {dimension_numbers = #tpu.dot_dimension_numbers<[1], [0], [0], [1], [0, 0, 1, 1], [], []>} : vector<32x128xbf16>, vector<128x128xbf16>, vector<32x128xf32> -> vector<32x128xf32>
    %394 = arith.addf %388, %393 : vector<32x128xf32>
    %395 = vector.extract_strided_slice %213 {offsets = [30, 0], sizes = [32, 128], strides = [1, 1]} : vector<62x128xf32> to vector<32x128xf32>
    %396 = arith.truncf %395 : vector<32x128xf32> to vector<32x128xbf16>
    %c30_223 = arith.constant 30 : index
    %c0_224 = arith.constant 0 : index
    %c0_225 = arith.constant 0 : index
    %397 = vector.load %arg4[%c30_223, %c0_224, %c0_225] : memref<31x128x128xbf16, #tpu.memory_space<vmem>>, vector<1x128x128xbf16>
    %398 = vector.shape_cast %397 : vector<1x128x128xbf16> to vector<128x128xbf16>
    %cst_226 = arith.constant dense<0.000000e+00> : vector<32x128xf32>
    %399 = tpu.matmul %396, %398, %cst_226 {dimension_numbers = #tpu.dot_dimension_numbers<[1], [0], [0], [1], [0, 0, 1, 1], [], []>} : vector<32x128xbf16>, vector<128x128xbf16>, vector<32x128xf32> -> vector<32x128xf32>
    %400 = arith.addf %394, %399 : vector<32x128xf32>
    %c0_227 = arith.constant 0 : index
    %c0_228 = arith.constant 0 : index
    %401 = vector.load %arg5[%c0_227, %c0_228] : memref<1x128xf32, #tpu.memory_space<vmem>>, vector<1x128xf32>
    %402 = vector.broadcast %401 : vector<1x128xf32> to vector<32x128xf32>
    %403 = arith.addf %400, %402 : vector<32x128xf32>
    %cst_229 = arith.constant 0.000000e+00 : f32
    %404 = vector.broadcast %cst_229 : f32 to vector<32x128xf32>
    %405 = arith.maximumf %403, %404 : vector<32x128xf32>
    %406 = math.absf %403 : vector<32x128xf32>
    %cst_230 = arith.constant 0.000000e+00 : f32
    %407 = vector.broadcast %cst_230 : f32 to vector<32x128xf32>
    %408 = arith.subf %407, %406 : vector<32x128xf32>
    %409 = math.exp %408 : vector<32x128xf32>
    %cst_231 = arith.constant 1.000000e+00 : f32
    %410 = vector.broadcast %cst_231 : f32 to vector<32x128xf32>
    %411 = arith.addf %410, %409 : vector<32x128xf32>
    %412 = math.log %411 : vector<32x128xf32>
    %413 = arith.addf %405, %412 : vector<32x128xf32>
    %414 = math.tanh %413 : vector<32x128xf32>
    %415 = arith.mulf %403, %414 : vector<32x128xf32>
    %c0_232 = arith.constant 0 : index
    %c0_233 = arith.constant 0 : index
    %c0_234 = arith.constant 0 : index
    %416 = vector.load %arg6[%c0_232, %c0_233, %c0_234] : memref<1x32x128xf32, #tpu.memory_space<vmem>>, vector<1x32x128xf32>
    %417 = vector.shape_cast %416 : vector<1x32x128xf32> to vector<32x128xf32>
    %418 = vector.shape_cast %415 : vector<32x128xf32> to vector<1x32x128xf32>
    tpu.vector_store %arg6[%c0_232, %c0_233, %c0_234], %418 {strides = array<i32>} : memref<1x32x128xf32, #tpu.memory_space<vmem>>, vector<1x32x128xf32>,
    return
  }
  func.func @transform_0(%arg0: i32) -> (i32, i32, i32) {
    %c0_i32 = arith.constant 0 : i32
    %c0_i32_0 = arith.constant 0 : i32
    %c0_i32_1 = arith.constant 0 : i32
    return %arg0, %c0_i32, %c0_i32_0 : i32, i32, i32
  }
  func.func @transform_1(%arg0: i32) -> (i32, i32, i32) {
    %c0_i32 = arith.constant 0 : i32
    %c0_i32_0 = arith.constant 0 : i32
    %c0_i32_1 = arith.constant 0 : i32
    %c0_i32_2 = arith.constant 0 : i32
    return %c0_i32, %c0_i32_0, %c0_i32_1 : i32, i32, i32
  }
  func.func @transform_2(%arg0: i32) -> (i32, i32) {
    %c0_i32 = arith.constant 0 : i32
    %c0_i32_0 = arith.constant 0 : i32
    %c0_i32_1 = arith.constant 0 : i32
    return %c0_i32, %c0_i32_0 : i32, i32
  }
  func.func @transform_3(%arg0: i32) -> (i32, i32, i32) {
    %c0_i32 = arith.constant 0 : i32
    %c0_i32_0 = arith.constant 0 : i32
    %c0_i32_1 = arith.constant 0 : i32
    %c0_i32_2 = arith.constant 0 : i32
    return %c0_i32, %c0_i32_0, %c0_i32_1 : i32, i32, i32
  }
  func.func @transform_4(%arg0: i32) -> (i32, i32) {
    %c0_i32 = arith.constant 0 : i32
    %c0_i32_0 = arith.constant 0 : i32
    %c0_i32_1 = arith.constant 0 : i32
    return %c0_i32, %c0_i32_0 : i32, i32
  }
  func.func @transform_5(%arg0: i32) -> (i32, i32, i32) {
    %c0_i32 = arith.constant 0 : i32
    %c0_i32_0 = arith.constant 0 : i32
    %c0_i32_1 = arith.constant 0 : i32
    return %arg0, %c0_i32, %c0_i32_0 : i32, i32, i32
  }
}

</mosaic_0001>

<llo_original>
// kernel: tpu_custom_call.1
$region0: #{tpu_custom_call.1}
  #allocation0 [shape = 'u32[]', space=smem, size = 0x4, offset = 0x4, fixed_abs, tag = 'smem constant byte address 0x4 - core index']
  #allocation1 [shape = 'u32[144,128]{1,0:T(1,128)}', space=vmem, size = 0x12000, scoped, tag = 'internal scratch']
  %s0 = inlined_call_operand.hbm [shape: f32[2,32,128], index: 0, kind: input, shape index: {}]
  %s1 = inlined_call_operand.hbm [shape: bf16[31,128,128], index: 1, kind: input, shape index: {}]
  %s2 = inlined_call_operand.hbm [shape: f32[1,128], index: 2, kind: input, shape index: {}]
  %s3 = inlined_call_operand.hbm [shape: bf16[31,128,128], index: 3, kind: input, shape index: {}]
  %s4 = inlined_call_operand.hbm [shape: f32[1,128], index: 4, kind: input, shape index: {}]
  %s5 = inlined_call_operand.hbm [shape: f32[2,32,128], index: 5, kind: output, shape index: {}]
  %s6 = sld [smem:[#allocation0]]
  $region73: #{tpu_custom_call.1} parent=0
    _
  %s8 = ssub.s32 1, %s6
  %s9 = scalar_select 0, %s8, %s6
  $region1: #{tpu_custom_call.1} parent=0
    #allocation2 [shape = 'u8[32768]{0}', space=vmem, size = 0x8000, scoped, tag = 'input window, operand 0']
    #allocation3 [shape = 's32[2]{0}', space=sflag, size = 0x8, scoped, tag = 'scoped memory for tpu_custom_call.1']
    #allocation4 [shape = 's32[2]{0}', space=sflag, size = 0x8, scoped, tag = 'scoped memory for tpu_custom_call.1']
    #allocation5 [shape = 'u8[1015808]{0}', space=vmem, size = 0xf8000, scoped, tag = 'input window, operand 1, single buffered']
    #allocation6 [shape = 's32[1]{0}', space=sflag, size = 0x4, scoped, tag = 'scoped memory for tpu_custom_call.1']
    #allocation7 [shape = 'u8[512]{0}', space=vmem, size = 0x400, scoped, tag = 'input window, operand 2, single buffered']
    #allocation8 [shape = 'u8[1015808]{0}', space=vmem, size = 0xf8000, scoped, tag = 'input window, operand 3, single buffered']
    #allocation9 [shape = 's32[1]{0}', space=sflag, size = 0x4, scoped, tag = 'scoped memory for tpu_custom_call.1']
    #allocation10 [shape = 'u8[512]{0}', space=vmem, size = 0x400, scoped, tag = 'input window, operand 4, single buffered']
    #allocation11 [shape = 'u8[32768]{0}', space=vmem, size = 0x8000, scoped, tag = 'output window, operand 0']
    %10 = vsyncpa [#allocation3], 0
    %s11 = scalar_lea.sflag [#allocation3], 1
    %12 = vsyncpa %s11, 0
    %13 = vsyncpa [#allocation6], 0
    %14 = vsyncpa [#allocation9], 0
    %15 = vsyncpa [#allocation4], 0
    %s16 = scalar_lea.sflag [#allocation4], 1
    %17 = vsyncpa %s16, 0
    loop: start=0, step=1, limit=4
    $region2: #{tpu_custom_call.1} parent=1 // loop_pre_header
      _
    $region3: #{tpu_custom_call.1} parent=1 // loop_header
      %s19 = sphi 0, %s23
      %p20 = scmp.ge.s32.totalorder %s19, 4
      %s29 = sphi 0, %s31
      %s32 = sphi 0, %s29
      %s33 = sphi 0, %s32
      %s49 = sphi 0, %s33
      %s53 = sphi 0, %s53
      %s55 = sphi 0, %s53
      %s56 = sphi 0, %s55
      %s70 = sphi 0, %s56
      %s74 = sphi 0, %s74
      %s76 = sphi 0, %s74
      %s77 = sphi 0, %s76
      %s91 = sphi 0, %s77
      %s95 = sphi 0, %s95
      %s97 = sphi 0, %s95
      %s98 = sphi 0, %s97
      %s112 = sphi 0, %s98
      %s116 = sphi 0, %s116
      %s118 = sphi 0, %s116
      %s119 = sphi 0, %s118
      %s133 = sphi 0, %s119
      %s139 = sphi 0, %s141
      %s142 = sphi 0, %s139
      %s143 = sphi 0, %s142
      %s159 = sphi 0, %s143
    $region4: #{tpu_custom_call.1} parent=1 // loop_header_branch
      %22 = sbr.rel (%p20) target = $region8
    $region5: #{tpu_custom_call.1} parent=1 // loop_body
      %s24 = ssub.s32 %s19, 1
      %s25 = ssub.s32 %s19, 2
      %s26 = sadd.s32 %s19, 1
      %s27 = ssub.s32 %s19, %s26
      %p28 = scmp.eq.s32.totalorder %s27, 0
      %s30 = sadd.s32 %s29, 1
      %s31 = scalar_select %p28, %s29, %s30
      %p34 = pneg %p28
      %p35 = scmp.eq.s32.totalorder %s19, 1
      %p36 = por %p34, %p35
      %p37 = scmp.ne.s32.totalorder %s29, %s32
      %p38 = scmp.eq.s32.totalorder %s19, 0
      %p39 = por %p37, %p38
      %p40 = scmp.ne.s32.totalorder %s29, %s32
      %p41 = scmp.eq.s32.totalorder %s24, 1
      %p42 = por %p40, %p41
      %p43 = scmp.ne.s32.totalorder %s32, %s33
      %p44 = scmp.eq.s32.totalorder %s24, 0
      %p45 = por %p43, %p44
      %p46 = scmp.ne.s32.totalorder %s32, %s33
      %p47 = scmp.eq.s32.totalorder %s25, 1
      %p48 = por %p46, %p47
      %p50 = scmp.ne.s32.totalorder %s33, %s49
      %p51 = scmp.eq.s32.totalorder %s25, 0
      %p52 = por %p50, %p51
      %s54 = sadd.s32 %s53, 1
      %p57 = scmp.eq.s32.totalorder %s19, 1
      %p58 = scmp.ne.s32.totalorder %s53, %s55
      %p59 = scmp.eq.s32.totalorder %s19, 0
      %p60 = por %p58, %p59
      %p61 = scmp.ne.s32.totalorder %s53, %s55
      %p62 = scmp.eq.s32.totalorder %s24, 1
      %p63 = por %p61, %p62
      %p64 = scmp.ne.s32.totalorder %s55, %s56
      %p65 = scmp.eq.s32.totalorder %s24, 0
      %p66 = por %p64, %p65
      %p67 = scmp.ne.s32.totalorder %s55, %s56
      %p68 = scmp.eq.s32.totalorder %s25, 1
      %p69 = por %p67, %p68
      %p71 = scmp.ne.s32.totalorder %s56, %s70
      %p72 = scmp.eq.s32.totalorder %s25, 0
      %p73 = por %p71, %p72
      %s75 = sadd.s32 %s74, 1
      %p78 = scmp.eq.s32.totalorder %s19, 1
      %p79 = scmp.ne.s32.totalorder %s74, %s76
      %p80 = scmp.eq.s32.totalorder %s19, 0
      %p81 = por %p79, %p80
      %p82 = scmp.ne.s32.totalorder %s74, %s76
      %p83 = scmp.eq.s32.totalorder %s24, 1
      %p84 = por %p82, %p83
      %p85 = scmp.ne.s32.totalorder %s76, %s77
      %p86 = scmp.eq.s32.totalorder %s24, 0
      %p87 = por %p85, %p86
      %p88 = scmp.ne.s32.totalorder %s76, %s77
      %p89 = scmp.eq.s32.totalorder %s25, 1
      %p90 = por %p88, %p89
      %p92 = scmp.ne.s32.totalorder %s77, %s91
      %p93 = scmp.eq.s32.totalorder %s25, 0
      %p94 = por %p92, %p93
      %s96 = sadd.s32 %s95, 1
      %p99 = scmp.eq.s32.totalorder %s19, 1
      %p100 = scmp.ne.s32.totalorder %s95, %s97
      %p101 = scmp.eq.s32.totalorder %s19, 0
      %p102 = por %p100, %p101
      %p103 = scmp.ne.s32.totalorder %s95, %s97
      %p104 = scmp.eq.s32.totalorder %s24, 1
      %p105 = por %p103, %p104
      %p106 = scmp.ne.s32.totalorder %s97, %s98
      %p107 = scmp.eq.s32.totalorder %s24, 0
      %p108 = por %p106, %p107
      %p109 = scmp.ne.s32.totalorder %s97, %s98
      %p110 = scmp.eq.s32.totalorder %s25, 1
      %p111 = por %p109, %p110
      %p113 = scmp.ne.s32.totalorder %s98, %s112
      %p114 = scmp.eq.s32.totalorder %s25, 0
      %p115 = por %p113, %p114
      %s117 = sadd.s32 %s116, 1
      %p120 = scmp.eq.s32.totalorder %s19, 1
      %p121 = scmp.ne.s32.totalorder %s116, %s118
      %p122 = scmp.eq.s32.totalorder %s19, 0
      %p123 = por %p121, %p122
      %p124 = scmp.ne.s32.totalorder %s116, %s118
      %p125 = scmp.eq.s32.totalorder %s24, 1
      %p126 = por %p124, %p125
      %p127 = scmp.ne.s32.totalorder %s118, %s119
      %p128 = scmp.eq.s32.totalorder %s24, 0
      %p129 = por %p127, %p128
      %p130 = scmp.ne.s32.totalorder %s118, %s119
      %p131 = scmp.eq.s32.totalorder %s25, 1
      %p132 = por %p130, %p131
      %p134 = scmp.ne.s32.totalorder %s119, %s133
      %p135 = scmp.eq.s32.totalorder %s25, 0
      %p136 = por %p134, %p135
      %s137 = ssub.s32 %s19, %s26
      %p138 = scmp.eq.s32.totalorder %s137, 0
      %s140 = sadd.s32 %s139, 1
      %s141 = scalar_select %p138, %s139, %s140
      %p144 = pneg %p138
      %p145 = scmp.eq.s32.totalorder %s19, 1
      %p146 = por %p144, %p145
      %p147 = scmp.ne.s32.totalorder %s139, %s142
      %p148 = scmp.eq.s32.totalorder %s19, 0
      %p149 = por %p147, %p148
      %p150 = scmp.ne.s32.totalorder %s139, %s142
      %p151 = scmp.eq.s32.totalorder %s24, 1
      %p152 = por %p150, %p151
      %p153 = scmp.ne.s32.totalorder %s142, %s143
      %p154 = scmp.eq.s32.totalorder %s24, 0
      %p155 = por %p153, %p154
      %p156 = scmp.ne.s32.totalorder %s142, %s143
      %p157 = scmp.eq.s32.totalorder %s25, 1
      %p158 = por %p156, %p157
      %p160 = scmp.ne.s32.totalorder %s143, %s159
      %p161 = scmp.eq.s32.totalorder %s25, 0
      %p162 = por %p160, %p161
      %p163 = scmp.le.s32.totalorder 1, %s19
      %p164 = scmp.lt.s32.totalorder %s19, 3
      %p165 = pnand %p163, %p164
      %p166 = pneg %p165
      // Predicated region
      $region9: #{tpu_custom_call.1} parent=5 // pred_check
        _
      $region10: #{tpu_custom_call.1} parent=5 // pred_check_branch
        %168 = sbr.rel (%p165) target = $region12
      $region11: #{tpu_custom_call.1} parent=5 // pred_region
        %s169 = ssub.s32 %s19, 1
        // Predicated region
        $region13: #{tpu_custom_call.1} parent=11 // pred_check
          %p170 = pneg %p66
        $region14: #{tpu_custom_call.1} parent=11 // pred_check_branch
          %172 = sbr.rel (%p170) target = $region16
        $region15: #{tpu_custom_call.1} parent=11 // pred_region
          %s174 = ssub.s32 31744, 31744
          %175 = vsyncadd [#allocation6], %s174
          %s176 = sshll.u32 [#allocation5], 4
          %s177 = int_to_ptr.vmem [resolvable:$true] %s176
          %182 = dma.hbm_to_vmem [thread:$0]  %s1, 31744, %s177, [#allocation6], 64, 64, 4
        $region16: #{tpu_custom_call.1} parent=11 // pred_fallthru
          _
        // Predicated region
        $region17: #{tpu_custom_call.1} parent=11 // pred_check
          %p183 = pneg %p87
        $region18: #{tpu_custom_call.1} parent=11 // pred_check_branch
          %185 = sbr.rel (%p183) target = $region20
        $region19: #{tpu_custom_call.1} parent=11 // pred_region
          %s187 = ssub.s32 16, 16
          %188 = vsyncadd [#allocation6], %s187
          %s190 = sshll.u32 [#allocation7], 4
          %s191 = int_to_ptr.vmem [resolvable:$true] %s190
          %193 = dma.hbm_to_vmem [thread:$0]  %s2, 16, %s191, [#allocation6]
        $region20: #{tpu_custom_call.1} parent=11 // pred_fallthru
          _
        // Predicated region
        $region21: #{tpu_custom_call.1} parent=11 // pred_check
          %p194 = pneg %p108
        $region22: #{tpu_custom_call.1} parent=11 // pred_check_branch
          %196 = sbr.rel (%p194) target = $region24
        $region23: #{tpu_custom_call.1} parent=11 // pred_region
          %s198 = ssub.s32 31744, 31744
          %199 = vsyncadd [#allocation9], %s198
          %s200 = sshll.u32 [#allocation8], 4
          %s201 = int_to_ptr.vmem [resolvable:$true] %s200
          %206 = dma.hbm_to_vmem [thread:$0]  %s3, 31744, %s201, [#allocation9], 64, 64, 4
        $region24: #{tpu_custom_call.1} parent=11 // pred_fallthru
          _
        // Predicated region
        $region25: #{tpu_custom_call.1} parent=11 // pred_check
          %p207 = pneg %p129
        $region26: #{tpu_custom_call.1} parent=11 // pred_check_branch
          %209 = sbr.rel (%p207) target = $region28
        $region27: #{tpu_custom_call.1} parent=11 // pred_region
          %s211 = ssub.s32 16, 16
          %212 = vsyncadd [#allocation9], %s211
          %s214 = sshll.u32 [#allocation10], 4
          %s215 = int_to_ptr.vmem [resolvable:$true] %s214
          %217 = dma.hbm_to_vmem [thread:$0]  %s4, 16, %s215, [#allocation9]
        $region28: #{tpu_custom_call.1} parent=11 // pred_fallthru
          _
      $region12: #{tpu_custom_call.1} parent=5 // pred_fallthru
        _
      %p218 = scmp.lt.s32.totalorder %s19, 2
      // Predicated region
      $region29: #{tpu_custom_call.1} parent=5 // pred_check
        %p219 = pneg %p218
      $region30: #{tpu_custom_call.1} parent=5 // pred_check_branch
        %221 = sbr.rel (%p219) target = $region32
      $region31: #{tpu_custom_call.1} parent=5 // pred_region
        // Predicated region
        $region33: #{tpu_custom_call.1} parent=31 // pred_check
          %p222 = pneg %p39
        $region34: #{tpu_custom_call.1} parent=31 // pred_check_branch
          %224 = sbr.rel (%p222) target = $region36
        $region35: #{tpu_custom_call.1} parent=31 // pred_region
          %s225 = sand.u32 %s29, 1
          %s226 = scalar_lea.sflag [#allocation3], %s225
          %s227 = sand.u32 %s29, 1
          %s228 = smul.addr %s227, 32
          %s229 = scalar_lea.vmem [#allocation2], %s228
          %s231 = ssub.s32 512, 512
          %232 = vsyncadd %s226, %s231
          %s233 = smul.addr %s19, 4
          %s234 = smul.addr %s233, 128
          %s235 = scalar_lea.hbm %s0, %s234
          %s236 = sshll.u32 %s229, 4
          %s237 = int_to_ptr.vmem [resolvable:$true] %s236
          %242 = dma.hbm_to_vmem [thread:$0]  %s235, 512, %s237, %s226, 128, 128, 8
        $region36: #{tpu_custom_call.1} parent=31 // pred_fallthru
          _
      $region32: #{tpu_custom_call.1} parent=5 // pred_fallthru
        _
      %p243 = scmp.le.s32.totalorder 1, %s19
      %p244 = scmp.lt.s32.totalorder %s19, 3
      %p245 = pnand %p243, %p244
      %p246 = pneg %p245
      // Predicated region
      $region37: #{tpu_custom_call.1} parent=5 // pred_check
        _
      $region38: #{tpu_custom_call.1} parent=5 // pred_check_branch
        %248 = sbr.rel (%p245) target = $region40
      $region39: #{tpu_custom_call.1} parent=5 // pred_region
        %s249 = ssub.s32 %s19, 1
        %s250 = sand.u32 %s32, 1
        %s251 = scalar_lea.sflag [#allocation3], %s250
        %s252 = sand.u32 %s32, 1
        %s253 = smul.addr %s252, 32
        %s254 = scalar_lea.vmem [#allocation2], %s253
        // Predicated region
        $region41: #{tpu_custom_call.1} parent=39 // pred_check
          %p255 = pneg %p45
        $region42: #{tpu_custom_call.1} parent=39 // pred_check_branch
          %257 = sbr.rel (%p255) target = $region44
        $region43: #{tpu_custom_call.1} parent=39 // pred_region
          %258 = dma.done %s251, 512
        $region44: #{tpu_custom_call.1} parent=39 // pred_fallthru
          _
        // Predicated region
        $region45: #{tpu_custom_call.1} parent=39 // pred_check
          %p259 = pneg %p66
        $region46: #{tpu_custom_call.1} parent=39 // pred_check_branch
          %261 = sbr.rel (%p259) target = $region48
        $region47: #{tpu_custom_call.1} parent=39 // pred_region
          %262 = dma.done [#allocation6], 31744
        $region48: #{tpu_custom_call.1} parent=39 // pred_fallthru
          _
        // Predicated region
        $region49: #{tpu_custom_call.1} parent=39 // pred_check
          %p263 = pneg %p87
        $region50: #{tpu_custom_call.1} parent=39 // pred_check_branch
          %265 = sbr.rel (%p263) target = $region52
        $region51: #{tpu_custom_call.1} parent=39 // pred_region
          %266 = dma.done [#allocation6], 16
        $region52: #{tpu_custom_call.1} parent=39 // pred_fallthru
          _
        // Predicated region
        $region53: #{tpu_custom_call.1} parent=39 // pred_check
          %p267 = pneg %p108
        $region54: #{tpu_custom_call.1} parent=39 // pred_check_branch
          %269 = sbr.rel (%p267) target = $region56
        $region55: #{tpu_custom_call.1} parent=39 // pred_region
          %270 = dma.done [#allocation9], 31744
        $region56: #{tpu_custom_call.1} parent=39 // pred_fallthru
          _
        // Predicated region
        $region57: #{tpu_custom_call.1} parent=39 // pred_check
          %p271 = pneg %p129
        $region58: #{tpu_custom_call.1} parent=39 // pred_check_branch
          %273 = sbr.rel (%p271) target = $region60
        $region59: #{tpu_custom_call.1} parent=39 // pred_region
          %274 = dma.done [#allocation9], 16
        $region60: #{tpu_custom_call.1} parent=39 // pred_fallthru
          _
        %s275 = sand.u32 %s32, 1
        %s276 = scalar_lea.sflag [#allocation3], %s275
        %s277 = sand.u32 %s32, 1
        %s278 = smul.addr %s277, 32
        %s279 = scalar_lea.vmem [#allocation2], %s278
        %p280 = pneg %p45
        %p281 = pneg %p42
        %p282 = pneg %p66
        %p283 = pneg %p63
        %p284 = pneg %p87
        %p285 = pneg %p84
        %p286 = pneg %p108
        %p287 = pneg %p105
        %p288 = pneg %p129
        %p289 = pneg %p126
        %p290 = pneg %p155
        %p291 = pneg %p152
        %s292 = sand.u32 %s142, 1
        %s293 = scalar_lea.sflag [#allocation4], %s292
        %s294 = sand.u32 %s142, 1
        %s295 = smul.addr %s294, 32
        %s296 = scalar_lea.vmem [#allocation11], %s295
        %v298 = vld [vmem:[%s254] sm:$0xff]
        %v299 = vld [vmem:[%s254 + $0x8] sm:$0xff]
        %v300 = vld [vmem:[%s254 + $0x10] sm:$0xff]
        %v301 = vld [vmem:[%s254 + $0x18] sm:$0xff]
        %vm306 = vcmask 1046528
        %v307 = vrot.slane %v298, 1
        %v308 = vrot.slane %v299, 1
        %v309 = vsel %vm306, %v307, %v308
        %v310 = vrot.slane %v300, 1
        %v311 = vsel %vm306, %v308, %v310
        %v312 = vrot.slane %v301, 1
        %v313 = vsel %vm306, %v310, %v312
        %v319 = vsel %vm306, 0.0, %v307
        %v320 = vsel %vm306, %v312, 0.0
        %v321 = vpack.c.bf16 %v319, 0.0
        %v322 = vpack.c.bf16 %v311, %v309
        %v323 = vld [vmem:[#allocation5] sm:$0xf]
        %v324 = vld [vmem:[#allocation5 + $0x4] sm:$0xf]
        %v325 = vld [vmem:[#allocation5 + $0x8] sm:$0xf]
        %v326 = vld [vmem:[#allocation5 + $0xc] sm:$0xf]
        %v327 = vld [vmem:[#allocation5 + $0x10] sm:$0xf]
        %v328 = vld [vmem:[#allocation5 + $0x14] sm:$0xf]
        %v329 = vld [vmem:[#allocation5 + $0x18] sm:$0xf]
        %v330 = vld [vmem:[#allocation5 + $0x1c] sm:$0xf]
        %v331 = vld [vmem:[#allocation5 + $0x20] sm:$0xf]
        %v332 = vld [vmem:[#allocation5 + $0x24] sm:$0xf]
        %v333 = vld [vmem:[#allocation5 + $0x28] sm:$0xf]
        %v334 = vld [vmem:[#allocation5 + $0x2c] sm:$0xf]
        %v335 = vld [vmem:[#allocation5 + $0x30] sm:$0xf]
        %v336 = vld [vmem:[#allocation5 + $0x34] sm:$0xf]
        %v337 = vld [vmem:[#allocation5 + $0x38] sm:$0xf]
        %v338 = vld [vmem:[#allocation5 + $0x3c] sm:$0xf]
        %v339 = vpack.c.bf16 %v313, %v313
        %s340 = scalar_lea.vmem [#allocation5], 64
        %v341 = vld [vmem:[%s340] sm:$0xf]
        %v342 = vld [vmem:[%s340 + $0x4] sm:$0xf]
        %v343 = vld [vmem:[%s340 + $0x8] sm:$0xf]
        %v344 = vld [vmem:[%s340 + $0xc] sm:$0xf]
        %v345 = vld [vmem:[%s340 + $0x10] sm:$0xf]
        %v346 = vld [vmem:[%s340 + $0x14] sm:$0xf]
        %v347 = vld [vmem:[%s340 + $0x18] sm:$0xf]
        %v348 = vld [vmem:[%s340 + $0x1c] sm:$0xf]
        %v349 = vld [vmem:[%s340 + $0x20] sm:$0xf]
        %v350 = vld [vmem:[%s340 + $0x24] sm:$0xf]
        %v351 = vld [vmem:[%s340 + $0x28] sm:$0xf]
        %v352 = vld [vmem:[%s340 + $0x2c] sm:$0xf]
        %v353 = vld [vmem:[%s340 + $0x30] sm:$0xf]
        %v354 = vld [vmem:[%s340 + $0x34] sm:$0xf]
        %v355 = vld [vmem:[%s340 + $0x38] sm:$0xf]
        %v356 = vld [vmem:[%s340 + $0x3c] sm:$0xf]
        %vm357 = vsmask.f32 7424
        %v359 = vshrl.u32 %v321, 16
        %v361 = vshll.u32 %v321, 16
        %v363 = vrot.slane %v361, 1
        %v364 = vor.u32 %v359, %v363
        %v366 = vshll.u32 %v322, 16
        %v368 = vrot.slane %v366, 1
        %v369 = vsel %vm357, %v364, %v368
        %v370 = vshrl.u32 %v322, 16
        %v372 = vor.u32 %v370, %v368
        %v374 = vshll.u32 %v339, 16
        %v376 = vrot.slane %v374, 1
        %v377 = vsel %vm357, %v372, %v376
        %v396 = vunpack.c.l.b16 %v341
        %v397 = vunpack.c.l.b16 %v342
        %v398 = vunpack.c.l.b16 %v343
        %v399 = vunpack.c.l.b16 %v344
        %v400 = vunpack.c.l.b16 %v345
        %v401 = vunpack.c.l.b16 %v346
        %v402 = vunpack.c.l.b16 %v347
        %v403 = vunpack.c.l.b16 %v348
        %v404 = vunpack.c.l.b16 %v349
        %v405 = vunpack.c.l.b16 %v350
        %v406 = vunpack.c.l.b16 %v351
        %v407 = vunpack.c.l.b16 %v352
        %v408 = vunpack.c.l.b16 %v353
        %v409 = vunpack.c.l.b16 %v354
        %v410 = vunpack.c.l.b16 %v355
        %v411 = vunpack.c.l.b16 %v356
        %v412 = vpack.c.b16 %v397, %v396
        %v413 = vpack.c.b16 %v399, %v398
        %v414 = vpack.c.b16 %v401, %v400
        %v415 = vpack.c.b16 %v403, %v402
        %v416 = vpack.c.b16 %v405, %v404
        %v417 = vpack.c.b16 %v407, %v406
        %v418 = vpack.c.b16 %v409, %v408
        %v419 = vpack.c.b16 %v411, %v410
        %428 = vmatprep.subr.bf16.mxu0 0
        %429 = vmatpush1.bf16.msra.mxu0 %v412
        %430 = vmatprep.subr.bf16.mxu0 0
        %431 = vmatpush1.bf16.msra.mxu0 %v413
        %432 = vmatprep.subr.bf16.mxu0 0
        %433 = vmatpush1.bf16.msra.mxu0 %v414
        %434 = vmatprep.subr.bf16.mxu0 0
        %435 = vmatpush1.bf16.msra.mxu0 %v415
        %436 = vmatprep.subr.bf16.mxu0 0
        %437 = vmatpush1.bf16.msra.mxu0 %v416
        %438 = vmatprep.subr.bf16.mxu0 0
        %439 = vmatpush1.bf16.msra.mxu0 %v417
        %440 = vmatprep.subr.bf16.mxu0 0
        %441 = vmatpush1.bf16.msra.mxu0 %v418
        %442 = vmatprep.subr.bf16.mxu0 0
        %443 = vmatpush1.bf16.msra.mxu0 %v419
        %444 = vmatprep.subr.bf16.mxu0 0
        %445 = vmatpush1.bf16.msra.mxu0 0
        %446 = vmatprep.subr.bf16.mxu0 0
        %447 = vmatpush1.bf16.msra.mxu0 0
        %448 = vmatprep.subr.bf16.mxu0 0
        %449 = vmatpush1.bf16.msra.mxu0 0
        %450 = vmatprep.subr.bf16.mxu0 0
        %451 = vmatpush1.bf16.msra.mxu0 0
        %452 = vmatprep.subr.bf16.mxu0 0
        %453 = vmatpush1.bf16.msra.mxu0 0
        %454 = vmatprep.subr.bf16.mxu0 0
        %455 = vmatpush1.bf16.msra.mxu0 0
        %456 = vmatprep.subr.bf16.mxu0 0
        %457 = vmatpush1.bf16.msra.mxu0 0
        %458 = vmatprep.subr.bf16.mxu0 0
        %459 = vmatpush1.bf16.msra.mxu0 0
        %460 = vmatprep.mubr.bf16.mxu0 0
        %461 = vmatmul.mubr.bf16.gmra.mrb[0].mxu0 %v369
        %v462 = vpop.f32.mrb[0].mxu0
        %v463 = vadd.f32 0.0, %v462
        %v464 = vpop.f32.mrb[0].mxu0
        %v465 = vpop.f32.mrb[0].mxu0
        %v466 = vadd.f32 0.0, %v465
        %v467 = vpop.f32.mrb[0].mxu0
        %468 = vmatprep.mubr.bf16.mxu0 0
        %469 = vmatmul.mubr.bf16.gmra.mrb[0].mxu0 %v377
        %v470 = vpop.f32.mrb[0].mxu0
        %v471 = vadd.f32 0.0, %v470
        %v472 = vpop.f32.mrb[0].mxu0
        %v473 = vpop.f32.mrb[0].mxu0
        %v474 = vadd.f32 0.0, %v473
        %v475 = vpop.f32.mrb[0].mxu0
        %476 = vdwg.mxu0
        %v493 = vunpack.c.l.b16 %v323
        %v494 = vunpack.c.l.b16 %v324
        %v495 = vunpack.c.l.b16 %v325
        %v496 = vunpack.c.l.b16 %v326
        %v497 = vunpack.c.l.b16 %v327
        %v498 = vunpack.c.l.b16 %v328
        %v499 = vunpack.c.l.b16 %v329
        %v500 = vunpack.c.l.b16 %v330
        %v501 = vunpack.c.l.b16 %v331
        %v502 = vunpack.c.l.b16 %v332
        %v503 = vunpack.c.l.b16 %v333
        %v504 = vunpack.c.l.b16 %v334
        %v505 = vunpack.c.l.b16 %v335
        %v506 = vunpack.c.l.b16 %v336
        %v507 = vunpack.c.l.b16 %v337
        %v508 = vunpack.c.l.b16 %v338
        %v509 = vpack.c.b16 %v494, %v493
        %v510 = vpack.c.b16 %v496, %v495
        %v511 = vpack.c.b16 %v498, %v497
        %v512 = vpack.c.b16 %v500, %v499
        %v513 = vpack.c.b16 %v502, %v501
        %v514 = vpack.c.b16 %v504, %v503
        %v515 = vpack.c.b16 %v506, %v505
        %v516 = vpack.c.b16 %v508, %v507
        %525 = vmatprep.subr.bf16.mxu0 0
        %526 = vmatpush1.bf16.msra.mxu0 %v509
        %527 = vmatprep.subr.bf16.mxu0 0
        %528 = vmatpush1.bf16.msra.mxu0 %v510
        %529 = vmatprep.subr.bf16.mxu0 0
        %530 = vmatpush1.bf16.msra.mxu0 %v511
        %531 = vmatprep.subr.bf16.mxu0 0
        %532 = vmatpush1.bf16.msra.mxu0 %v512
        %533 = vmatprep.subr.bf16.mxu0 0
        %534 = vmatpush1.bf16.msra.mxu0 %v513
        %535 = vmatprep.subr.bf16.mxu0 0
        %536 = vmatpush1.bf16.msra.mxu0 %v514
        %537 = vmatprep.subr.bf16.mxu0 0
        %538 = vmatpush1.bf16.msra.mxu0 %v515
        %539 = vmatprep.subr.bf16.mxu0 0
        %540 = vmatpush1.bf16.msra.mxu0 %v516
        %541 = vmatprep.subr.bf16.mxu0 0
        %542 = vmatpush1.bf16.msra.mxu0 0
        %543 = vmatprep.subr.bf16.mxu0 0
        %544 = vmatpush1.bf16.msra.mxu0 0
        %545 = vmatprep.subr.bf16.mxu0 0
        %546 = vmatpush1.bf16.msra.mxu0 0
        %547 = vmatprep.subr.bf16.mxu0 0
        %548 = vmatpush1.bf16.msra.mxu0 0
        %549 = vmatprep.subr.bf16.mxu0 0
        %550 = vmatpush1.bf16.msra.mxu0 0
        %551 = vmatprep.subr.bf16.mxu0 0
        %552 = vmatpush1.bf16.msra.mxu0 0
        %553 = vmatprep.subr.bf16.mxu0 0
        %554 = vmatpush1.bf16.msra.mxu0 0
        %555 = vmatprep.subr.bf16.mxu0 0
        %556 = vmatpush1.bf16.msra.mxu0 0
        %557 = vmatprep.mubr.bf16.mxu0 0
        %558 = vmatmul.mubr.bf16.gmra.mrb[0].mxu0 %v321
        %v559 = vpop.f32.mrb[0].mxu0
        %v560 = vadd.f32 %v463, %v559
        %v561 = vpop.f32.mrb[0].mxu0
        %v562 = vpop.f32.mrb[0].mxu0
        %v563 = vadd.f32 %v466, %v562
        %v564 = vpop.f32.mrb[0].mxu0
        %565 = vmatprep.mubr.bf16.mxu0 0
        %566 = vmatmul.mubr.bf16.gmra.mrb[0].mxu0 %v322
        %v567 = vpop.f32.mrb[0].mxu0
        %v568 = vadd.f32 %v471, %v567
        %v569 = vpop.f32.mrb[0].mxu0
        %v570 = vpop.f32.mrb[0].mxu0
        %v571 = vadd.f32 %v474, %v570
        %v572 = vpop.f32.mrb[0].mxu0
        %573 = vdwg.mxu0
        %s574 = scalar_lea.vmem [#allocation5], 128
        %v575 = vld [vmem:[%s574] sm:$0xf]
        %v576 = vld [vmem:[%s574 + $0x4] sm:$0xf]
        %v577 = vld [vmem:[%s574 + $0x8] sm:$0xf]
        %v578 = vld [vmem:[%s574 + $0xc] sm:$0xf]
        %v579 = vld [vmem:[%s574 + $0x10] sm:$0xf]
        %v580 = vld [vmem:[%s574 + $0x14] sm:$0xf]
        %v581 = vld [vmem:[%s574 + $0x18] sm:$0xf]
        %v582 = vld [vmem:[%s574 + $0x1c] sm:$0xf]
        %v583 = vld [vmem:[%s574 + $0x20] sm:$0xf]
        %v584 = vld [vmem:[%s574 + $0x24] sm:$0xf]
        %v585 = vld [vmem:[%s574 + $0x28] sm:$0xf]
        %v586 = vld [vmem:[%s574 + $0x2c] sm:$0xf]
        %v587 = vld [vmem:[%s574 + $0x30] sm:$0xf]
        %v588 = vld [vmem:[%s574 + $0x34] sm:$0xf]
        %v589 = vld [vmem:[%s574 + $0x38] sm:$0xf]
        %v590 = vld [vmem:[%s574 + $0x3c] sm:$0xf]
        %vm594 = vcmask 1046528
        %v595 = vrot.slane %v321, 1
        %v596 = vrot.slane %v322, 1
        %v597 = vsel %vm594, %v595, %v596
        %v598 = vrot.slane %v339, 1
        %v599 = vsel %vm594, %v596, %v598
        %v618 = vunpack.c.l.b16 %v575
        %v619 = vunpack.c.l.b16 %v576
        %v620 = vunpack.c.l.b16 %v577
        %v621 = vunpack.c.l.b16 %v578
        %v622 = vunpack.c.l.b16 %v579
        %v623 = vunpack.c.l.b16 %v580
        %v624 = vunpack.c.l.b16 %v581
        %v625 = vunpack.c.l.b16 %v582
        %v626 = vunpack.c.l.b16 %v583
        %v627 = vunpack.c.l.b16 %v584
        %v628 = vunpack.c.l.b16 %v585
        %v629 = vunpack.c.l.b16 %v586
        %v630 = vunpack.c.l.b16 %v587
        %v631 = vunpack.c.l.b16 %v588
        %v632 = vunpack.c.l.b16 %v589
        %v633 = vunpack.c.l.b16 %v590
        %v634 = vpack.c.b16 %v619, %v618
        %v635 = vpack.c.b16 %v621, %v620
        %v636 = vpack.c.b16 %v623, %v622
        %v637 = vpack.c.b16 %v625, %v624
        %v638 = vpack.c.b16 %v627, %v626
        %v639 = vpack.c.b16 %v629, %v628
        %v640 = vpack.c.b16 %v631, %v630
        %v641 = vpack.c.b16 %v633, %v632
        %650 = vmatprep.subr.bf16.mxu0 0
        %651 = vmatpush1.bf16.msra.mxu0 %v634
        %652 = vmatprep.subr.bf16.mxu0 0
        %653 = vmatpush1.bf16.msra.mxu0 %v635
        %654 = vmatprep.subr.bf16.mxu0 0
        %655 = vmatpush1.bf16.msra.mxu0 %v636
        %656 = vmatprep.subr.bf16.mxu0 0
        %657 = vmatpush1.bf16.msra.mxu0 %v637
        %658 = vmatprep.subr.bf16.mxu0 0
        %659 = vmatpush1.bf16.msra.mxu0 %v638
        %660 = vmatprep.subr.bf16.mxu0 0
        %661 = vmatpush1.bf16.msra.mxu0 %v639
        %662 = vmatprep.subr.bf16.mxu0 0
        %663 = vmatpush1.bf16.msra.mxu0 %v640
        %664 = vmatprep.subr.bf16.mxu0 0
        %665 = vmatpush1.bf16.msra.mxu0 %v641
        %666 = vmatprep.subr.bf16.mxu0 0
        %667 = vmatpush1.bf16.msra.mxu0 0
        %668 = vmatprep.subr.bf16.mxu0 0
        %669 = vmatpush1.bf16.msra.mxu0 0
        %670 = vmatprep.subr.bf16.mxu0 0
        %671 = vmatpush1.bf16.msra.mxu0 0
        %672 = vmatprep.subr.bf16.mxu0 0
        %673 = vmatpush1.bf16.msra.mxu0 0
        %674 = vmatprep.subr.bf16.mxu0 0
        %675 = vmatpush1.bf16.msra.mxu0 0
        %676 = vmatprep.subr.bf16.mxu0 0
        %677 = vmatpush1.bf16.msra.mxu0 0
        %678 = vmatprep.subr.bf16.mxu0 0
        %679 = vmatpush1.bf16.msra.mxu0 0
        %680 = vmatprep.subr.bf16.mxu0 0
        %681 = vmatpush1.bf16.msra.mxu0 0
        %682 = vmatprep.mubr.bf16.mxu0 0
        %683 = vmatmul.mubr.bf16.gmra.mrb[0].mxu0 %v597
        %v684 = vpop.f32.mrb[0].mxu0
        %v685 = vadd.f32 0.0, %v684
        %v686 = vpop.f32.mrb[0].mxu0
        %v687 = vpop.f32.mrb[0].mxu0
        %v688 = vadd.f32 0.0, %v687
        %v689 = vpop.f32.mrb[0].mxu0
        %690 = vmatprep.mubr.bf16.mxu0 0
        %691 = vmatmul.mubr.bf16.gmra.mrb[0].mxu0 %v599
        %v692 = vpop.f32.mrb[0].mxu0
        %v693 = vadd.f32 0.0, %v692
        %v694 = vpop.f32.mrb[0].mxu0
        %v695 = vpop.f32.mrb[0].mxu0
        %v696 = vadd.f32 0.0, %v695
        %v697 = vpop.f32.mrb[0].mxu0
        %698 = vdwg.mxu0
        %v699 = vadd.f32 %v560, %v685
        %v700 = vadd.f32 %v563, %v688
        %v701 = vadd.f32 %v568, %v693
        %v702 = vadd.f32 %v571, %v696
        %s703 = scalar_lea.vmem [#allocation5], 192
        %v704 = vld [vmem:[%s703] sm:$0xf]
        %v705 = vld [vmem:[%s703 + $0x4] sm:$0xf]
        %v706 = vld [vmem:[%s703 + $0x8] sm:$0xf]
        %v707 = vld [vmem:[%s703 + $0xc] sm:$0xf]
        %v708 = vld [vmem:[%s703 + $0x10] sm:$0xf]
        %v709 = vld [vmem:[%s703 + $0x14] sm:$0xf]
        %v710 = vld [vmem:[%s703 + $0x18] sm:$0xf]
        %v711 = vld [vmem:[%s703 + $0x1c] sm:$0xf]
        %v712 = vld [vmem:[%s703 + $0x20] sm:$0xf]
        %v713 = vld [vmem:[%s703 + $0x24] sm:$0xf]
        %v714 = vld [vmem:[%s703 + $0x28] sm:$0xf]
        %v715 = vld [vmem:[%s703 + $0x2c] sm:$0xf]
        %v716 = vld [vmem:[%s703 + $0x30] sm:$0xf]
        %v717 = vld [vmem:[%s703 + $0x34] sm:$0xf]
        %v718 = vld [vmem:[%s703 + $0x38] sm:$0xf]
        %v719 = vld [vmem:[%s703 + $0x3c] sm:$0xf]
        %vm720 = vsmask.f32 6400
        %v721 = vrot.slane %v359, 1
        %v722 = vrot.slane %v361, 2
        %v723 = vor.u32 %v721, %v722
        %v724 = vrot.slane %v370, 1
        %v725 = vrot.slane %v366, 2
        %v726 = vor.u32 %v724, %v725
        %v727 = vsel %vm720, %v723, %v726
        %v728 = vshrl.u32 %v339, 16
        %v730 = vrot.slane %v728, 1
        %v731 = vrot.slane %v374, 2
        %v732 = vor.u32 %v730, %v731
        %v733 = vsel %vm720, %v726, %v732
        %v752 = vunpack.c.l.b16 %v704
        %v753 = vunpack.c.l.b16 %v705
        %v754 = vunpack.c.l.b16 %v706
        %v755 = vunpack.c.l.b16 %v707
        %v756 = vunpack.c.l.b16 %v708
        %v757 = vunpack.c.l.b16 %v709
        %v758 = vunpack.c.l.b16 %v710
        %v759 = vunpack.c.l.b16 %v711
        %v760 = vunpack.c.l.b16 %v712
        %v761 = vunpack.c.l.b16 %v713
        %v762 = vunpack.c.l.b16 %v714
        %v763 = vunpack.c.l.b16 %v715
        %v764 = vunpack.c.l.b16 %v716
        %v765 = vunpack.c.l.b16 %v717
        %v766 = vunpack.c.l.b16 %v718
        %v767 = vunpack.c.l.b16 %v719
        %v768 = vpack.c.b16 %v753, %v752
        %v769 = vpack.c.b16 %v755, %v754
        %v770 = vpack.c.b16 %v757, %v756
        %v771 = vpack.c.b16 %v759, %v758
        %v772 = vpack.c.b16 %v761, %v760
        %v773 = vpack.c.b16 %v763, %v762
        %v774 = vpack.c.b16 %v765, %v764
        %v775 = vpack.c.b16 %v767, %v766
        %784 = vmatprep.subr.bf16.mxu0 0
        %785 = vmatpush1.bf16.msra.mxu0 %v768
        %786 = vmatprep.subr.bf16.mxu0 0
        %787 = vmatpush1.bf16.msra.mxu0 %v769
        %788 = vmatprep.subr.bf16.mxu0 0
        %789 = vmatpush1.bf16.msra.mxu0 %v770
        %790 = vmatprep.subr.bf16.mxu0 0
        %791 = vmatpush1.bf16.msra.mxu0 %v771
        %792 = vmatprep.subr.bf16.mxu0 0
        %793 = vmatpush1.bf16.msra.mxu0 %v772
        %794 = vmatprep.subr.bf16.mxu0 0
        %795 = vmatpush1.bf16.msra.mxu0 %v773
        %796 = vmatprep.subr.bf16.mxu0 0
        %797 = vmatpush1.bf16.msra.mxu0 %v774
        %798 = vmatprep.subr.bf16.mxu0 0
        %799 = vmatpush1.bf16.msra.mxu0 %v775
        %800 = vmatprep.subr.bf16.mxu0 0
        %801 = vmatpush1.bf16.msra.mxu0 0
        %802 = vmatprep.subr.bf16.mxu0 0
        %803 = vmatpush1.bf16.msra.mxu0 0
        %804 = vmatprep.subr.bf16.mxu0 0
        %805 = vmatpush1.bf16.msra.mxu0 0
        %806 = vmatprep.subr.bf16.mxu0 0
        %807 = vmatpush1.bf16.msra.mxu0 0
        %808 = vmatprep.subr.bf16.mxu0 0
        %809 = vmatpush1.bf16.msra.mxu0 0
        %810 = vmatprep.subr.bf16.mxu0 0
        %811 = vmatpush1.bf16.msra.mxu0 0
        %812 = vmatprep.subr.bf16.mxu0 0
        %813 = vmatpush1.bf16.msra.mxu0 0
        %814 = vmatprep.subr.bf16.mxu0 0
        %815 = vmatpush1.bf16.msra.mxu0 0
        %816 = vmatprep.mubr.bf16.mxu0 0
        %817 = vmatmul.mubr.bf16.gmra.mrb[0].mxu0 %v727
        %v818 = vpop.f32.mrb[0].mxu0
        %v819 = vadd.f32 0.0, %v818
        %v820 = vpop.f32.mrb[0].mxu0
        %v821 = vpop.f32.mrb[0].mxu0
        %v822 = vadd.f32 0.0, %v821
        %v823 = vpop.f32.mrb[0].mxu0
        %824 = vmatprep.mubr.bf16.mxu0 0
        %825 = vmatmul.mubr.bf16.gmra.mrb[0].mxu0 %v733
        %v826 = vpop.f32.mrb[0].mxu0
        %v827 = vadd.f32 0.0, %v826
        %v828 = vpop.f32.mrb[0].mxu0
        %v829 = vpop.f32.mrb[0].mxu0
        %v830 = vadd.f32 0.0, %v829
        %v831 = vpop.f32.mrb[0].mxu0
        %832 = vdwg.mxu0
        %v833 = vadd.f32 %v699, %v819
        %v834 = vadd.f32 %v700, %v822
        %v835 = vadd.f32 %v701, %v827
        %v836 = vadd.f32 %v702, %v830
        %s837 = scalar_lea.vmem [#allocation5], 256
        %v838 = vld [vmem:[%s837] sm:$0xf]
        %v839 = vld [vmem:[%s837 + $0x4] sm:$0xf]
        %v840 = vld [vmem:[%s837 + $0x8] sm:$0xf]
        %v841 = vld [vmem:[%s837 + $0xc] sm:$0xf]
        %v842 = vld [vmem:[%s837 + $0x10] sm:$0xf]
        %v843 = vld [vmem:[%s837 + $0x14] sm:$0xf]
        %v844 = vld [vmem:[%s837 + $0x18] sm:$0xf]
        %v845 = vld [vmem:[%s837 + $0x1c] sm:$0xf]
        %v846 = vld [vmem:[%s837 + $0x20] sm:$0xf]
        %v847 = vld [vmem:[%s837 + $0x24] sm:$0xf]
        %v848 = vld [vmem:[%s837 + $0x28] sm:$0xf]
        %v849 = vld [vmem:[%s837 + $0x2c] sm:$0xf]
        %v850 = vld [vmem:[%s837 + $0x30] sm:$0xf]
        %v851 = vld [vmem:[%s837 + $0x34] sm:$0xf]
        %v852 = vld [vmem:[%s837 + $0x38] sm:$0xf]
        %v853 = vld [vmem:[%s837 + $0x3c] sm:$0xf]
        %vm854 = vcmask 1045504
        %v855 = vrot.slane %v321, 2
        %v856 = vrot.slane %v322, 2
        %v857 = vsel %vm854, %v855, %v856
        %v858 = vrot.slane %v339, 2
        %v859 = vsel %vm854, %v856, %v858
        %v878 = vunpack.c.l.b16 %v838
        %v879 = vunpack.c.l.b16 %v839
        %v880 = vunpack.c.l.b16 %v840
        %v881 = vunpack.c.l.b16 %v841
        %v882 = vunpack.c.l.b16 %v842
        %v883 = vunpack.c.l.b16 %v843
        %v884 = vunpack.c.l.b16 %v844
        %v885 = vunpack.c.l.b16 %v845
        %v886 = vunpack.c.l.b16 %v846
        %v887 = vunpack.c.l.b16 %v847
        %v888 = vunpack.c.l.b16 %v848
        %v889 = vunpack.c.l.b16 %v849
        %v890 = vunpack.c.l.b16 %v850
        %v891 = vunpack.c.l.b16 %v851
        %v892 = vunpack.c.l.b16 %v852
        %v893 = vunpack.c.l.b16 %v853
        %v894 = vpack.c.b16 %v879, %v878
        %v895 = vpack.c.b16 %v881, %v880
        %v896 = vpack.c.b16 %v883, %v882
        %v897 = vpack.c.b16 %v885, %v884
        %v898 = vpack.c.b16 %v887, %v886
        %v899 = vpack.c.b16 %v889, %v888
        %v900 = vpack.c.b16 %v891, %v890
        %v901 = vpack.c.b16 %v893, %v892
        %910 = vmatprep.subr.bf16.mxu0 0
        %911 = vmatpush1.bf16.msra.mxu0 %v894
        %912 = vmatprep.subr.bf16.mxu0 0
        %913 = vmatpush1.bf16.msra.mxu0 %v895
        %914 = vmatprep.subr.bf16.mxu0 0
        %915 = vmatpush1.bf16.msra.mxu0 %v896
        %916 = vmatprep.subr.bf16.mxu0 0
        %917 = vmatpush1.bf16.msra.mxu0 %v897
        %918 = vmatprep.subr.bf16.mxu0 0
        %919 = vmatpush1.bf16.msra.mxu0 %v898
        %920 = vmatprep.subr.bf16.mxu0 0
        %921 = vmatpush1.bf16.msra.mxu0 %v899
        %922 = vmatprep.subr.bf16.mxu0 0
        %923 = vmatpush1.bf16.msra.mxu0 %v900
        %924 = vmatprep.subr.bf16.mxu0 0
        %925 = vmatpush1.bf16.msra.mxu0 %v901
        %926 = vmatprep.subr.bf16.mxu0 0
        %927 = vmatpush1.bf16.msra.mxu0 0
        %928 = vmatprep.subr.bf16.mxu0 0
        %929 = vmatpush1.bf16.msra.mxu0 0
        %930 = vmatprep.subr.bf16.mxu0 0
        %931 = vmatpush1.bf16.msra.mxu0 0
        %932 = vmatprep.subr.bf16.mxu0 0
        %933 = vmatpush1.bf16.msra.mxu0 0
        %934 = vmatprep.subr.bf16.mxu0 0
        %935 = vmatpush1.bf16.msra.mxu0 0
        %936 = vmatprep.subr.bf16.mxu0 0
        %937 = vmatpush1.bf16.msra.mxu0 0
        %938 = vmatprep.subr.bf16.mxu0 0
        %939 = vmatpush1.bf16.msra.mxu0 0
        %940 = vmatprep.subr.bf16.mxu0 0
        %941 = vmatpush1.bf16.msra.mxu0 0
        %942 = vmatprep.mubr.bf16.mxu0 0
        %943 = vmatmul.mubr.bf16.gmra.mrb[0].mxu0 %v857
        %v944 = vpop.f32.mrb[0].mxu0
        %v945 = vadd.f32 0.0, %v944
        %v946 = vpop.f32.mrb[0].mxu0
        %v947 = vpop.f32.mrb[0].mxu0
        %v948 = vadd.f32 0.0, %v947
        %v949 = vpop.f32.mrb[0].mxu0
        %950 = vmatprep.mubr.bf16.mxu0 0
        %951 = vmatmul.mubr.bf16.gmra.mrb[0].mxu0 %v859
        %v952 = vpop.f32.mrb[0].mxu0
        %v953 = vadd.f32 0.0, %v952
        %v954 = vpop.f32.mrb[0].mxu0
        %v955 = vpop.f32.mrb[0].mxu0
        %v956 = vadd.f32 0.0, %v955
        %v957 = vpop.f32.mrb[0].mxu0
        %958 = vdwg.mxu0
        %v959 = vadd.f32 %v833, %v945
        %v960 = vadd.f32 %v834, %v948
        %v961 = vadd.f32 %v835, %v953
        %v962 = vadd.f32 %v836, %v956
        %s963 = scalar_lea.vmem [#allocation5], 320
        %v964 = vld [vmem:[%s963] sm:$0xf]
        %v965 = vld [vmem:[%s963 + $0x4] sm:$0xf]
        %v966 = vld [vmem:[%s963 + $0x8] sm:$0xf]
        %v967 = vld [vmem:[%s963 + $0xc] sm:$0xf]
        %v968 = vld [vmem:[%s963 + $0x10] sm:$0xf]
        %v969 = vld [vmem:[%s963 + $0x14] sm:$0xf]
        %v970 = vld [vmem:[%s963 + $0x18] sm:$0xf]
        %v971 = vld [vmem:[%s963 + $0x1c] sm:$0xf]
        %v972 = vld [vmem:[%s963 + $0x20] sm:$0xf]
        %v973 = vld [vmem:[%s963 + $0x24] sm:$0xf]
        %v974 = vld [vmem:[%s963 + $0x28] sm:$0xf]
        %v975 = vld [vmem:[%s963 + $0x2c] sm:$0xf]
        %v976 = vld [vmem:[%s963 + $0x30] sm:$0xf]
        %v977 = vld [vmem:[%s963 + $0x34] sm:$0xf]
        %v978 = vld [vmem:[%s963 + $0x38] sm:$0xf]
        %v979 = vld [vmem:[%s963 + $0x3c] sm:$0xf]
        %vm980 = vsmask.f32 5376
        %v981 = vrot.slane %v359, 2
        %v982 = vrot.slane %v361, 3
        %v983 = vor.u32 %v981, %v982
        %v984 = vrot.slane %v370, 2
        %v985 = vrot.slane %v366, 3
        %v986 = vor.u32 %v984, %v985
        %v987 = vsel %vm980, %v983, %v986
        %v988 = vrot.slane %v728, 2
        %v989 = vrot.slane %v374, 3
        %v990 = vor.u32 %v988, %v989
        %v991 = vsel %vm980, %v986, %v990
        %v1010 = vunpack.c.l.b16 %v964
        %v1011 = vunpack.c.l.b16 %v965
        %v1012 = vunpack.c.l.b16 %v966
        %v1013 = vunpack.c.l.b16 %v967
        %v1014 = vunpack.c.l.b16 %v968
        %v1015 = vunpack.c.l.b16 %v969
        %v1016 = vunpack.c.l.b16 %v970
        %v1017 = vunpack.c.l.b16 %v971
        %v1018 = vunpack.c.l.b16 %v972
        %v1019 = vunpack.c.l.b16 %v973
        %v1020 = vunpack.c.l.b16 %v974
        %v1021 = vunpack.c.l.b16 %v975
        %v1022 = vunpack.c.l.b16 %v976
        %v1023 = vunpack.c.l.b16 %v977
        %v1024 = vunpack.c.l.b16 %v978
        %v1025 = vunpack.c.l.b16 %v979
        %v1026 = vpack.c.b16 %v1011, %v1010
        %v1027 = vpack.c.b16 %v1013, %v1012
        %v1028 = vpack.c.b16 %v1015, %v1014
        %v1029 = vpack.c.b16 %v1017, %v1016
        %v1030 = vpack.c.b16 %v1019, %v1018
        %v1031 = vpack.c.b16 %v1021, %v1020
        %v1032 = vpack.c.b16 %v1023, %v1022
        %v1033 = vpack.c.b16 %v1025, %v1024
        %1042 = vmatprep.subr.bf16.mxu0 0
        %1043 = vmatpush1.bf16.msra.mxu0 %v1026
        %1044 = vmatprep.subr.bf16.mxu0 0
        %1045 = vmatpush1.bf16.msra.mxu0 %v1027
        %1046 = vmatprep.subr.bf16.mxu0 0
        %1047 = vmatpush1.bf16.msra.mxu0 %v1028
        %1048 = vmatprep.subr.bf16.mxu0 0
        %1049 = vmatpush1.bf16.msra.mxu0 %v1029
        %1050 = vmatprep.subr.bf16.mxu0 0
        %1051 = vmatpush1.bf16.msra.mxu0 %v1030
        %1052 = vmatprep.subr.bf16.mxu0 0
        %1053 = vmatpush1.bf16.msra.mxu0 %v1031
        %1054 = vmatprep.subr.bf16.mxu0 0
        %1055 = vmatpush1.bf16.msra.mxu0 %v1032
        %1056 = vmatprep.subr.bf16.mxu0 0
        %1057 = vmatpush1.bf16.msra.mxu0 %v1033
        %1058 = vmatprep.subr.bf16.mxu0 0
        %1059 = vmatpush1.bf16.msra.mxu0 0
        %1060 = vmatprep.subr.bf16.mxu0 0
        %1061 = vmatpush1.bf16.msra.mxu0 0
        %1062 = vmatprep.subr.bf16.mxu0 0
        %1063 = vmatpush1.bf16.msra.mxu0 0
        %1064 = vmatprep.subr.bf16.mxu0 0
        %1065 = vmatpush1.bf16.msra.mxu0 0
        %1066 = vmatprep.subr.bf16.mxu0 0
        %1067 = vmatpush1.bf16.msra.mxu0 0
        %1068 = vmatprep.subr.bf16.mxu0 0
        %1069 = vmatpush1.bf16.msra.mxu0 0
        %1070 = vmatprep.subr.bf16.mxu0 0
        %1071 = vmatpush1.bf16.msra.mxu0 0
        %1072 = vmatprep.subr.bf16.mxu0 0
        %1073 = vmatpush1.bf16.msra.mxu0 0
        %1074 = vmatprep.mubr.bf16.mxu0 0
        %1075 = vmatmul.mubr.bf16.gmra.mrb[0].mxu0 %v987
        %v1076 = vpop.f32.mrb[0].mxu0
        %v1077 = vadd.f32 0.0, %v1076
        %v1078 = vpop.f32.mrb[0].mxu0
        %v1079 = vpop.f32.mrb[0].mxu0
        %v1080 = vadd.f32 0.0, %v1079
        %v1081 = vpop.f32.mrb[0].mxu0
        %1082 = vmatprep.mubr.bf16.mxu0 0
        %1083 = vmatmul.mubr.bf16.gmra.mrb[0].mxu0 %v991
        %v1084 = vpop.f32.mrb[0].mxu0
        %v1085 = vadd.f32 0.0, %v1084
        %v1086 = vpop.f32.mrb[0].mxu0
        %v1087 = vpop.f32.mrb[0].mxu0
        %v1088 = vadd.f32 0.0, %v1087
        %v1089 = vpop.f32.mrb[0].mxu0
        %1090 = vdwg.mxu0
        %v1091 = vadd.f32 %v959, %v1077
        %v1092 = vadd.f32 %v960, %v1080
        %v1093 = vadd.f32 %v961, %v1085
        %v1094 = vadd.f32 %v962, %v1088
        %s1095 = scalar_lea.vmem [#allocation5], 384
        %v1096 = vld [vmem:[%s1095] sm:$0xf]
        %v1097 = vld [vmem:[%s1095 + $0x4] sm:$0xf]
        %v1098 = vld [vmem:[%s1095 + $0x8] sm:$0xf]
        %v1099 = vld [vmem:[%s1095 + $0xc] sm:$0xf]
        %v1100 = vld [vmem:[%s1095 + $0x10] sm:$0xf]
        %v1101 = vld [vmem:[%s1095 + $0x14] sm:$0xf]
        %v1102 = vld [vmem:[%s1095 + $0x18] sm:$0xf]
        %v1103 = vld [vmem:[%s1095 + $0x1c] sm:$0xf]
        %v1104 = vld [vmem:[%s1095 + $0x20] sm:$0xf]
        %v1105 = vld [vmem:[%s1095 + $0x24] sm:$0xf]
        %v1106 = vld [vmem:[%s1095 + $0x28] sm:$0xf]
        %v1107 = vld [vmem:[%s1095 + $0x2c] sm:$0xf]
        %v1108 = vld [vmem:[%s1095 + $0x30] sm:$0xf]
        %v1109 = vld [vmem:[%s1095 + $0x34] sm:$0xf]
        %v1110 = vld [vmem:[%s1095 + $0x38] sm:$0xf]
        %v1111 = vld [vmem:[%s1095 + $0x3c] sm:$0xf]
        %vm1112 = vcmask 1044480
        %v1113 = vrot.slane %v321, 3
        %v1114 = vrot.slane %v322, 3
        %v1115 = vsel %vm1112, %v1113, %v1114
        %v1116 = vrot.slane %v339, 3
        %v1117 = vsel %vm1112, %v1114, %v1116
        %v1136 = vunpack.c.l.b16 %v1096
        %v1137 = vunpack.c.l.b16 %v1097
        %v1138 = vunpack.c.l.b16 %v1098
        %v1139 = vunpack.c.l.b16 %v1099
        %v1140 = vunpack.c.l.b16 %v1100
        %v1141 = vunpack.c.l.b16 %v1101
        %v1142 = vunpack.c.l.b16 %v1102
        %v1143 = vunpack.c.l.b16 %v1103
        %v1144 = vunpack.c.l.b16 %v1104
        %v1145 = vunpack.c.l.b16 %v1105
        %v1146 = vunpack.c.l.b16 %v1106
        %v1147 = vunpack.c.l.b16 %v1107
        %v1148 = vunpack.c.l.b16 %v1108
        %v1149 = vunpack.c.l.b16 %v1109
        %v1150 = vunpack.c.l.b16 %v1110
        %v1151 = vunpack.c.l.b16 %v1111
        %v1152 = vpack.c.b16 %v1137, %v1136
        %v1153 = vpack.c.b16 %v1139, %v1138
        %v1154 = vpack.c.b16 %v1141, %v1140
        %v1155 = vpack.c.b16 %v1143, %v1142
        %v1156 = vpack.c.b16 %v1145, %v1144
        %v1157 = vpack.c.b16 %v1147, %v1146
        %v1158 = vpack.c.b16 %v1149, %v1148
        %v1159 = vpack.c.b16 %v1151, %v1150
        %1168 = vmatprep.subr.bf16.mxu0 0
        %1169 = vmatpush1.bf16.msra.mxu0 %v1152
        %1170 = vmatprep.subr.bf16.mxu0 0
        %1171 = vmatpush1.bf16.msra.mxu0 %v1153
        %1172 = vmatprep.subr.bf16.mxu0 0
        %1173 = vmatpush1.bf16.msra.mxu0 %v1154
        %1174 = vmatprep.subr.bf16.mxu0 0
        %1175 = vmatpush1.bf16.msra.mxu0 %v1155
        %1176 = vmatprep.subr.bf16.mxu0 0
        %1177 = vmatpush1.bf16.msra.mxu0 %v1156
        %1178 = vmatprep.subr.bf16.mxu0 0
        %1179 = vmatpush1.bf16.msra.mxu0 %v1157
        %1180 = vmatprep.subr.bf16.mxu0 0
        %1181 = vmatpush1.bf16.msra.mxu0 %v1158
        %1182 = vmatprep.subr.bf16.mxu0 0
        %1183 = vmatpush1.bf16.msra.mxu0 %v1159
        %1184 = vmatprep.subr.bf16.mxu0 0
        %1185 = vmatpush1.bf16.msra.mxu0 0
        %1186 = vmatprep.subr.bf16.mxu0 0
        %1187 = vmatpush1.bf16.msra.mxu0 0
        %1188 = vmatprep.subr.bf16.mxu0 0
        %1189 = vmatpush1.bf16.msra.mxu0 0
        %1190 = vmatprep.subr.bf16.mxu0 0
        %1191 = vmatpush1.bf16.msra.mxu0 0
        %1192 = vmatprep.subr.bf16.mxu0 0
        %1193 = vmatpush1.bf16.msra.mxu0 0
        %1194 = vmatprep.subr.bf16.mxu0 0
        %1195 = vmatpush1.bf16.msra.mxu0 0
        %1196 = vmatprep.subr.bf16.mxu0 0
        %1197 = vmatpush1.bf16.msra.mxu0 0
        %1198 = vmatprep.subr.bf16.mxu0 0
        %1199 = vmatpush1.bf16.msra.mxu0 0
        %1200 = vmatprep.mubr.bf16.mxu0 0
        %1201 = vmatmul.mubr.bf16.gmra.mrb[0].mxu0 %v1115
        %v1202 = vpop.f32.mrb[0].mxu0
        %v1203 = vadd.f32 0.0, %v1202
        %v1204 = vpop.f32.mrb[0].mxu0
        %v1205 = vpop.f32.mrb[0].mxu0
        %v1206 = vadd.f32 0.0, %v1205
        %v1207 = vpop.f32.mrb[0].mxu0
        %1208 = vmatprep.mubr.bf16.mxu0 0
        %1209 = vmatmul.mubr.bf16.gmra.mrb[0].mxu0 %v1117
        %v1210 = vpop.f32.mrb[0].mxu0
        %v1211 = vadd.f32 0.0, %v1210
        %v1212 = vpop.f32.mrb[0].mxu0
        %v1213 = vpop.f32.mrb[0].mxu0
        %v1214 = vadd.f32 0.0, %v1213
        %v1215 = vpop.f32.mrb[0].mxu0
        %1216 = vdwg.mxu0
        %v1217 = vadd.f32 %v1091, %v1203
        %v1218 = vadd.f32 %v1092, %v1206
        %v1219 = vadd.f32 %v1093, %v1211
        %v1220 = vadd.f32 %v1094, %v1214
        %s1221 = scalar_lea.vmem [#allocation5], 448
        %v1222 = vld [vmem:[%s1221] sm:$0xf]
        %v1223 = vld [vmem:[%s1221 + $0x4] sm:$0xf]
        %v1224 = vld [vmem:[%s1221 + $0x8] sm:$0xf]
        %v1225 = vld [vmem:[%s1221 + $0xc] sm:$0xf]
        %v1226 = vld [vmem:[%s1221 + $0x10] sm:$0xf]
        %v1227 = vld [vmem:[%s1221 + $0x14] sm:$0xf]
        %v1228 = vld [vmem:[%s1221 + $0x18] sm:$0xf]
        %v1229 = vld [vmem:[%s1221 + $0x1c] sm:$0xf]
        %v1230 = vld [vmem:[%s1221 + $0x20] sm:$0xf]
        %v1231 = vld [vmem:[%s1221 + $0x24] sm:$0xf]
        %v1232 = vld [vmem:[%s1221 + $0x28] sm:$0xf]
        %v1233 = vld [vmem:[%s1221 + $0x2c] sm:$0xf]
        %v1234 = vld [vmem:[%s1221 + $0x30] sm:$0xf]
        %v1235 = vld [vmem:[%s1221 + $0x34] sm:$0xf]
        %v1236 = vld [vmem:[%s1221 + $0x38] sm:$0xf]
        %v1237 = vld [vmem:[%s1221 + $0x3c] sm:$0xf]
        %vm1238 = vsmask.f32 4352
        %v1239 = vrot.slane %v359, 3
        %v1240 = vrot.slane %v361, 4
        %v1241 = vor.u32 %v1239, %v1240
        %v1242 = vrot.slane %v370, 3
        %v1243 = vrot.slane %v366, 4
        %v1244 = vor.u32 %v1242, %v1243
        %v1245 = vsel %vm1238, %v1241, %v1244
        %v1246 = vrot.slane %v728, 3
        %v1247 = vrot.slane %v374, 4
        %v1248 = vor.u32 %v1246, %v1247
        %v1249 = vsel %vm1238, %v1244, %v1248
        %v1268 = vunpack.c.l.b16 %v1222
        %v1269 = vunpack.c.l.b16 %v1223
        %v1270 = vunpack.c.l.b16 %v1224
        %v1271 = vunpack.c.l.b16 %v1225
        %v1272 = vunpack.c.l.b16 %v1226
        %v1273 = vunpack.c.l.b16 %v1227
        %v1274 = vunpack.c.l.b16 %v1228
        %v1275 = vunpack.c.l.b16 %v1229
        %v1276 = vunpack.c.l.b16 %v1230
        %v1277 = vunpack.c.l.b16 %v1231
        %v1278 = vunpack.c.l.b16 %v1232
        %v1279 = vunpack.c.l.b16 %v1233
        %v1280 = vunpack.c.l.b16 %v1234
        %v1281 = vunpack.c.l.b16 %v1235
        %v1282 = vunpack.c.l.b16 %v1236
        %v1283 = vunpack.c.l.b16 %v1237
        %v1284 = vpack.c.b16 %v1269, %v1268
        %v1285 = vpack.c.b16 %v1271, %v1270
        %v1286 = vpack.c.b16 %v1273, %v1272
        %v1287 = vpack.c.b16 %v1275, %v1274
        %v1288 = vpack.c.b16 %v1277, %v1276
        %v1289 = vpack.c.b16 %v1279, %v1278
        %v1290 = vpack.c.b16 %v1281, %v1280
        %v1291 = vpack.c.b16 %v1283, %v1282
        %1300 = vmatprep.subr.bf16.mxu0 0
        %1301 = vmatpush1.bf16.msra.mxu0 %v1284
        %1302 = vmatprep.subr.bf16.mxu0 0
        %1303 = vmatpush1.bf16.msra.mxu0 %v1285
        %1304 = vmatprep.subr.bf16.mxu0 0
        %1305 = vmatpush1.bf16.msra.mxu0 %v1286
        %1306 = vmatprep.subr.bf16.mxu0 0
        %1307 = vmatpush1.bf16.msra.mxu0 %v1287
        %1308 = vmatprep.subr.bf16.mxu0 0
        %1309 = vmatpush1.bf16.msra.mxu0 %v1288
        %1310 = vmatprep.subr.bf16.mxu0 0
        %1311 = vmatpush1.bf16.msra.mxu0 %v1289
        %1312 = vmatprep.subr.bf16.mxu0 0
        %1313 = vmatpush1.bf16.msra.mxu0 %v1290
        %1314 = vmatprep.subr.bf16.mxu0 0
        %1315 = vmatpush1.bf16.msra.mxu0 %v1291
        %1316 = vmatprep.subr.bf16.mxu0 0
        %1317 = vmatpush1.bf16.msra.mxu0 0
        %1318 = vmatprep.subr.bf16.mxu0 0
        %1319 = vmatpush1.bf16.msra.mxu0 0
        %1320 = vmatprep.subr.bf16.mxu0 0
        %1321 = vmatpush1.bf16.msra.mxu0 0
        %1322 = vmatprep.subr.bf16.mxu0 0
        %1323 = vmatpush1.bf16.msra.mxu0 0
        %1324 = vmatprep.subr.bf16.mxu0 0
        %1325 = vmatpush1.bf16.msra.mxu0 0
        %1326 = vmatprep.subr.bf16.mxu0 0
        %1327 = vmatpush1.bf16.msra.mxu0 0
        %1328 = vmatprep.subr.bf16.mxu0 0
        %1329 = vmatpush1.bf16.msra.mxu0 0
        %1330 = vmatprep.subr.bf16.mxu0 0
        %1331 = vmatpush1.bf16.msra.mxu0 0
        %1332 = vmatprep.mubr.bf16.mxu0 0
        %1333 = vmatmul.mubr.bf16.gmra.mrb[0].mxu0 %v1245
        %v1334 = vpop.f32.mrb[0].mxu0
        %v1335 = vadd.f32 0.0, %v1334
        %v1336 = vpop.f32.mrb[0].mxu0
        %v1337 = vpop.f32.mrb[0].mxu0
        %v1338 = vadd.f32 0.0, %v1337
        %v1339 = vpop.f32.mrb[0].mxu0
        %1340 = vmatprep.mubr.bf16.mxu0 0
        %1341 = vmatmul.mubr.bf16.gmra.mrb[0].mxu0 %v1249
        %v1342 = vpop.f32.mrb[0].mxu0
        %v1343 = vadd.f32 0.0, %v1342
        %v1344 = vpop.f32.mrb[0].mxu0
        %v1345 = vpop.f32.mrb[0].mxu0
        %v1346 = vadd.f32 0.0, %v1345
        %v1347 = vpop.f32.mrb[0].mxu0
        %1348 = vdwg.mxu0
        %v1349 = vadd.f32 %v1217, %v1335
        %v1350 = vadd.f32 %v1218, %v1338
        %v1351 = vadd.f32 %v1219, %v1343
        %v1352 = vadd.f32 %v1220, %v1346
        %v1353 = vpack.c.bf16 %v309, %v319
        %v1354 = vpack.c.bf16 %v313, %v311
        %s1355 = scalar_lea.vmem [#allocation5], 512
        %v1356 = vld [vmem:[%s1355] sm:$0xf]
        %v1357 = vld [vmem:[%s1355 + $0x4] sm:$0xf]
        %v1358 = vld [vmem:[%s1355 + $0x8] sm:$0xf]
        %v1359 = vld [vmem:[%s1355 + $0xc] sm:$0xf]
        %v1360 = vld [vmem:[%s1355 + $0x10] sm:$0xf]
        %v1361 = vld [vmem:[%s1355 + $0x14] sm:$0xf]
        %v1362 = vld [vmem:[%s1355 + $0x18] sm:$0xf]
        %v1363 = vld [vmem:[%s1355 + $0x1c] sm:$0xf]
        %v1364 = vld [vmem:[%s1355 + $0x20] sm:$0xf]
        %v1365 = vld [vmem:[%s1355 + $0x24] sm:$0xf]
        %v1366 = vld [vmem:[%s1355 + $0x28] sm:$0xf]
        %v1367 = vld [vmem:[%s1355 + $0x2c] sm:$0xf]
        %v1368 = vld [vmem:[%s1355 + $0x30] sm:$0xf]
        %v1369 = vld [vmem:[%s1355 + $0x34] sm:$0xf]
        %v1370 = vld [vmem:[%s1355 + $0x38] sm:$0xf]
        %v1371 = vld [vmem:[%s1355 + $0x3c] sm:$0xf]
        %v1388 = vunpack.c.l.b16 %v1356
        %v1389 = vunpack.c.l.b16 %v1357
        %v1390 = vunpack.c.l.b16 %v1358
        %v1391 = vunpack.c.l.b16 %v1359
        %v1392 = vunpack.c.l.b16 %v1360
        %v1393 = vunpack.c.l.b16 %v1361
        %v1394 = vunpack.c.l.b16 %v1362
        %v1395 = vunpack.c.l.b16 %v1363
        %v1396 = vunpack.c.l.b16 %v1364
        %v1397 = vunpack.c.l.b16 %v1365
        %v1398 = vunpack.c.l.b16 %v1366
        %v1399 = vunpack.c.l.b16 %v1367
        %v1400 = vunpack.c.l.b16 %v1368
        %v1401 = vunpack.c.l.b16 %v1369
        %v1402 = vunpack.c.l.b16 %v1370
        %v1403 = vunpack.c.l.b16 %v1371
        %v1404 = vpack.c.b16 %v1389, %v1388
        %v1405 = vpack.c.b16 %v1391, %v1390
        %v1406 = vpack.c.b16 %v1393, %v1392
        %v1407 = vpack.c.b16 %v1395, %v1394
        %v1408 = vpack.c.b16 %v1397, %v1396
        %v1409 = vpack.c.b16 %v1399, %v1398
        %v1410 = vpack.c.b16 %v1401, %v1400
        %v1411 = vpack.c.b16 %v1403, %v1402
        %1420 = vmatprep.subr.bf16.mxu0 0
        %1421 = vmatpush1.bf16.msra.mxu0 %v1404
        %1422 = vmatprep.subr.bf16.mxu0 0
        %1423 = vmatpush1.bf16.msra.mxu0 %v1405
        %1424 = vmatprep.subr.bf16.mxu0 0
        %1425 = vmatpush1.bf16.msra.mxu0 %v1406
        %1426 = vmatprep.subr.bf16.mxu0 0
        %1427 = vmatpush1.bf16.msra.mxu0 %v1407
        %1428 = vmatprep.subr.bf16.mxu0 0
        %1429 = vmatpush1.bf16.msra.mxu0 %v1408
        %1430 = vmatprep.subr.bf16.mxu0 0
        %1431 = vmatpush1.bf16.msra.mxu0 %v1409
        %1432 = vmatprep.subr.bf16.mxu0 0
        %1433 = vmatpush1.bf16.msra.mxu0 %v1410
        %1434 = vmatprep.subr.bf16.mxu0 0
        %1435 = vmatpush1.bf16.msra.mxu0 %v1411
        %1436 = vmatprep.subr.bf16.mxu0 0
        %1437 = vmatpush1.bf16.msra.mxu0 0
        %1438 = vmatprep.subr.bf16.mxu0 0
        %1439 = vmatpush1.bf16.msra.mxu0 0
        %1440 = vmatprep.subr.bf16.mxu0 0
        %1441 = vmatpush1.bf16.msra.mxu0 0
        %1442 = vmatprep.subr.bf16.mxu0 0
        %1443 = vmatpush1.bf16.msra.mxu0 0
        %1444 = vmatprep.subr.bf16.mxu0 0
        %1445 = vmatpush1.bf16.msra.mxu0 0
        %1446 = vmatprep.subr.bf16.mxu0 0
        %1447 = vmatpush1.bf16.msra.mxu0 0
        %1448 = vmatprep.subr.bf16.mxu0 0
        %1449 = vmatpush1.bf16.msra.mxu0 0
        %1450 = vmatprep.subr.bf16.mxu0 0
        %1451 = vmatpush1.bf16.msra.mxu0 0
        %1452 = vmatprep.mubr.bf16.mxu0 0
        %1453 = vmatmul.mubr.bf16.gmra.mrb[0].mxu0 %v1353
        %v1454 = vpop.f32.mrb[0].mxu0
        %v1455 = vadd.f32 0.0, %v1454
        %v1456 = vpop.f32.mrb[0].mxu0
        %v1457 = vpop.f32.mrb[0].mxu0
        %v1458 = vadd.f32 0.0, %v1457
        %v1459 = vpop.f32.mrb[0].mxu0
        %1460 = vmatprep.mubr.bf16.mxu0 0
        %1461 = vmatmul.mubr.bf16.gmra.mrb[0].mxu0 %v1354
        %v1462 = vpop.f32.mrb[0].mxu0
        %v1463 = vadd.f32 0.0, %v1462
        %v1464 = vpop.f32.mrb[0].mxu0
        %v1465 = vpop.f32.mrb[0].mxu0
        %v1466 = vadd.f32 0.0, %v1465
        %v1467 = vpop.f32.mrb[0].mxu0
        %1468 = vdwg.mxu0
        %v1469 = vadd.f32 %v1349, %v1455
        %v1470 = vadd.f32 %v1350, %v1458
        %v1471 = vadd.f32 %v1351, %v1463
        %v1472 = vadd.f32 %v1352, %v1466
        %v1473 = vpack.c.bf16 %v320, %v320
        %s1474 = scalar_lea.vmem [#allocation5], 576
        %v1475 = vld [vmem:[%s1474] sm:$0xf]
        %v1476 = vld [vmem:[%s1474 + $0x4] sm:$0xf]
        %v1477 = vld [vmem:[%s1474 + $0x8] sm:$0xf]
        %v1478 = vld [vmem:[%s1474 + $0xc] sm:$0xf]
        %v1479 = vld [vmem:[%s1474 + $0x10] sm:$0xf]
        %v1480 = vld [vmem:[%s1474 + $0x14] sm:$0xf]
        %v1481 = vld [vmem:[%s1474 + $0x18] sm:$0xf]
        %v1482 = vld [vmem:[%s1474 + $0x1c] sm:$0xf]
        %v1483 = vld [vmem:[%s1474 + $0x20] sm:$0xf]
        %v1484 = vld [vmem:[%s1474 + $0x24] sm:$0xf]
        %v1485 = vld [vmem:[%s1474 + $0x28] sm:$0xf]
        %v1486 = vld [vmem:[%s1474 + $0x2c] sm:$0xf]
        %v1487 = vld [vmem:[%s1474 + $0x30] sm:$0xf]
        %v1488 = vld [vmem:[%s1474 + $0x34] sm:$0xf]
        %v1489 = vld [vmem:[%s1474 + $0x38] sm:$0xf]
        %v1490 = vld [vmem:[%s1474 + $0x3c] sm:$0xf]
        %v1492 = vshrl.u32 %v1353, 16
        %v1494 = vshll.u32 %v1353, 16
        %v1496 = vrot.slane %v1494, 1
        %v1497 = vor.u32 %v1492, %v1496
        %v1499 = vshll.u32 %v1354, 16
        %v1501 = vrot.slane %v1499, 1
        %v1502 = vsel %vm357, %v1497, %v1501
        %v1503 = vshrl.u32 %v1354, 16
        %v1505 = vor.u32 %v1503, %v1501
        %v1507 = vshll.u32 %v1473, 16
        %v1509 = vrot.slane %v1507, 1
        %v1510 = vsel %vm357, %v1505, %v1509
        %v1529 = vunpack.c.l.b16 %v1475
        %v1530 = vunpack.c.l.b16 %v1476
        %v1531 = vunpack.c.l.b16 %v1477
        %v1532 = vunpack.c.l.b16 %v1478
        %v1533 = vunpack.c.l.b16 %v1479
        %v1534 = vunpack.c.l.b16 %v1480
        %v1535 = vunpack.c.l.b16 %v1481
        %v1536 = vunpack.c.l.b16 %v1482
        %v1537 = vunpack.c.l.b16 %v1483
        %v1538 = vunpack.c.l.b16 %v1484
        %v1539 = vunpack.c.l.b16 %v1485
        %v1540 = vunpack.c.l.b16 %v1486
        %v1541 = vunpack.c.l.b16 %v1487
        %v1542 = vunpack.c.l.b16 %v1488
        %v1543 = vunpack.c.l.b16 %v1489
        %v1544 = vunpack.c.l.b16 %v1490
        %v1545 = vpack.c.b16 %v1530, %v1529
        %v1546 = vpack.c.b16 %v1532, %v1531
        %v1547 = vpack.c.b16 %v1534, %v1533
        %v1548 = vpack.c.b16 %v1536, %v1535
        %v1549 = vpack.c.b16 %v1538, %v1537
        %v1550 = vpack.c.b16 %v1540, %v1539
        %v1551 = vpack.c.b16 %v1542, %v1541
        %v1552 = vpack.c.b16 %v1544, %v1543
        %1561 = vmatprep.subr.bf16.mxu0 0
        %1562 = vmatpush1.bf16.msra.mxu0 %v1545
        %1563 = vmatprep.subr.bf16.mxu0 0
        %1564 = vmatpush1.bf16.msra.mxu0 %v1546
        %1565 = vmatprep.subr.bf16.mxu0 0
        %1566 = vmatpush1.bf16.msra.mxu0 %v1547
        %1567 = vmatprep.subr.bf16.mxu0 0
        %1568 = vmatpush1.bf16.msra.mxu0 %v1548
        %1569 = vmatprep.subr.bf16.mxu0 0
        %1570 = vmatpush1.bf16.msra.mxu0 %v1549
        %1571 = vmatprep.subr.bf16.mxu0 0
        %1572 = vmatpush1.bf16.msra.mxu0 %v1550
        %1573 = vmatprep.subr.bf16.mxu0 0
        %1574 = vmatpush1.bf16.msra.mxu0 %v1551
        %1575 = vmatprep.subr.bf16.mxu0 0
        %1576 = vmatpush1.bf16.msra.mxu0 %v1552
        %1577 = vmatprep.subr.bf16.mxu0 0
        %1578 = vmatpush1.bf16.msra.mxu0 0
        %1579 = vmatprep.subr.bf16.mxu0 0
        %1580 = vmatpush1.bf16.msra.mxu0 0
        %1581 = vmatprep.subr.bf16.mxu0 0
        %1582 = vmatpush1.bf16.msra.mxu0 0
        %1583 = vmatprep.subr.bf16.mxu0 0
        %1584 = vmatpush1.bf16.msra.mxu0 0
        %1585 = vmatprep.subr.bf16.mxu0 0
        %1586 = vmatpush1.bf16.msra.mxu0 0
        %1587 = vmatprep.subr.bf16.mxu0 0
        %1588 = vmatpush1.bf16.msra.mxu0 0
        %1589 = vmatprep.subr.bf16.mxu0 0
        %1590 = vmatpush1.bf16.msra.mxu0 0
        %1591 = vmatprep.subr.bf16.mxu0 0
        %1592 = vmatpush1.bf16.msra.mxu0 0
        %1593 = vmatprep.mubr.bf16.mxu0 0
        %1594 = vmatmul.mubr.bf16.gmra.mrb[0].mxu0 %v1502
        %v1595 = vpop.f32.mrb[0].mxu0
        %v1596 = vadd.f32 0.0, %v1595
        %v1597 = vpop.f32.mrb[0].mxu0
        %v1598 = vpop.f32.mrb[0].mxu0
        %v1599 = vadd.f32 0.0, %v1598
        %v1600 = vpop.f32.mrb[0].mxu0
        %1601 = vmatprep.mubr.bf16.mxu0 0
        %1602 = vmatmul.mubr.bf16.gmra.mrb[0].mxu0 %v1510
        %v1603 = vpop.f32.mrb[0].mxu0
        %v1604 = vadd.f32 0.0, %v1603
        %v1605 = vpop.f32.mrb[0].mxu0
        %v1606 = vpop.f32.mrb[0].mxu0
        %v1607 = vadd.f32 0.0, %v1606
        %v1608 = vpop.f32.mrb[0].mxu0
        %1609 = vdwg.mxu0
        %v1610 = vadd.f32 %v1469, %v1596
        %v1611 = vadd.f32 %v1470, %v1599
        %v1612 = vadd.f32 %v1471, %v1604
        %v1613 = vadd.f32 %v1472, %v1607
        %s1614 = scalar_lea.vmem [#allocation5], 640
        %v1615 = vld [vmem:[%s1614] sm:$0xf]
        %v1616 = vld [vmem:[%s1614 + $0x4] sm:$0xf]
        %v1617 = vld [vmem:[%s1614 + $0x8] sm:$0xf]
        %v1618 = vld [vmem:[%s1614 + $0xc] sm:$0xf]
        %v1619 = vld [vmem:[%s1614 + $0x10] sm:$0xf]
        %v1620 = vld [vmem:[%s1614 + $0x14] sm:$0xf]
        %v1621 = vld [vmem:[%s1614 + $0x18] sm:$0xf]
        %v1622 = vld [vmem:[%s1614 + $0x1c] sm:$0xf]
        %v1623 = vld [vmem:[%s1614 + $0x20] sm:$0xf]
        %v1624 = vld [vmem:[%s1614 + $0x24] sm:$0xf]
        %v1625 = vld [vmem:[%s1614 + $0x28] sm:$0xf]
        %v1626 = vld [vmem:[%s1614 + $0x2c] sm:$0xf]
        %v1627 = vld [vmem:[%s1614 + $0x30] sm:$0xf]
        %v1628 = vld [vmem:[%s1614 + $0x34] sm:$0xf]
        %v1629 = vld [vmem:[%s1614 + $0x38] sm:$0xf]
        %v1630 = vld [vmem:[%s1614 + $0x3c] sm:$0xf]
        %v1634 = vrot.slane %v1353, 1
        %v1635 = vrot.slane %v1354, 1
        %v1636 = vsel %vm594, %v1634, %v1635
        %v1637 = vrot.slane %v1473, 1
        %v1638 = vsel %vm594, %v1635, %v1637
        %v1657 = vunpack.c.l.b16 %v1615
        %v1658 = vunpack.c.l.b16 %v1616
        %v1659 = vunpack.c.l.b16 %v1617
        %v1660 = vunpack.c.l.b16 %v1618
        %v1661 = vunpack.c.l.b16 %v1619
        %v1662 = vunpack.c.l.b16 %v1620
        %v1663 = vunpack.c.l.b16 %v1621
        %v1664 = vunpack.c.l.b16 %v1622
        %v1665 = vunpack.c.l.b16 %v1623
        %v1666 = vunpack.c.l.b16 %v1624
        %v1667 = vunpack.c.l.b16 %v1625
        %v1668 = vunpack.c.l.b16 %v1626
        %v1669 = vunpack.c.l.b16 %v1627
        %v1670 = vunpack.c.l.b16 %v1628
        %v1671 = vunpack.c.l.b16 %v1629
        %v1672 = vunpack.c.l.b16 %v1630
        %v1673 = vpack.c.b16 %v1658, %v1657
        %v1674 = vpack.c.b16 %v1660, %v1659
        %v1675 = vpack.c.b16 %v1662, %v1661
        %v1676 = vpack.c.b16 %v1664, %v1663
        %v1677 = vpack.c.b16 %v1666, %v1665
        %v1678 = vpack.c.b16 %v1668, %v1667
        %v1679 = vpack.c.b16 %v1670, %v1669
        %v1680 = vpack.c.b16 %v1672, %v1671
        %1689 = vmatprep.subr.bf16.mxu0 0
        %1690 = vmatpush1.bf16.msra.mxu0 %v1673
        %1691 = vmatprep.subr.bf16.mxu0 0
        %1692 = vmatpush1.bf16.msra.mxu0 %v1674
        %1693 = vmatprep.subr.bf16.mxu0 0
        %1694 = vmatpush1.bf16.msra.mxu0 %v1675
        %1695 = vmatprep.subr.bf16.mxu0 0
        %1696 = vmatpush1.bf16.msra.mxu0 %v1676
        %1697 = vmatprep.subr.bf16.mxu0 0
        %1698 = vmatpush1.bf16.msra.mxu0 %v1677
        %1699 = vmatprep.subr.bf16.mxu0 0
        %1700 = vmatpush1.bf16.msra.mxu0 %v1678
        %1701 = vmatprep.subr.bf16.mxu0 0
        %1702 = vmatpush1.bf16.msra.mxu0 %v1679
        %1703 = vmatprep.subr.bf16.mxu0 0
        %1704 = vmatpush1.bf16.msra.mxu0 %v1680
        %1705 = vmatprep.subr.bf16.mxu0 0
        %1706 = vmatpush1.bf16.msra.mxu0 0
        %1707 = vmatprep.subr.bf16.mxu0 0
        %1708 = vmatpush1.bf16.msra.mxu0 0
        %1709 = vmatprep.subr.bf16.mxu0 0
        %1710 = vmatpush1.bf16.msra.mxu0 0
        %1711 = vmatprep.subr.bf16.mxu0 0
        %1712 = vmatpush1.bf16.msra.mxu0 0
        %1713 = vmatprep.subr.bf16.mxu0 0
        %1714 = vmatpush1.bf16.msra.mxu0 0
        %1715 = vmatprep.subr.bf16.mxu0 0
        %1716 = vmatpush1.bf16.msra.mxu0 0
        %1717 = vmatprep.subr.bf16.mxu0 0
        %1718 = vmatpush1.bf16.msra.mxu0 0
        %1719 = vmatprep.subr.bf16.mxu0 0
        %1720 = vmatpush1.bf16.msra.mxu0 0
        %1721 = vmatprep.mubr.bf16.mxu0 0
        %1722 = vmatmul.mubr.bf16.gmra.mrb[0].mxu0 %v1636
        %v1723 = vpop.f32.mrb[0].mxu0
        %v1724 = vadd.f32 0.0, %v1723
        %v1725 = vpop.f32.mrb[0].mxu0
        %v1726 = vpop.f32.mrb[0].mxu0
        %v1727 = vadd.f32 0.0, %v1726
        %v1728 = vpop.f32.mrb[0].mxu0
        %1729 = vmatprep.mubr.bf16.mxu0 0
        %1730 = vmatmul.mubr.bf16.gmra.mrb[0].mxu0 %v1638
        %v1731 = vpop.f32.mrb[0].mxu0
        %v1732 = vadd.f32 0.0, %v1731
        %v1733 = vpop.f32.mrb[0].mxu0
        %v1734 = vpop.f32.mrb[0].mxu0
        %v1735 = vadd.f32 0.0, %v1734
        %v1736 = vpop.f32.mrb[0].mxu0
        %1737 = vdwg.mxu0
        %v1738 = vadd.f32 %v1610, %v1724
        %v1739 = vadd.f32 %v1611, %v1727
        %v1740 = vadd.f32 %v1612, %v1732
        %v1741 = vadd.f32 %v1613, %v1735
        %s1742 = scalar_lea.vmem [#allocation5], 704
        %v1743 = vld [vmem:[%s1742] sm:$0xf]
        %v1744 = vld [vmem:[%s1742 + $0x4] sm:$0xf]
        %v1745 = vld [vmem:[%s1742 + $0x8] sm:$0xf]
        %v1746 = vld [vmem:[%s1742 + $0xc] sm:$0xf]
        %v1747 = vld [vmem:[%s1742 + $0x10] sm:$0xf]
        %v1748 = vld [vmem:[%s1742 + $0x14] sm:$0xf]
        %v1749 = vld [vmem:[%s1742 + $0x18] sm:$0xf]
        %v1750 = vld [vmem:[%s1742 + $0x1c] sm:$0xf]
        %v1751 = vld [vmem:[%s1742 + $0x20] sm:$0xf]
        %v1752 = vld [vmem:[%s1742 + $0x24] sm:$0xf]
        %v1753 = vld [vmem:[%s1742 + $0x28] sm:$0xf]
        %v1754 = vld [vmem:[%s1742 + $0x2c] sm:$0xf]
        %v1755 = vld [vmem:[%s1742 + $0x30] sm:$0xf]
        %v1756 = vld [vmem:[%s1742 + $0x34] sm:$0xf]
        %v1757 = vld [vmem:[%s1742 + $0x38] sm:$0xf]
        %v1758 = vld [vmem:[%s1742 + $0x3c] sm:$0xf]
        %v1759 = vrot.slane %v1492, 1
        %v1760 = vrot.slane %v1494, 2
        %v1761 = vor.u32 %v1759, %v1760
        %v1762 = vrot.slane %v1503, 1
        %v1763 = vrot.slane %v1499, 2
        %v1764 = vor.u32 %v1762, %v1763
        %v1765 = vsel %vm720, %v1761, %v1764
        %v1766 = vshrl.u32 %v1473, 16
        %v1768 = vrot.slane %v1766, 1
        %v1769 = vrot.slane %v1507, 2
        %v1770 = vor.u32 %v1768, %v1769
        %v1771 = vsel %vm720, %v1764, %v1770
        %v1790 = vunpack.c.l.b16 %v1743
        %v1791 = vunpack.c.l.b16 %v1744
        %v1792 = vunpack.c.l.b16 %v1745
        %v1793 = vunpack.c.l.b16 %v1746
        %v1794 = vunpack.c.l.b16 %v1747
        %v1795 = vunpack.c.l.b16 %v1748
        %v1796 = vunpack.c.l.b16 %v1749
        %v1797 = vunpack.c.l.b16 %v1750
        %v1798 = vunpack.c.l.b16 %v1751
        %v1799 = vunpack.c.l.b16 %v1752
        %v1800 = vunpack.c.l.b16 %v1753
        %v1801 = vunpack.c.l.b16 %v1754
        %v1802 = vunpack.c.l.b16 %v1755
        %v1803 = vunpack.c.l.b16 %v1756
        %v1804 = vunpack.c.l.b16 %v1757
        %v1805 = vunpack.c.l.b16 %v1758
        %v1806 = vpack.c.b16 %v1791, %v1790
        %v1807 = vpack.c.b16 %v1793, %v1792
        %v1808 = vpack.c.b16 %v1795, %v1794
        %v1809 = vpack.c.b16 %v1797, %v1796
        %v1810 = vpack.c.b16 %v1799, %v1798
        %v1811 = vpack.c.b16 %v1801, %v1800
        %v1812 = vpack.c.b16 %v1803, %v1802
        %v1813 = vpack.c.b16 %v1805, %v1804
        %1822 = vmatprep.subr.bf16.mxu0 0
        %1823 = vmatpush1.bf16.msra.mxu0 %v1806
        %1824 = vmatprep.subr.bf16.mxu0 0
        %1825 = vmatpush1.bf16.msra.mxu0 %v1807
        %1826 = vmatprep.subr.bf16.mxu0 0
        %1827 = vmatpush1.bf16.msra.mxu0 %v1808
        %1828 = vmatprep.subr.bf16.mxu0 0
        %1829 = vmatpush1.bf16.msra.mxu0 %v1809
        %1830 = vmatprep.subr.bf16.mxu0 0
        %1831 = vmatpush1.bf16.msra.mxu0 %v1810
        %1832 = vmatprep.subr.bf16.mxu0 0
        %1833 = vmatpush1.bf16.msra.mxu0 %v1811
        %1834 = vmatprep.subr.bf16.mxu0 0
        %1835 = vmatpush1.bf16.msra.mxu0 %v1812
        %1836 = vmatprep.subr.bf16.mxu0 0
        %1837 = vmatpush1.bf16.msra.mxu0 %v1813
        %1838 = vmatprep.subr.bf16.mxu0 0
        %1839 = vmatpush1.bf16.msra.mxu0 0
        %1840 = vmatprep.subr.bf16.mxu0 0
        %1841 = vmatpush1.bf16.msra.mxu0 0
        %1842 = vmatprep.subr.bf16.mxu0 0
        %1843 = vmatpush1.bf16.msra.mxu0 0
        %1844 = vmatprep.subr.bf16.mxu0 0
        %1845 = vmatpush1.bf16.msra.mxu0 0
        %1846 = vmatprep.subr.bf16.mxu0 0
        %1847 = vmatpush1.bf16.msra.mxu0 0
        %1848 = vmatprep.subr.bf16.mxu0 0
        %1849 = vmatpush1.bf16.msra.mxu0 0
        %1850 = vmatprep.subr.bf16.mxu0 0
        %1851 = vmatpush1.bf16.msra.mxu0 0
        %1852 = vmatprep.subr.bf16.mxu0 0
        %1853 = vmatpush1.bf16.msra.mxu0 0
        %1854 = vmatprep.mubr.bf16.mxu0 0
        %1855 = vmatmul.mubr.bf16.gmra.mrb[0].mxu0 %v1765
        %v1856 = vpop.f32.mrb[0].mxu0
        %v1857 = vadd.f32 0.0, %v1856
        %v1858 = vpop.f32.mrb[0].mxu0
        %v1859 = vpop.f32.mrb[0].mxu0
        %v1860 = vadd.f32 0.0, %v1859
        %v1861 = vpop.f32.mrb[0].mxu0
        %1862 = vmatprep.mubr.bf16.mxu0 0
        %1863 = vmatmul.mubr.bf16.gmra.mrb[0].mxu0 %v1771
        %v1864 = vpop.f32.mrb[0].mxu0
        %v1865 = vadd.f32 0.0, %v1864
        %v1866 = vpop.f32.mrb[0].mxu0
        %v1867 = vpop.f32.mrb[0].mxu0
        %v1868 = vadd.f32 0.0, %v1867
        %v1869 = vpop.f32.mrb[0].mxu0
        %1870 = vdwg.mxu0
        %v1871 = vadd.f32 %v1738, %v1857
        %v1872 = vadd.f32 %v1739, %v1860
        %v1873 = vadd.f32 %v1740, %v1865
        %v1874 = vadd.f32 %v1741, %v1868
        %s1875 = scalar_lea.vmem [#allocation5], 768
        %v1876 = vld [vmem:[%s1875] sm:$0xf]
        %v1877 = vld [vmem:[%s1875 + $0x4] sm:$0xf]
        %v1878 = vld [vmem:[%s1875 + $0x8] sm:$0xf]
        %v1879 = vld [vmem:[%s1875 + $0xc] sm:$0xf]
        %v1880 = vld [vmem:[%s1875 + $0x10] sm:$0xf]
        %v1881 = vld [vmem:[%s1875 + $0x14] sm:$0xf]
        %v1882 = vld [vmem:[%s1875 + $0x18] sm:$0xf]
        %v1883 = vld [vmem:[%s1875 + $0x1c] sm:$0xf]
        %v1884 = vld [vmem:[%s1875 + $0x20] sm:$0xf]
        %v1885 = vld [vmem:[%s1875 + $0x24] sm:$0xf]
        %v1886 = vld [vmem:[%s1875 + $0x28] sm:$0xf]
        %v1887 = vld [vmem:[%s1875 + $0x2c] sm:$0xf]
        %v1888 = vld [vmem:[%s1875 + $0x30] sm:$0xf]
        %v1889 = vld [vmem:[%s1875 + $0x34] sm:$0xf]
        %v1890 = vld [vmem:[%s1875 + $0x38] sm:$0xf]
        %v1891 = vld [vmem:[%s1875 + $0x3c] sm:$0xf]
        %v1892 = vrot.slane %v1353, 2
        %v1893 = vrot.slane %v1354, 2
        %v1894 = vsel %vm854, %v1892, %v1893
        %v1895 = vrot.slane %v1473, 2
        %v1896 = vsel %vm854, %v1893, %v1895
        %v1915 = vunpack.c.l.b16 %v1876
        %v1916 = vunpack.c.l.b16 %v1877
        %v1917 = vunpack.c.l.b16 %v1878
        %v1918 = vunpack.c.l.b16 %v1879
        %v1919 = vunpack.c.l.b16 %v1880
        %v1920 = vunpack.c.l.b16 %v1881
        %v1921 = vunpack.c.l.b16 %v1882
        %v1922 = vunpack.c.l.b16 %v1883
        %v1923 = vunpack.c.l.b16 %v1884
        %v1924 = vunpack.c.l.b16 %v1885
        %v1925 = vunpack.c.l.b16 %v1886
        %v1926 = vunpack.c.l.b16 %v1887
        %v1927 = vunpack.c.l.b16 %v1888
        %v1928 = vunpack.c.l.b16 %v1889
        %v1929 = vunpack.c.l.b16 %v1890
        %v1930 = vunpack.c.l.b16 %v1891
        %v1931 = vpack.c.b16 %v1916, %v1915
        %v1932 = vpack.c.b16 %v1918, %v1917
        %v1933 = vpack.c.b16 %v1920, %v1919
        %v1934 = vpack.c.b16 %v1922, %v1921
        %v1935 = vpack.c.b16 %v1924, %v1923
        %v1936 = vpack.c.b16 %v1926, %v1925
        %v1937 = vpack.c.b16 %v1928, %v1927
        %v1938 = vpack.c.b16 %v1930, %v1929
        %1947 = vmatprep.subr.bf16.mxu0 0
        %1948 = vmatpush1.bf16.msra.mxu0 %v1931
        %1949 = vmatprep.subr.bf16.mxu0 0
        %1950 = vmatpush1.bf16.msra.mxu0 %v1932
        %1951 = vmatprep.subr.bf16.mxu0 0
        %1952 = vmatpush1.bf16.msra.mxu0 %v1933
        %1953 = vmatprep.subr.bf16.mxu0 0
        %1954 = vmatpush1.bf16.msra.mxu0 %v1934
        %1955 = vmatprep.subr.bf16.mxu0 0
        %1956 = vmatpush1.bf16.msra.mxu0 %v1935
        %1957 = vmatprep.subr.bf16.mxu0 0
        %1958 = vmatpush1.bf16.msra.mxu0 %v1936
        %1959 = vmatprep.subr.bf16.mxu0 0
        %1960 = vmatpush1.bf16.msra.mxu0 %v1937
        %1961 = vmatprep.subr.bf16.mxu0 0
        %1962 = vmatpush1.bf16.msra.mxu0 %v1938
        %1963 = vmatprep.subr.bf16.mxu0 0
        %1964 = vmatpush1.bf16.msra.mxu0 0
        %1965 = vmatprep.subr.bf16.mxu0 0
        %1966 = vmatpush1.bf16.msra.mxu0 0
        %1967 = vmatprep.subr.bf16.mxu0 0
        %1968 = vmatpush1.bf16.msra.mxu0 0
        %1969 = vmatprep.subr.bf16.mxu0 0
        %1970 = vmatpush1.bf16.msra.mxu0 0
        %1971 = vmatprep.subr.bf16.mxu0 0
        %1972 = vmatpush1.bf16.msra.mxu0 0
        %1973 = vmatprep.subr.bf16.mxu0 0
        %1974 = vmatpush1.bf16.msra.mxu0 0
        %1975 = vmatprep.subr.bf16.mxu0 0
        %1976 = vmatpush1.bf16.msra.mxu0 0
        %1977 = vmatprep.subr.bf16.mxu0 0
        %1978 = vmatpush1.bf16.msra.mxu0 0
        %1979 = vmatprep.mubr.bf16.mxu0 0
        %1980 = vmatmul.mubr.bf16.gmra.mrb[0].mxu0 %v1894
        %v1981 = vpop.f32.mrb[0].mxu0
        %v1982 = vadd.f32 0.0, %v1981
        %v1983 = vpop.f32.mrb[0].mxu0
        %v1984 = vpop.f32.mrb[0].mxu0
        %v1985 = vadd.f32 0.0, %v1984
        %v1986 = vpop.f32.mrb[0].mxu0
        %1987 = vmatprep.mubr.bf16.mxu0 0
        %1988 = vmatmul.mubr.bf16.gmra.mrb[0].mxu0 %v1896
        %v1989 = vpop.f32.mrb[0].mxu0
        %v1990 = vadd.f32 0.0, %v1989
        %v1991 = vpop.f32.mrb[0].mxu0
        %v1992 = vpop.f32.mrb[0].mxu0
        %v1993 = vadd.f32 0.0, %v1992
        %v1994 = vpop.f32.mrb[0].mxu0
        %1995 = vdwg.mxu0
        %v1996 = vadd.f32 %v1871, %v1982
        %v1997 = vadd.f32 %v1872, %v1985
        %v1998 = vadd.f32 %v1873, %v1990
        %v1999 = vadd.f32 %v1874, %v1993
        %s2000 = scalar_lea.vmem [#allocation5], 832
        %v2001 = vld [vmem:[%s2000] sm:$0xf]
        %v2002 = vld [vmem:[%s2000 + $0x4] sm:$0xf]
        %v2003 = vld [vmem:[%s2000 + $0x8] sm:$0xf]
        %v2004 = vld [vmem:[%s2000 + $0xc] sm:$0xf]
        %v2005 = vld [vmem:[%s2000 + $0x10] sm:$0xf]
        %v2006 = vld [vmem:[%s2000 + $0x14] sm:$0xf]
        %v2007 = vld [vmem:[%s2000 + $0x18] sm:$0xf]
        %v2008 = vld [vmem:[%s2000 + $0x1c] sm:$0xf]
        %v2009 = vld [vmem:[%s2000 + $0x20] sm:$0xf]
        %v2010 = vld [vmem:[%s2000 + $0x24] sm:$0xf]
        %v2011 = vld [vmem:[%s2000 + $0x28] sm:$0xf]
        %v2012 = vld [vmem:[%s2000 + $0x2c] sm:$0xf]
        %v2013 = vld [vmem:[%s2000 + $0x30] sm:$0xf]
        %v2014 = vld [vmem:[%s2000 + $0x34] sm:$0xf]
        %v2015 = vld [vmem:[%s2000 + $0x38] sm:$0xf]
        %v2016 = vld [vmem:[%s2000 + $0x3c] sm:$0xf]
        %v2017 = vrot.slane %v1492, 2
        %v2018 = vrot.slane %v1494, 3
        %v2019 = vor.u32 %v2017, %v2018
        %v2020 = vrot.slane %v1503, 2
        %v2021 = vrot.slane %v1499, 3
        %v2022 = vor.u32 %v2020, %v2021
        %v2023 = vsel %vm980, %v2019, %v2022
        %v2024 = vrot.slane %v1766, 2
        %v2025 = vrot.slane %v1507, 3
        %v2026 = vor.u32 %v2024, %v2025
        %v2027 = vsel %vm980, %v2022, %v2026
        %v2046 = vunpack.c.l.b16 %v2001
        %v2047 = vunpack.c.l.b16 %v2002
        %v2048 = vunpack.c.l.b16 %v2003
        %v2049 = vunpack.c.l.b16 %v2004
        %v2050 = vunpack.c.l.b16 %v2005
        %v2051 = vunpack.c.l.b16 %v2006
        %v2052 = vunpack.c.l.b16 %v2007
        %v2053 = vunpack.c.l.b16 %v2008
        %v2054 = vunpack.c.l.b16 %v2009
        %v2055 = vunpack.c.l.b16 %v2010
        %v2056 = vunpack.c.l.b16 %v2011
        %v2057 = vunpack.c.l.b16 %v2012
        %v2058 = vunpack.c.l.b16 %v2013
        %v2059 = vunpack.c.l.b16 %v2014
        %v2060 = vunpack.c.l.b16 %v2015
        %v2061 = vunpack.c.l.b16 %v2016
        %v2062 = vpack.c.b16 %v2047, %v2046
        %v2063 = vpack.c.b16 %v2049, %v2048
        %v2064 = vpack.c.b16 %v2051, %v2050
        %v2065 = vpack.c.b16 %v2053, %v2052
        %v2066 = vpack.c.b16 %v2055, %v2054
        %v2067 = vpack.c.b16 %v2057, %v2056
        %v2068 = vpack.c.b16 %v2059, %v2058
        %v2069 = vpack.c.b16 %v2061, %v2060
        %2078 = vmatprep.subr.bf16.mxu0 0
        %2079 = vmatpush1.bf16.msra.mxu0 %v2062
        %2080 = vmatprep.subr.bf16.mxu0 0
        %2081 = vmatpush1.bf16.msra.mxu0 %v2063
        %2082 = vmatprep.subr.bf16.mxu0 0
        %2083 = vmatpush1.bf16.msra.mxu0 %v2064
        %2084 = vmatprep.subr.bf16.mxu0 0
        %2085 = vmatpush1.bf16.msra.mxu0 %v2065
        %2086 = vmatprep.subr.bf16.mxu0 0
        %2087 = vmatpush1.bf16.msra.mxu0 %v2066
        %2088 = vmatprep.subr.bf16.mxu0 0
        %2089 = vmatpush1.bf16.msra.mxu0 %v2067
        %2090 = vmatprep.subr.bf16.mxu0 0
        %2091 = vmatpush1.bf16.msra.mxu0 %v2068
        %2092 = vmatprep.subr.bf16.mxu0 0
        %2093 = vmatpush1.bf16.msra.mxu0 %v2069
        %2094 = vmatprep.subr.bf16.mxu0 0
        %2095 = vmatpush1.bf16.msra.mxu0 0
        %2096 = vmatprep.subr.bf16.mxu0 0
        %2097 = vmatpush1.bf16.msra.mxu0 0
        %2098 = vmatprep.subr.bf16.mxu0 0
        %2099 = vmatpush1.bf16.msra.mxu0 0
        %2100 = vmatprep.subr.bf16.mxu0 0
        %2101 = vmatpush1.bf16.msra.mxu0 0
        %2102 = vmatprep.subr.bf16.mxu0 0
        %2103 = vmatpush1.bf16.msra.mxu0 0
        %2104 = vmatprep.subr.bf16.mxu0 0
        %2105 = vmatpush1.bf16.msra.mxu0 0
        %2106 = vmatprep.subr.bf16.mxu0 0
        %2107 = vmatpush1.bf16.msra.mxu0 0
        %2108 = vmatprep.subr.bf16.mxu0 0
        %2109 = vmatpush1.bf16.msra.mxu0 0
        %2110 = vmatprep.mubr.bf16.mxu0 0
        %2111 = vmatmul.mubr.bf16.gmra.mrb[0].mxu0 %v2023
        %v2112 = vpop.f32.mrb[0].mxu0
        %v2113 = vadd.f32 0.0, %v2112
        %v2114 = vpop.f32.mrb[0].mxu0
        %v2115 = vpop.f32.mrb[0].mxu0
        %v2116 = vadd.f32 0.0, %v2115
        %v2117 = vpop.f32.mrb[0].mxu0
        %2118 = vmatprep.mubr.bf16.mxu0 0
        %2119 = vmatmul.mubr.bf16.gmra.mrb[0].mxu0 %v2027
        %v2120 = vpop.f32.mrb[0].mxu0
        %v2121 = vadd.f32 0.0, %v2120
        %v2122 = vpop.f32.mrb[0].mxu0
        %v2123 = vpop.f32.mrb[0].mxu0
        %v2124 = vadd.f32 0.0, %v2123
        %v2125 = vpop.f32.mrb[0].mxu0
        %2126 = vdwg.mxu0
        %v2127 = vadd.f32 %v1996, %v2113
        %v2128 = vadd.f32 %v1997, %v2116
        %v2129 = vadd.f32 %v1998, %v2121
        %v2130 = vadd.f32 %v1999, %v2124
        %s2131 = scalar_lea.vmem [#allocation5], 896
        %v2132 = vld [vmem:[%s2131] sm:$0xf]
        %v2133 = vld [vmem:[%s2131 + $0x4] sm:$0xf]
        %v2134 = vld [vmem:[%s2131 + $0x8] sm:$0xf]
        %v2135 = vld [vmem:[%s2131 + $0xc] sm:$0xf]
        %v2136 = vld [vmem:[%s2131 + $0x10] sm:$0xf]
        %v2137 = vld [vmem:[%s2131 + $0x14] sm:$0xf]
        %v2138 = vld [vmem:[%s2131 + $0x18] sm:$0xf]
        %v2139 = vld [vmem:[%s2131 + $0x1c] sm:$0xf]
        %v2140 = vld [vmem:[%s2131 + $0x20] sm:$0xf]
        %v2141 = vld [vmem:[%s2131 + $0x24] sm:$0xf]
        %v2142 = vld [vmem:[%s2131 + $0x28] sm:$0xf]
        %v2143 = vld [vmem:[%s2131 + $0x2c] sm:$0xf]
        %v2144 = vld [vmem:[%s2131 + $0x30] sm:$0xf]
        %v2145 = vld [vmem:[%s2131 + $0x34] sm:$0xf]
        %v2146 = vld [vmem:[%s2131 + $0x38] sm:$0xf]
        %v2147 = vld [vmem:[%s2131 + $0x3c] sm:$0xf]
        %v2148 = vrot.slane %v1353, 3
        %v2149 = vrot.slane %v1354, 3
        %v2150 = vsel %vm1112, %v2148, %v2149
        %v2151 = vrot.slane %v1473, 3
        %v2152 = vsel %vm1112, %v2149, %v2151
        %v2171 = vunpack.c.l.b16 %v2132
        %v2172 = vunpack.c.l.b16 %v2133
        %v2173 = vunpack.c.l.b16 %v2134
        %v2174 = vunpack.c.l.b16 %v2135
        %v2175 = vunpack.c.l.b16 %v2136
        %v2176 = vunpack.c.l.b16 %v2137
        %v2177 = vunpack.c.l.b16 %v2138
        %v2178 = vunpack.c.l.b16 %v2139
        %v2179 = vunpack.c.l.b16 %v2140
        %v2180 = vunpack.c.l.b16 %v2141
        %v2181 = vunpack.c.l.b16 %v2142
        %v2182 = vunpack.c.l.b16 %v2143
        %v2183 = vunpack.c.l.b16 %v2144
        %v2184 = vunpack.c.l.b16 %v2145
        %v2185 = vunpack.c.l.b16 %v2146
        %v2186 = vunpack.c.l.b16 %v2147
        %v2187 = vpack.c.b16 %v2172, %v2171
        %v2188 = vpack.c.b16 %v2174, %v2173
        %v2189 = vpack.c.b16 %v2176, %v2175
        %v2190 = vpack.c.b16 %v2178, %v2177
        %v2191 = vpack.c.b16 %v2180, %v2179
        %v2192 = vpack.c.b16 %v2182, %v2181
        %v2193 = vpack.c.b16 %v2184, %v2183
        %v2194 = vpack.c.b16 %v2186, %v2185
        %2203 = vmatprep.subr.bf16.mxu0 0
        %2204 = vmatpush1.bf16.msra.mxu0 %v2187
        %2205 = vmatprep.subr.bf16.mxu0 0
        %2206 = vmatpush1.bf16.msra.mxu0 %v2188
        %2207 = vmatprep.subr.bf16.mxu0 0
        %2208 = vmatpush1.bf16.msra.mxu0 %v2189
        %2209 = vmatprep.subr.bf16.mxu0 0
        %2210 = vmatpush1.bf16.msra.mxu0 %v2190
        %2211 = vmatprep.subr.bf16.mxu0 0
        %2212 = vmatpush1.bf16.msra.mxu0 %v2191
        %2213 = vmatprep.subr.bf16.mxu0 0
        %2214 = vmatpush1.bf16.msra.mxu0 %v2192
        %2215 = vmatprep.subr.bf16.mxu0 0
        %2216 = vmatpush1.bf16.msra.mxu0 %v2193
        %2217 = vmatprep.subr.bf16.mxu0 0
        %2218 = vmatpush1.bf16.msra.mxu0 %v2194
        %2219 = vmatprep.subr.bf16.mxu0 0
        %2220 = vmatpush1.bf16.msra.mxu0 0
        %2221 = vmatprep.subr.bf16.mxu0 0
        %2222 = vmatpush1.bf16.msra.mxu0 0
        %2223 = vmatprep.subr.bf16.mxu0 0
        %2224 = vmatpush1.bf16.msra.mxu0 0
        %2225 = vmatprep.subr.bf16.mxu0 0
        %2226 = vmatpush1.bf16.msra.mxu0 0
        %2227 = vmatprep.subr.bf16.mxu0 0
        %2228 = vmatpush1.bf16.msra.mxu0 0
        %2229 = vmatprep.subr.bf16.mxu0 0
        %2230 = vmatpush1.bf16.msra.mxu0 0
        %2231 = vmatprep.subr.bf16.mxu0 0
        %2232 = vmatpush1.bf16.msra.mxu0 0
        %2233 = vmatprep.subr.bf16.mxu0 0
        %2234 = vmatpush1.bf16.msra.mxu0 0
        %2235 = vmatprep.mubr.bf16.mxu0 0
        %2236 = vmatmul.mubr.bf16.gmra.mrb[0].mxu0 %v2150
        %v2237 = vpop.f32.mrb[0].mxu0
        %v2238 = vadd.f32 0.0, %v2237
        %v2239 = vpop.f32.mrb[0].mxu0
        %v2240 = vpop.f32.mrb[0].mxu0
        %v2241 = vadd.f32 0.0, %v2240
        %v2242 = vpop.f32.mrb[0].mxu0
        %2243 = vmatprep.mubr.bf16.mxu0 0
        %2244 = vmatmul.mubr.bf16.gmra.mrb[0].mxu0 %v2152
        %v2245 = vpop.f32.mrb[0].mxu0
        %v2246 = vadd.f32 0.0, %v2245
        %v2247 = vpop.f32.mrb[0].mxu0
        %v2248 = vpop.f32.mrb[0].mxu0
        %v2249 = vadd.f32 0.0, %v2248
        %v2250 = vpop.f32.mrb[0].mxu0
        %2251 = vdwg.mxu0
        %v2252 = vadd.f32 %v2127, %v2238
        %v2253 = vadd.f32 %v2128, %v2241
        %v2254 = vadd.f32 %v2129, %v2246
        %v2255 = vadd.f32 %v2130, %v2249
        %s2256 = scalar_lea.vmem [#allocation5], 960
        %v2257 = vld [vmem:[%s2256] sm:$0xf]
        %v2258 = vld [vmem:[%s2256 + $0x4] sm:$0xf]
        %v2259 = vld [vmem:[%s2256 + $0x8] sm:$0xf]
        %v2260 = vld [vmem:[%s2256 + $0xc] sm:$0xf]
        %v2261 = vld [vmem:[%s2256 + $0x10] sm:$0xf]
        %v2262 = vld [vmem:[%s2256 + $0x14] sm:$0xf]
        %v2263 = vld [vmem:[%s2256 + $0x18] sm:$0xf]
        %v2264 = vld [vmem:[%s2256 + $0x1c] sm:$0xf]
        %v2265 = vld [vmem:[%s2256 + $0x20] sm:$0xf]
        %v2266 = vld [vmem:[%s2256 + $0x24] sm:$0xf]
        %v2267 = vld [vmem:[%s2256 + $0x28] sm:$0xf]
        %v2268 = vld [vmem:[%s2256 + $0x2c] sm:$0xf]
        %v2269 = vld [vmem:[%s2256 + $0x30] sm:$0xf]
        %v2270 = vld [vmem:[%s2256 + $0x34] sm:$0xf]
        %v2271 = vld [vmem:[%s2256 + $0x38] sm:$0xf]
        %v2272 = vld [vmem:[%s2256 + $0x3c] sm:$0xf]
        %v2273 = vrot.slane %v1492, 3
        %v2274 = vrot.slane %v1494, 4
        %v2275 = vor.u32 %v2273, %v2274
        %v2276 = vrot.slane %v1503, 3
        %v2277 = vrot.slane %v1499, 4
        %v2278 = vor.u32 %v2276, %v2277
        %v2279 = vsel %vm1238, %v2275, %v2278
        %v2280 = vrot.slane %v1766, 3
        %v2281 = vrot.slane %v1507, 4
        %v2282 = vor.u32 %v2280, %v2281
        %v2283 = vsel %vm1238, %v2278, %v2282
        %v2302 = vunpack.c.l.b16 %v2257
        %v2303 = vunpack.c.l.b16 %v2258
        %v2304 = vunpack.c.l.b16 %v2259
        %v2305 = vunpack.c.l.b16 %v2260
        %v2306 = vunpack.c.l.b16 %v2261
        %v2307 = vunpack.c.l.b16 %v2262
        %v2308 = vunpack.c.l.b16 %v2263
        %v2309 = vunpack.c.l.b16 %v2264
        %v2310 = vunpack.c.l.b16 %v2265
        %v2311 = vunpack.c.l.b16 %v2266
        %v2312 = vunpack.c.l.b16 %v2267
        %v2313 = vunpack.c.l.b16 %v2268
        %v2314 = vunpack.c.l.b16 %v2269
        %v2315 = vunpack.c.l.b16 %v2270
        %v2316 = vunpack.c.l.b16 %v2271
        %v2317 = vunpack.c.l.b16 %v2272
        %v2318 = vpack.c.b16 %v2303, %v2302
        %v2319 = vpack.c.b16 %v2305, %v2304
        %v2320 = vpack.c.b16 %v2307, %v2306
        %v2321 = vpack.c.b16 %v2309, %v2308
        %v2322 = vpack.c.b16 %v2311, %v2310
        %v2323 = vpack.c.b16 %v2313, %v2312
        %v2324 = vpack.c.b16 %v2315, %v2314
        %v2325 = vpack.c.b16 %v2317, %v2316
        %2334 = vmatprep.subr.bf16.mxu0 0
        %2335 = vmatpush1.bf16.msra.mxu0 %v2318
        %2336 = vmatprep.subr.bf16.mxu0 0
        %2337 = vmatpush1.bf16.msra.mxu0 %v2319
        %2338 = vmatprep.subr.bf16.mxu0 0
        %2339 = vmatpush1.bf16.msra.mxu0 %v2320
        %2340 = vmatprep.subr.bf16.mxu0 0
        %2341 = vmatpush1.bf16.msra.mxu0 %v2321
        %2342 = vmatprep.subr.bf16.mxu0 0
        %2343 = vmatpush1.bf16.msra.mxu0 %v2322
        %2344 = vmatprep.subr.bf16.mxu0 0
        %2345 = vmatpush1.bf16.msra.mxu0 %v2323
        %2346 = vmatprep.subr.bf16.mxu0 0
        %2347 = vmatpush1.bf16.msra.mxu0 %v2324
        %2348 = vmatprep.subr.bf16.mxu0 0
        %2349 = vmatpush1.bf16.msra.mxu0 %v2325
        %2350 = vmatprep.subr.bf16.mxu0 0
        %2351 = vmatpush1.bf16.msra.mxu0 0
        %2352 = vmatprep.subr.bf16.mxu0 0
        %2353 = vmatpush1.bf16.msra.mxu0 0
        %2354 = vmatprep.subr.bf16.mxu0 0
        %2355 = vmatpush1.bf16.msra.mxu0 0
        %2356 = vmatprep.subr.bf16.mxu0 0
        %2357 = vmatpush1.bf16.msra.mxu0 0
        %2358 = vmatprep.subr.bf16.mxu0 0
        %2359 = vmatpush1.bf16.msra.mxu0 0
        %2360 = vmatprep.subr.bf16.mxu0 0
        %2361 = vmatpush1.bf16.msra.mxu0 0
        %2362 = vmatprep.subr.bf16.mxu0 0
        %2363 = vmatpush1.bf16.msra.mxu0 0
        %2364 = vmatprep.subr.bf16.mxu0 0
        %2365 = vmatpush1.bf16.msra.mxu0 0
        %2366 = vmatprep.mubr.bf16.mxu0 0
        %2367 = vmatmul.mubr.bf16.gmra.mrb[0].mxu0 %v2279
        %v2368 = vpop.f32.mrb[0].mxu0
        %v2369 = vadd.f32 0.0, %v2368
        %v2370 = vpop.f32.mrb[0].mxu0
        %v2371 = vpop.f32.mrb[0].mxu0
        %v2372 = vadd.f32 0.0, %v2371
        %v2373 = vpop.f32.mrb[0].mxu0
        %2374 = vmatprep.mubr.bf16.mxu0 0
        %2375 = vmatmul.mubr.bf16.gmra.mrb[0].mxu0 %v2283
        %v2376 = vpop.f32.mrb[0].mxu0
        %v2377 = vadd.f32 0.0, %v2376
        %v2378 = vpop.f32.mrb[0].mxu0
        %v2379 = vpop.f32.mrb[0].mxu0
        %v2380 = vadd.f32 0.0, %v2379
        %v2381 = vpop.f32.mrb[0].mxu0
        %2382 = vdwg.mxu0
        %v2383 = vadd.f32 %v2252, %v2369
        %v2384 = vadd.f32 %v2253, %v2372
        %v2385 = vadd.f32 %v2254, %v2377
        %v2386 = vadd.f32 %v2255, %v2380
        %v2387 = vpack.c.bf16 %v320, %v313
        %s2388 = scalar_lea.vmem [#allocation5], 1024
        %v2389 = vld [vmem:[%s2388] sm:$0xf]
        %v2390 = vld [vmem:[%s2388 + $0x4] sm:$0xf]
        %v2391 = vld [vmem:[%s2388 + $0x8] sm:$0xf]
        %v2392 = vld [vmem:[%s2388 + $0xc] sm:$0xf]
        %v2393 = vld [vmem:[%s2388 + $0x10] sm:$0xf]
        %v2394 = vld [vmem:[%s2388 + $0x14] sm:$0xf]
        %v2395 = vld [vmem:[%s2388 + $0x18] sm:$0xf]
        %v2396 = vld [vmem:[%s2388 + $0x1c] sm:$0xf]
        %v2397 = vld [vmem:[%s2388 + $0x20] sm:$0xf]
        %v2398 = vld [vmem:[%s2388 + $0x24] sm:$0xf]
        %v2399 = vld [vmem:[%s2388 + $0x28] sm:$0xf]
        %v2400 = vld [vmem:[%s2388 + $0x2c] sm:$0xf]
        %v2401 = vld [vmem:[%s2388 + $0x30] sm:$0xf]
        %v2402 = vld [vmem:[%s2388 + $0x34] sm:$0xf]
        %v2403 = vld [vmem:[%s2388 + $0x38] sm:$0xf]
        %v2404 = vld [vmem:[%s2388 + $0x3c] sm:$0xf]
        %v2421 = vunpack.c.l.b16 %v2389
        %v2422 = vunpack.c.l.b16 %v2390
        %v2423 = vunpack.c.l.b16 %v2391
        %v2424 = vunpack.c.l.b16 %v2392
        %v2425 = vunpack.c.l.b16 %v2393
        %v2426 = vunpack.c.l.b16 %v2394
        %v2427 = vunpack.c.l.b16 %v2395
        %v2428 = vunpack.c.l.b16 %v2396
        %v2429 = vunpack.c.l.b16 %v2397
        %v2430 = vunpack.c.l.b16 %v2398
        %v2431 = vunpack.c.l.b16 %v2399
        %v2432 = vunpack.c.l.b16 %v2400
        %v2433 = vunpack.c.l.b16 %v2401
        %v2434 = vunpack.c.l.b16 %v2402
        %v2435 = vunpack.c.l.b16 %v2403
        %v2436 = vunpack.c.l.b16 %v2404
        %v2437 = vpack.c.b16 %v2422, %v2421
        %v2438 = vpack.c.b16 %v2424, %v2423
        %v2439 = vpack.c.b16 %v2426, %v2425
        %v2440 = vpack.c.b16 %v2428, %v2427
        %v2441 = vpack.c.b16 %v2430, %v2429
        %v2442 = vpack.c.b16 %v2432, %v2431
        %v2443 = vpack.c.b16 %v2434, %v2433
        %v2444 = vpack.c.b16 %v2436, %v2435
        %2453 = vmatprep.subr.bf16.mxu0 0
        %2454 = vmatpush1.bf16.msra.mxu0 %v2437
        %2455 = vmatprep.subr.bf16.mxu0 0
        %2456 = vmatpush1.bf16.msra.mxu0 %v2438
        %2457 = vmatprep.subr.bf16.mxu0 0
        %2458 = vmatpush1.bf16.msra.mxu0 %v2439
        %2459 = vmatprep.subr.bf16.mxu0 0
        %2460 = vmatpush1.bf16.msra.mxu0 %v2440
        %2461 = vmatprep.subr.bf16.mxu0 0
        %2462 = vmatpush1.bf16.msra.mxu0 %v2441
        %2463 = vmatprep.subr.bf16.mxu0 0
        %2464 = vmatpush1.bf16.msra.mxu0 %v2442
        %2465 = vmatprep.subr.bf16.mxu0 0
        %2466 = vmatpush1.bf16.msra.mxu0 %v2443
        %2467 = vmatprep.subr.bf16.mxu0 0
        %2468 = vmatpush1.bf16.msra.mxu0 %v2444
        %2469 = vmatprep.subr.bf16.mxu0 0
        %2470 = vmatpush1.bf16.msra.mxu0 0
        %2471 = vmatprep.subr.bf16.mxu0 0
        %2472 = vmatpush1.bf16.msra.mxu0 0
        %2473 = vmatprep.subr.bf16.mxu0 0
        %2474 = vmatpush1.bf16.msra.mxu0 0
        %2475 = vmatprep.subr.bf16.mxu0 0
        %2476 = vmatpush1.bf16.msra.mxu0 0
        %2477 = vmatprep.subr.bf16.mxu0 0
        %2478 = vmatpush1.bf16.msra.mxu0 0
        %2479 = vmatprep.subr.bf16.mxu0 0
        %2480 = vmatpush1.bf16.msra.mxu0 0
        %2481 = vmatprep.subr.bf16.mxu0 0
        %2482 = vmatpush1.bf16.msra.mxu0 0
        %2483 = vmatprep.subr.bf16.mxu0 0
        %2484 = vmatpush1.bf16.msra.mxu0 0
        %2485 = vmatprep.mubr.bf16.mxu0 0
        %2486 = vmatmul.mubr.bf16.gmra.mrb[0].mxu0 %v322
        %v2487 = vpop.f32.mrb[0].mxu0
        %v2488 = vadd.f32 0.0, %v2487
        %v2489 = vpop.f32.mrb[0].mxu0
        %v2490 = vpop.f32.mrb[0].mxu0
        %v2491 = vadd.f32 0.0, %v2490
        %v2492 = vpop.f32.mrb[0].mxu0
        %2493 = vmatprep.mubr.bf16.mxu0 0
        %2494 = vmatmul.mubr.bf16.gmra.mrb[0].mxu0 %v2387
        %v2495 = vpop.f32.mrb[0].mxu0
        %v2496 = vadd.f32 0.0, %v2495
        %v2497 = vpop.f32.mrb[0].mxu0
        %v2498 = vpop.f32.mrb[0].mxu0
        %v2499 = vadd.f32 0.0, %v2498
        %v2500 = vpop.f32.mrb[0].mxu0
        %2501 = vdwg.mxu0
        %v2502 = vadd.f32 %v2383, %v2488
        %v2503 = vadd.f32 %v2384, %v2491
        %v2504 = vadd.f32 %v2385, %v2496
        %v2505 = vadd.f32 %v2386, %v2499
        %v2506 = vpack.c.bf16 0.0, 0.0
        %s2507 = scalar_lea.vmem [#allocation5], 1088
        %v2508 = vld [vmem:[%s2507] sm:$0xf]
        %v2509 = vld [vmem:[%s2507 + $0x4] sm:$0xf]
        %v2510 = vld [vmem:[%s2507 + $0x8] sm:$0xf]
        %v2511 = vld [vmem:[%s2507 + $0xc] sm:$0xf]
        %v2512 = vld [vmem:[%s2507 + $0x10] sm:$0xf]
        %v2513 = vld [vmem:[%s2507 + $0x14] sm:$0xf]
        %v2514 = vld [vmem:[%s2507 + $0x18] sm:$0xf]
        %v2515 = vld [vmem:[%s2507 + $0x1c] sm:$0xf]
        %v2516 = vld [vmem:[%s2507 + $0x20] sm:$0xf]
        %v2517 = vld [vmem:[%s2507 + $0x24] sm:$0xf]
        %v2518 = vld [vmem:[%s2507 + $0x28] sm:$0xf]
        %v2519 = vld [vmem:[%s2507 + $0x2c] sm:$0xf]
        %v2520 = vld [vmem:[%s2507 + $0x30] sm:$0xf]
        %v2521 = vld [vmem:[%s2507 + $0x34] sm:$0xf]
        %v2522 = vld [vmem:[%s2507 + $0x38] sm:$0xf]
        %v2523 = vld [vmem:[%s2507 + $0x3c] sm:$0xf]
        %v2525 = vshll.u32 %v2387, 16
        %v2527 = vrot.slane %v2525, 1
        %v2528 = vsel %vm357, %v372, %v2527
        %v2529 = vshrl.u32 %v2387, 16
        %v2531 = vor.u32 %v2529, %v2527
        %v2533 = vshll.u32 %v2506, 16
        %v2535 = vrot.slane %v2533, 1
        %v2536 = vsel %vm357, %v2531, %v2535
        %v2555 = vunpack.c.l.b16 %v2508
        %v2556 = vunpack.c.l.b16 %v2509
        %v2557 = vunpack.c.l.b16 %v2510
        %v2558 = vunpack.c.l.b16 %v2511
        %v2559 = vunpack.c.l.b16 %v2512
        %v2560 = vunpack.c.l.b16 %v2513
        %v2561 = vunpack.c.l.b16 %v2514
        %v2562 = vunpack.c.l.b16 %v2515
        %v2563 = vunpack.c.l.b16 %v2516
        %v2564 = vunpack.c.l.b16 %v2517
        %v2565 = vunpack.c.l.b16 %v2518
        %v2566 = vunpack.c.l.b16 %v2519
        %v2567 = vunpack.c.l.b16 %v2520
        %v2568 = vunpack.c.l.b16 %v2521
        %v2569 = vunpack.c.l.b16 %v2522
        %v2570 = vunpack.c.l.b16 %v2523
        %v2571 = vpack.c.b16 %v2556, %v2555
        %v2572 = vpack.c.b16 %v2558, %v2557
        %v2573 = vpack.c.b16 %v2560, %v2559
        %v2574 = vpack.c.b16 %v2562, %v2561
        %v2575 = vpack.c.b16 %v2564, %v2563
        %v2576 = vpack.c.b16 %v2566, %v2565
        %v2577 = vpack.c.b16 %v2568, %v2567
        %v2578 = vpack.c.b16 %v2570, %v2569
        %2587 = vmatprep.subr.bf16.mxu0 0
        %2588 = vmatpush1.bf16.msra.mxu0 %v2571
        %2589 = vmatprep.subr.bf16.mxu0 0
        %2590 = vmatpush1.bf16.msra.mxu0 %v2572
        %2591 = vmatprep.subr.bf16.mxu0 0
        %2592 = vmatpush1.bf16.msra.mxu0 %v2573
        %2593 = vmatprep.subr.bf16.mxu0 0
        %2594 = vmatpush1.bf16.msra.mxu0 %v2574
        %2595 = vmatprep.subr.bf16.mxu0 0
        %2596 = vmatpush1.bf16.msra.mxu0 %v2575
        %2597 = vmatprep.subr.bf16.mxu0 0
        %2598 = vmatpush1.bf16.msra.mxu0 %v2576
        %2599 = vmatprep.subr.bf16.mxu0 0
        %2600 = vmatpush1.bf16.msra.mxu0 %v2577
        %2601 = vmatprep.subr.bf16.mxu0 0
        %2602 = vmatpush1.bf16.msra.mxu0 %v2578
        %2603 = vmatprep.subr.bf16.mxu0 0
        %2604 = vmatpush1.bf16.msra.mxu0 0
        %2605 = vmatprep.subr.bf16.mxu0 0
        %2606 = vmatpush1.bf16.msra.mxu0 0
        %2607 = vmatprep.subr.bf16.mxu0 0
        %2608 = vmatpush1.bf16.msra.mxu0 0
        %2609 = vmatprep.subr.bf16.mxu0 0
        %2610 = vmatpush1.bf16.msra.mxu0 0
        %2611 = vmatprep.subr.bf16.mxu0 0
        %2612 = vmatpush1.bf16.msra.mxu0 0
        %2613 = vmatprep.subr.bf16.mxu0 0
        %2614 = vmatpush1.bf16.msra.mxu0 0
        %2615 = vmatprep.subr.bf16.mxu0 0
        %2616 = vmatpush1.bf16.msra.mxu0 0
        %2617 = vmatprep.subr.bf16.mxu0 0
        %2618 = vmatpush1.bf16.msra.mxu0 0
        %2619 = vmatprep.mubr.bf16.mxu0 0
        %2620 = vmatmul.mubr.bf16.gmra.mrb[0].mxu0 %v2528
        %v2621 = vpop.f32.mrb[0].mxu0
        %v2622 = vadd.f32 0.0, %v2621
        %v2623 = vpop.f32.mrb[0].mxu0
        %v2624 = vpop.f32.mrb[0].mxu0
        %v2625 = vadd.f32 0.0, %v2624
        %v2626 = vpop.f32.mrb[0].mxu0
        %2627 = vmatprep.mubr.bf16.mxu0 0
        %2628 = vmatmul.mubr.bf16.gmra.mrb[0].mxu0 %v2536
        %v2629 = vpop.f32.mrb[0].mxu0
        %v2630 = vadd.f32 0.0, %v2629
        %v2631 = vpop.f32.mrb[0].mxu0
        %v2632 = vpop.f32.mrb[0].mxu0
        %v2633 = vadd.f32 0.0, %v2632
        %v2634 = vpop.f32.mrb[0].mxu0
        %2635 = vdwg.mxu0
        %v2636 = vadd.f32 %v2502, %v2622
        %v2637 = vadd.f32 %v2503, %v2625
        %v2638 = vadd.f32 %v2504, %v2630
        %v2639 = vadd.f32 %v2505, %v2633
        %s2640 = scalar_lea.vmem [#allocation5], 1152
        %v2641 = vld [vmem:[%s2640] sm:$0xf]
        %v2642 = vld [vmem:[%s2640 + $0x4] sm:$0xf]
        %v2643 = vld [vmem:[%s2640 + $0x8] sm:$0xf]
        %v2644 = vld [vmem:[%s2640 + $0xc] sm:$0xf]
        %v2645 = vld [vmem:[%s2640 + $0x10] sm:$0xf]
        %v2646 = vld [vmem:[%s2640 + $0x14] sm:$0xf]
        %v2647 = vld [vmem:[%s2640 + $0x18] sm:$0xf]
        %v2648 = vld [vmem:[%s2640 + $0x1c] sm:$0xf]
        %v2649 = vld [vmem:[%s2640 + $0x20] sm:$0xf]
        %v2650 = vld [vmem:[%s2640 + $0x24] sm:$0xf]
        %v2651 = vld [vmem:[%s2640 + $0x28] sm:$0xf]
        %v2652 = vld [vmem:[%s2640 + $0x2c] sm:$0xf]
        %v2653 = vld [vmem:[%s2640 + $0x30] sm:$0xf]
        %v2654 = vld [vmem:[%s2640 + $0x34] sm:$0xf]
        %v2655 = vld [vmem:[%s2640 + $0x38] sm:$0xf]
        %v2656 = vld [vmem:[%s2640 + $0x3c] sm:$0xf]
        %v2659 = vrot.slane %v2387, 1
        %v2660 = vsel %vm594, %v596, %v2659
        %v2661 = vrot.slane %v2506, 1
        %v2662 = vsel %vm594, %v2659, %v2661
        %v2681 = vunpack.c.l.b16 %v2641
        %v2682 = vunpack.c.l.b16 %v2642
        %v2683 = vunpack.c.l.b16 %v2643
        %v2684 = vunpack.c.l.b16 %v2644
        %v2685 = vunpack.c.l.b16 %v2645
        %v2686 = vunpack.c.l.b16 %v2646
        %v2687 = vunpack.c.l.b16 %v2647
        %v2688 = vunpack.c.l.b16 %v2648
        %v2689 = vunpack.c.l.b16 %v2649
        %v2690 = vunpack.c.l.b16 %v2650
        %v2691 = vunpack.c.l.b16 %v2651
        %v2692 = vunpack.c.l.b16 %v2652
        %v2693 = vunpack.c.l.b16 %v2653
        %v2694 = vunpack.c.l.b16 %v2654
        %v2695 = vunpack.c.l.b16 %v2655
        %v2696 = vunpack.c.l.b16 %v2656
        %v2697 = vpack.c.b16 %v2682, %v2681
        %v2698 = vpack.c.b16 %v2684, %v2683
        %v2699 = vpack.c.b16 %v2686, %v2685
        %v2700 = vpack.c.b16 %v2688, %v2687
        %v2701 = vpack.c.b16 %v2690, %v2689
        %v2702 = vpack.c.b16 %v2692, %v2691
        %v2703 = vpack.c.b16 %v2694, %v2693
        %v2704 = vpack.c.b16 %v2696, %v2695
        %2713 = vmatprep.subr.bf16.mxu0 0
        %2714 = vmatpush1.bf16.msra.mxu0 %v2697
        %2715 = vmatprep.subr.bf16.mxu0 0
        %2716 = vmatpush1.bf16.msra.mxu0 %v2698
        %2717 = vmatprep.subr.bf16.mxu0 0
        %2718 = vmatpush1.bf16.msra.mxu0 %v2699
        %2719 = vmatprep.subr.bf16.mxu0 0
        %2720 = vmatpush1.bf16.msra.mxu0 %v2700
        %2721 = vmatprep.subr.bf16.mxu0 0
        %2722 = vmatpush1.bf16.msra.mxu0 %v2701
        %2723 = vmatprep.subr.bf16.mxu0 0
        %2724 = vmatpush1.bf16.msra.mxu0 %v2702
        %2725 = vmatprep.subr.bf16.mxu0 0
        %2726 = vmatpush1.bf16.msra.mxu0 %v2703
        %2727 = vmatprep.subr.bf16.mxu0 0
        %2728 = vmatpush1.bf16.msra.mxu0 %v2704
        %2729 = vmatprep.subr.bf16.mxu0 0
        %2730 = vmatpush1.bf16.msra.mxu0 0
        %2731 = vmatprep.subr.bf16.mxu0 0
        %2732 = vmatpush1.bf16.msra.mxu0 0
        %2733 = vmatprep.subr.bf16.mxu0 0
        %2734 = vmatpush1.bf16.msra.mxu0 0
        %2735 = vmatprep.subr.bf16.mxu0 0
        %2736 = vmatpush1.bf16.msra.mxu0 0
        %2737 = vmatprep.subr.bf16.mxu0 0
        %2738 = vmatpush1.bf16.msra.mxu0 0
        %2739 = vmatprep.subr.bf16.mxu0 0
        %2740 = vmatpush1.bf16.msra.mxu0 0
        %2741 = vmatprep.subr.bf16.mxu0 0
        %2742 = vmatpush1.bf16.msra.mxu0 0
        %2743 = vmatprep.subr.bf16.mxu0 0
        %2744 = vmatpush1.bf16.msra.mxu0 0
        %2745 = vmatprep.mubr.bf16.mxu0 0
        %2746 = vmatmul.mubr.bf16.gmra.mrb[0].mxu0 %v2660
        %v2747 = vpop.f32.mrb[0].mxu0
        %v2748 = vadd.f32 0.0, %v2747
        %v2749 = vpop.f32.mrb[0].mxu0
        %v2750 = vpop.f32.mrb[0].mxu0
        %v2751 = vadd.f32 0.0, %v2750
        %v2752 = vpop.f32.mrb[0].mxu0
        %2753 = vmatprep.mubr.bf16.mxu0 0
        %2754 = vmatmul.mubr.bf16.gmra.mrb[0].mxu0 %v2662
        %v2755 = vpop.f32.mrb[0].mxu0
        %v2756 = vadd.f32 0.0, %v2755
        %v2757 = vpop.f32.mrb[0].mxu0
        %v2758 = vpop.f32.mrb[0].mxu0
        %v2759 = vadd.f32 0.0, %v2758
        %v2760 = vpop.f32.mrb[0].mxu0
        %2761 = vdwg.mxu0
        %v2762 = vadd.f32 %v2636, %v2748
        %v2763 = vadd.f32 %v2637, %v2751
        %v2764 = vadd.f32 %v2638, %v2756
        %v2765 = vadd.f32 %v2639, %v2759
        %s2766 = scalar_lea.vmem [#allocation5], 1216
        %v2767 = vld [vmem:[%s2766] sm:$0xf]
        %v2768 = vld [vmem:[%s2766 + $0x4] sm:$0xf]
        %v2769 = vld [vmem:[%s2766 + $0x8] sm:$0xf]
        %v2770 = vld [vmem:[%s2766 + $0xc] sm:$0xf]
        %v2771 = vld [vmem:[%s2766 + $0x10] sm:$0xf]
        %v2772 = vld [vmem:[%s2766 + $0x14] sm:$0xf]
        %v2773 = vld [vmem:[%s2766 + $0x18] sm:$0xf]
        %v2774 = vld [vmem:[%s2766 + $0x1c] sm:$0xf]
        %v2775 = vld [vmem:[%s2766 + $0x20] sm:$0xf]
        %v2776 = vld [vmem:[%s2766 + $0x24] sm:$0xf]
        %v2777 = vld [vmem:[%s2766 + $0x28] sm:$0xf]
        %v2778 = vld [vmem:[%s2766 + $0x2c] sm:$0xf]
        %v2779 = vld [vmem:[%s2766 + $0x30] sm:$0xf]
        %v2780 = vld [vmem:[%s2766 + $0x34] sm:$0xf]
        %v2781 = vld [vmem:[%s2766 + $0x38] sm:$0xf]
        %v2782 = vld [vmem:[%s2766 + $0x3c] sm:$0xf]
        %v2783 = vrot.slane %v2529, 1
        %v2784 = vrot.slane %v2525, 2
        %v2785 = vor.u32 %v2783, %v2784
        %v2786 = vsel %vm720, %v726, %v2785
        %v2787 = vshrl.u32 %v2506, 16
        %v2789 = vrot.slane %v2787, 1
        %v2790 = vrot.slane %v2533, 2
        %v2791 = vor.u32 %v2789, %v2790
        %v2792 = vsel %vm720, %v2785, %v2791
        %v2811 = vunpack.c.l.b16 %v2767
        %v2812 = vunpack.c.l.b16 %v2768
        %v2813 = vunpack.c.l.b16 %v2769
        %v2814 = vunpack.c.l.b16 %v2770
        %v2815 = vunpack.c.l.b16 %v2771
        %v2816 = vunpack.c.l.b16 %v2772
        %v2817 = vunpack.c.l.b16 %v2773
        %v2818 = vunpack.c.l.b16 %v2774
        %v2819 = vunpack.c.l.b16 %v2775
        %v2820 = vunpack.c.l.b16 %v2776
        %v2821 = vunpack.c.l.b16 %v2777
        %v2822 = vunpack.c.l.b16 %v2778
        %v2823 = vunpack.c.l.b16 %v2779
        %v2824 = vunpack.c.l.b16 %v2780
        %v2825 = vunpack.c.l.b16 %v2781
        %v2826 = vunpack.c.l.b16 %v2782
        %v2827 = vpack.c.b16 %v2812, %v2811
        %v2828 = vpack.c.b16 %v2814, %v2813
        %v2829 = vpack.c.b16 %v2816, %v2815
        %v2830 = vpack.c.b16 %v2818, %v2817
        %v2831 = vpack.c.b16 %v2820, %v2819
        %v2832 = vpack.c.b16 %v2822, %v2821
        %v2833 = vpack.c.b16 %v2824, %v2823
        %v2834 = vpack.c.b16 %v2826, %v2825
        %2843 = vmatprep.subr.bf16.mxu0 0
        %2844 = vmatpush1.bf16.msra.mxu0 %v2827
        %2845 = vmatprep.subr.bf16.mxu0 0
        %2846 = vmatpush1.bf16.msra.mxu0 %v2828
        %2847 = vmatprep.subr.bf16.mxu0 0
        %2848 = vmatpush1.bf16.msra.mxu0 %v2829
        %2849 = vmatprep.subr.bf16.mxu0 0
        %2850 = vmatpush1.bf16.msra.mxu0 %v2830
        %2851 = vmatprep.subr.bf16.mxu0 0
        %2852 = vmatpush1.bf16.msra.mxu0 %v2831
        %2853 = vmatprep.subr.bf16.mxu0 0
        %2854 = vmatpush1.bf16.msra.mxu0 %v2832
        %2855 = vmatprep.subr.bf16.mxu0 0
        %2856 = vmatpush1.bf16.msra.mxu0 %v2833
        %2857 = vmatprep.subr.bf16.mxu0 0
        %2858 = vmatpush1.bf16.msra.mxu0 %v2834
        %2859 = vmatprep.subr.bf16.mxu0 0
        %2860 = vmatpush1.bf16.msra.mxu0 0
        %2861 = vmatprep.subr.bf16.mxu0 0
        %2862 = vmatpush1.bf16.msra.mxu0 0
        %2863 = vmatprep.subr.bf16.mxu0 0
        %2864 = vmatpush1.bf16.msra.mxu0 0
        %2865 = vmatprep.subr.bf16.mxu0 0
        %2866 = vmatpush1.bf16.msra.mxu0 0
        %2867 = vmatprep.subr.bf16.mxu0 0
        %2868 = vmatpush1.bf16.msra.mxu0 0
        %2869 = vmatprep.subr.bf16.mxu0 0
        %2870 = vmatpush1.bf16.msra.mxu0 0
        %2871 = vmatprep.subr.bf16.mxu0 0
        %2872 = vmatpush1.bf16.msra.mxu0 0
        %2873 = vmatprep.subr.bf16.mxu0 0
        %2874 = vmatpush1.bf16.msra.mxu0 0
        %2875 = vmatprep.mubr.bf16.mxu0 0
        %2876 = vmatmul.mubr.bf16.gmra.mrb[0].mxu0 %v2786
        %v2877 = vpop.f32.mrb[0].mxu0
        %v2878 = vadd.f32 0.0, %v2877
        %v2879 = vpop.f32.mrb[0].mxu0
        %v2880 = vpop.f32.mrb[0].mxu0
        %v2881 = vadd.f32 0.0, %v2880
        %v2882 = vpop.f32.mrb[0].mxu0
        %2883 = vmatprep.mubr.bf16.mxu0 0
        %2884 = vmatmul.mubr.bf16.gmra.mrb[0].mxu0 %v2792
        %v2885 = vpop.f32.mrb[0].mxu0
        %v2886 = vadd.f32 0.0, %v2885
        %v2887 = vpop.f32.mrb[0].mxu0
        %v2888 = vpop.f32.mrb[0].mxu0
        %v2889 = vadd.f32 0.0, %v2888
        %v2890 = vpop.f32.mrb[0].mxu0
        %2891 = vdwg.mxu0
        %v2892 = vadd.f32 %v2762, %v2878
        %v2893 = vadd.f32 %v2763, %v2881
        %v2894 = vadd.f32 %v2764, %v2886
        %v2895 = vadd.f32 %v2765, %v2889
        %s2896 = scalar_lea.vmem [#allocation5], 1280
        %v2897 = vld [vmem:[%s2896] sm:$0xf]
        %v2898 = vld [vmem:[%s2896 + $0x4] sm:$0xf]
        %v2899 = vld [vmem:[%s2896 + $0x8] sm:$0xf]
        %v2900 = vld [vmem:[%s2896 + $0xc] sm:$0xf]
        %v2901 = vld [vmem:[%s2896 + $0x10] sm:$0xf]
        %v2902 = vld [vmem:[%s2896 + $0x14] sm:$0xf]
        %v2903 = vld [vmem:[%s2896 + $0x18] sm:$0xf]
        %v2904 = vld [vmem:[%s2896 + $0x1c] sm:$0xf]
        %v2905 = vld [vmem:[%s2896 + $0x20] sm:$0xf]
        %v2906 = vld [vmem:[%s2896 + $0x24] sm:$0xf]
        %v2907 = vld [vmem:[%s2896 + $0x28] sm:$0xf]
        %v2908 = vld [vmem:[%s2896 + $0x2c] sm:$0xf]
        %v2909 = vld [vmem:[%s2896 + $0x30] sm:$0xf]
        %v2910 = vld [vmem:[%s2896 + $0x34] sm:$0xf]
        %v2911 = vld [vmem:[%s2896 + $0x38] sm:$0xf]
        %v2912 = vld [vmem:[%s2896 + $0x3c] sm:$0xf]
        %v2913 = vrot.slane %v2387, 2
        %v2914 = vsel %vm854, %v856, %v2913
        %v2915 = vrot.slane %v2506, 2
        %v2916 = vsel %vm854, %v2913, %v2915
        %v2935 = vunpack.c.l.b16 %v2897
        %v2936 = vunpack.c.l.b16 %v2898
        %v2937 = vunpack.c.l.b16 %v2899
        %v2938 = vunpack.c.l.b16 %v2900
        %v2939 = vunpack.c.l.b16 %v2901
        %v2940 = vunpack.c.l.b16 %v2902
        %v2941 = vunpack.c.l.b16 %v2903
        %v2942 = vunpack.c.l.b16 %v2904
        %v2943 = vunpack.c.l.b16 %v2905
        %v2944 = vunpack.c.l.b16 %v2906
        %v2945 = vunpack.c.l.b16 %v2907
        %v2946 = vunpack.c.l.b16 %v2908
        %v2947 = vunpack.c.l.b16 %v2909
        %v2948 = vunpack.c.l.b16 %v2910
        %v2949 = vunpack.c.l.b16 %v2911
        %v2950 = vunpack.c.l.b16 %v2912
        %v2951 = vpack.c.b16 %v2936, %v2935
        %v2952 = vpack.c.b16 %v2938, %v2937
        %v2953 = vpack.c.b16 %v2940, %v2939
        %v2954 = vpack.c.b16 %v2942, %v2941
        %v2955 = vpack.c.b16 %v2944, %v2943
        %v2956 = vpack.c.b16 %v2946, %v2945
        %v2957 = vpack.c.b16 %v2948, %v2947
        %v2958 = vpack.c.b16 %v2950, %v2949
        %2967 = vmatprep.subr.bf16.mxu0 0
        %2968 = vmatpush1.bf16.msra.mxu0 %v2951
        %2969 = vmatprep.subr.bf16.mxu0 0
        %2970 = vmatpush1.bf16.msra.mxu0 %v2952
        %2971 = vmatprep.subr.bf16.mxu0 0
        %2972 = vmatpush1.bf16.msra.mxu0 %v2953
        %2973 = vmatprep.subr.bf16.mxu0 0
        %2974 = vmatpush1.bf16.msra.mxu0 %v2954
        %2975 = vmatprep.subr.bf16.mxu0 0
        %2976 = vmatpush1.bf16.msra.mxu0 %v2955
        %2977 = vmatprep.subr.bf16.mxu0 0
        %2978 = vmatpush1.bf16.msra.mxu0 %v2956
        %2979 = vmatprep.subr.bf16.mxu0 0
        %2980 = vmatpush1.bf16.msra.mxu0 %v2957
        %2981 = vmatprep.subr.bf16.mxu0 0
        %2982 = vmatpush1.bf16.msra.mxu0 %v2958
        %2983 = vmatprep.subr.bf16.mxu0 0
        %2984 = vmatpush1.bf16.msra.mxu0 0
        %2985 = vmatprep.subr.bf16.mxu0 0
        %2986 = vmatpush1.bf16.msra.mxu0 0
        %2987 = vmatprep.subr.bf16.mxu0 0
        %2988 = vmatpush1.bf16.msra.mxu0 0
        %2989 = vmatprep.subr.bf16.mxu0 0
        %2990 = vmatpush1.bf16.msra.mxu0 0
        %2991 = vmatprep.subr.bf16.mxu0 0
        %2992 = vmatpush1.bf16.msra.mxu0 0
        %2993 = vmatprep.subr.bf16.mxu0 0
        %2994 = vmatpush1.bf16.msra.mxu0 0
        %2995 = vmatprep.subr.bf16.mxu0 0
        %2996 = vmatpush1.bf16.msra.mxu0 0
        %2997 = vmatprep.subr.bf16.mxu0 0
        %2998 = vmatpush1.bf16.msra.mxu0 0
        %2999 = vmatprep.mubr.bf16.mxu0 0
        %3000 = vmatmul.mubr.bf16.gmra.mrb[0].mxu0 %v2914
        %v3001 = vpop.f32.mrb[0].mxu0
        %v3002 = vadd.f32 0.0, %v3001
        %v3003 = vpop.f32.mrb[0].mxu0
        %v3004 = vpop.f32.mrb[0].mxu0
        %v3005 = vadd.f32 0.0, %v3004
        %v3006 = vpop.f32.mrb[0].mxu0
        %3007 = vmatprep.mubr.bf16.mxu0 0
        %3008 = vmatmul.mubr.bf16.gmra.mrb[0].mxu0 %v2916
        %v3009 = vpop.f32.mrb[0].mxu0
        %v3010 = vadd.f32 0.0, %v3009
        %v3011 = vpop.f32.mrb[0].mxu0
        %v3012 = vpop.f32.mrb[0].mxu0
        %v3013 = vadd.f32 0.0, %v3012
        %v3014 = vpop.f32.mrb[0].mxu0
        %3015 = vdwg.mxu0
        %v3016 = vadd.f32 %v2892, %v3002
        %v3017 = vadd.f32 %v2893, %v3005
        %v3018 = vadd.f32 %v2894, %v3010
        %v3019 = vadd.f32 %v2895, %v3013
        %s3020 = scalar_lea.vmem [#allocation5], 1344
        %v3021 = vld [vmem:[%s3020] sm:$0xf]
        %v3022 = vld [vmem:[%s3020 + $0x4] sm:$0xf]
        %v3023 = vld [vmem:[%s3020 + $0x8] sm:$0xf]
        %v3024 = vld [vmem:[%s3020 + $0xc] sm:$0xf]
        %v3025 = vld [vmem:[%s3020 + $0x10] sm:$0xf]
        %v3026 = vld [vmem:[%s3020 + $0x14] sm:$0xf]
        %v3027 = vld [vmem:[%s3020 + $0x18] sm:$0xf]
        %v3028 = vld [vmem:[%s3020 + $0x1c] sm:$0xf]
        %v3029 = vld [vmem:[%s3020 + $0x20] sm:$0xf]
        %v3030 = vld [vmem:[%s3020 + $0x24] sm:$0xf]
        %v3031 = vld [vmem:[%s3020 + $0x28] sm:$0xf]
        %v3032 = vld [vmem:[%s3020 + $0x2c] sm:$0xf]
        %v3033 = vld [vmem:[%s3020 + $0x30] sm:$0xf]
        %v3034 = vld [vmem:[%s3020 + $0x34] sm:$0xf]
        %v3035 = vld [vmem:[%s3020 + $0x38] sm:$0xf]
        %v3036 = vld [vmem:[%s3020 + $0x3c] sm:$0xf]
        %v3037 = vrot.slane %v2529, 2
        %v3038 = vrot.slane %v2525, 3
        %v3039 = vor.u32 %v3037, %v3038
        %v3040 = vsel %vm980, %v986, %v3039
        %v3041 = vrot.slane %v2787, 2
        %v3042 = vrot.slane %v2533, 3
        %v3043 = vor.u32 %v3041, %v3042
        %v3044 = vsel %vm980, %v3039, %v3043
        %v3063 = vunpack.c.l.b16 %v3021
        %v3064 = vunpack.c.l.b16 %v3022
        %v3065 = vunpack.c.l.b16 %v3023
        %v3066 = vunpack.c.l.b16 %v3024
        %v3067 = vunpack.c.l.b16 %v3025
        %v3068 = vunpack.c.l.b16 %v3026
        %v3069 = vunpack.c.l.b16 %v3027
        %v3070 = vunpack.c.l.b16 %v3028
        %v3071 = vunpack.c.l.b16 %v3029
        %v3072 = vunpack.c.l.b16 %v3030
        %v3073 = vunpack.c.l.b16 %v3031
        %v3074 = vunpack.c.l.b16 %v3032
        %v3075 = vunpack.c.l.b16 %v3033
        %v3076 = vunpack.c.l.b16 %v3034
        %v3077 = vunpack.c.l.b16 %v3035
        %v3078 = vunpack.c.l.b16 %v3036
        %v3079 = vpack.c.b16 %v3064, %v3063
        %v3080 = vpack.c.b16 %v3066, %v3065
        %v3081 = vpack.c.b16 %v3068, %v3067
        %v3082 = vpack.c.b16 %v3070, %v3069
        %v3083 = vpack.c.b16 %v3072, %v3071
        %v3084 = vpack.c.b16 %v3074, %v3073
        %v3085 = vpack.c.b16 %v3076, %v3075
        %v3086 = vpack.c.b16 %v3078, %v3077
        %3095 = vmatprep.subr.bf16.mxu0 0
        %3096 = vmatpush1.bf16.msra.mxu0 %v3079
        %3097 = vmatprep.subr.bf16.mxu0 0
        %3098 = vmatpush1.bf16.msra.mxu0 %v3080
        %3099 = vmatprep.subr.bf16.mxu0 0
        %3100 = vmatpush1.bf16.msra.mxu0 %v3081
        %3101 = vmatprep.subr.bf16.mxu0 0
        %3102 = vmatpush1.bf16.msra.mxu0 %v3082
        %3103 = vmatprep.subr.bf16.mxu0 0
        %3104 = vmatpush1.bf16.msra.mxu0 %v3083
        %3105 = vmatprep.subr.bf16.mxu0 0
        %3106 = vmatpush1.bf16.msra.mxu0 %v3084
        %3107 = vmatprep.subr.bf16.mxu0 0
        %3108 = vmatpush1.bf16.msra.mxu0 %v3085
        %3109 = vmatprep.subr.bf16.mxu0 0
        %3110 = vmatpush1.bf16.msra.mxu0 %v3086
        %3111 = vmatprep.subr.bf16.mxu0 0
        %3112 = vmatpush1.bf16.msra.mxu0 0
        %3113 = vmatprep.subr.bf16.mxu0 0
        %3114 = vmatpush1.bf16.msra.mxu0 0
        %3115 = vmatprep.subr.bf16.mxu0 0
        %3116 = vmatpush1.bf16.msra.mxu0 0
        %3117 = vmatprep.subr.bf16.mxu0 0
        %3118 = vmatpush1.bf16.msra.mxu0 0
        %3119 = vmatprep.subr.bf16.mxu0 0
        %3120 = vmatpush1.bf16.msra.mxu0 0
        %3121 = vmatprep.subr.bf16.mxu0 0
        %3122 = vmatpush1.bf16.msra.mxu0 0
        %3123 = vmatprep.subr.bf16.mxu0 0
        %3124 = vmatpush1.bf16.msra.mxu0 0
        %3125 = vmatprep.subr.bf16.mxu0 0
        %3126 = vmatpush1.bf16.msra.mxu0 0
        %3127 = vmatprep.mubr.bf16.mxu0 0
        %3128 = vmatmul.mubr.bf16.gmra.mrb[0].mxu0 %v3040
        %v3129 = vpop.f32.mrb[0].mxu0
        %v3130 = vadd.f32 0.0, %v3129
        %v3131 = vpop.f32.mrb[0].mxu0
        %v3132 = vpop.f32.mrb[0].mxu0
        %v3133 = vadd.f32 0.0, %v3132
        %v3134 = vpop.f32.mrb[0].mxu0
        %3135 = vmatprep.mubr.bf16.mxu0 0
        %3136 = vmatmul.mubr.bf16.gmra.mrb[0].mxu0 %v3044
        %v3137 = vpop.f32.mrb[0].mxu0
        %v3138 = vadd.f32 0.0, %v3137
        %v3139 = vpop.f32.mrb[0].mxu0
        %v3140 = vpop.f32.mrb[0].mxu0
        %v3141 = vadd.f32 0.0, %v3140
        %v3142 = vpop.f32.mrb[0].mxu0
        %3143 = vdwg.mxu0
        %v3144 = vadd.f32 %v3016, %v3130
        %v3145 = vadd.f32 %v3017, %v3133
        %v3146 = vadd.f32 %v3018, %v3138
        %v3147 = vadd.f32 %v3019, %v3141
        %s3148 = scalar_lea.vmem [#allocation5], 1408
        %v3149 = vld [vmem:[%s3148] sm:$0xf]
        %v3150 = vld [vmem:[%s3148 + $0x4] sm:$0xf]
        %v3151 = vld [vmem:[%s3148 + $0x8] sm:$0xf]
        %v3152 = vld [vmem:[%s3148 + $0xc] sm:$0xf]
        %v3153 = vld [vmem:[%s3148 + $0x10] sm:$0xf]
        %v3154 = vld [vmem:[%s3148 + $0x14] sm:$0xf]
        %v3155 = vld [vmem:[%s3148 + $0x18] sm:$0xf]
        %v3156 = vld [vmem:[%s3148 + $0x1c] sm:$0xf]
        %v3157 = vld [vmem:[%s3148 + $0x20] sm:$0xf]
        %v3158 = vld [vmem:[%s3148 + $0x24] sm:$0xf]
        %v3159 = vld [vmem:[%s3148 + $0x28] sm:$0xf]
        %v3160 = vld [vmem:[%s3148 + $0x2c] sm:$0xf]
        %v3161 = vld [vmem:[%s3148 + $0x30] sm:$0xf]
        %v3162 = vld [vmem:[%s3148 + $0x34] sm:$0xf]
        %v3163 = vld [vmem:[%s3148 + $0x38] sm:$0xf]
        %v3164 = vld [vmem:[%s3148 + $0x3c] sm:$0xf]
        %v3165 = vrot.slane %v2387, 3
        %v3166 = vsel %vm1112, %v1114, %v3165
        %v3167 = vrot.slane %v2506, 3
        %v3168 = vsel %vm1112, %v3165, %v3167
        %v3187 = vunpack.c.l.b16 %v3149
        %v3188 = vunpack.c.l.b16 %v3150
        %v3189 = vunpack.c.l.b16 %v3151
        %v3190 = vunpack.c.l.b16 %v3152
        %v3191 = vunpack.c.l.b16 %v3153
        %v3192 = vunpack.c.l.b16 %v3154
        %v3193 = vunpack.c.l.b16 %v3155
        %v3194 = vunpack.c.l.b16 %v3156
        %v3195 = vunpack.c.l.b16 %v3157
        %v3196 = vunpack.c.l.b16 %v3158
        %v3197 = vunpack.c.l.b16 %v3159
        %v3198 = vunpack.c.l.b16 %v3160
        %v3199 = vunpack.c.l.b16 %v3161
        %v3200 = vunpack.c.l.b16 %v3162
        %v3201 = vunpack.c.l.b16 %v3163
        %v3202 = vunpack.c.l.b16 %v3164
        %v3203 = vpack.c.b16 %v3188, %v3187
        %v3204 = vpack.c.b16 %v3190, %v3189
        %v3205 = vpack.c.b16 %v3192, %v3191
        %v3206 = vpack.c.b16 %v3194, %v3193
        %v3207 = vpack.c.b16 %v3196, %v3195
        %v3208 = vpack.c.b16 %v3198, %v3197
        %v3209 = vpack.c.b16 %v3200, %v3199
        %v3210 = vpack.c.b16 %v3202, %v3201
        %3219 = vmatprep.subr.bf16.mxu0 0
        %3220 = vmatpush1.bf16.msra.mxu0 %v3203
        %3221 = vmatprep.subr.bf16.mxu0 0
        %3222 = vmatpush1.bf16.msra.mxu0 %v3204
        %3223 = vmatprep.subr.bf16.mxu0 0
        %3224 = vmatpush1.bf16.msra.mxu0 %v3205
        %3225 = vmatprep.subr.bf16.mxu0 0
        %3226 = vmatpush1.bf16.msra.mxu0 %v3206
        %3227 = vmatprep.subr.bf16.mxu0 0
        %3228 = vmatpush1.bf16.msra.mxu0 %v3207
        %3229 = vmatprep.subr.bf16.mxu0 0
        %3230 = vmatpush1.bf16.msra.mxu0 %v3208
        %3231 = vmatprep.subr.bf16.mxu0 0
        %3232 = vmatpush1.bf16.msra.mxu0 %v3209
        %3233 = vmatprep.subr.bf16.mxu0 0
        %3234 = vmatpush1.bf16.msra.mxu0 %v3210
        %3235 = vmatprep.subr.bf16.mxu0 0
        %3236 = vmatpush1.bf16.msra.mxu0 0
        %3237 = vmatprep.subr.bf16.mxu0 0
        %3238 = vmatpush1.bf16.msra.mxu0 0
        %3239 = vmatprep.subr.bf16.mxu0 0
        %3240 = vmatpush1.bf16.msra.mxu0 0
        %3241 = vmatprep.subr.bf16.mxu0 0
        %3242 = vmatpush1.bf16.msra.mxu0 0
        %3243 = vmatprep.subr.bf16.mxu0 0
        %3244 = vmatpush1.bf16.msra.mxu0 0
        %3245 = vmatprep.subr.bf16.mxu0 0
        %3246 = vmatpush1.bf16.msra.mxu0 0
        %3247 = vmatprep.subr.bf16.mxu0 0
        %3248 = vmatpush1.bf16.msra.mxu0 0
        %3249 = vmatprep.subr.bf16.mxu0 0
        %3250 = vmatpush1.bf16.msra.mxu0 0
        %3251 = vmatprep.mubr.bf16.mxu0 0
        %3252 = vmatmul.mubr.bf16.gmra.mrb[0].mxu0 %v3166
        %v3253 = vpop.f32.mrb[0].mxu0
        %v3254 = vadd.f32 0.0, %v3253
        %v3255 = vpop.f32.mrb[0].mxu0
        %v3256 = vpop.f32.mrb[0].mxu0
        %v3257 = vadd.f32 0.0, %v3256
        %v3258 = vpop.f32.mrb[0].mxu0
        %3259 = vmatprep.mubr.bf16.mxu0 0
        %3260 = vmatmul.mubr.bf16.gmra.mrb[0].mxu0 %v3168
        %v3261 = vpop.f32.mrb[0].mxu0
        %v3262 = vadd.f32 0.0, %v3261
        %v3263 = vpop.f32.mrb[0].mxu0
        %v3264 = vpop.f32.mrb[0].mxu0
        %v3265 = vadd.f32 0.0, %v3264
        %v3266 = vpop.f32.mrb[0].mxu0
        %3267 = vdwg.mxu0
        %v3268 = vadd.f32 %v3144, %v3254
        %v3269 = vadd.f32 %v3145, %v3257
        %v3270 = vadd.f32 %v3146, %v3262
        %v3271 = vadd.f32 %v3147, %v3265
        %s3272 = scalar_lea.vmem [#allocation5], 1472
        %v3273 = vld [vmem:[%s3272] sm:$0xf]
        %v3274 = vld [vmem:[%s3272 + $0x4] sm:$0xf]
        %v3275 = vld [vmem:[%s3272 + $0x8] sm:$0xf]
        %v3276 = vld [vmem:[%s3272 + $0xc] sm:$0xf]
        %v3277 = vld [vmem:[%s3272 + $0x10] sm:$0xf]
        %v3278 = vld [vmem:[%s3272 + $0x14] sm:$0xf]
        %v3279 = vld [vmem:[%s3272 + $0x18] sm:$0xf]
        %v3280 = vld [vmem:[%s3272 + $0x1c] sm:$0xf]
        %v3281 = vld [vmem:[%s3272 + $0x20] sm:$0xf]
        %v3282 = vld [vmem:[%s3272 + $0x24] sm:$0xf]
        %v3283 = vld [vmem:[%s3272 + $0x28] sm:$0xf]
        %v3284 = vld [vmem:[%s3272 + $0x2c] sm:$0xf]
        %v3285 = vld [vmem:[%s3272 + $0x30] sm:$0xf]
        %v3286 = vld [vmem:[%s3272 + $0x34] sm:$0xf]
        %v3287 = vld [vmem:[%s3272 + $0x38] sm:$0xf]
        %v3288 = vld [vmem:[%s3272 + $0x3c] sm:$0xf]
        %v3289 = vrot.slane %v2529, 3
        %v3290 = vrot.slane %v2525, 4
        %v3291 = vor.u32 %v3289, %v3290
        %v3292 = vsel %vm1238, %v1244, %v3291
        %v3293 = vrot.slane %v2787, 3
        %v3294 = vrot.slane %v2533, 4
        %v3295 = vor.u32 %v3293, %v3294
        %v3296 = vsel %vm1238, %v3291, %v3295
        %v3315 = vunpack.c.l.b16 %v3273
        %v3316 = vunpack.c.l.b16 %v3274
        %v3317 = vunpack.c.l.b16 %v3275
        %v3318 = vunpack.c.l.b16 %v3276
        %v3319 = vunpack.c.l.b16 %v3277
        %v3320 = vunpack.c.l.b16 %v3278
        %v3321 = vunpack.c.l.b16 %v3279
        %v3322 = vunpack.c.l.b16 %v3280
        %v3323 = vunpack.c.l.b16 %v3281
        %v3324 = vunpack.c.l.b16 %v3282
        %v3325 = vunpack.c.l.b16 %v3283
        %v3326 = vunpack.c.l.b16 %v3284
        %v3327 = vunpack.c.l.b16 %v3285
        %v3328 = vunpack.c.l.b16 %v3286
        %v3329 = vunpack.c.l.b16 %v3287
        %v3330 = vunpack.c.l.b16 %v3288
        %v3331 = vpack.c.b16 %v3316, %v3315
        %v3332 = vpack.c.b16 %v3318, %v3317
        %v3333 = vpack.c.b16 %v3320, %v3319
        %v3334 = vpack.c.b16 %v3322, %v3321
        %v3335 = vpack.c.b16 %v3324, %v3323
        %v3336 = vpack.c.b16 %v3326, %v3325
        %v3337 = vpack.c.b16 %v3328, %v3327
        %v3338 = vpack.c.b16 %v3330, %v3329
        %3347 = vmatprep.subr.bf16.mxu0 0
        %3348 = vmatpush1.bf16.msra.mxu0 %v3331
        %3349 = vmatprep.subr.bf16.mxu0 0
        %3350 = vmatpush1.bf16.msra.mxu0 %v3332
        %3351 = vmatprep.subr.bf16.mxu0 0
        %3352 = vmatpush1.bf16.msra.mxu0 %v3333
        %3353 = vmatprep.subr.bf16.mxu0 0
        %3354 = vmatpush1.bf16.msra.mxu0 %v3334
        %3355 = vmatprep.subr.bf16.mxu0 0
        %3356 = vmatpush1.bf16.msra.mxu0 %v3335
        %3357 = vmatprep.subr.bf16.mxu0 0
        %3358 = vmatpush1.bf16.msra.mxu0 %v3336
        %3359 = vmatprep.subr.bf16.mxu0 0
        %3360 = vmatpush1.bf16.msra.mxu0 %v3337
        %3361 = vmatprep.subr.bf16.mxu0 0
        %3362 = vmatpush1.bf16.msra.mxu0 %v3338
        %3363 = vmatprep.subr.bf16.mxu0 0
        %3364 = vmatpush1.bf16.msra.mxu0 0
        %3365 = vmatprep.subr.bf16.mxu0 0
        %3366 = vmatpush1.bf16.msra.mxu0 0
        %3367 = vmatprep.subr.bf16.mxu0 0
        %3368 = vmatpush1.bf16.msra.mxu0 0
        %3369 = vmatprep.subr.bf16.mxu0 0
        %3370 = vmatpush1.bf16.msra.mxu0 0
        %3371 = vmatprep.subr.bf16.mxu0 0
        %3372 = vmatpush1.bf16.msra.mxu0 0
        %3373 = vmatprep.subr.bf16.mxu0 0
        %3374 = vmatpush1.bf16.msra.mxu0 0
        %3375 = vmatprep.subr.bf16.mxu0 0
        %3376 = vmatpush1.bf16.msra.mxu0 0
        %3377 = vmatprep.subr.bf16.mxu0 0
        %3378 = vmatpush1.bf16.msra.mxu0 0
        %3379 = vmatprep.mubr.bf16.mxu0 0
        %3380 = vmatmul.mubr.bf16.gmra.mrb[0].mxu0 %v3292
        %v3381 = vpop.f32.mrb[0].mxu0
        %v3382 = vadd.f32 0.0, %v3381
        %v3383 = vpop.f32.mrb[0].mxu0
        %v3384 = vpop.f32.mrb[0].mxu0
        %v3385 = vadd.f32 0.0, %v3384
        %v3386 = vpop.f32.mrb[0].mxu0
        %3387 = vmatprep.mubr.bf16.mxu0 0
        %3388 = vmatmul.mubr.bf16.gmra.mrb[0].mxu0 %v3296
        %v3389 = vpop.f32.mrb[0].mxu0
        %v3390 = vadd.f32 0.0, %v3389
        %v3391 = vpop.f32.mrb[0].mxu0
        %v3392 = vpop.f32.mrb[0].mxu0
        %v3393 = vadd.f32 0.0, %v3392
        %v3394 = vpop.f32.mrb[0].mxu0
        %3395 = vdwg.mxu0
        %v3396 = vadd.f32 %v3268, %v3382
        %v3397 = vadd.f32 %v3269, %v3385
        %v3398 = vadd.f32 %v3270, %v3390
        %v3399 = vadd.f32 %v3271, %v3393
        %v3400 = vpack.c.bf16 0.0, %v320
        %s3401 = scalar_lea.vmem [#allocation5], 1536
        %v3402 = vld [vmem:[%s3401] sm:$0xf]
        %v3403 = vld [vmem:[%s3401 + $0x4] sm:$0xf]
        %v3404 = vld [vmem:[%s3401 + $0x8] sm:$0xf]
        %v3405 = vld [vmem:[%s3401 + $0xc] sm:$0xf]
        %v3406 = vld [vmem:[%s3401 + $0x10] sm:$0xf]
        %v3407 = vld [vmem:[%s3401 + $0x14] sm:$0xf]
        %v3408 = vld [vmem:[%s3401 + $0x18] sm:$0xf]
        %v3409 = vld [vmem:[%s3401 + $0x1c] sm:$0xf]
        %v3410 = vld [vmem:[%s3401 + $0x20] sm:$0xf]
        %v3411 = vld [vmem:[%s3401 + $0x24] sm:$0xf]
        %v3412 = vld [vmem:[%s3401 + $0x28] sm:$0xf]
        %v3413 = vld [vmem:[%s3401 + $0x2c] sm:$0xf]
        %v3414 = vld [vmem:[%s3401 + $0x30] sm:$0xf]
        %v3415 = vld [vmem:[%s3401 + $0x34] sm:$0xf]
        %v3416 = vld [vmem:[%s3401 + $0x38] sm:$0xf]
        %v3417 = vld [vmem:[%s3401 + $0x3c] sm:$0xf]
        %v3434 = vunpack.c.l.b16 %v3402
        %v3435 = vunpack.c.l.b16 %v3403
        %v3436 = vunpack.c.l.b16 %v3404
        %v3437 = vunpack.c.l.b16 %v3405
        %v3438 = vunpack.c.l.b16 %v3406
        %v3439 = vunpack.c.l.b16 %v3407
        %v3440 = vunpack.c.l.b16 %v3408
        %v3441 = vunpack.c.l.b16 %v3409
        %v3442 = vunpack.c.l.b16 %v3410
        %v3443 = vunpack.c.l.b16 %v3411
        %v3444 = vunpack.c.l.b16 %v3412
        %v3445 = vunpack.c.l.b16 %v3413
        %v3446 = vunpack.c.l.b16 %v3414
        %v3447 = vunpack.c.l.b16 %v3415
        %v3448 = vunpack.c.l.b16 %v3416
        %v3449 = vunpack.c.l.b16 %v3417
        %v3450 = vpack.c.b16 %v3435, %v3434
        %v3451 = vpack.c.b16 %v3437, %v3436
        %v3452 = vpack.c.b16 %v3439, %v3438
        %v3453 = vpack.c.b16 %v3441, %v3440
        %v3454 = vpack.c.b16 %v3443, %v3442
        %v3455 = vpack.c.b16 %v3445, %v3444
        %v3456 = vpack.c.b16 %v3447, %v3446
        %v3457 = vpack.c.b16 %v3449, %v3448
        %3466 = vmatprep.subr.bf16.mxu0 0
        %3467 = vmatpush1.bf16.msra.mxu0 %v3450
        %3468 = vmatprep.subr.bf16.mxu0 0
        %3469 = vmatpush1.bf16.msra.mxu0 %v3451
        %3470 = vmatprep.subr.bf16.mxu0 0
        %3471 = vmatpush1.bf16.msra.mxu0 %v3452
        %3472 = vmatprep.subr.bf16.mxu0 0
        %3473 = vmatpush1.bf16.msra.mxu0 %v3453
        %3474 = vmatprep.subr.bf16.mxu0 0
        %3475 = vmatpush1.bf16.msra.mxu0 %v3454
        %3476 = vmatprep.subr.bf16.mxu0 0
        %3477 = vmatpush1.bf16.msra.mxu0 %v3455
        %3478 = vmatprep.subr.bf16.mxu0 0
        %3479 = vmatpush1.bf16.msra.mxu0 %v3456
        %3480 = vmatprep.subr.bf16.mxu0 0
        %3481 = vmatpush1.bf16.msra.mxu0 %v3457
        %3482 = vmatprep.subr.bf16.mxu0 0
        %3483 = vmatpush1.bf16.msra.mxu0 0
        %3484 = vmatprep.subr.bf16.mxu0 0
        %3485 = vmatpush1.bf16.msra.mxu0 0
        %3486 = vmatprep.subr.bf16.mxu0 0
        %3487 = vmatpush1.bf16.msra.mxu0 0
        %3488 = vmatprep.subr.bf16.mxu0 0
        %3489 = vmatpush1.bf16.msra.mxu0 0
        %3490 = vmatprep.subr.bf16.mxu0 0
        %3491 = vmatpush1.bf16.msra.mxu0 0
        %3492 = vmatprep.subr.bf16.mxu0 0
        %3493 = vmatpush1.bf16.msra.mxu0 0
        %3494 = vmatprep.subr.bf16.mxu0 0
        %3495 = vmatpush1.bf16.msra.mxu0 0
        %3496 = vmatprep.subr.bf16.mxu0 0
        %3497 = vmatpush1.bf16.msra.mxu0 0
        %3498 = vmatprep.mubr.bf16.mxu0 0
        %3499 = vmatmul.mubr.bf16.gmra.mrb[0].mxu0 %v1354
        %v3500 = vpop.f32.mrb[0].mxu0
        %v3501 = vadd.f32 0.0, %v3500
        %v3502 = vpop.f32.mrb[0].mxu0
        %v3503 = vpop.f32.mrb[0].mxu0
        %v3504 = vadd.f32 0.0, %v3503
        %v3505 = vpop.f32.mrb[0].mxu0
        %3506 = vmatprep.mubr.bf16.mxu0 0
        %3507 = vmatmul.mubr.bf16.gmra.mrb[0].mxu0 %v3400
        %v3508 = vpop.f32.mrb[0].mxu0
        %v3509 = vadd.f32 0.0, %v3508
        %v3510 = vpop.f32.mrb[0].mxu0
        %v3511 = vpop.f32.mrb[0].mxu0
        %v3512 = vadd.f32 0.0, %v3511
        %v3513 = vpop.f32.mrb[0].mxu0
        %3514 = vdwg.mxu0
        %v3515 = vadd.f32 %v3396, %v3501
        %v3516 = vadd.f32 %v3397, %v3504
        %v3517 = vadd.f32 %v3398, %v3509
        %v3518 = vadd.f32 %v3399, %v3512
        %s3519 = scalar_lea.vmem [#allocation5], 1600
        %v3520 = vld [vmem:[%s3519] sm:$0xf]
        %v3521 = vld [vmem:[%s3519 + $0x4] sm:$0xf]
        %v3522 = vld [vmem:[%s3519 + $0x8] sm:$0xf]
        %v3523 = vld [vmem:[%s3519 + $0xc] sm:$0xf]
        %v3524 = vld [vmem:[%s3519 + $0x10] sm:$0xf]
        %v3525 = vld [vmem:[%s3519 + $0x14] sm:$0xf]
        %v3526 = vld [vmem:[%s3519 + $0x18] sm:$0xf]
        %v3527 = vld [vmem:[%s3519 + $0x1c] sm:$0xf]
        %v3528 = vld [vmem:[%s3519 + $0x20] sm:$0xf]
        %v3529 = vld [vmem:[%s3519 + $0x24] sm:$0xf]
        %v3530 = vld [vmem:[%s3519 + $0x28] sm:$0xf]
        %v3531 = vld [vmem:[%s3519 + $0x2c] sm:$0xf]
        %v3532 = vld [vmem:[%s3519 + $0x30] sm:$0xf]
        %v3533 = vld [vmem:[%s3519 + $0x34] sm:$0xf]
        %v3534 = vld [vmem:[%s3519 + $0x38] sm:$0xf]
        %v3535 = vld [vmem:[%s3519 + $0x3c] sm:$0xf]
        %v3537 = vshll.u32 %v3400, 16
        %v3539 = vrot.slane %v3537, 1
        %v3540 = vsel %vm357, %v1505, %v3539
        %v3541 = vshrl.u32 %v3400, 16
        %v3543 = vor.u32 %v3541, %v3539
        %v3544 = vsel %vm357, %v3543, %v2535
        %v3563 = vunpack.c.l.b16 %v3520
        %v3564 = vunpack.c.l.b16 %v3521
        %v3565 = vunpack.c.l.b16 %v3522
        %v3566 = vunpack.c.l.b16 %v3523
        %v3567 = vunpack.c.l.b16 %v3524
        %v3568 = vunpack.c.l.b16 %v3525
        %v3569 = vunpack.c.l.b16 %v3526
        %v3570 = vunpack.c.l.b16 %v3527
        %v3571 = vunpack.c.l.b16 %v3528
        %v3572 = vunpack.c.l.b16 %v3529
        %v3573 = vunpack.c.l.b16 %v3530
        %v3574 = vunpack.c.l.b16 %v3531
        %v3575 = vunpack.c.l.b16 %v3532
        %v3576 = vunpack.c.l.b16 %v3533
        %v3577 = vunpack.c.l.b16 %v3534
        %v3578 = vunpack.c.l.b16 %v3535
        %v3579 = vpack.c.b16 %v3564, %v3563
        %v3580 = vpack.c.b16 %v3566, %v3565
        %v3581 = vpack.c.b16 %v3568, %v3567
        %v3582 = vpack.c.b16 %v3570, %v3569
        %v3583 = vpack.c.b16 %v3572, %v3571
        %v3584 = vpack.c.b16 %v3574, %v3573
        %v3585 = vpack.c.b16 %v3576, %v3575
        %v3586 = vpack.c.b16 %v3578, %v3577
        %3595 = vmatprep.subr.bf16.mxu0 0
        %3596 = vmatpush1.bf16.msra.mxu0 %v3579
        %3597 = vmatprep.subr.bf16.mxu0 0
        %3598 = vmatpush1.bf16.msra.mxu0 %v3580
        %3599 = vmatprep.subr.bf16.mxu0 0
        %3600 = vmatpush1.bf16.msra.mxu0 %v3581
        %3601 = vmatprep.subr.bf16.mxu0 0
        %3602 = vmatpush1.bf16.msra.mxu0 %v3582
        %3603 = vmatprep.subr.bf16.mxu0 0
        %3604 = vmatpush1.bf16.msra.mxu0 %v3583
        %3605 = vmatprep.subr.bf16.mxu0 0
        %3606 = vmatpush1.bf16.msra.mxu0 %v3584
        %3607 = vmatprep.subr.bf16.mxu0 0
        %3608 = vmatpush1.bf16.msra.mxu0 %v3585
        %3609 = vmatprep.subr.bf16.mxu0 0
        %3610 = vmatpush1.bf16.msra.mxu0 %v3586
        %3611 = vmatprep.subr.bf16.mxu0 0
        %3612 = vmatpush1.bf16.msra.mxu0 0
        %3613 = vmatprep.subr.bf16.mxu0 0
        %3614 = vmatpush1.bf16.msra.mxu0 0
        %3615 = vmatprep.subr.bf16.mxu0 0
        %3616 = vmatpush1.bf16.msra.mxu0 0
        %3617 = vmatprep.subr.bf16.mxu0 0
        %3618 = vmatpush1.bf16.msra.mxu0 0
        %3619 = vmatprep.subr.bf16.mxu0 0
        %3620 = vmatpush1.bf16.msra.mxu0 0
        %3621 = vmatprep.subr.bf16.mxu0 0
        %3622 = vmatpush1.bf16.msra.mxu0 0
        %3623 = vmatprep.subr.bf16.mxu0 0
        %3624 = vmatpush1.bf16.msra.mxu0 0
        %3625 = vmatprep.subr.bf16.mxu0 0
        %3626 = vmatpush1.bf16.msra.mxu0 0
        %3627 = vmatprep.mubr.bf16.mxu0 0
        %3628 = vmatmul.mubr.bf16.gmra.mrb[0].mxu0 %v3540
        %v3629 = vpop.f32.mrb[0].mxu0
        %v3630 = vadd.f32 0.0, %v3629
        %v3631 = vpop.f32.mrb[0].mxu0
        %v3632 = vpop.f32.mrb[0].mxu0
        %v3633 = vadd.f32 0.0, %v3632
        %v3634 = vpop.f32.mrb[0].mxu0
        %3635 = vmatprep.mubr.bf16.mxu0 0
        %3636 = vmatmul.mubr.bf16.gmra.mrb[0].mxu0 %v3544
        %v3637 = vpop.f32.mrb[0].mxu0
        %v3638 = vadd.f32 0.0, %v3637
        %v3639 = vpop.f32.mrb[0].mxu0
        %v3640 = vpop.f32.mrb[0].mxu0
        %v3641 = vadd.f32 0.0, %v3640
        %v3642 = vpop.f32.mrb[0].mxu0
        %3643 = vdwg.mxu0
        %v3644 = vadd.f32 %v3515, %v3630
        %v3645 = vadd.f32 %v3516, %v3633
        %v3646 = vadd.f32 %v3517, %v3638
        %v3647 = vadd.f32 %v3518, %v3641
        %s3648 = scalar_lea.vmem [#allocation5], 1664
        %v3649 = vld [vmem:[%s3648] sm:$0xf]
        %v3650 = vld [vmem:[%s3648 + $0x4] sm:$0xf]
        %v3651 = vld [vmem:[%s3648 + $0x8] sm:$0xf]
        %v3652 = vld [vmem:[%s3648 + $0xc] sm:$0xf]
        %v3653 = vld [vmem:[%s3648 + $0x10] sm:$0xf]
        %v3654 = vld [vmem:[%s3648 + $0x14] sm:$0xf]
        %v3655 = vld [vmem:[%s3648 + $0x18] sm:$0xf]
        %v3656 = vld [vmem:[%s3648 + $0x1c] sm:$0xf]
        %v3657 = vld [vmem:[%s3648 + $0x20] sm:$0xf]
        %v3658 = vld [vmem:[%s3648 + $0x24] sm:$0xf]
        %v3659 = vld [vmem:[%s3648 + $0x28] sm:$0xf]
        %v3660 = vld [vmem:[%s3648 + $0x2c] sm:$0xf]
        %v3661 = vld [vmem:[%s3648 + $0x30] sm:$0xf]
        %v3662 = vld [vmem:[%s3648 + $0x34] sm:$0xf]
        %v3663 = vld [vmem:[%s3648 + $0x38] sm:$0xf]
        %v3664 = vld [vmem:[%s3648 + $0x3c] sm:$0xf]
        %v3666 = vrot.slane %v3400, 1
        %v3667 = vsel %vm594, %v1635, %v3666
        %v3668 = vsel %vm594, %v3666, %v2661
        %v3687 = vunpack.c.l.b16 %v3649
        %v3688 = vunpack.c.l.b16 %v3650
        %v3689 = vunpack.c.l.b16 %v3651
        %v3690 = vunpack.c.l.b16 %v3652
        %v3691 = vunpack.c.l.b16 %v3653
        %v3692 = vunpack.c.l.b16 %v3654
        %v3693 = vunpack.c.l.b16 %v3655
        %v3694 = vunpack.c.l.b16 %v3656
        %v3695 = vunpack.c.l.b16 %v3657
        %v3696 = vunpack.c.l.b16 %v3658
        %v3697 = vunpack.c.l.b16 %v3659
        %v3698 = vunpack.c.l.b16 %v3660
        %v3699 = vunpack.c.l.b16 %v3661
        %v3700 = vunpack.c.l.b16 %v3662
        %v3701 = vunpack.c.l.b16 %v3663
        %v3702 = vunpack.c.l.b16 %v3664
        %v3703 = vpack.c.b16 %v3688, %v3687
        %v3704 = vpack.c.b16 %v3690, %v3689
        %v3705 = vpack.c.b16 %v3692, %v3691
        %v3706 = vpack.c.b16 %v3694, %v3693
        %v3707 = vpack.c.b16 %v3696, %v3695
        %v3708 = vpack.c.b16 %v3698, %v3697
        %v3709 = vpack.c.b16 %v3700, %v3699
        %v3710 = vpack.c.b16 %v3702, %v3701
        %3719 = vmatprep.subr.bf16.mxu0 0
        %3720 = vmatpush1.bf16.msra.mxu0 %v3703
        %3721 = vmatprep.subr.bf16.mxu0 0
        %3722 = vmatpush1.bf16.msra.mxu0 %v3704
        %3723 = vmatprep.subr.bf16.mxu0 0
        %3724 = vmatpush1.bf16.msra.mxu0 %v3705
        %3725 = vmatprep.subr.bf16.mxu0 0
        %3726 = vmatpush1.bf16.msra.mxu0 %v3706
        %3727 = vmatprep.subr.bf16.mxu0 0
        %3728 = vmatpush1.bf16.msra.mxu0 %v3707
        %3729 = vmatprep.subr.bf16.mxu0 0
        %3730 = vmatpush1.bf16.msra.mxu0 %v3708
        %3731 = vmatprep.subr.bf16.mxu0 0
        %3732 = vmatpush1.bf16.msra.mxu0 %v3709
        %3733 = vmatprep.subr.bf16.mxu0 0
        %3734 = vmatpush1.bf16.msra.mxu0 %v3710
        %3735 = vmatprep.subr.bf16.mxu0 0
        %3736 = vmatpush1.bf16.msra.mxu0 0
        %3737 = vmatprep.subr.bf16.mxu0 0
        %3738 = vmatpush1.bf16.msra.mxu0 0
        %3739 = vmatprep.subr.bf16.mxu0 0
        %3740 = vmatpush1.bf16.msra.mxu0 0
        %3741 = vmatprep.subr.bf16.mxu0 0
        %3742 = vmatpush1.bf16.msra.mxu0 0
        %3743 = vmatprep.subr.bf16.mxu0 0
        %3744 = vmatpush1.bf16.msra.mxu0 0
        %3745 = vmatprep.subr.bf16.mxu0 0
        %3746 = vmatpush1.bf16.msra.mxu0 0
        %3747 = vmatprep.subr.bf16.mxu0 0
        %3748 = vmatpush1.bf16.msra.mxu0 0
        %3749 = vmatprep.subr.bf16.mxu0 0
        %3750 = vmatpush1.bf16.msra.mxu0 0
        %3751 = vmatprep.mubr.bf16.mxu0 0
        %3752 = vmatmul.mubr.bf16.gmra.mrb[0].mxu0 %v3667
        %v3753 = vpop.f32.mrb[0].mxu0
        %v3754 = vadd.f32 0.0, %v3753
        %v3755 = vpop.f32.mrb[0].mxu0
        %v3756 = vpop.f32.mrb[0].mxu0
        %v3757 = vadd.f32 0.0, %v3756
        %v3758 = vpop.f32.mrb[0].mxu0
        %3759 = vmatprep.mubr.bf16.mxu0 0
        %3760 = vmatmul.mubr.bf16.gmra.mrb[0].mxu0 %v3668
        %v3761 = vpop.f32.mrb[0].mxu0
        %v3762 = vadd.f32 0.0, %v3761
        %v3763 = vpop.f32.mrb[0].mxu0
        %v3764 = vpop.f32.mrb[0].mxu0
        %v3765 = vadd.f32 0.0, %v3764
        %v3766 = vpop.f32.mrb[0].mxu0
        %3767 = vdwg.mxu0
        %v3768 = vadd.f32 %v3644, %v3754
        %v3769 = vadd.f32 %v3645, %v3757
        %v3770 = vadd.f32 %v3646, %v3762
        %v3771 = vadd.f32 %v3647, %v3765
        %s3772 = scalar_lea.vmem [#allocation5], 1728
        %v3773 = vld [vmem:[%s3772] sm:$0xf]
        %v3774 = vld [vmem:[%s3772 + $0x4] sm:$0xf]
        %v3775 = vld [vmem:[%s3772 + $0x8] sm:$0xf]
        %v3776 = vld [vmem:[%s3772 + $0xc] sm:$0xf]
        %v3777 = vld [vmem:[%s3772 + $0x10] sm:$0xf]
        %v3778 = vld [vmem:[%s3772 + $0x14] sm:$0xf]
        %v3779 = vld [vmem:[%s3772 + $0x18] sm:$0xf]
        %v3780 = vld [vmem:[%s3772 + $0x1c] sm:$0xf]
        %v3781 = vld [vmem:[%s3772 + $0x20] sm:$0xf]
        %v3782 = vld [vmem:[%s3772 + $0x24] sm:$0xf]
        %v3783 = vld [vmem:[%s3772 + $0x28] sm:$0xf]
        %v3784 = vld [vmem:[%s3772 + $0x2c] sm:$0xf]
        %v3785 = vld [vmem:[%s3772 + $0x30] sm:$0xf]
        %v3786 = vld [vmem:[%s3772 + $0x34] sm:$0xf]
        %v3787 = vld [vmem:[%s3772 + $0x38] sm:$0xf]
        %v3788 = vld [vmem:[%s3772 + $0x3c] sm:$0xf]
        %v3789 = vrot.slane %v3541, 1
        %v3790 = vrot.slane %v3537, 2
        %v3791 = vor.u32 %v3789, %v3790
        %v3792 = vsel %vm720, %v1764, %v3791
        %v3793 = vsel %vm720, %v3791, %v2791
        %v3812 = vunpack.c.l.b16 %v3773
        %v3813 = vunpack.c.l.b16 %v3774
        %v3814 = vunpack.c.l.b16 %v3775
        %v3815 = vunpack.c.l.b16 %v3776
        %v3816 = vunpack.c.l.b16 %v3777
        %v3817 = vunpack.c.l.b16 %v3778
        %v3818 = vunpack.c.l.b16 %v3779
        %v3819 = vunpack.c.l.b16 %v3780
        %v3820 = vunpack.c.l.b16 %v3781
        %v3821 = vunpack.c.l.b16 %v3782
        %v3822 = vunpack.c.l.b16 %v3783
        %v3823 = vunpack.c.l.b16 %v3784
        %v3824 = vunpack.c.l.b16 %v3785
        %v3825 = vunpack.c.l.b16 %v3786
        %v3826 = vunpack.c.l.b16 %v3787
        %v3827 = vunpack.c.l.b16 %v3788
        %v3828 = vpack.c.b16 %v3813, %v3812
        %v3829 = vpack.c.b16 %v3815, %v3814
        %v3830 = vpack.c.b16 %v3817, %v3816
        %v3831 = vpack.c.b16 %v3819, %v3818
        %v3832 = vpack.c.b16 %v3821, %v3820
        %v3833 = vpack.c.b16 %v3823, %v3822
        %v3834 = vpack.c.b16 %v3825, %v3824
        %v3835 = vpack.c.b16 %v3827, %v3826
        %3844 = vmatprep.subr.bf16.mxu0 0
        %3845 = vmatpush1.bf16.msra.mxu0 %v3828
        %3846 = vmatprep.subr.bf16.mxu0 0
        %3847 = vmatpush1.bf16.msra.mxu0 %v3829
        %3848 = vmatprep.subr.bf16.mxu0 0
        %3849 = vmatpush1.bf16.msra.mxu0 %v3830
        %3850 = vmatprep.subr.bf16.mxu0 0
        %3851 = vmatpush1.bf16.msra.mxu0 %v3831
        %3852 = vmatprep.subr.bf16.mxu0 0
        %3853 = vmatpush1.bf16.msra.mxu0 %v3832
        %3854 = vmatprep.subr.bf16.mxu0 0
        %3855 = vmatpush1.bf16.msra.mxu0 %v3833
        %3856 = vmatprep.subr.bf16.mxu0 0
        %3857 = vmatpush1.bf16.msra.mxu0 %v3834
        %3858 = vmatprep.subr.bf16.mxu0 0
        %3859 = vmatpush1.bf16.msra.mxu0 %v3835
        %3860 = vmatprep.subr.bf16.mxu0 0
        %3861 = vmatpush1.bf16.msra.mxu0 0
        %3862 = vmatprep.subr.bf16.mxu0 0
        %3863 = vmatpush1.bf16.msra.mxu0 0
        %3864 = vmatprep.subr.bf16.mxu0 0
        %3865 = vmatpush1.bf16.msra.mxu0 0
        %3866 = vmatprep.subr.bf16.mxu0 0
        %3867 = vmatpush1.bf16.msra.mxu0 0
        %3868 = vmatprep.subr.bf16.mxu0 0
        %3869 = vmatpush1.bf16.msra.mxu0 0
        %3870 = vmatprep.subr.bf16.mxu0 0
        %3871 = vmatpush1.bf16.msra.mxu0 0
        %3872 = vmatprep.subr.bf16.mxu0 0
        %3873 = vmatpush1.bf16.msra.mxu0 0
        %3874 = vmatprep.subr.bf16.mxu0 0
        %3875 = vmatpush1.bf16.msra.mxu0 0
        %3876 = vmatprep.mubr.bf16.mxu0 0
        %3877 = vmatmul.mubr.bf16.gmra.mrb[0].mxu0 %v3792
        %v3878 = vpop.f32.mrb[0].mxu0
        %v3879 = vadd.f32 0.0, %v3878
        %v3880 = vpop.f32.mrb[0].mxu0
        %v3881 = vpop.f32.mrb[0].mxu0
        %v3882 = vadd.f32 0.0, %v3881
        %v3883 = vpop.f32.mrb[0].mxu0
        %3884 = vmatprep.mubr.bf16.mxu0 0
        %3885 = vmatmul.mubr.bf16.gmra.mrb[0].mxu0 %v3793
        %v3886 = vpop.f32.mrb[0].mxu0
        %v3887 = vadd.f32 0.0, %v3886
        %v3888 = vpop.f32.mrb[0].mxu0
        %v3889 = vpop.f32.mrb[0].mxu0
        %v3890 = vadd.f32 0.0, %v3889
        %v3891 = vpop.f32.mrb[0].mxu0
        %3892 = vdwg.mxu0
        %v3893 = vadd.f32 %v3768, %v3879
        %v3894 = vadd.f32 %v3769, %v3882
        %v3895 = vadd.f32 %v3770, %v3887
        %v3896 = vadd.f32 %v3771, %v3890
        %s3897 = scalar_lea.vmem [#allocation5], 1792
        %v3898 = vld [vmem:[%s3897] sm:$0xf]
        %v3899 = vld [vmem:[%s3897 + $0x4] sm:$0xf]
        %v3900 = vld [vmem:[%s3897 + $0x8] sm:$0xf]
        %v3901 = vld [vmem:[%s3897 + $0xc] sm:$0xf]
        %v3902 = vld [vmem:[%s3897 + $0x10] sm:$0xf]
        %v3903 = vld [vmem:[%s3897 + $0x14] sm:$0xf]
        %v3904 = vld [vmem:[%s3897 + $0x18] sm:$0xf]
        %v3905 = vld [vmem:[%s3897 + $0x1c] sm:$0xf]
        %v3906 = vld [vmem:[%s3897 + $0x20] sm:$0xf]
        %v3907 = vld [vmem:[%s3897 + $0x24] sm:$0xf]
        %v3908 = vld [vmem:[%s3897 + $0x28] sm:$0xf]
        %v3909 = vld [vmem:[%s3897 + $0x2c] sm:$0xf]
        %v3910 = vld [vmem:[%s3897 + $0x30] sm:$0xf]
        %v3911 = vld [vmem:[%s3897 + $0x34] sm:$0xf]
        %v3912 = vld [vmem:[%s3897 + $0x38] sm:$0xf]
        %v3913 = vld [vmem:[%s3897 + $0x3c] sm:$0xf]
        %v3914 = vrot.slane %v3400, 2
        %v3915 = vsel %vm854, %v1893, %v3914
        %v3916 = vsel %vm854, %v3914, %v2915
        %v3935 = vunpack.c.l.b16 %v3898
        %v3936 = vunpack.c.l.b16 %v3899
        %v3937 = vunpack.c.l.b16 %v3900
        %v3938 = vunpack.c.l.b16 %v3901
        %v3939 = vunpack.c.l.b16 %v3902
        %v3940 = vunpack.c.l.b16 %v3903
        %v3941 = vunpack.c.l.b16 %v3904
        %v3942 = vunpack.c.l.b16 %v3905
        %v3943 = vunpack.c.l.b16 %v3906
        %v3944 = vunpack.c.l.b16 %v3907
        %v3945 = vunpack.c.l.b16 %v3908
        %v3946 = vunpack.c.l.b16 %v3909
        %v3947 = vunpack.c.l.b16 %v3910
        %v3948 = vunpack.c.l.b16 %v3911
        %v3949 = vunpack.c.l.b16 %v3912
        %v3950 = vunpack.c.l.b16 %v3913
        %v3951 = vpack.c.b16 %v3936, %v3935
        %v3952 = vpack.c.b16 %v3938, %v3937
        %v3953 = vpack.c.b16 %v3940, %v3939
        %v3954 = vpack.c.b16 %v3942, %v3941
        %v3955 = vpack.c.b16 %v3944, %v3943
        %v3956 = vpack.c.b16 %v3946, %v3945
        %v3957 = vpack.c.b16 %v3948, %v3947
        %v3958 = vpack.c.b16 %v3950, %v3949
        %3967 = vmatprep.subr.bf16.mxu0 0
        %3968 = vmatpush1.bf16.msra.mxu0 %v3951
        %3969 = vmatprep.subr.bf16.mxu0 0
        %3970 = vmatpush1.bf16.msra.mxu0 %v3952
        %3971 = vmatprep.subr.bf16.mxu0 0
        %3972 = vmatpush1.bf16.msra.mxu0 %v3953
        %3973 = vmatprep.subr.bf16.mxu0 0
        %3974 = vmatpush1.bf16.msra.mxu0 %v3954
        %3975 = vmatprep.subr.bf16.mxu0 0
        %3976 = vmatpush1.bf16.msra.mxu0 %v3955
        %3977 = vmatprep.subr.bf16.mxu0 0
        %3978 = vmatpush1.bf16.msra.mxu0 %v3956
        %3979 = vmatprep.subr.bf16.mxu0 0
        %3980 = vmatpush1.bf16.msra.mxu0 %v3957
        %3981 = vmatprep.subr.bf16.mxu0 0
        %3982 = vmatpush1.bf16.msra.mxu0 %v3958
        %3983 = vmatprep.subr.bf16.mxu0 0
        %3984 = vmatpush1.bf16.msra.mxu0 0
        %3985 = vmatprep.subr.bf16.mxu0 0
        %3986 = vmatpush1.bf16.msra.mxu0 0
        %3987 = vmatprep.subr.bf16.mxu0 0
        %3988 = vmatpush1.bf16.msra.mxu0 0
        %3989 = vmatprep.subr.bf16.mxu0 0
        %3990 = vmatpush1.bf16.msra.mxu0 0
        %3991 = vmatprep.subr.bf16.mxu0 0
        %3992 = vmatpush1.bf16.msra.mxu0 0
        %3993 = vmatprep.subr.bf16.mxu0 0
        %3994 = vmatpush1.bf16.msra.mxu0 0
        %3995 = vmatprep.subr.bf16.mxu0 0
        %3996 = vmatpush1.bf16.msra.mxu0 0
        %3997 = vmatprep.subr.bf16.mxu0 0
        %3998 = vmatpush1.bf16.msra.mxu0 0
        %3999 = vmatprep.mubr.bf16.mxu0 0
        %4000 = vmatmul.mubr.bf16.gmra.mrb[0].mxu0 %v3915
        %v4001 = vpop.f32.mrb[0].mxu0
        %v4002 = vadd.f32 0.0, %v4001
        %v4003 = vpop.f32.mrb[0].mxu0
        %v4004 = vpop.f32.mrb[0].mxu0
        %v4005 = vadd.f32 0.0, %v4004
        %v4006 = vpop.f32.mrb[0].mxu0
        %4007 = vmatprep.mubr.bf16.mxu0 0
        %4008 = vmatmul.mubr.bf16.gmra.mrb[0].mxu0 %v3916
        %v4009 = vpop.f32.mrb[0].mxu0
        %v4010 = vadd.f32 0.0, %v4009
        %v4011 = vpop.f32.mrb[0].mxu0
        %v4012 = vpop.f32.mrb[0].mxu0
        %v4013 = vadd.f32 0.0, %v4012
        %v4014 = vpop.f32.mrb[0].mxu0
        %4015 = vdwg.mxu0
        %v4016 = vadd.f32 %v3893, %v4002
        %v4017 = vadd.f32 %v3894, %v4005
        %v4018 = vadd.f32 %v3895, %v4010
        %v4019 = vadd.f32 %v3896, %v4013
        %s4020 = scalar_lea.vmem [#allocation5], 1856
        %v4021 = vld [vmem:[%s4020] sm:$0xf]
        %v4022 = vld [vmem:[%s4020 + $0x4] sm:$0xf]
        %v4023 = vld [vmem:[%s4020 + $0x8] sm:$0xf]
        %v4024 = vld [vmem:[%s4020 + $0xc] sm:$0xf]
        %v4025 = vld [vmem:[%s4020 + $0x10] sm:$0xf]
        %v4026 = vld [vmem:[%s4020 + $0x14] sm:$0xf]
        %v4027 = vld [vmem:[%s4020 + $0x18] sm:$0xf]
        %v4028 = vld [vmem:[%s4020 + $0x1c] sm:$0xf]
        %v4029 = vld [vmem:[%s4020 + $0x20] sm:$0xf]
        %v4030 = vld [vmem:[%s4020 + $0x24] sm:$0xf]
        %v4031 = vld [vmem:[%s4020 + $0x28] sm:$0xf]
        %v4032 = vld [vmem:[%s4020 + $0x2c] sm:$0xf]
        %v4033 = vld [vmem:[%s4020 + $0x30] sm:$0xf]
        %v4034 = vld [vmem:[%s4020 + $0x34] sm:$0xf]
        %v4035 = vld [vmem:[%s4020 + $0x38] sm:$0xf]
        %v4036 = vld [vmem:[%s4020 + $0x3c] sm:$0xf]
        %v4037 = vrot.slane %v3541, 2
        %v4038 = vrot.slane %v3537, 3
        %v4039 = vor.u32 %v4037, %v4038
        %v4040 = vsel %vm980, %v2022, %v4039
        %v4041 = vsel %vm980, %v4039, %v3043
        %v4060 = vunpack.c.l.b16 %v4021
        %v4061 = vunpack.c.l.b16 %v4022
        %v4062 = vunpack.c.l.b16 %v4023
        %v4063 = vunpack.c.l.b16 %v4024
        %v4064 = vunpack.c.l.b16 %v4025
        %v4065 = vunpack.c.l.b16 %v4026
        %v4066 = vunpack.c.l.b16 %v4027
        %v4067 = vunpack.c.l.b16 %v4028
        %v4068 = vunpack.c.l.b16 %v4029
        %v4069 = vunpack.c.l.b16 %v4030
        %v4070 = vunpack.c.l.b16 %v4031
        %v4071 = vunpack.c.l.b16 %v4032
        %v4072 = vunpack.c.l.b16 %v4033
        %v4073 = vunpack.c.l.b16 %v4034
        %v4074 = vunpack.c.l.b16 %v4035
        %v4075 = vunpack.c.l.b16 %v4036
        %v4076 = vpack.c.b16 %v4061, %v4060
        %v4077 = vpack.c.b16 %v4063, %v4062
        %v4078 = vpack.c.b16 %v4065, %v4064
        %v4079 = vpack.c.b16 %v4067, %v4066
        %v4080 = vpack.c.b16 %v4069, %v4068
        %v4081 = vpack.c.b16 %v4071, %v4070
        %v4082 = vpack.c.b16 %v4073, %v4072
        %v4083 = vpack.c.b16 %v4075, %v4074
        %4092 = vmatprep.subr.bf16.mxu0 0
        %4093 = vmatpush1.bf16.msra.mxu0 %v4076
        %4094 = vmatprep.subr.bf16.mxu0 0
        %4095 = vmatpush1.bf16.msra.mxu0 %v4077
        %4096 = vmatprep.subr.bf16.mxu0 0
        %4097 = vmatpush1.bf16.msra.mxu0 %v4078
        %4098 = vmatprep.subr.bf16.mxu0 0
        %4099 = vmatpush1.bf16.msra.mxu0 %v4079
        %4100 = vmatprep.subr.bf16.mxu0 0
        %4101 = vmatpush1.bf16.msra.mxu0 %v4080
        %4102 = vmatprep.subr.bf16.mxu0 0
        %4103 = vmatpush1.bf16.msra.mxu0 %v4081
        %4104 = vmatprep.subr.bf16.mxu0 0
        %4105 = vmatpush1.bf16.msra.mxu0 %v4082
        %4106 = vmatprep.subr.bf16.mxu0 0
        %4107 = vmatpush1.bf16.msra.mxu0 %v4083
        %4108 = vmatprep.subr.bf16.mxu0 0
        %4109 = vmatpush1.bf16.msra.mxu0 0
        %4110 = vmatprep.subr.bf16.mxu0 0
        %4111 = vmatpush1.bf16.msra.mxu0 0
        %4112 = vmatprep.subr.bf16.mxu0 0
        %4113 = vmatpush1.bf16.msra.mxu0 0
        %4114 = vmatprep.subr.bf16.mxu0 0
        %4115 = vmatpush1.bf16.msra.mxu0 0
        %4116 = vmatprep.subr.bf16.mxu0 0
        %4117 = vmatpush1.bf16.msra.mxu0 0
        %4118 = vmatprep.subr.bf16.mxu0 0
        %4119 = vmatpush1.bf16.msra.mxu0 0
        %4120 = vmatprep.subr.bf16.mxu0 0
        %4121 = vmatpush1.bf16.msra.mxu0 0
        %4122 = vmatprep.subr.bf16.mxu0 0
        %4123 = vmatpush1.bf16.msra.mxu0 0
        %4124 = vmatprep.mubr.bf16.mxu0 0
        %4125 = vmatmul.mubr.bf16.gmra.mrb[0].mxu0 %v4040
        %v4126 = vpop.f32.mrb[0].mxu0
        %v4127 = vadd.f32 0.0, %v4126
        %v4128 = vpop.f32.mrb[0].mxu0
        %v4129 = vpop.f32.mrb[0].mxu0
        %v4130 = vadd.f32 0.0, %v4129
        %v4131 = vpop.f32.mrb[0].mxu0
        %4132 = vmatprep.mubr.bf16.mxu0 0
        %4133 = vmatmul.mubr.bf16.gmra.mrb[0].mxu0 %v4041
        %v4134 = vpop.f32.mrb[0].mxu0
        %v4135 = vadd.f32 0.0, %v4134
        %v4136 = vpop.f32.mrb[0].mxu0
        %v4137 = vpop.f32.mrb[0].mxu0
        %v4138 = vadd.f32 0.0, %v4137
        %v4139 = vpop.f32.mrb[0].mxu0
        %4140 = vdwg.mxu0
        %v4141 = vadd.f32 %v4016, %v4127
        %v4142 = vadd.f32 %v4017, %v4130
        %v4143 = vadd.f32 %v4018, %v4135
        %v4144 = vadd.f32 %v4019, %v4138
        %s4145 = scalar_lea.vmem [#allocation5], 1920
        %v4146 = vld [vmem:[%s4145] sm:$0xf]
        %v4147 = vld [vmem:[%s4145 + $0x4] sm:$0xf]
        %v4148 = vld [vmem:[%s4145 + $0x8] sm:$0xf]
        %v4149 = vld [vmem:[%s4145 + $0xc] sm:$0xf]
        %v4150 = vld [vmem:[%s4145 + $0x10] sm:$0xf]
        %v4151 = vld [vmem:[%s4145 + $0x14] sm:$0xf]
        %v4152 = vld [vmem:[%s4145 + $0x18] sm:$0xf]
        %v4153 = vld [vmem:[%s4145 + $0x1c] sm:$0xf]
        %v4154 = vld [vmem:[%s4145 + $0x20] sm:$0xf]
        %v4155 = vld [vmem:[%s4145 + $0x24] sm:$0xf]
        %v4156 = vld [vmem:[%s4145 + $0x28] sm:$0xf]
        %v4157 = vld [vmem:[%s4145 + $0x2c] sm:$0xf]
        %v4158 = vld [vmem:[%s4145 + $0x30] sm:$0xf]
        %v4159 = vld [vmem:[%s4145 + $0x34] sm:$0xf]
        %v4160 = vld [vmem:[%s4145 + $0x38] sm:$0xf]
        %v4161 = vld [vmem:[%s4145 + $0x3c] sm:$0xf]
        %v4162 = vrot.slane %v3400, 3
        %v4163 = vsel %vm1112, %v2149, %v4162
        %v4164 = vsel %vm1112, %v4162, %v3167
        %v4183 = vunpack.c.l.b16 %v4146
        %v4184 = vunpack.c.l.b16 %v4147
        %v4185 = vunpack.c.l.b16 %v4148
        %v4186 = vunpack.c.l.b16 %v4149
        %v4187 = vunpack.c.l.b16 %v4150
        %v4188 = vunpack.c.l.b16 %v4151
        %v4189 = vunpack.c.l.b16 %v4152
        %v4190 = vunpack.c.l.b16 %v4153
        %v4191 = vunpack.c.l.b16 %v4154
        %v4192 = vunpack.c.l.b16 %v4155
        %v4193 = vunpack.c.l.b16 %v4156
        %v4194 = vunpack.c.l.b16 %v4157
        %v4195 = vunpack.c.l.b16 %v4158
        %v4196 = vunpack.c.l.b16 %v4159
        %v4197 = vunpack.c.l.b16 %v4160
        %v4198 = vunpack.c.l.b16 %v4161
        %v4199 = vpack.c.b16 %v4184, %v4183
        %v4200 = vpack.c.b16 %v4186, %v4185
        %v4201 = vpack.c.b16 %v4188, %v4187
        %v4202 = vpack.c.b16 %v4190, %v4189
        %v4203 = vpack.c.b16 %v4192, %v4191
        %v4204 = vpack.c.b16 %v4194, %v4193
        %v4205 = vpack.c.b16 %v4196, %v4195
        %v4206 = vpack.c.b16 %v4198, %v4197
        %4215 = vmatprep.subr.bf16.mxu0 0
        %4216 = vmatpush1.bf16.msra.mxu0 %v4199
        %4217 = vmatprep.subr.bf16.mxu0 0
        %4218 = vmatpush1.bf16.msra.mxu0 %v4200
        %4219 = vmatprep.subr.bf16.mxu0 0
        %4220 = vmatpush1.bf16.msra.mxu0 %v4201
        %4221 = vmatprep.subr.bf16.mxu0 0
        %4222 = vmatpush1.bf16.msra.mxu0 %v4202
        %4223 = vmatprep.subr.bf16.mxu0 0
        %4224 = vmatpush1.bf16.msra.mxu0 %v4203
        %4225 = vmatprep.subr.bf16.mxu0 0
        %4226 = vmatpush1.bf16.msra.mxu0 %v4204
        %4227 = vmatprep.subr.bf16.mxu0 0
        %4228 = vmatpush1.bf16.msra.mxu0 %v4205
        %4229 = vmatprep.subr.bf16.mxu0 0
        %4230 = vmatpush1.bf16.msra.mxu0 %v4206
        %4231 = vmatprep.subr.bf16.mxu0 0
        %4232 = vmatpush1.bf16.msra.mxu0 0
        %4233 = vmatprep.subr.bf16.mxu0 0
        %4234 = vmatpush1.bf16.msra.mxu0 0
        %4235 = vmatprep.subr.bf16.mxu0 0
        %4236 = vmatpush1.bf16.msra.mxu0 0
        %4237 = vmatprep.subr.bf16.mxu0 0
        %4238 = vmatpush1.bf16.msra.mxu0 0
        %4239 = vmatprep.subr.bf16.mxu0 0
        %4240 = vmatpush1.bf16.msra.mxu0 0
        %4241 = vmatprep.subr.bf16.mxu0 0
        %4242 = vmatpush1.bf16.msra.mxu0 0
        %4243 = vmatprep.subr.bf16.mxu0 0
        %4244 = vmatpush1.bf16.msra.mxu0 0
        %4245 = vmatprep.subr.bf16.mxu0 0
        %4246 = vmatpush1.bf16.msra.mxu0 0
        %4247 = vmatprep.mubr.bf16.mxu0 0
        %4248 = vmatmul.mubr.bf16.gmra.mrb[0].mxu0 %v4163
        %v4249 = vpop.f32.mrb[0].mxu0
        %v4250 = vadd.f32 0.0, %v4249
        %v4251 = vpop.f32.mrb[0].mxu0
        %v4252 = vpop.f32.mrb[0].mxu0
        %v4253 = vadd.f32 0.0, %v4252
        %v4254 = vpop.f32.mrb[0].mxu0
        %4255 = vmatprep.mubr.bf16.mxu0 0
        %4256 = vmatmul.mubr.bf16.gmra.mrb[0].mxu0 %v4164
        %v4257 = vpop.f32.mrb[0].mxu0
        %v4258 = vadd.f32 0.0, %v4257
        %v4259 = vpop.f32.mrb[0].mxu0
        %v4260 = vpop.f32.mrb[0].mxu0
        %v4261 = vadd.f32 0.0, %v4260
        %v4262 = vpop.f32.mrb[0].mxu0
        %4263 = vdwg.mxu0
        %v4264 = vadd.f32 %v4141, %v4250
        %v4265 = vadd.f32 %v4142, %v4253
        %v4266 = vadd.f32 %v4143, %v4258
        %v4267 = vadd.f32 %v4144, %v4261
        %v4268 = vld [vmem:[#allocation7] sm:$0x1]
        %v4270 = vlaneseq
        %v4271 = vshrl.u32 %v4270, 7
        %v4272 = vsub.s32 0, %v4271
        %v4273 = vrot.slane %v4268, %v4272
        %v4275 = vadd.f32 %v4264, %v4273
        %v4276 = vadd.f32 %v4265, %v4273
        %v4277 = vadd.f32 %v4266, %v4273
        %v4278 = vadd.f32 %v4267, %v4273
        %v4279 = vmax.f32 %v4275, 0.0
        %v4280 = vmax.f32 %v4276, 0.0
        %v4281 = vmax.f32 %v4277, 0.0
        %v4282 = vmax.f32 %v4278, 0.0
        %v4283 = vand.u32 2147483647, %v4275
        %v4284 = vand.u32 2147483647, %v4276
        %v4285 = vand.u32 2147483647, %v4277
        %v4286 = vand.u32 2147483647, %v4278
        %v4287 = vsub.f32 0.0, %v4283
        %v4288 = vsub.f32 0.0, %v4284
        %v4289 = vsub.f32 0.0, %v4285
        %v4290 = vsub.f32 0.0, %v4286
        %v4291 = vmul.f32 %v4287, 1.442695
        %v4292 = vpow.pop %v4291
        %v4293 = vmul.f32 %v4288, 1.442695
        %v4294 = vpow.pop %v4293
        %v4295 = vmul.f32 %v4289, 1.442695
        %v4296 = vpow.pop %v4295
        %v4297 = vmul.f32 %v4290, 1.442695
        %v4298 = vpow.pop %v4297
        %v4299 = vadd.f32 %v4292, 1.0
        %v4300 = vadd.f32 %v4294, 1.0
        %v4301 = vadd.f32 %v4296, 1.0
        %v4302 = vadd.f32 %v4298, 1.0
        %v4303 = vlog2.pop %v4299
        %v4304 = vmul.f32 %v4303, 0.6931472
        %v4305 = vlog2.pop %v4300
        %v4306 = vmul.f32 %v4305, 0.6931472
        %v4307 = vlog2.pop %v4301
        %v4308 = vmul.f32 %v4307, 0.6931472
        %v4309 = vlog2.pop %v4302
        %v4310 = vmul.f32 %v4309, 0.6931472
        %v4311 = vadd.f32 %v4279, %v4304
        %v4312 = vadd.f32 %v4280, %v4306
        %v4313 = vadd.f32 %v4281, %v4308
        %v4314 = vadd.f32 %v4282, %v4310
        %v4315 = vtanh.pop %v4311
        %v4316 = vtanh.pop %v4312
        %v4317 = vtanh.pop %v4313
        %v4318 = vtanh.pop %v4314
        %v4319 = vmul.f32 %v4275, %v4315
        %v4320 = vmul.f32 %v4276, %v4316
        %v4321 = vmul.f32 %v4277, %v4317
        %v4322 = vmul.f32 %v4278, %v4318
        %v4327 = vrot.slane %v4319, 1
        %v4328 = vrot.slane %v4320, 1
        %v4329 = vsel %vm306, %v4327, %v4328
        %v4330 = vrot.slane %v4321, 1
        %v4331 = vsel %vm306, %v4328, %v4330
        %v4332 = vrot.slane %v4322, 1
        %v4333 = vsel %vm306, %v4330, %v4332
        %v4339 = vsel %vm306, 0.0, %v4327
        %v4340 = vsel %vm306, %v4332, 0.0
        %v4341 = vpack.c.bf16 %v4339, 0.0
        %v4342 = vpack.c.bf16 %v4331, %v4329
        %v4343 = vld [vmem:[#allocation8] sm:$0xf]
        %v4344 = vld [vmem:[#allocation8 + $0x4] sm:$0xf]
        %v4345 = vld [vmem:[#allocation8 + $0x8] sm:$0xf]
        %v4346 = vld [vmem:[#allocation8 + $0xc] sm:$0xf]
        %v4347 = vld [vmem:[#allocation8 + $0x10] sm:$0xf]
        %v4348 = vld [vmem:[#allocation8 + $0x14] sm:$0xf]
        %v4349 = vld [vmem:[#allocation8 + $0x18] sm:$0xf]
        %v4350 = vld [vmem:[#allocation8 + $0x1c] sm:$0xf]
        %v4351 = vld [vmem:[#allocation8 + $0x20] sm:$0xf]
        %v4352 = vld [vmem:[#allocation8 + $0x24] sm:$0xf]
        %v4353 = vld [vmem:[#allocation8 + $0x28] sm:$0xf]
        %v4354 = vld [vmem:[#allocation8 + $0x2c] sm:$0xf]
        %v4355 = vld [vmem:[#allocation8 + $0x30] sm:$0xf]
        %v4356 = vld [vmem:[#allocation8 + $0x34] sm:$0xf]
        %v4357 = vld [vmem:[#allocation8 + $0x38] sm:$0xf]
        %v4358 = vld [vmem:[#allocation8 + $0x3c] sm:$0xf]
        %v4359 = vpack.c.bf16 %v4333, %v4333
        %s4360 = scalar_lea.vmem [#allocation8], 64
        %v4361 = vld [vmem:[%s4360] sm:$0xf]
        %v4362 = vld [vmem:[%s4360 + $0x4] sm:$0xf]
        %v4363 = vld [vmem:[%s4360 + $0x8] sm:$0xf]
        %v4364 = vld [vmem:[%s4360 + $0xc] sm:$0xf]
        %v4365 = vld [vmem:[%s4360 + $0x10] sm:$0xf]
        %v4366 = vld [vmem:[%s4360 + $0x14] sm:$0xf]
        %v4367 = vld [vmem:[%s4360 + $0x18] sm:$0xf]
        %v4368 = vld [vmem:[%s4360 + $0x1c] sm:$0xf]
        %v4369 = vld [vmem:[%s4360 + $0x20] sm:$0xf]
        %v4370 = vld [vmem:[%s4360 + $0x24] sm:$0xf]
        %v4371 = vld [vmem:[%s4360 + $0x28] sm:$0xf]
        %v4372 = vld [vmem:[%s4360 + $0x2c] sm:$0xf]
        %v4373 = vld [vmem:[%s4360 + $0x30] sm:$0xf]
        %v4374 = vld [vmem:[%s4360 + $0x34] sm:$0xf]
        %v4375 = vld [vmem:[%s4360 + $0x38] sm:$0xf]
        %v4376 = vld [vmem:[%s4360 + $0x3c] sm:$0xf]
        %v4378 = vshrl.u32 %v4341, 16
        %v4380 = vshll.u32 %v4341, 16
        %v4382 = vrot.slane %v4380, 1
        %v4383 = vor.u32 %v4378, %v4382
        %v4385 = vshll.u32 %v4342, 16
        %v4387 = vrot.slane %v4385, 1
        %v4388 = vsel %vm357, %v4383, %v4387
        %v4389 = vshrl.u32 %v4342, 16
        %v4391 = vor.u32 %v4389, %v4387
        %v4393 = vshll.u32 %v4359, 16
        %v4395 = vrot.slane %v4393, 1
        %v4396 = vsel %vm357, %v4391, %v4395
        %v4415 = vunpack.c.l.b16 %v4361
        %v4416 = vunpack.c.l.b16 %v4362
        %v4417 = vunpack.c.l.b16 %v4363
        %v4418 = vunpack.c.l.b16 %v4364
        %v4419 = vunpack.c.l.b16 %v4365
        %v4420 = vunpack.c.l.b16 %v4366
        %v4421 = vunpack.c.l.b16 %v4367
        %v4422 = vunpack.c.l.b16 %v4368
        %v4423 = vunpack.c.l.b16 %v4369
        %v4424 = vunpack.c.l.b16 %v4370
        %v4425 = vunpack.c.l.b16 %v4371
        %v4426 = vunpack.c.l.b16 %v4372
        %v4427 = vunpack.c.l.b16 %v4373
        %v4428 = vunpack.c.l.b16 %v4374
        %v4429 = vunpack.c.l.b16 %v4375
        %v4430 = vunpack.c.l.b16 %v4376
        %v4431 = vpack.c.b16 %v4416, %v4415
        %v4432 = vpack.c.b16 %v4418, %v4417
        %v4433 = vpack.c.b16 %v4420, %v4419
        %v4434 = vpack.c.b16 %v4422, %v4421
        %v4435 = vpack.c.b16 %v4424, %v4423
        %v4436 = vpack.c.b16 %v4426, %v4425
        %v4437 = vpack.c.b16 %v4428, %v4427
        %v4438 = vpack.c.b16 %v4430, %v4429
        %4447 = vmatprep.subr.bf16.mxu0 0
        %4448 = vmatpush1.bf16.msra.mxu0 %v4431
        %4449 = vmatprep.subr.bf16.mxu0 0
        %4450 = vmatpush1.bf16.msra.mxu0 %v4432
        %4451 = vmatprep.subr.bf16.mxu0 0
        %4452 = vmatpush1.bf16.msra.mxu0 %v4433
        %4453 = vmatprep.subr.bf16.mxu0 0
        %4454 = vmatpush1.bf16.msra.mxu0 %v4434
        %4455 = vmatprep.subr.bf16.mxu0 0
        %4456 = vmatpush1.bf16.msra.mxu0 %v4435
        %4457 = vmatprep.subr.bf16.mxu0 0
        %4458 = vmatpush1.bf16.msra.mxu0 %v4436
        %4459 = vmatprep.subr.bf16.mxu0 0
        %4460 = vmatpush1.bf16.msra.mxu0 %v4437
        %4461 = vmatprep.subr.bf16.mxu0 0
        %4462 = vmatpush1.bf16.msra.mxu0 %v4438
        %4463 = vmatprep.subr.bf16.mxu0 0
        %4464 = vmatpush1.bf16.msra.mxu0 0
        %4465 = vmatprep.subr.bf16.mxu0 0
        %4466 = vmatpush1.bf16.msra.mxu0 0
        %4467 = vmatprep.subr.bf16.mxu0 0
        %4468 = vmatpush1.bf16.msra.mxu0 0
        %4469 = vmatprep.subr.bf16.mxu0 0
        %4470 = vmatpush1.bf16.msra.mxu0 0
        %4471 = vmatprep.subr.bf16.mxu0 0
        %4472 = vmatpush1.bf16.msra.mxu0 0
        %4473 = vmatprep.subr.bf16.mxu0 0
        %4474 = vmatpush1.bf16.msra.mxu0 0
        %4475 = vmatprep.subr.bf16.mxu0 0
        %4476 = vmatpush1.bf16.msra.mxu0 0
        %4477 = vmatprep.subr.bf16.mxu0 0
        %4478 = vmatpush1.bf16.msra.mxu0 0
        %4479 = vmatprep.mubr.bf16.mxu0 0
        %4480 = vmatmul.mubr.bf16.gmra.mrb[0].mxu0 %v4388
        %v4481 = vpop.f32.mrb[0].mxu0
        %v4482 = vadd.f32 0.0, %v4481
        %v4483 = vpop.f32.mrb[0].mxu0
        %v4484 = vpop.f32.mrb[0].mxu0
        %v4485 = vadd.f32 0.0, %v4484
        %v4486 = vpop.f32.mrb[0].mxu0
        %4487 = vmatprep.mubr.bf16.mxu0 0
        %4488 = vmatmul.mubr.bf16.gmra.mrb[0].mxu0 %v4396
        %v4489 = vpop.f32.mrb[0].mxu0
        %v4490 = vadd.f32 0.0, %v4489
        %v4491 = vpop.f32.mrb[0].mxu0
        %v4492 = vpop.f32.mrb[0].mxu0
        %v4493 = vadd.f32 0.0, %v4492
        %v4494 = vpop.f32.mrb[0].mxu0
        %4495 = vdwg.mxu0
        %v4512 = vunpack.c.l.b16 %v4343
        %v4513 = vunpack.c.l.b16 %v4344
        %v4514 = vunpack.c.l.b16 %v4345
        %v4515 = vunpack.c.l.b16 %v4346
        %v4516 = vunpack.c.l.b16 %v4347
        %v4517 = vunpack.c.l.b16 %v4348
        %v4518 = vunpack.c.l.b16 %v4349
        %v4519 = vunpack.c.l.b16 %v4350
        %v4520 = vunpack.c.l.b16 %v4351
        %v4521 = vunpack.c.l.b16 %v4352
        %v4522 = vunpack.c.l.b16 %v4353
        %v4523 = vunpack.c.l.b16 %v4354
        %v4524 = vunpack.c.l.b16 %v4355
        %v4525 = vunpack.c.l.b16 %v4356
        %v4526 = vunpack.c.l.b16 %v4357
        %v4527 = vunpack.c.l.b16 %v4358
        %v4528 = vpack.c.b16 %v4513, %v4512
        %v4529 = vpack.c.b16 %v4515, %v4514
        %v4530 = vpack.c.b16 %v4517, %v4516
        %v4531 = vpack.c.b16 %v4519, %v4518
        %v4532 = vpack.c.b16 %v4521, %v4520
        %v4533 = vpack.c.b16 %v4523, %v4522
        %v4534 = vpack.c.b16 %v4525, %v4524
        %v4535 = vpack.c.b16 %v4527, %v4526
        %4544 = vmatprep.subr.bf16.mxu0 0
        %4545 = vmatpush1.bf16.msra.mxu0 %v4528
        %4546 = vmatprep.subr.bf16.mxu0 0
        %4547 = vmatpush1.bf16.msra.mxu0 %v4529
        %4548 = vmatprep.subr.bf16.mxu0 0
        %4549 = vmatpush1.bf16.msra.mxu0 %v4530
        %4550 = vmatprep.subr.bf16.mxu0 0
        %4551 = vmatpush1.bf16.msra.mxu0 %v4531
        %4552 = vmatprep.subr.bf16.mxu0 0
        %4553 = vmatpush1.bf16.msra.mxu0 %v4532
        %4554 = vmatprep.subr.bf16.mxu0 0
        %4555 = vmatpush1.bf16.msra.mxu0 %v4533
        %4556 = vmatprep.subr.bf16.mxu0 0
        %4557 = vmatpush1.bf16.msra.mxu0 %v4534
        %4558 = vmatprep.subr.bf16.mxu0 0
        %4559 = vmatpush1.bf16.msra.mxu0 %v4535
        %4560 = vmatprep.subr.bf16.mxu0 0
        %4561 = vmatpush1.bf16.msra.mxu0 0
        %4562 = vmatprep.subr.bf16.mxu0 0
        %4563 = vmatpush1.bf16.msra.mxu0 0
        %4564 = vmatprep.subr.bf16.mxu0 0
        %4565 = vmatpush1.bf16.msra.mxu0 0
        %4566 = vmatprep.subr.bf16.mxu0 0
        %4567 = vmatpush1.bf16.msra.mxu0 0
        %4568 = vmatprep.subr.bf16.mxu0 0
        %4569 = vmatpush1.bf16.msra.mxu0 0
        %4570 = vmatprep.subr.bf16.mxu0 0
        %4571 = vmatpush1.bf16.msra.mxu0 0
        %4572 = vmatprep.subr.bf16.mxu0 0
        %4573 = vmatpush1.bf16.msra.mxu0 0
        %4574 = vmatprep.subr.bf16.mxu0 0
        %4575 = vmatpush1.bf16.msra.mxu0 0
        %4576 = vmatprep.mubr.bf16.mxu0 0
        %4577 = vmatmul.mubr.bf16.gmra.mrb[0].mxu0 %v4341
        %v4578 = vpop.f32.mrb[0].mxu0
        %v4579 = vadd.f32 %v4482, %v4578
        %v4580 = vpop.f32.mrb[0].mxu0
        %v4581 = vpop.f32.mrb[0].mxu0
        %v4582 = vadd.f32 %v4485, %v4581
        %v4583 = vpop.f32.mrb[0].mxu0
        %4584 = vmatprep.mubr.bf16.mxu0 0
        %4585 = vmatmul.mubr.bf16.gmra.mrb[0].mxu0 %v4342
        %v4586 = vpop.f32.mrb[0].mxu0
        %v4587 = vadd.f32 %v4490, %v4586
        %v4588 = vpop.f32.mrb[0].mxu0
        %v4589 = vpop.f32.mrb[0].mxu0
        %v4590 = vadd.f32 %v4493, %v4589
        %v4591 = vpop.f32.mrb[0].mxu0
        %4592 = vdwg.mxu0
        %s4593 = scalar_lea.vmem [#allocation8], 128
        %v4594 = vld [vmem:[%s4593] sm:$0xf]
        %v4595 = vld [vmem:[%s4593 + $0x4] sm:$0xf]
        %v4596 = vld [vmem:[%s4593 + $0x8] sm:$0xf]
        %v4597 = vld [vmem:[%s4593 + $0xc] sm:$0xf]
        %v4598 = vld [vmem:[%s4593 + $0x10] sm:$0xf]
        %v4599 = vld [vmem:[%s4593 + $0x14] sm:$0xf]
        %v4600 = vld [vmem:[%s4593 + $0x18] sm:$0xf]
        %v4601 = vld [vmem:[%s4593 + $0x1c] sm:$0xf]
        %v4602 = vld [vmem:[%s4593 + $0x20] sm:$0xf]
        %v4603 = vld [vmem:[%s4593 + $0x24] sm:$0xf]
        %v4604 = vld [vmem:[%s4593 + $0x28] sm:$0xf]
        %v4605 = vld [vmem:[%s4593 + $0x2c] sm:$0xf]
        %v4606 = vld [vmem:[%s4593 + $0x30] sm:$0xf]
        %v4607 = vld [vmem:[%s4593 + $0x34] sm:$0xf]
        %v4608 = vld [vmem:[%s4593 + $0x38] sm:$0xf]
        %v4609 = vld [vmem:[%s4593 + $0x3c] sm:$0xf]
        %v4613 = vrot.slane %v4341, 1
        %v4614 = vrot.slane %v4342, 1
        %v4615 = vsel %vm594, %v4613, %v4614
        %v4616 = vrot.slane %v4359, 1
        %v4617 = vsel %vm594, %v4614, %v4616
        %v4636 = vunpack.c.l.b16 %v4594
        %v4637 = vunpack.c.l.b16 %v4595
        %v4638 = vunpack.c.l.b16 %v4596
        %v4639 = vunpack.c.l.b16 %v4597
        %v4640 = vunpack.c.l.b16 %v4598
        %v4641 = vunpack.c.l.b16 %v4599
        %v4642 = vunpack.c.l.b16 %v4600
        %v4643 = vunpack.c.l.b16 %v4601
        %v4644 = vunpack.c.l.b16 %v4602
        %v4645 = vunpack.c.l.b16 %v4603
        %v4646 = vunpack.c.l.b16 %v4604
        %v4647 = vunpack.c.l.b16 %v4605
        %v4648 = vunpack.c.l.b16 %v4606
        %v4649 = vunpack.c.l.b16 %v4607
        %v4650 = vunpack.c.l.b16 %v4608
        %v4651 = vunpack.c.l.b16 %v4609
        %v4652 = vpack.c.b16 %v4637, %v4636
        %v4653 = vpack.c.b16 %v4639, %v4638
        %v4654 = vpack.c.b16 %v4641, %v4640
        %v4655 = vpack.c.b16 %v4643, %v4642
        %v4656 = vpack.c.b16 %v4645, %v4644
        %v4657 = vpack.c.b16 %v4647, %v4646
        %v4658 = vpack.c.b16 %v4649, %v4648
        %v4659 = vpack.c.b16 %v4651, %v4650
        %4668 = vmatprep.subr.bf16.mxu0 0
        %4669 = vmatpush1.bf16.msra.mxu0 %v4652
        %4670 = vmatprep.subr.bf16.mxu0 0
        %4671 = vmatpush1.bf16.msra.mxu0 %v4653
        %4672 = vmatprep.subr.bf16.mxu0 0
        %4673 = vmatpush1.bf16.msra.mxu0 %v4654
        %4674 = vmatprep.subr.bf16.mxu0 0
        %4675 = vmatpush1.bf16.msra.mxu0 %v4655
        %4676 = vmatprep.subr.bf16.mxu0 0
        %4677 = vmatpush1.bf16.msra.mxu0 %v4656
        %4678 = vmatprep.subr.bf16.mxu0 0
        %4679 = vmatpush1.bf16.msra.mxu0 %v4657
        %4680 = vmatprep.subr.bf16.mxu0 0
        %4681 = vmatpush1.bf16.msra.mxu0 %v4658
        %4682 = vmatprep.subr.bf16.mxu0 0
        %4683 = vmatpush1.bf16.msra.mxu0 %v4659
        %4684 = vmatprep.subr.bf16.mxu0 0
        %4685 = vmatpush1.bf16.msra.mxu0 0
        %4686 = vmatprep.subr.bf16.mxu0 0
        %4687 = vmatpush1.bf16.msra.mxu0 0
        %4688 = vmatprep.subr.bf16.mxu0 0
        %4689 = vmatpush1.bf16.msra.mxu0 0
        %4690 = vmatprep.subr.bf16.mxu0 0
        %4691 = vmatpush1.bf16.msra.mxu0 0
        %4692 = vmatprep.subr.bf16.mxu0 0
        %4693 = vmatpush1.bf16.msra.mxu0 0
        %4694 = vmatprep.subr.bf16.mxu0 0
        %4695 = vmatpush1.bf16.msra.mxu0 0
        %4696 = vmatprep.subr.bf16.mxu0 0
        %4697 = vmatpush1.bf16.msra.mxu0 0
        %4698 = vmatprep.subr.bf16.mxu0 0
        %4699 = vmatpush1.bf16.msra.mxu0 0
        %4700 = vmatprep.mubr.bf16.mxu0 0
        %4701 = vmatmul.mubr.bf16.gmra.mrb[0].mxu0 %v4615
        %v4702 = vpop.f32.mrb[0].mxu0
        %v4703 = vadd.f32 0.0, %v4702
        %v4704 = vpop.f32.mrb[0].mxu0
        %v4705 = vpop.f32.mrb[0].mxu0
        %v4706 = vadd.f32 0.0, %v4705
        %v4707 = vpop.f32.mrb[0].mxu0
        %4708 = vmatprep.mubr.bf16.mxu0 0
        %4709 = vmatmul.mubr.bf16.gmra.mrb[0].mxu0 %v4617
        %v4710 = vpop.f32.mrb[0].mxu0
        %v4711 = vadd.f32 0.0, %v4710
        %v4712 = vpop.f32.mrb[0].mxu0
        %v4713 = vpop.f32.mrb[0].mxu0
        %v4714 = vadd.f32 0.0, %v4713
        %v4715 = vpop.f32.mrb[0].mxu0
        %4716 = vdwg.mxu0
        %v4717 = vadd.f32 %v4579, %v4703
        %v4718 = vadd.f32 %v4582, %v4706
        %v4719 = vadd.f32 %v4587, %v4711
        %v4720 = vadd.f32 %v4590, %v4714
        %s4721 = scalar_lea.vmem [#allocation8], 192
        %v4722 = vld [vmem:[%s4721] sm:$0xf]
        %v4723 = vld [vmem:[%s4721 + $0x4] sm:$0xf]
        %v4724 = vld [vmem:[%s4721 + $0x8] sm:$0xf]
        %v4725 = vld [vmem:[%s4721 + $0xc] sm:$0xf]
        %v4726 = vld [vmem:[%s4721 + $0x10] sm:$0xf]
        %v4727 = vld [vmem:[%s4721 + $0x14] sm:$0xf]
        %v4728 = vld [vmem:[%s4721 + $0x18] sm:$0xf]
        %v4729 = vld [vmem:[%s4721 + $0x1c] sm:$0xf]
        %v4730 = vld [vmem:[%s4721 + $0x20] sm:$0xf]
        %v4731 = vld [vmem:[%s4721 + $0x24] sm:$0xf]
        %v4732 = vld [vmem:[%s4721 + $0x28] sm:$0xf]
        %v4733 = vld [vmem:[%s4721 + $0x2c] sm:$0xf]
        %v4734 = vld [vmem:[%s4721 + $0x30] sm:$0xf]
        %v4735 = vld [vmem:[%s4721 + $0x34] sm:$0xf]
        %v4736 = vld [vmem:[%s4721 + $0x38] sm:$0xf]
        %v4737 = vld [vmem:[%s4721 + $0x3c] sm:$0xf]
        %v4738 = vrot.slane %v4378, 1
        %v4739 = vrot.slane %v4380, 2
        %v4740 = vor.u32 %v4738, %v4739
        %v4741 = vrot.slane %v4389, 1
        %v4742 = vrot.slane %v4385, 2
        %v4743 = vor.u32 %v4741, %v4742
        %v4744 = vsel %vm720, %v4740, %v4743
        %v4745 = vshrl.u32 %v4359, 16
        %v4747 = vrot.slane %v4745, 1
        %v4748 = vrot.slane %v4393, 2
        %v4749 = vor.u32 %v4747, %v4748
        %v4750 = vsel %vm720, %v4743, %v4749
        %v4769 = vunpack.c.l.b16 %v4722
        %v4770 = vunpack.c.l.b16 %v4723
        %v4771 = vunpack.c.l.b16 %v4724
        %v4772 = vunpack.c.l.b16 %v4725
        %v4773 = vunpack.c.l.b16 %v4726
        %v4774 = vunpack.c.l.b16 %v4727
        %v4775 = vunpack.c.l.b16 %v4728
        %v4776 = vunpack.c.l.b16 %v4729
        %v4777 = vunpack.c.l.b16 %v4730
        %v4778 = vunpack.c.l.b16 %v4731
        %v4779 = vunpack.c.l.b16 %v4732
        %v4780 = vunpack.c.l.b16 %v4733
        %v4781 = vunpack.c.l.b16 %v4734
        %v4782 = vunpack.c.l.b16 %v4735
        %v4783 = vunpack.c.l.b16 %v4736
        %v4784 = vunpack.c.l.b16 %v4737
        %v4785 = vpack.c.b16 %v4770, %v4769
        %v4786 = vpack.c.b16 %v4772, %v4771
        %v4787 = vpack.c.b16 %v4774, %v4773
        %v4788 = vpack.c.b16 %v4776, %v4775
        %v4789 = vpack.c.b16 %v4778, %v4777
        %v4790 = vpack.c.b16 %v4780, %v4779
        %v4791 = vpack.c.b16 %v4782, %v4781
        %v4792 = vpack.c.b16 %v4784, %v4783
        %4801 = vmatprep.subr.bf16.mxu0 0
        %4802 = vmatpush1.bf16.msra.mxu0 %v4785
        %4803 = vmatprep.subr.bf16.mxu0 0
        %4804 = vmatpush1.bf16.msra.mxu0 %v4786
        %4805 = vmatprep.subr.bf16.mxu0 0
        %4806 = vmatpush1.bf16.msra.mxu0 %v4787
        %4807 = vmatprep.subr.bf16.mxu0 0
        %4808 = vmatpush1.bf16.msra.mxu0 %v4788
        %4809 = vmatprep.subr.bf16.mxu0 0
        %4810 = vmatpush1.bf16.msra.mxu0 %v4789
        %4811 = vmatprep.subr.bf16.mxu0 0
        %4812 = vmatpush1.bf16.msra.mxu0 %v4790
        %4813 = vmatprep.subr.bf16.mxu0 0
        %4814 = vmatpush1.bf16.msra.mxu0 %v4791
        %4815 = vmatprep.subr.bf16.mxu0 0
        %4816 = vmatpush1.bf16.msra.mxu0 %v4792
        %4817 = vmatprep.subr.bf16.mxu0 0
        %4818 = vmatpush1.bf16.msra.mxu0 0
        %4819 = vmatprep.subr.bf16.mxu0 0
        %4820 = vmatpush1.bf16.msra.mxu0 0
        %4821 = vmatprep.subr.bf16.mxu0 0
        %4822 = vmatpush1.bf16.msra.mxu0 0
        %4823 = vmatprep.subr.bf16.mxu0 0
        %4824 = vmatpush1.bf16.msra.mxu0 0
        %4825 = vmatprep.subr.bf16.mxu0 0
        %4826 = vmatpush1.bf16.msra.mxu0 0
        %4827 = vmatprep.subr.bf16.mxu0 0
        %4828 = vmatpush1.bf16.msra.mxu0 0
        %4829 = vmatprep.subr.bf16.mxu0 0
        %4830 = vmatpush1.bf16.msra.mxu0 0
        %4831 = vmatprep.subr.bf16.mxu0 0
        %4832 = vmatpush1.bf16.msra.mxu0 0
        %4833 = vmatprep.mubr.bf16.mxu0 0
        %4834 = vmatmul.mubr.bf16.gmra.mrb[0].mxu0 %v4744
        %v4835 = vpop.f32.mrb[0].mxu0
        %v4836 = vadd.f32 0.0, %v4835
        %v4837 = vpop.f32.mrb[0].mxu0
        %v4838 = vpop.f32.mrb[0].mxu0
        %v4839 = vadd.f32 0.0, %v4838
        %v4840 = vpop.f32.mrb[0].mxu0
        %4841 = vmatprep.mubr.bf16.mxu0 0
        %4842 = vmatmul.mubr.bf16.gmra.mrb[0].mxu0 %v4750
        %v4843 = vpop.f32.mrb[0].mxu0
        %v4844 = vadd.f32 0.0, %v4843
        %v4845 = vpop.f32.mrb[0].mxu0
        %v4846 = vpop.f32.mrb[0].mxu0
        %v4847 = vadd.f32 0.0, %v4846
        %v4848 = vpop.f32.mrb[0].mxu0
        %4849 = vdwg.mxu0
        %v4850 = vadd.f32 %v4717, %v4836
        %v4851 = vadd.f32 %v4718, %v4839
        %v4852 = vadd.f32 %v4719, %v4844
        %v4853 = vadd.f32 %v4720, %v4847
        %s4854 = scalar_lea.vmem [#allocation8], 256
        %v4855 = vld [vmem:[%s4854] sm:$0xf]
        %v4856 = vld [vmem:[%s4854 + $0x4] sm:$0xf]
        %v4857 = vld [vmem:[%s4854 + $0x8] sm:$0xf]
        %v4858 = vld [vmem:[%s4854 + $0xc] sm:$0xf]
        %v4859 = vld [vmem:[%s4854 + $0x10] sm:$0xf]
        %v4860 = vld [vmem:[%s4854 + $0x14] sm:$0xf]
        %v4861 = vld [vmem:[%s4854 + $0x18] sm:$0xf]
        %v4862 = vld [vmem:[%s4854 + $0x1c] sm:$0xf]
        %v4863 = vld [vmem:[%s4854 + $0x20] sm:$0xf]
        %v4864 = vld [vmem:[%s4854 + $0x24] sm:$0xf]
        %v4865 = vld [vmem:[%s4854 + $0x28] sm:$0xf]
        %v4866 = vld [vmem:[%s4854 + $0x2c] sm:$0xf]
        %v4867 = vld [vmem:[%s4854 + $0x30] sm:$0xf]
        %v4868 = vld [vmem:[%s4854 + $0x34] sm:$0xf]
        %v4869 = vld [vmem:[%s4854 + $0x38] sm:$0xf]
        %v4870 = vld [vmem:[%s4854 + $0x3c] sm:$0xf]
        %v4871 = vrot.slane %v4341, 2
        %v4872 = vrot.slane %v4342, 2
        %v4873 = vsel %vm854, %v4871, %v4872
        %v4874 = vrot.slane %v4359, 2
        %v4875 = vsel %vm854, %v4872, %v4874
        %v4894 = vunpack.c.l.b16 %v4855
        %v4895 = vunpack.c.l.b16 %v4856
        %v4896 = vunpack.c.l.b16 %v4857
        %v4897 = vunpack.c.l.b16 %v4858
        %v4898 = vunpack.c.l.b16 %v4859
        %v4899 = vunpack.c.l.b16 %v4860
        %v4900 = vunpack.c.l.b16 %v4861
        %v4901 = vunpack.c.l.b16 %v4862
        %v4902 = vunpack.c.l.b16 %v4863
        %v4903 = vunpack.c.l.b16 %v4864
        %v4904 = vunpack.c.l.b16 %v4865
        %v4905 = vunpack.c.l.b16 %v4866
        %v4906 = vunpack.c.l.b16 %v4867
        %v4907 = vunpack.c.l.b16 %v4868
        %v4908 = vunpack.c.l.b16 %v4869
        %v4909 = vunpack.c.l.b16 %v4870
        %v4910 = vpack.c.b16 %v4895, %v4894
        %v4911 = vpack.c.b16 %v4897, %v4896
        %v4912 = vpack.c.b16 %v4899, %v4898
        %v4913 = vpack.c.b16 %v4901, %v4900
        %v4914 = vpack.c.b16 %v4903, %v4902
        %v4915 = vpack.c.b16 %v4905, %v4904
        %v4916 = vpack.c.b16 %v4907, %v4906
        %v4917 = vpack.c.b16 %v4909, %v4908
        %4926 = vmatprep.subr.bf16.mxu0 0
        %4927 = vmatpush1.bf16.msra.mxu0 %v4910
        %4928 = vmatprep.subr.bf16.mxu0 0
        %4929 = vmatpush1.bf16.msra.mxu0 %v4911
        %4930 = vmatprep.subr.bf16.mxu0 0
        %4931 = vmatpush1.bf16.msra.mxu0 %v4912
        %4932 = vmatprep.subr.bf16.mxu0 0
        %4933 = vmatpush1.bf16.msra.mxu0 %v4913
        %4934 = vmatprep.subr.bf16.mxu0 0
        %4935 = vmatpush1.bf16.msra.mxu0 %v4914
        %4936 = vmatprep.subr.bf16.mxu0 0
        %4937 = vmatpush1.bf16.msra.mxu0 %v4915
        %4938 = vmatprep.subr.bf16.mxu0 0
        %4939 = vmatpush1.bf16.msra.mxu0 %v4916
        %4940 = vmatprep.subr.bf16.mxu0 0
        %4941 = vmatpush1.bf16.msra.mxu0 %v4917
        %4942 = vmatprep.subr.bf16.mxu0 0
        %4943 = vmatpush1.bf16.msra.mxu0 0
        %4944 = vmatprep.subr.bf16.mxu0 0
        %4945 = vmatpush1.bf16.msra.mxu0 0
        %4946 = vmatprep.subr.bf16.mxu0 0
        %4947 = vmatpush1.bf16.msra.mxu0 0
        %4948 = vmatprep.subr.bf16.mxu0 0
        %4949 = vmatpush1.bf16.msra.mxu0 0
        %4950 = vmatprep.subr.bf16.mxu0 0
        %4951 = vmatpush1.bf16.msra.mxu0 0
        %4952 = vmatprep.subr.bf16.mxu0 0
        %4953 = vmatpush1.bf16.msra.mxu0 0
        %4954 = vmatprep.subr.bf16.mxu0 0
        %4955 = vmatpush1.bf16.msra.mxu0 0
        %4956 = vmatprep.subr.bf16.mxu0 0
        %4957 = vmatpush1.bf16.msra.mxu0 0
        %4958 = vmatprep.mubr.bf16.mxu0 0
        %4959 = vmatmul.mubr.bf16.gmra.mrb[0].mxu0 %v4873
        %v4960 = vpop.f32.mrb[0].mxu0
        %v4961 = vadd.f32 0.0, %v4960
        %v4962 = vpop.f32.mrb[0].mxu0
        %v4963 = vpop.f32.mrb[0].mxu0
        %v4964 = vadd.f32 0.0, %v4963
        %v4965 = vpop.f32.mrb[0].mxu0
        %4966 = vmatprep.mubr.bf16.mxu0 0
        %4967 = vmatmul.mubr.bf16.gmra.mrb[0].mxu0 %v4875
        %v4968 = vpop.f32.mrb[0].mxu0
        %v4969 = vadd.f32 0.0, %v4968
        %v4970 = vpop.f32.mrb[0].mxu0
        %v4971 = vpop.f32.mrb[0].mxu0
        %v4972 = vadd.f32 0.0, %v4971
        %v4973 = vpop.f32.mrb[0].mxu0
        %4974 = vdwg.mxu0
        %v4975 = vadd.f32 %v4850, %v4961
        %v4976 = vadd.f32 %v4851, %v4964
        %v4977 = vadd.f32 %v4852, %v4969
        %v4978 = vadd.f32 %v4853, %v4972
        %s4979 = scalar_lea.vmem [#allocation8], 320
        %v4980 = vld [vmem:[%s4979] sm:$0xf]
        %v4981 = vld [vmem:[%s4979 + $0x4] sm:$0xf]
        %v4982 = vld [vmem:[%s4979 + $0x8] sm:$0xf]
        %v4983 = vld [vmem:[%s4979 + $0xc] sm:$0xf]
        %v4984 = vld [vmem:[%s4979 + $0x10] sm:$0xf]
        %v4985 = vld [vmem:[%s4979 + $0x14] sm:$0xf]
        %v4986 = vld [vmem:[%s4979 + $0x18] sm:$0xf]
        %v4987 = vld [vmem:[%s4979 + $0x1c] sm:$0xf]
        %v4988 = vld [vmem:[%s4979 + $0x20] sm:$0xf]
        %v4989 = vld [vmem:[%s4979 + $0x24] sm:$0xf]
        %v4990 = vld [vmem:[%s4979 + $0x28] sm:$0xf]
        %v4991 = vld [vmem:[%s4979 + $0x2c] sm:$0xf]
        %v4992 = vld [vmem:[%s4979 + $0x30] sm:$0xf]
        %v4993 = vld [vmem:[%s4979 + $0x34] sm:$0xf]
        %v4994 = vld [vmem:[%s4979 + $0x38] sm:$0xf]
        %v4995 = vld [vmem:[%s4979 + $0x3c] sm:$0xf]
        %v4996 = vrot.slane %v4378, 2
        %v4997 = vrot.slane %v4380, 3
        %v4998 = vor.u32 %v4996, %v4997
        %v4999 = vrot.slane %v4389, 2
        %v5000 = vrot.slane %v4385, 3
        %v5001 = vor.u32 %v4999, %v5000
        %v5002 = vsel %vm980, %v4998, %v5001
        %v5003 = vrot.slane %v4745, 2
        %v5004 = vrot.slane %v4393, 3
        %v5005 = vor.u32 %v5003, %v5004
        %v5006 = vsel %vm980, %v5001, %v5005
        %v5025 = vunpack.c.l.b16 %v4980
        %v5026 = vunpack.c.l.b16 %v4981
        %v5027 = vunpack.c.l.b16 %v4982
        %v5028 = vunpack.c.l.b16 %v4983
        %v5029 = vunpack.c.l.b16 %v4984
        %v5030 = vunpack.c.l.b16 %v4985
        %v5031 = vunpack.c.l.b16 %v4986
        %v5032 = vunpack.c.l.b16 %v4987
        %v5033 = vunpack.c.l.b16 %v4988
        %v5034 = vunpack.c.l.b16 %v4989
        %v5035 = vunpack.c.l.b16 %v4990
        %v5036 = vunpack.c.l.b16 %v4991
        %v5037 = vunpack.c.l.b16 %v4992
        %v5038 = vunpack.c.l.b16 %v4993
        %v5039 = vunpack.c.l.b16 %v4994
        %v5040 = vunpack.c.l.b16 %v4995
        %v5041 = vpack.c.b16 %v5026, %v5025
        %v5042 = vpack.c.b16 %v5028, %v5027
        %v5043 = vpack.c.b16 %v5030, %v5029
        %v5044 = vpack.c.b16 %v5032, %v5031
        %v5045 = vpack.c.b16 %v5034, %v5033
        %v5046 = vpack.c.b16 %v5036, %v5035
        %v5047 = vpack.c.b16 %v5038, %v5037
        %v5048 = vpack.c.b16 %v5040, %v5039
        %5057 = vmatprep.subr.bf16.mxu0 0
        %5058 = vmatpush1.bf16.msra.mxu0 %v5041
        %5059 = vmatprep.subr.bf16.mxu0 0
        %5060 = vmatpush1.bf16.msra.mxu0 %v5042
        %5061 = vmatprep.subr.bf16.mxu0 0
        %5062 = vmatpush1.bf16.msra.mxu0 %v5043
        %5063 = vmatprep.subr.bf16.mxu0 0
        %5064 = vmatpush1.bf16.msra.mxu0 %v5044
        %5065 = vmatprep.subr.bf16.mxu0 0
        %5066 = vmatpush1.bf16.msra.mxu0 %v5045
        %5067 = vmatprep.subr.bf16.mxu0 0
        %5068 = vmatpush1.bf16.msra.mxu0 %v5046
        %5069 = vmatprep.subr.bf16.mxu0 0
        %5070 = vmatpush1.bf16.msra.mxu0 %v5047
        %5071 = vmatprep.subr.bf16.mxu0 0
        %5072 = vmatpush1.bf16.msra.mxu0 %v5048
        %5073 = vmatprep.subr.bf16.mxu0 0
        %5074 = vmatpush1.bf16.msra.mxu0 0
        %5075 = vmatprep.subr.bf16.mxu0 0
        %5076 = vmatpush1.bf16.msra.mxu0 0
        %5077 = vmatprep.subr.bf16.mxu0 0
        %5078 = vmatpush1.bf16.msra.mxu0 0
        %5079 = vmatprep.subr.bf16.mxu0 0
        %5080 = vmatpush1.bf16.msra.mxu0 0
        %5081 = vmatprep.subr.bf16.mxu0 0
        %5082 = vmatpush1.bf16.msra.mxu0 0
        %5083 = vmatprep.subr.bf16.mxu0 0
        %5084 = vmatpush1.bf16.msra.mxu0 0
        %5085 = vmatprep.subr.bf16.mxu0 0
        %5086 = vmatpush1.bf16.msra.mxu0 0
        %5087 = vmatprep.subr.bf16.mxu0 0
        %5088 = vmatpush1.bf16.msra.mxu0 0
        %5089 = vmatprep.mubr.bf16.mxu0 0
        %5090 = vmatmul.mubr.bf16.gmra.mrb[0].mxu0 %v5002
        %v5091 = vpop.f32.mrb[0].mxu0
        %v5092 = vadd.f32 0.0, %v5091
        %v5093 = vpop.f32.mrb[0].mxu0
        %v5094 = vpop.f32.mrb[0].mxu0
        %v5095 = vadd.f32 0.0, %v5094
        %v5096 = vpop.f32.mrb[0].mxu0
        %5097 = vmatprep.mubr.bf16.mxu0 0
        %5098 = vmatmul.mubr.bf16.gmra.mrb[0].mxu0 %v5006
        %v5099 = vpop.f32.mrb[0].mxu0
        %v5100 = vadd.f32 0.0, %v5099
        %v5101 = vpop.f32.mrb[0].mxu0
        %v5102 = vpop.f32.mrb[0].mxu0
        %v5103 = vadd.f32 0.0, %v5102
        %v5104 = vpop.f32.mrb[0].mxu0
        %5105 = vdwg.mxu0
        %v5106 = vadd.f32 %v4975, %v5092
        %v5107 = vadd.f32 %v4976, %v5095
        %v5108 = vadd.f32 %v4977, %v5100
        %v5109 = vadd.f32 %v4978, %v5103
        %s5110 = scalar_lea.vmem [#allocation8], 384
        %v5111 = vld [vmem:[%s5110] sm:$0xf]
        %v5112 = vld [vmem:[%s5110 + $0x4] sm:$0xf]
        %v5113 = vld [vmem:[%s5110 + $0x8] sm:$0xf]
        %v5114 = vld [vmem:[%s5110 + $0xc] sm:$0xf]
        %v5115 = vld [vmem:[%s5110 + $0x10] sm:$0xf]
        %v5116 = vld [vmem:[%s5110 + $0x14] sm:$0xf]
        %v5117 = vld [vmem:[%s5110 + $0x18] sm:$0xf]
        %v5118 = vld [vmem:[%s5110 + $0x1c] sm:$0xf]
        %v5119 = vld [vmem:[%s5110 + $0x20] sm:$0xf]
        %v5120 = vld [vmem:[%s5110 + $0x24] sm:$0xf]
        %v5121 = vld [vmem:[%s5110 + $0x28] sm:$0xf]
        %v5122 = vld [vmem:[%s5110 + $0x2c] sm:$0xf]
        %v5123 = vld [vmem:[%s5110 + $0x30] sm:$0xf]
        %v5124 = vld [vmem:[%s5110 + $0x34] sm:$0xf]
        %v5125 = vld [vmem:[%s5110 + $0x38] sm:$0xf]
        %v5126 = vld [vmem:[%s5110 + $0x3c] sm:$0xf]
        %v5127 = vrot.slane %v4341, 3
        %v5128 = vrot.slane %v4342, 3
        %v5129 = vsel %vm1112, %v5127, %v5128
        %v5130 = vrot.slane %v4359, 3
        %v5131 = vsel %vm1112, %v5128, %v5130
        %v5150 = vunpack.c.l.b16 %v5111
        %v5151 = vunpack.c.l.b16 %v5112
        %v5152 = vunpack.c.l.b16 %v5113
        %v5153 = vunpack.c.l.b16 %v5114
        %v5154 = vunpack.c.l.b16 %v5115
        %v5155 = vunpack.c.l.b16 %v5116
        %v5156 = vunpack.c.l.b16 %v5117
        %v5157 = vunpack.c.l.b16 %v5118
        %v5158 = vunpack.c.l.b16 %v5119
        %v5159 = vunpack.c.l.b16 %v5120
        %v5160 = vunpack.c.l.b16 %v5121
        %v5161 = vunpack.c.l.b16 %v5122
        %v5162 = vunpack.c.l.b16 %v5123
        %v5163 = vunpack.c.l.b16 %v5124
        %v5164 = vunpack.c.l.b16 %v5125
        %v5165 = vunpack.c.l.b16 %v5126
        %v5166 = vpack.c.b16 %v5151, %v5150
        %v5167 = vpack.c.b16 %v5153, %v5152
        %v5168 = vpack.c.b16 %v5155, %v5154
        %v5169 = vpack.c.b16 %v5157, %v5156
        %v5170 = vpack.c.b16 %v5159, %v5158
        %v5171 = vpack.c.b16 %v5161, %v5160
        %v5172 = vpack.c.b16 %v5163, %v5162
        %v5173 = vpack.c.b16 %v5165, %v5164
        %5182 = vmatprep.subr.bf16.mxu0 0
        %5183 = vmatpush1.bf16.msra.mxu0 %v5166
        %5184 = vmatprep.subr.bf16.mxu0 0
        %5185 = vmatpush1.bf16.msra.mxu0 %v5167
        %5186 = vmatprep.subr.bf16.mxu0 0
        %5187 = vmatpush1.bf16.msra.mxu0 %v5168
        %5188 = vmatprep.subr.bf16.mxu0 0
        %5189 = vmatpush1.bf16.msra.mxu0 %v5169
        %5190 = vmatprep.subr.bf16.mxu0 0
        %5191 = vmatpush1.bf16.msra.mxu0 %v5170
        %5192 = vmatprep.subr.bf16.mxu0 0
        %5193 = vmatpush1.bf16.msra.mxu0 %v5171
        %5194 = vmatprep.subr.bf16.mxu0 0
        %5195 = vmatpush1.bf16.msra.mxu0 %v5172
        %5196 = vmatprep.subr.bf16.mxu0 0
        %5197 = vmatpush1.bf16.msra.mxu0 %v5173
        %5198 = vmatprep.subr.bf16.mxu0 0
        %5199 = vmatpush1.bf16.msra.mxu0 0
        %5200 = vmatprep.subr.bf16.mxu0 0
        %5201 = vmatpush1.bf16.msra.mxu0 0
        %5202 = vmatprep.subr.bf16.mxu0 0
        %5203 = vmatpush1.bf16.msra.mxu0 0
        %5204 = vmatprep.subr.bf16.mxu0 0
        %5205 = vmatpush1.bf16.msra.mxu0 0
        %5206 = vmatprep.subr.bf16.mxu0 0
        %5207 = vmatpush1.bf16.msra.mxu0 0
        %5208 = vmatprep.subr.bf16.mxu0 0
        %5209 = vmatpush1.bf16.msra.mxu0 0
        %5210 = vmatprep.subr.bf16.mxu0 0
        %5211 = vmatpush1.bf16.msra.mxu0 0
        %5212 = vmatprep.subr.bf16.mxu0 0
        %5213 = vmatpush1.bf16.msra.mxu0 0
        %5214 = vmatprep.mubr.bf16.mxu0 0
        %5215 = vmatmul.mubr.bf16.gmra.mrb[0].mxu0 %v5129
        %v5216 = vpop.f32.mrb[0].mxu0
        %v5217 = vadd.f32 0.0, %v5216
        %v5218 = vpop.f32.mrb[0].mxu0
        %v5219 = vpop.f32.mrb[0].mxu0
        %v5220 = vadd.f32 0.0, %v5219
        %v5221 = vpop.f32.mrb[0].mxu0
        %5222 = vmatprep.mubr.bf16.mxu0 0
        %5223 = vmatmul.mubr.bf16.gmra.mrb[0].mxu0 %v5131
        %v5224 = vpop.f32.mrb[0].mxu0
        %v5225 = vadd.f32 0.0, %v5224
        %v5226 = vpop.f32.mrb[0].mxu0
        %v5227 = vpop.f32.mrb[0].mxu0
        %v5228 = vadd.f32 0.0, %v5227
        %v5229 = vpop.f32.mrb[0].mxu0
        %5230 = vdwg.mxu0
        %v5231 = vadd.f32 %v5106, %v5217
        %v5232 = vadd.f32 %v5107, %v5220
        %v5233 = vadd.f32 %v5108, %v5225
        %v5234 = vadd.f32 %v5109, %v5228
        %s5235 = scalar_lea.vmem [#allocation8], 448
        %v5236 = vld [vmem:[%s5235] sm:$0xf]
        %v5237 = vld [vmem:[%s5235 + $0x4] sm:$0xf]
        %v5238 = vld [vmem:[%s5235 + $0x8] sm:$0xf]
        %v5239 = vld [vmem:[%s5235 + $0xc] sm:$0xf]
        %v5240 = vld [vmem:[%s5235 + $0x10] sm:$0xf]
        %v5241 = vld [vmem:[%s5235 + $0x14] sm:$0xf]
        %v5242 = vld [vmem:[%s5235 + $0x18] sm:$0xf]
        %v5243 = vld [vmem:[%s5235 + $0x1c] sm:$0xf]
        %v5244 = vld [vmem:[%s5235 + $0x20] sm:$0xf]
        %v5245 = vld [vmem:[%s5235 + $0x24] sm:$0xf]
        %v5246 = vld [vmem:[%s5235 + $0x28] sm:$0xf]
        %v5247 = vld [vmem:[%s5235 + $0x2c] sm:$0xf]
        %v5248 = vld [vmem:[%s5235 + $0x30] sm:$0xf]
        %v5249 = vld [vmem:[%s5235 + $0x34] sm:$0xf]
        %v5250 = vld [vmem:[%s5235 + $0x38] sm:$0xf]
        %v5251 = vld [vmem:[%s5235 + $0x3c] sm:$0xf]
        %v5252 = vrot.slane %v4378, 3
        %v5253 = vrot.slane %v4380, 4
        %v5254 = vor.u32 %v5252, %v5253
        %v5255 = vrot.slane %v4389, 3
        %v5256 = vrot.slane %v4385, 4
        %v5257 = vor.u32 %v5255, %v5256
        %v5258 = vsel %vm1238, %v5254, %v5257
        %v5259 = vrot.slane %v4745, 3
        %v5260 = vrot.slane %v4393, 4
        %v5261 = vor.u32 %v5259, %v5260
        %v5262 = vsel %vm1238, %v5257, %v5261
        %v5281 = vunpack.c.l.b16 %v5236
        %v5282 = vunpack.c.l.b16 %v5237
        %v5283 = vunpack.c.l.b16 %v5238
        %v5284 = vunpack.c.l.b16 %v5239
        %v5285 = vunpack.c.l.b16 %v5240
        %v5286 = vunpack.c.l.b16 %v5241
        %v5287 = vunpack.c.l.b16 %v5242
        %v5288 = vunpack.c.l.b16 %v5243
        %v5289 = vunpack.c.l.b16 %v5244
        %v5290 = vunpack.c.l.b16 %v5245
        %v5291 = vunpack.c.l.b16 %v5246
        %v5292 = vunpack.c.l.b16 %v5247
        %v5293 = vunpack.c.l.b16 %v5248
        %v5294 = vunpack.c.l.b16 %v5249
        %v5295 = vunpack.c.l.b16 %v5250
        %v5296 = vunpack.c.l.b16 %v5251
        %v5297 = vpack.c.b16 %v5282, %v5281
        %v5298 = vpack.c.b16 %v5284, %v5283
        %v5299 = vpack.c.b16 %v5286, %v5285
        %v5300 = vpack.c.b16 %v5288, %v5287
        %v5301 = vpack.c.b16 %v5290, %v5289
        %v5302 = vpack.c.b16 %v5292, %v5291
        %v5303 = vpack.c.b16 %v5294, %v5293
        %v5304 = vpack.c.b16 %v5296, %v5295
        %5313 = vmatprep.subr.bf16.mxu0 0
        %5314 = vmatpush1.bf16.msra.mxu0 %v5297
        %5315 = vmatprep.subr.bf16.mxu0 0
        %5316 = vmatpush1.bf16.msra.mxu0 %v5298
        %5317 = vmatprep.subr.bf16.mxu0 0
        %5318 = vmatpush1.bf16.msra.mxu0 %v5299
        %5319 = vmatprep.subr.bf16.mxu0 0
        %5320 = vmatpush1.bf16.msra.mxu0 %v5300
        %5321 = vmatprep.subr.bf16.mxu0 0
        %5322 = vmatpush1.bf16.msra.mxu0 %v5301
        %5323 = vmatprep.subr.bf16.mxu0 0
        %5324 = vmatpush1.bf16.msra.mxu0 %v5302
        %5325 = vmatprep.subr.bf16.mxu0 0
        %5326 = vmatpush1.bf16.msra.mxu0 %v5303
        %5327 = vmatprep.subr.bf16.mxu0 0
        %5328 = vmatpush1.bf16.msra.mxu0 %v5304
        %5329 = vmatprep.subr.bf16.mxu0 0
        %5330 = vmatpush1.bf16.msra.mxu0 0
        %5331 = vmatprep.subr.bf16.mxu0 0
        %5332 = vmatpush1.bf16.msra.mxu0 0
        %5333 = vmatprep.subr.bf16.mxu0 0
        %5334 = vmatpush1.bf16.msra.mxu0 0
        %5335 = vmatprep.subr.bf16.mxu0 0
        %5336 = vmatpush1.bf16.msra.mxu0 0
        %5337 = vmatprep.subr.bf16.mxu0 0
        %5338 = vmatpush1.bf16.msra.mxu0 0
        %5339 = vmatprep.subr.bf16.mxu0 0
        %5340 = vmatpush1.bf16.msra.mxu0 0
        %5341 = vmatprep.subr.bf16.mxu0 0
        %5342 = vmatpush1.bf16.msra.mxu0 0
        %5343 = vmatprep.subr.bf16.mxu0 0
        %5344 = vmatpush1.bf16.msra.mxu0 0
        %5345 = vmatprep.mubr.bf16.mxu0 0
        %5346 = vmatmul.mubr.bf16.gmra.mrb[0].mxu0 %v5258
        %v5347 = vpop.f32.mrb[0].mxu0
        %v5348 = vadd.f32 0.0, %v5347
        %v5349 = vpop.f32.mrb[0].mxu0
        %v5350 = vpop.f32.mrb[0].mxu0
        %v5351 = vadd.f32 0.0, %v5350
        %v5352 = vpop.f32.mrb[0].mxu0
        %5353 = vmatprep.mubr.bf16.mxu0 0
        %5354 = vmatmul.mubr.bf16.gmra.mrb[0].mxu0 %v5262
        %v5355 = vpop.f32.mrb[0].mxu0
        %v5356 = vadd.f32 0.0, %v5355
        %v5357 = vpop.f32.mrb[0].mxu0
        %v5358 = vpop.f32.mrb[0].mxu0
        %v5359 = vadd.f32 0.0, %v5358
        %v5360 = vpop.f32.mrb[0].mxu0
        %5361 = vdwg.mxu0
        %v5362 = vadd.f32 %v5231, %v5348
        %v5363 = vadd.f32 %v5232, %v5351
        %v5364 = vadd.f32 %v5233, %v5356
        %v5365 = vadd.f32 %v5234, %v5359
        %v5366 = vpack.c.bf16 %v4329, %v4339
        %v5367 = vpack.c.bf16 %v4333, %v4331
        %s5368 = scalar_lea.vmem [#allocation8], 512
        %v5369 = vld [vmem:[%s5368] sm:$0xf]
        %v5370 = vld [vmem:[%s5368 + $0x4] sm:$0xf]
        %v5371 = vld [vmem:[%s5368 + $0x8] sm:$0xf]
        %v5372 = vld [vmem:[%s5368 + $0xc] sm:$0xf]
        %v5373 = vld [vmem:[%s5368 + $0x10] sm:$0xf]
        %v5374 = vld [vmem:[%s5368 + $0x14] sm:$0xf]
        %v5375 = vld [vmem:[%s5368 + $0x18] sm:$0xf]
        %v5376 = vld [vmem:[%s5368 + $0x1c] sm:$0xf]
        %v5377 = vld [vmem:[%s5368 + $0x20] sm:$0xf]
        %v5378 = vld [vmem:[%s5368 + $0x24] sm:$0xf]
        %v5379 = vld [vmem:[%s5368 + $0x28] sm:$0xf]
        %v5380 = vld [vmem:[%s5368 + $0x2c] sm:$0xf]
        %v5381 = vld [vmem:[%s5368 + $0x30] sm:$0xf]
        %v5382 = vld [vmem:[%s5368 + $0x34] sm:$0xf]
        %v5383 = vld [vmem:[%s5368 + $0x38] sm:$0xf]
        %v5384 = vld [vmem:[%s5368 + $0x3c] sm:$0xf]
        %v5401 = vunpack.c.l.b16 %v5369
        %v5402 = vunpack.c.l.b16 %v5370
        %v5403 = vunpack.c.l.b16 %v5371
        %v5404 = vunpack.c.l.b16 %v5372
        %v5405 = vunpack.c.l.b16 %v5373
        %v5406 = vunpack.c.l.b16 %v5374
        %v5407 = vunpack.c.l.b16 %v5375
        %v5408 = vunpack.c.l.b16 %v5376
        %v5409 = vunpack.c.l.b16 %v5377
        %v5410 = vunpack.c.l.b16 %v5378
        %v5411 = vunpack.c.l.b16 %v5379
        %v5412 = vunpack.c.l.b16 %v5380
        %v5413 = vunpack.c.l.b16 %v5381
        %v5414 = vunpack.c.l.b16 %v5382
        %v5415 = vunpack.c.l.b16 %v5383
        %v5416 = vunpack.c.l.b16 %v5384
        %v5417 = vpack.c.b16 %v5402, %v5401
        %v5418 = vpack.c.b16 %v5404, %v5403
        %v5419 = vpack.c.b16 %v5406, %v5405
        %v5420 = vpack.c.b16 %v5408, %v5407
        %v5421 = vpack.c.b16 %v5410, %v5409
        %v5422 = vpack.c.b16 %v5412, %v5411
        %v5423 = vpack.c.b16 %v5414, %v5413
        %v5424 = vpack.c.b16 %v5416, %v5415
        %5433 = vmatprep.subr.bf16.mxu0 0
        %5434 = vmatpush1.bf16.msra.mxu0 %v5417
        %5435 = vmatprep.subr.bf16.mxu0 0
        %5436 = vmatpush1.bf16.msra.mxu0 %v5418
        %5437 = vmatprep.subr.bf16.mxu0 0
        %5438 = vmatpush1.bf16.msra.mxu0 %v5419
        %5439 = vmatprep.subr.bf16.mxu0 0
        %5440 = vmatpush1.bf16.msra.mxu0 %v5420
        %5441 = vmatprep.subr.bf16.mxu0 0
        %5442 = vmatpush1.bf16.msra.mxu0 %v5421
        %5443 = vmatprep.subr.bf16.mxu0 0
        %5444 = vmatpush1.bf16.msra.mxu0 %v5422
        %5445 = vmatprep.subr.bf16.mxu0 0
        %5446 = vmatpush1.bf16.msra.mxu0 %v5423
        %5447 = vmatprep.subr.bf16.mxu0 0
        %5448 = vmatpush1.bf16.msra.mxu0 %v5424
        %5449 = vmatprep.subr.bf16.mxu0 0
        %5450 = vmatpush1.bf16.msra.mxu0 0
        %5451 = vmatprep.subr.bf16.mxu0 0
        %5452 = vmatpush1.bf16.msra.mxu0 0
        %5453 = vmatprep.subr.bf16.mxu0 0
        %5454 = vmatpush1.bf16.msra.mxu0 0
        %5455 = vmatprep.subr.bf16.mxu0 0
        %5456 = vmatpush1.bf16.msra.mxu0 0
        %5457 = vmatprep.subr.bf16.mxu0 0
        %5458 = vmatpush1.bf16.msra.mxu0 0
        %5459 = vmatprep.subr.bf16.mxu0 0
        %5460 = vmatpush1.bf16.msra.mxu0 0
        %5461 = vmatprep.subr.bf16.mxu0 0
        %5462 = vmatpush1.bf16.msra.mxu0 0
        %5463 = vmatprep.subr.bf16.mxu0 0
        %5464 = vmatpush1.bf16.msra.mxu0 0
        %5465 = vmatprep.mubr.bf16.mxu0 0
        %5466 = vmatmul.mubr.bf16.gmra.mrb[0].mxu0 %v5366
        %v5467 = vpop.f32.mrb[0].mxu0
        %v5468 = vadd.f32 0.0, %v5467
        %v5469 = vpop.f32.mrb[0].mxu0
        %v5470 = vpop.f32.mrb[0].mxu0
        %v5471 = vadd.f32 0.0, %v5470
        %v5472 = vpop.f32.mrb[0].mxu0
        %5473 = vmatprep.mubr.bf16.mxu0 0
        %5474 = vmatmul.mubr.bf16.gmra.mrb[0].mxu0 %v5367
        %v5475 = vpop.f32.mrb[0].mxu0
        %v5476 = vadd.f32 0.0, %v5475
        %v5477 = vpop.f32.mrb[0].mxu0
        %v5478 = vpop.f32.mrb[0].mxu0
        %v5479 = vadd.f32 0.0, %v5478
        %v5480 = vpop.f32.mrb[0].mxu0
        %5481 = vdwg.mxu0
        %v5482 = vadd.f32 %v5362, %v5468
        %v5483 = vadd.f32 %v5363, %v5471
        %v5484 = vadd.f32 %v5364, %v5476
        %v5485 = vadd.f32 %v5365, %v5479
        %v5486 = vpack.c.bf16 %v4340, %v4340
        %s5487 = scalar_lea.vmem [#allocation8], 576
        %v5488 = vld [vmem:[%s5487] sm:$0xf]
        %v5489 = vld [vmem:[%s5487 + $0x4] sm:$0xf]
        %v5490 = vld [vmem:[%s5487 + $0x8] sm:$0xf]
        %v5491 = vld [vmem:[%s5487 + $0xc] sm:$0xf]
        %v5492 = vld [vmem:[%s5487 + $0x10] sm:$0xf]
        %v5493 = vld [vmem:[%s5487 + $0x14] sm:$0xf]
        %v5494 = vld [vmem:[%s5487 + $0x18] sm:$0xf]
        %v5495 = vld [vmem:[%s5487 + $0x1c] sm:$0xf]
        %v5496 = vld [vmem:[%s5487 + $0x20] sm:$0xf]
        %v5497 = vld [vmem:[%s5487 + $0x24] sm:$0xf]
        %v5498 = vld [vmem:[%s5487 + $0x28] sm:$0xf]
        %v5499 = vld [vmem:[%s5487 + $0x2c] sm:$0xf]
        %v5500 = vld [vmem:[%s5487 + $0x30] sm:$0xf]
        %v5501 = vld [vmem:[%s5487 + $0x34] sm:$0xf]
        %v5502 = vld [vmem:[%s5487 + $0x38] sm:$0xf]
        %v5503 = vld [vmem:[%s5487 + $0x3c] sm:$0xf]
        %v5505 = vshrl.u32 %v5366, 16
        %v5507 = vshll.u32 %v5366, 16
        %v5509 = vrot.slane %v5507, 1
        %v5510 = vor.u32 %v5505, %v5509
        %v5512 = vshll.u32 %v5367, 16
        %v5514 = vrot.slane %v5512, 1
        %v5515 = vsel %vm357, %v5510, %v5514
        %v5516 = vshrl.u32 %v5367, 16
        %v5518 = vor.u32 %v5516, %v5514
        %v5520 = vshll.u32 %v5486, 16
        %v5522 = vrot.slane %v5520, 1
        %v5523 = vsel %vm357, %v5518, %v5522
        %v5542 = vunpack.c.l.b16 %v5488
        %v5543 = vunpack.c.l.b16 %v5489
        %v5544 = vunpack.c.l.b16 %v5490
        %v5545 = vunpack.c.l.b16 %v5491
        %v5546 = vunpack.c.l.b16 %v5492
        %v5547 = vunpack.c.l.b16 %v5493
        %v5548 = vunpack.c.l.b16 %v5494
        %v5549 = vunpack.c.l.b16 %v5495
        %v5550 = vunpack.c.l.b16 %v5496
        %v5551 = vunpack.c.l.b16 %v5497
        %v5552 = vunpack.c.l.b16 %v5498
        %v5553 = vunpack.c.l.b16 %v5499
        %v5554 = vunpack.c.l.b16 %v5500
        %v5555 = vunpack.c.l.b16 %v5501
        %v5556 = vunpack.c.l.b16 %v5502
        %v5557 = vunpack.c.l.b16 %v5503
        %v5558 = vpack.c.b16 %v5543, %v5542
        %v5559 = vpack.c.b16 %v5545, %v5544
        %v5560 = vpack.c.b16 %v5547, %v5546
        %v5561 = vpack.c.b16 %v5549, %v5548
        %v5562 = vpack.c.b16 %v5551, %v5550
        %v5563 = vpack.c.b16 %v5553, %v5552
        %v5564 = vpack.c.b16 %v5555, %v5554
        %v5565 = vpack.c.b16 %v5557, %v5556
        %5574 = vmatprep.subr.bf16.mxu0 0
        %5575 = vmatpush1.bf16.msra.mxu0 %v5558
        %5576 = vmatprep.subr.bf16.mxu0 0
        %5577 = vmatpush1.bf16.msra.mxu0 %v5559
        %5578 = vmatprep.subr.bf16.mxu0 0
        %5579 = vmatpush1.bf16.msra.mxu0 %v5560
        %5580 = vmatprep.subr.bf16.mxu0 0
        %5581 = vmatpush1.bf16.msra.mxu0 %v5561
        %5582 = vmatprep.subr.bf16.mxu0 0
        %5583 = vmatpush1.bf16.msra.mxu0 %v5562
        %5584 = vmatprep.subr.bf16.mxu0 0
        %5585 = vmatpush1.bf16.msra.mxu0 %v5563
        %5586 = vmatprep.subr.bf16.mxu0 0
        %5587 = vmatpush1.bf16.msra.mxu0 %v5564
        %5588 = vmatprep.subr.bf16.mxu0 0
        %5589 = vmatpush1.bf16.msra.mxu0 %v5565
        %5590 = vmatprep.subr.bf16.mxu0 0
        %5591 = vmatpush1.bf16.msra.mxu0 0
        %5592 = vmatprep.subr.bf16.mxu0 0
        %5593 = vmatpush1.bf16.msra.mxu0 0
        %5594 = vmatprep.subr.bf16.mxu0 0
        %5595 = vmatpush1.bf16.msra.mxu0 0
        %5596 = vmatprep.subr.bf16.mxu0 0
        %5597 = vmatpush1.bf16.msra.mxu0 0
        %5598 = vmatprep.subr.bf16.mxu0 0
        %5599 = vmatpush1.bf16.msra.mxu0 0
        %5600 = vmatprep.subr.bf16.mxu0 0
        %5601 = vmatpush1.bf16.msra.mxu0 0
        %5602 = vmatprep.subr.bf16.mxu0 0
        %5603 = vmatpush1.bf16.msra.mxu0 0
        %5604 = vmatprep.subr.bf16.mxu0 0
        %5605 = vmatpush1.bf16.msra.mxu0 0
        %5606 = vmatprep.mubr.bf16.mxu0 0
        %5607 = vmatmul.mubr.bf16.gmra.mrb[0].mxu0 %v5515
        %v5608 = vpop.f32.mrb[0].mxu0
        %v5609 = vadd.f32 0.0, %v5608
        %v5610 = vpop.f32.mrb[0].mxu0
        %v5611 = vpop.f32.mrb[0].mxu0
        %v5612 = vadd.f32 0.0, %v5611
        %v5613 = vpop.f32.mrb[0].mxu0
        %5614 = vmatprep.mubr.bf16.mxu0 0
        %5615 = vmatmul.mubr.bf16.gmra.mrb[0].mxu0 %v5523
        %v5616 = vpop.f32.mrb[0].mxu0
        %v5617 = vadd.f32 0.0, %v5616
        %v5618 = vpop.f32.mrb[0].mxu0
        %v5619 = vpop.f32.mrb[0].mxu0
        %v5620 = vadd.f32 0.0, %v5619
        %v5621 = vpop.f32.mrb[0].mxu0
        %5622 = vdwg.mxu0
        %v5623 = vadd.f32 %v5482, %v5609
        %v5624 = vadd.f32 %v5483, %v5612
        %v5625 = vadd.f32 %v5484, %v5617
        %v5626 = vadd.f32 %v5485, %v5620
        %s5627 = scalar_lea.vmem [#allocation8], 640
        %v5628 = vld [vmem:[%s5627] sm:$0xf]
        %v5629 = vld [vmem:[%s5627 + $0x4] sm:$0xf]
        %v5630 = vld [vmem:[%s5627 + $0x8] sm:$0xf]
        %v5631 = vld [vmem:[%s5627 + $0xc] sm:$0xf]
        %v5632 = vld [vmem:[%s5627 + $0x10] sm:$0xf]
        %v5633 = vld [vmem:[%s5627 + $0x14] sm:$0xf]
        %v5634 = vld [vmem:[%s5627 + $0x18] sm:$0xf]
        %v5635 = vld [vmem:[%s5627 + $0x1c] sm:$0xf]
        %v5636 = vld [vmem:[%s5627 + $0x20] sm:$0xf]
        %v5637 = vld [vmem:[%s5627 + $0x24] sm:$0xf]
        %v5638 = vld [vmem:[%s5627 + $0x28] sm:$0xf]
        %v5639 = vld [vmem:[%s5627 + $0x2c] sm:$0xf]
        %v5640 = vld [vmem:[%s5627 + $0x30] sm:$0xf]
        %v5641 = vld [vmem:[%s5627 + $0x34] sm:$0xf]
        %v5642 = vld [vmem:[%s5627 + $0x38] sm:$0xf]
        %v5643 = vld [vmem:[%s5627 + $0x3c] sm:$0xf]
        %v5647 = vrot.slane %v5366, 1
        %v5648 = vrot.slane %v5367, 1
        %v5649 = vsel %vm594, %v5647, %v5648
        %v5650 = vrot.slane %v5486, 1
        %v5651 = vsel %vm594, %v5648, %v5650
        %v5670 = vunpack.c.l.b16 %v5628
        %v5671 = vunpack.c.l.b16 %v5629
        %v5672 = vunpack.c.l.b16 %v5630
        %v5673 = vunpack.c.l.b16 %v5631
        %v5674 = vunpack.c.l.b16 %v5632
        %v5675 = vunpack.c.l.b16 %v5633
        %v5676 = vunpack.c.l.b16 %v5634
        %v5677 = vunpack.c.l.b16 %v5635
        %v5678 = vunpack.c.l.b16 %v5636
        %v5679 = vunpack.c.l.b16 %v5637
        %v5680 = vunpack.c.l.b16 %v5638
        %v5681 = vunpack.c.l.b16 %v5639
        %v5682 = vunpack.c.l.b16 %v5640
        %v5683 = vunpack.c.l.b16 %v5641
        %v5684 = vunpack.c.l.b16 %v5642
        %v5685 = vunpack.c.l.b16 %v5643
        %v5686 = vpack.c.b16 %v5671, %v5670
        %v5687 = vpack.c.b16 %v5673, %v5672
        %v5688 = vpack.c.b16 %v5675, %v5674
        %v5689 = vpack.c.b16 %v5677, %v5676
        %v5690 = vpack.c.b16 %v5679, %v5678
        %v5691 = vpack.c.b16 %v5681, %v5680
        %v5692 = vpack.c.b16 %v5683, %v5682
        %v5693 = vpack.c.b16 %v5685, %v5684
        %5702 = vmatprep.subr.bf16.mxu0 0
        %5703 = vmatpush1.bf16.msra.mxu0 %v5686
        %5704 = vmatprep.subr.bf16.mxu0 0
        %5705 = vmatpush1.bf16.msra.mxu0 %v5687
        %5706 = vmatprep.subr.bf16.mxu0 0
        %5707 = vmatpush1.bf16.msra.mxu0 %v5688
        %5708 = vmatprep.subr.bf16.mxu0 0
        %5709 = vmatpush1.bf16.msra.mxu0 %v5689
        %5710 = vmatprep.subr.bf16.mxu0 0
        %5711 = vmatpush1.bf16.msra.mxu0 %v5690
        %5712 = vmatprep.subr.bf16.mxu0 0
        %5713 = vmatpush1.bf16.msra.mxu0 %v5691
        %5714 = vmatprep.subr.bf16.mxu0 0
        %5715 = vmatpush1.bf16.msra.mxu0 %v5692
        %5716 = vmatprep.subr.bf16.mxu0 0
        %5717 = vmatpush1.bf16.msra.mxu0 %v5693
        %5718 = vmatprep.subr.bf16.mxu0 0
        %5719 = vmatpush1.bf16.msra.mxu0 0
        %5720 = vmatprep.subr.bf16.mxu0 0
        %5721 = vmatpush1.bf16.msra.mxu0 0
        %5722 = vmatprep.subr.bf16.mxu0 0
        %5723 = vmatpush1.bf16.msra.mxu0 0
        %5724 = vmatprep.subr.bf16.mxu0 0
        %5725 = vmatpush1.bf16.msra.mxu0 0
        %5726 = vmatprep.subr.bf16.mxu0 0
        %5727 = vmatpush1.bf16.msra.mxu0 0
        %5728 = vmatprep.subr.bf16.mxu0 0
        %5729 = vmatpush1.bf16.msra.mxu0 0
        %5730 = vmatprep.subr.bf16.mxu0 0
        %5731 = vmatpush1.bf16.msra.mxu0 0
        %5732 = vmatprep.subr.bf16.mxu0 0
        %5733 = vmatpush1.bf16.msra.mxu0 0
        %5734 = vmatprep.mubr.bf16.mxu0 0
        %5735 = vmatmul.mubr.bf16.gmra.mrb[0].mxu0 %v5649
        %v5736 = vpop.f32.mrb[0].mxu0
        %v5737 = vadd.f32 0.0, %v5736
        %v5738 = vpop.f32.mrb[0].mxu0
        %v5739 = vpop.f32.mrb[0].mxu0
        %v5740 = vadd.f32 0.0, %v5739
        %v5741 = vpop.f32.mrb[0].mxu0
        %5742 = vmatprep.mubr.bf16.mxu0 0
        %5743 = vmatmul.mubr.bf16.gmra.mrb[0].mxu0 %v5651
        %v5744 = vpop.f32.mrb[0].mxu0
        %v5745 = vadd.f32 0.0, %v5744
        %v5746 = vpop.f32.mrb[0].mxu0
        %v5747 = vpop.f32.mrb[0].mxu0
        %v5748 = vadd.f32 0.0, %v5747
        %v5749 = vpop.f32.mrb[0].mxu0
        %5750 = vdwg.mxu0
        %v5751 = vadd.f32 %v5623, %v5737
        %v5752 = vadd.f32 %v5624, %v5740
        %v5753 = vadd.f32 %v5625, %v5745
        %v5754 = vadd.f32 %v5626, %v5748
        %s5755 = scalar_lea.vmem [#allocation8], 704
        %v5756 = vld [vmem:[%s5755] sm:$0xf]
        %v5757 = vld [vmem:[%s5755 + $0x4] sm:$0xf]
        %v5758 = vld [vmem:[%s5755 + $0x8] sm:$0xf]
        %v5759 = vld [vmem:[%s5755 + $0xc] sm:$0xf]
        %v5760 = vld [vmem:[%s5755 + $0x10] sm:$0xf]
        %v5761 = vld [vmem:[%s5755 + $0x14] sm:$0xf]
        %v5762 = vld [vmem:[%s5755 + $0x18] sm:$0xf]
        %v5763 = vld [vmem:[%s5755 + $0x1c] sm:$0xf]
        %v5764 = vld [vmem:[%s5755 + $0x20] sm:$0xf]
        %v5765 = vld [vmem:[%s5755 + $0x24] sm:$0xf]
        %v5766 = vld [vmem:[%s5755 + $0x28] sm:$0xf]
        %v5767 = vld [vmem:[%s5755 + $0x2c] sm:$0xf]
        %v5768 = vld [vmem:[%s5755 + $0x30] sm:$0xf]
        %v5769 = vld [vmem:[%s5755 + $0x34] sm:$0xf]
        %v5770 = vld [vmem:[%s5755 + $0x38] sm:$0xf]
        %v5771 = vld [vmem:[%s5755 + $0x3c] sm:$0xf]
        %v5772 = vrot.slane %v5505, 1
        %v5773 = vrot.slane %v5507, 2
        %v5774 = vor.u32 %v5772, %v5773
        %v5775 = vrot.slane %v5516, 1
        %v5776 = vrot.slane %v5512, 2
        %v5777 = vor.u32 %v5775, %v5776
        %v5778 = vsel %vm720, %v5774, %v5777
        %v5779 = vshrl.u32 %v5486, 16
        %v5781 = vrot.slane %v5779, 1
        %v5782 = vrot.slane %v5520, 2
        %v5783 = vor.u32 %v5781, %v5782
        %v5784 = vsel %vm720, %v5777, %v5783
        %v5803 = vunpack.c.l.b16 %v5756
        %v5804 = vunpack.c.l.b16 %v5757
        %v5805 = vunpack.c.l.b16 %v5758
        %v5806 = vunpack.c.l.b16 %v5759
        %v5807 = vunpack.c.l.b16 %v5760
        %v5808 = vunpack.c.l.b16 %v5761
        %v5809 = vunpack.c.l.b16 %v5762
        %v5810 = vunpack.c.l.b16 %v5763
        %v5811 = vunpack.c.l.b16 %v5764
        %v5812 = vunpack.c.l.b16 %v5765
        %v5813 = vunpack.c.l.b16 %v5766
        %v5814 = vunpack.c.l.b16 %v5767
        %v5815 = vunpack.c.l.b16 %v5768
        %v5816 = vunpack.c.l.b16 %v5769
        %v5817 = vunpack.c.l.b16 %v5770
        %v5818 = vunpack.c.l.b16 %v5771
        %v5819 = vpack.c.b16 %v5804, %v5803
        %v5820 = vpack.c.b16 %v5806, %v5805
        %v5821 = vpack.c.b16 %v5808, %v5807
        %v5822 = vpack.c.b16 %v5810, %v5809
        %v5823 = vpack.c.b16 %v5812, %v5811
        %v5824 = vpack.c.b16 %v5814, %v5813
        %v5825 = vpack.c.b16 %v5816, %v5815
        %v5826 = vpack.c.b16 %v5818, %v5817
        %5835 = vmatprep.subr.bf16.mxu0 0
        %5836 = vmatpush1.bf16.msra.mxu0 %v5819
        %5837 = vmatprep.subr.bf16.mxu0 0
        %5838 = vmatpush1.bf16.msra.mxu0 %v5820
        %5839 = vmatprep.subr.bf16.mxu0 0
        %5840 = vmatpush1.bf16.msra.mxu0 %v5821
        %5841 = vmatprep.subr.bf16.mxu0 0
        %5842 = vmatpush1.bf16.msra.mxu0 %v5822
        %5843 = vmatprep.subr.bf16.mxu0 0
        %5844 = vmatpush1.bf16.msra.mxu0 %v5823
        %5845 = vmatprep.subr.bf16.mxu0 0
        %5846 = vmatpush1.bf16.msra.mxu0 %v5824
        %5847 = vmatprep.subr.bf16.mxu0 0
        %5848 = vmatpush1.bf16.msra.mxu0 %v5825
        %5849 = vmatprep.subr.bf16.mxu0 0
        %5850 = vmatpush1.bf16.msra.mxu0 %v5826
        %5851 = vmatprep.subr.bf16.mxu0 0
        %5852 = vmatpush1.bf16.msra.mxu0 0
        %5853 = vmatprep.subr.bf16.mxu0 0
        %5854 = vmatpush1.bf16.msra.mxu0 0
        %5855 = vmatprep.subr.bf16.mxu0 0
        %5856 = vmatpush1.bf16.msra.mxu0 0
        %5857 = vmatprep.subr.bf16.mxu0 0
        %5858 = vmatpush1.bf16.msra.mxu0 0
        %5859 = vmatprep.subr.bf16.mxu0 0
        %5860 = vmatpush1.bf16.msra.mxu0 0
        %5861 = vmatprep.subr.bf16.mxu0 0
        %5862 = vmatpush1.bf16.msra.mxu0 0
        %5863 = vmatprep.subr.bf16.mxu0 0
        %5864 = vmatpush1.bf16.msra.mxu0 0
        %5865 = vmatprep.subr.bf16.mxu0 0
        %5866 = vmatpush1.bf16.msra.mxu0 0
        %5867 = vmatprep.mubr.bf16.mxu0 0
        %5868 = vmatmul.mubr.bf16.gmra.mrb[0].mxu0 %v5778
        %v5869 = vpop.f32.mrb[0].mxu0
        %v5870 = vadd.f32 0.0, %v5869
        %v5871 = vpop.f32.mrb[0].mxu0
        %v5872 = vpop.f32.mrb[0].mxu0
        %v5873 = vadd.f32 0.0, %v5872
        %v5874 = vpop.f32.mrb[0].mxu0
        %5875 = vmatprep.mubr.bf16.mxu0 0
        %5876 = vmatmul.mubr.bf16.gmra.mrb[0].mxu0 %v5784
        %v5877 = vpop.f32.mrb[0].mxu0
        %v5878 = vadd.f32 0.0, %v5877
        %v5879 = vpop.f32.mrb[0].mxu0
        %v5880 = vpop.f32.mrb[0].mxu0
        %v5881 = vadd.f32 0.0, %v5880
        %v5882 = vpop.f32.mrb[0].mxu0
        %5883 = vdwg.mxu0
        %v5884 = vadd.f32 %v5751, %v5870
        %v5885 = vadd.f32 %v5752, %v5873
        %v5886 = vadd.f32 %v5753, %v5878
        %v5887 = vadd.f32 %v5754, %v5881
        %s5888 = scalar_lea.vmem [#allocation8], 768
        %v5889 = vld [vmem:[%s5888] sm:$0xf]
        %v5890 = vld [vmem:[%s5888 + $0x4] sm:$0xf]
        %v5891 = vld [vmem:[%s5888 + $0x8] sm:$0xf]
        %v5892 = vld [vmem:[%s5888 + $0xc] sm:$0xf]
        %v5893 = vld [vmem:[%s5888 + $0x10] sm:$0xf]
        %v5894 = vld [vmem:[%s5888 + $0x14] sm:$0xf]
        %v5895 = vld [vmem:[%s5888 + $0x18] sm:$0xf]
        %v5896 = vld [vmem:[%s5888 + $0x1c] sm:$0xf]
        %v5897 = vld [vmem:[%s5888 + $0x20] sm:$0xf]
        %v5898 = vld [vmem:[%s5888 + $0x24] sm:$0xf]
        %v5899 = vld [vmem:[%s5888 + $0x28] sm:$0xf]
        %v5900 = vld [vmem:[%s5888 + $0x2c] sm:$0xf]
        %v5901 = vld [vmem:[%s5888 + $0x30] sm:$0xf]
        %v5902 = vld [vmem:[%s5888 + $0x34] sm:$0xf]
        %v5903 = vld [vmem:[%s5888 + $0x38] sm:$0xf]
        %v5904 = vld [vmem:[%s5888 + $0x3c] sm:$0xf]
        %v5905 = vrot.slane %v5366, 2
        %v5906 = vrot.slane %v5367, 2
        %v5907 = vsel %vm854, %v5905, %v5906
        %v5908 = vrot.slane %v5486, 2
        %v5909 = vsel %vm854, %v5906, %v5908
        %v5928 = vunpack.c.l.b16 %v5889
        %v5929 = vunpack.c.l.b16 %v5890
        %v5930 = vunpack.c.l.b16 %v5891
        %v5931 = vunpack.c.l.b16 %v5892
        %v5932 = vunpack.c.l.b16 %v5893
        %v5933 = vunpack.c.l.b16 %v5894
        %v5934 = vunpack.c.l.b16 %v5895
        %v5935 = vunpack.c.l.b16 %v5896
        %v5936 = vunpack.c.l.b16 %v5897
        %v5937 = vunpack.c.l.b16 %v5898
        %v5938 = vunpack.c.l.b16 %v5899
        %v5939 = vunpack.c.l.b16 %v5900
        %v5940 = vunpack.c.l.b16 %v5901
        %v5941 = vunpack.c.l.b16 %v5902
        %v5942 = vunpack.c.l.b16 %v5903
        %v5943 = vunpack.c.l.b16 %v5904
        %v5944 = vpack.c.b16 %v5929, %v5928
        %v5945 = vpack.c.b16 %v5931, %v5930
        %v5946 = vpack.c.b16 %v5933, %v5932
        %v5947 = vpack.c.b16 %v5935, %v5934
        %v5948 = vpack.c.b16 %v5937, %v5936
        %v5949 = vpack.c.b16 %v5939, %v5938
        %v5950 = vpack.c.b16 %v5941, %v5940
        %v5951 = vpack.c.b16 %v5943, %v5942
        %5960 = vmatprep.subr.bf16.mxu0 0
        %5961 = vmatpush1.bf16.msra.mxu0 %v5944
        %5962 = vmatprep.subr.bf16.mxu0 0
        %5963 = vmatpush1.bf16.msra.mxu0 %v5945
        %5964 = vmatprep.subr.bf16.mxu0 0
        %5965 = vmatpush1.bf16.msra.mxu0 %v5946
        %5966 = vmatprep.subr.bf16.mxu0 0
        %5967 = vmatpush1.bf16.msra.mxu0 %v5947
        %5968 = vmatprep.subr.bf16.mxu0 0
        %5969 = vmatpush1.bf16.msra.mxu0 %v5948
        %5970 = vmatprep.subr.bf16.mxu0 0
        %5971 = vmatpush1.bf16.msra.mxu0 %v5949
        %5972 = vmatprep.subr.bf16.mxu0 0
        %5973 = vmatpush1.bf16.msra.mxu0 %v5950
        %5974 = vmatprep.subr.bf16.mxu0 0
        %5975 = vmatpush1.bf16.msra.mxu0 %v5951
        %5976 = vmatprep.subr.bf16.mxu0 0
        %5977 = vmatpush1.bf16.msra.mxu0 0
        %5978 = vmatprep.subr.bf16.mxu0 0
        %5979 = vmatpush1.bf16.msra.mxu0 0
        %5980 = vmatprep.subr.bf16.mxu0 0
        %5981 = vmatpush1.bf16.msra.mxu0 0
        %5982 = vmatprep.subr.bf16.mxu0 0
        %5983 = vmatpush1.bf16.msra.mxu0 0
        %5984 = vmatprep.subr.bf16.mxu0 0
        %5985 = vmatpush1.bf16.msra.mxu0 0
        %5986 = vmatprep.subr.bf16.mxu0 0
        %5987 = vmatpush1.bf16.msra.mxu0 0
        %5988 = vmatprep.subr.bf16.mxu0 0
        %5989 = vmatpush1.bf16.msra.mxu0 0
        %5990 = vmatprep.subr.bf16.mxu0 0
        %5991 = vmatpush1.bf16.msra.mxu0 0
        %5992 = vmatprep.mubr.bf16.mxu0 0
        %5993 = vmatmul.mubr.bf16.gmra.mrb[0].mxu0 %v5907
        %v5994 = vpop.f32.mrb[0].mxu0
        %v5995 = vadd.f32 0.0, %v5994
        %v5996 = vpop.f32.mrb[0].mxu0
        %v5997 = vpop.f32.mrb[0].mxu0
        %v5998 = vadd.f32 0.0, %v5997
        %v5999 = vpop.f32.mrb[0].mxu0
        %6000 = vmatprep.mubr.bf16.mxu0 0
        %6001 = vmatmul.mubr.bf16.gmra.mrb[0].mxu0 %v5909
        %v6002 = vpop.f32.mrb[0].mxu0
        %v6003 = vadd.f32 0.0, %v6002
        %v6004 = vpop.f32.mrb[0].mxu0
        %v6005 = vpop.f32.mrb[0].mxu0
        %v6006 = vadd.f32 0.0, %v6005
        %v6007 = vpop.f32.mrb[0].mxu0
        %6008 = vdwg.mxu0
        %v6009 = vadd.f32 %v5884, %v5995
        %v6010 = vadd.f32 %v5885, %v5998
        %v6011 = vadd.f32 %v5886, %v6003
        %v6012 = vadd.f32 %v5887, %v6006
        %s6013 = scalar_lea.vmem [#allocation8], 832
        %v6014 = vld [vmem:[%s6013] sm:$0xf]
        %v6015 = vld [vmem:[%s6013 + $0x4] sm:$0xf]
        %v6016 = vld [vmem:[%s6013 + $0x8] sm:$0xf]
        %v6017 = vld [vmem:[%s6013 + $0xc] sm:$0xf]
        %v6018 = vld [vmem:[%s6013 + $0x10] sm:$0xf]
        %v6019 = vld [vmem:[%s6013 + $0x14] sm:$0xf]
        %v6020 = vld [vmem:[%s6013 + $0x18] sm:$0xf]
        %v6021 = vld [vmem:[%s6013 + $0x1c] sm:$0xf]
        %v6022 = vld [vmem:[%s6013 + $0x20] sm:$0xf]
        %v6023 = vld [vmem:[%s6013 + $0x24] sm:$0xf]
        %v6024 = vld [vmem:[%s6013 + $0x28] sm:$0xf]
        %v6025 = vld [vmem:[%s6013 + $0x2c] sm:$0xf]
        %v6026 = vld [vmem:[%s6013 + $0x30] sm:$0xf]
        %v6027 = vld [vmem:[%s6013 + $0x34] sm:$0xf]
        %v6028 = vld [vmem:[%s6013 + $0x38] sm:$0xf]
        %v6029 = vld [vmem:[%s6013 + $0x3c] sm:$0xf]
        %v6030 = vrot.slane %v5505, 2
        %v6031 = vrot.slane %v5507, 3
        %v6032 = vor.u32 %v6030, %v6031
        %v6033 = vrot.slane %v5516, 2
        %v6034 = vrot.slane %v5512, 3
        %v6035 = vor.u32 %v6033, %v6034
        %v6036 = vsel %vm980, %v6032, %v6035
        %v6037 = vrot.slane %v5779, 2
        %v6038 = vrot.slane %v5520, 3
        %v6039 = vor.u32 %v6037, %v6038
        %v6040 = vsel %vm980, %v6035, %v6039
        %v6059 = vunpack.c.l.b16 %v6014
        %v6060 = vunpack.c.l.b16 %v6015
        %v6061 = vunpack.c.l.b16 %v6016
        %v6062 = vunpack.c.l.b16 %v6017
        %v6063 = vunpack.c.l.b16 %v6018
        %v6064 = vunpack.c.l.b16 %v6019
        %v6065 = vunpack.c.l.b16 %v6020
        %v6066 = vunpack.c.l.b16 %v6021
        %v6067 = vunpack.c.l.b16 %v6022
        %v6068 = vunpack.c.l.b16 %v6023
        %v6069 = vunpack.c.l.b16 %v6024
        %v6070 = vunpack.c.l.b16 %v6025
        %v6071 = vunpack.c.l.b16 %v6026
        %v6072 = vunpack.c.l.b16 %v6027
        %v6073 = vunpack.c.l.b16 %v6028
        %v6074 = vunpack.c.l.b16 %v6029
        %v6075 = vpack.c.b16 %v6060, %v6059
        %v6076 = vpack.c.b16 %v6062, %v6061
        %v6077 = vpack.c.b16 %v6064, %v6063
        %v6078 = vpack.c.b16 %v6066, %v6065
        %v6079 = vpack.c.b16 %v6068, %v6067
        %v6080 = vpack.c.b16 %v6070, %v6069
        %v6081 = vpack.c.b16 %v6072, %v6071
        %v6082 = vpack.c.b16 %v6074, %v6073
        %6091 = vmatprep.subr.bf16.mxu0 0
        %6092 = vmatpush1.bf16.msra.mxu0 %v6075
        %6093 = vmatprep.subr.bf16.mxu0 0
        %6094 = vmatpush1.bf16.msra.mxu0 %v6076
        %6095 = vmatprep.subr.bf16.mxu0 0
        %6096 = vmatpush1.bf16.msra.mxu0 %v6077
        %6097 = vmatprep.subr.bf16.mxu0 0
        %6098 = vmatpush1.bf16.msra.mxu0 %v6078
        %6099 = vmatprep.subr.bf16.mxu0 0
        %6100 = vmatpush1.bf16.msra.mxu0 %v6079
        %6101 = vmatprep.subr.bf16.mxu0 0
        %6102 = vmatpush1.bf16.msra.mxu0 %v6080
        %6103 = vmatprep.subr.bf16.mxu0 0
        %6104 = vmatpush1.bf16.msra.mxu0 %v6081
        %6105 = vmatprep.subr.bf16.mxu0 0
        %6106 = vmatpush1.bf16.msra.mxu0 %v6082
        %6107 = vmatprep.subr.bf16.mxu0 0
        %6108 = vmatpush1.bf16.msra.mxu0 0
        %6109 = vmatprep.subr.bf16.mxu0 0
        %6110 = vmatpush1.bf16.msra.mxu0 0
        %6111 = vmatprep.subr.bf16.mxu0 0
        %6112 = vmatpush1.bf16.msra.mxu0 0
        %6113 = vmatprep.subr.bf16.mxu0 0
        %6114 = vmatpush1.bf16.msra.mxu0 0
        %6115 = vmatprep.subr.bf16.mxu0 0
        %6116 = vmatpush1.bf16.msra.mxu0 0
        %6117 = vmatprep.subr.bf16.mxu0 0
        %6118 = vmatpush1.bf16.msra.mxu0 0
        %6119 = vmatprep.subr.bf16.mxu0 0
        %6120 = vmatpush1.bf16.msra.mxu0 0
        %6121 = vmatprep.subr.bf16.mxu0 0
        %6122 = vmatpush1.bf16.msra.mxu0 0
        %6123 = vmatprep.mubr.bf16.mxu0 0
        %6124 = vmatmul.mubr.bf16.gmra.mrb[0].mxu0 %v6036
        %v6125 = vpop.f32.mrb[0].mxu0
        %v6126 = vadd.f32 0.0, %v6125
        %v6127 = vpop.f32.mrb[0].mxu0
        %v6128 = vpop.f32.mrb[0].mxu0
        %v6129 = vadd.f32 0.0, %v6128
        %v6130 = vpop.f32.mrb[0].mxu0
        %6131 = vmatprep.mubr.bf16.mxu0 0
        %6132 = vmatmul.mubr.bf16.gmra.mrb[0].mxu0 %v6040
        %v6133 = vpop.f32.mrb[0].mxu0
        %v6134 = vadd.f32 0.0, %v6133
        %v6135 = vpop.f32.mrb[0].mxu0
        %v6136 = vpop.f32.mrb[0].mxu0
        %v6137 = vadd.f32 0.0, %v6136
        %v6138 = vpop.f32.mrb[0].mxu0
        %6139 = vdwg.mxu0
        %v6140 = vadd.f32 %v6009, %v6126
        %v6141 = vadd.f32 %v6010, %v6129
        %v6142 = vadd.f32 %v6011, %v6134
        %v6143 = vadd.f32 %v6012, %v6137
        %s6144 = scalar_lea.vmem [#allocation8], 896
        %v6145 = vld [vmem:[%s6144] sm:$0xf]
        %v6146 = vld [vmem:[%s6144 + $0x4] sm:$0xf]
        %v6147 = vld [vmem:[%s6144 + $0x8] sm:$0xf]
        %v6148 = vld [vmem:[%s6144 + $0xc] sm:$0xf]
        %v6149 = vld [vmem:[%s6144 + $0x10] sm:$0xf]
        %v6150 = vld [vmem:[%s6144 + $0x14] sm:$0xf]
        %v6151 = vld [vmem:[%s6144 + $0x18] sm:$0xf]
        %v6152 = vld [vmem:[%s6144 + $0x1c] sm:$0xf]
        %v6153 = vld [vmem:[%s6144 + $0x20] sm:$0xf]
        %v6154 = vld [vmem:[%s6144 + $0x24] sm:$0xf]
        %v6155 = vld [vmem:[%s6144 + $0x28] sm:$0xf]
        %v6156 = vld [vmem:[%s6144 + $0x2c] sm:$0xf]
        %v6157 = vld [vmem:[%s6144 + $0x30] sm:$0xf]
        %v6158 = vld [vmem:[%s6144 + $0x34] sm:$0xf]
        %v6159 = vld [vmem:[%s6144 + $0x38] sm:$0xf]
        %v6160 = vld [vmem:[%s6144 + $0x3c] sm:$0xf]
        %v6161 = vrot.slane %v5366, 3
        %v6162 = vrot.slane %v5367, 3
        %v6163 = vsel %vm1112, %v6161, %v6162
        %v6164 = vrot.slane %v5486, 3
        %v6165 = vsel %vm1112, %v6162, %v6164
        %v6184 = vunpack.c.l.b16 %v6145
        %v6185 = vunpack.c.l.b16 %v6146
        %v6186 = vunpack.c.l.b16 %v6147
        %v6187 = vunpack.c.l.b16 %v6148
        %v6188 = vunpack.c.l.b16 %v6149
        %v6189 = vunpack.c.l.b16 %v6150
        %v6190 = vunpack.c.l.b16 %v6151
        %v6191 = vunpack.c.l.b16 %v6152
        %v6192 = vunpack.c.l.b16 %v6153
        %v6193 = vunpack.c.l.b16 %v6154
        %v6194 = vunpack.c.l.b16 %v6155
        %v6195 = vunpack.c.l.b16 %v6156
        %v6196 = vunpack.c.l.b16 %v6157
        %v6197 = vunpack.c.l.b16 %v6158
        %v6198 = vunpack.c.l.b16 %v6159
        %v6199 = vunpack.c.l.b16 %v6160
        %v6200 = vpack.c.b16 %v6185, %v6184
        %v6201 = vpack.c.b16 %v6187, %v6186
        %v6202 = vpack.c.b16 %v6189, %v6188
        %v6203 = vpack.c.b16 %v6191, %v6190
        %v6204 = vpack.c.b16 %v6193, %v6192
        %v6205 = vpack.c.b16 %v6195, %v6194
        %v6206 = vpack.c.b16 %v6197, %v6196
        %v6207 = vpack.c.b16 %v6199, %v6198
        %6216 = vmatprep.subr.bf16.mxu0 0
        %6217 = vmatpush1.bf16.msra.mxu0 %v6200
        %6218 = vmatprep.subr.bf16.mxu0 0
        %6219 = vmatpush1.bf16.msra.mxu0 %v6201
        %6220 = vmatprep.subr.bf16.mxu0 0
        %6221 = vmatpush1.bf16.msra.mxu0 %v6202
        %6222 = vmatprep.subr.bf16.mxu0 0
        %6223 = vmatpush1.bf16.msra.mxu0 %v6203
        %6224 = vmatprep.subr.bf16.mxu0 0
        %6225 = vmatpush1.bf16.msra.mxu0 %v6204
        %6226 = vmatprep.subr.bf16.mxu0 0
        %6227 = vmatpush1.bf16.msra.mxu0 %v6205
        %6228 = vmatprep.subr.bf16.mxu0 0
        %6229 = vmatpush1.bf16.msra.mxu0 %v6206
        %6230 = vmatprep.subr.bf16.mxu0 0
        %6231 = vmatpush1.bf16.msra.mxu0 %v6207
        %6232 = vmatprep.subr.bf16.mxu0 0
        %6233 = vmatpush1.bf16.msra.mxu0 0
        %6234 = vmatprep.subr.bf16.mxu0 0
        %6235 = vmatpush1.bf16.msra.mxu0 0
        %6236 = vmatprep.subr.bf16.mxu0 0
        %6237 = vmatpush1.bf16.msra.mxu0 0
        %6238 = vmatprep.subr.bf16.mxu0 0
        %6239 = vmatpush1.bf16.msra.mxu0 0
        %6240 = vmatprep.subr.bf16.mxu0 0
        %6241 = vmatpush1.bf16.msra.mxu0 0
        %6242 = vmatprep.subr.bf16.mxu0 0
        %6243 = vmatpush1.bf16.msra.mxu0 0
        %6244 = vmatprep.subr.bf16.mxu0 0
        %6245 = vmatpush1.bf16.msra.mxu0 0
        %6246 = vmatprep.subr.bf16.mxu0 0
        %6247 = vmatpush1.bf16.msra.mxu0 0
        %6248 = vmatprep.mubr.bf16.mxu0 0
        %6249 = vmatmul.mubr.bf16.gmra.mrb[0].mxu0 %v6163
        %v6250 = vpop.f32.mrb[0].mxu0
        %v6251 = vadd.f32 0.0, %v6250
        %v6252 = vpop.f32.mrb[0].mxu0
        %v6253 = vpop.f32.mrb[0].mxu0
        %v6254 = vadd.f32 0.0, %v6253
        %v6255 = vpop.f32.mrb[0].mxu0
        %6256 = vmatprep.mubr.bf16.mxu0 0
        %6257 = vmatmul.mubr.bf16.gmra.mrb[0].mxu0 %v6165
        %v6258 = vpop.f32.mrb[0].mxu0
        %v6259 = vadd.f32 0.0, %v6258
        %v6260 = vpop.f32.mrb[0].mxu0
        %v6261 = vpop.f32.mrb[0].mxu0
        %v6262 = vadd.f32 0.0, %v6261
        %v6263 = vpop.f32.mrb[0].mxu0
        %6264 = vdwg.mxu0
        %v6265 = vadd.f32 %v6140, %v6251
        %v6266 = vadd.f32 %v6141, %v6254
        %v6267 = vadd.f32 %v6142, %v6259
        %v6268 = vadd.f32 %v6143, %v6262
        %s6269 = scalar_lea.vmem [#allocation8], 960
        %v6270 = vld [vmem:[%s6269] sm:$0xf]
        %v6271 = vld [vmem:[%s6269 + $0x4] sm:$0xf]
        %v6272 = vld [vmem:[%s6269 + $0x8] sm:$0xf]
        %v6273 = vld [vmem:[%s6269 + $0xc] sm:$0xf]
        %v6274 = vld [vmem:[%s6269 + $0x10] sm:$0xf]
        %v6275 = vld [vmem:[%s6269 + $0x14] sm:$0xf]
        %v6276 = vld [vmem:[%s6269 + $0x18] sm:$0xf]
        %v6277 = vld [vmem:[%s6269 + $0x1c] sm:$0xf]
        %v6278 = vld [vmem:[%s6269 + $0x20] sm:$0xf]
        %v6279 = vld [vmem:[%s6269 + $0x24] sm:$0xf]
        %v6280 = vld [vmem:[%s6269 + $0x28] sm:$0xf]
        %v6281 = vld [vmem:[%s6269 + $0x2c] sm:$0xf]
        %v6282 = vld [vmem:[%s6269 + $0x30] sm:$0xf]
        %v6283 = vld [vmem:[%s6269 + $0x34] sm:$0xf]
        %v6284 = vld [vmem:[%s6269 + $0x38] sm:$0xf]
        %v6285 = vld [vmem:[%s6269 + $0x3c] sm:$0xf]
        %v6286 = vrot.slane %v5505, 3
        %v6287 = vrot.slane %v5507, 4
        %v6288 = vor.u32 %v6286, %v6287
        %v6289 = vrot.slane %v5516, 3
        %v6290 = vrot.slane %v5512, 4
        %v6291 = vor.u32 %v6289, %v6290
        %v6292 = vsel %vm1238, %v6288, %v6291
        %v6293 = vrot.slane %v5779, 3
        %v6294 = vrot.slane %v5520, 4
        %v6295 = vor.u32 %v6293, %v6294
        %v6296 = vsel %vm1238, %v6291, %v6295
        %v6315 = vunpack.c.l.b16 %v6270
        %v6316 = vunpack.c.l.b16 %v6271
        %v6317 = vunpack.c.l.b16 %v6272
        %v6318 = vunpack.c.l.b16 %v6273
        %v6319 = vunpack.c.l.b16 %v6274
        %v6320 = vunpack.c.l.b16 %v6275
        %v6321 = vunpack.c.l.b16 %v6276
        %v6322 = vunpack.c.l.b16 %v6277
        %v6323 = vunpack.c.l.b16 %v6278
        %v6324 = vunpack.c.l.b16 %v6279
        %v6325 = vunpack.c.l.b16 %v6280
        %v6326 = vunpack.c.l.b16 %v6281
        %v6327 = vunpack.c.l.b16 %v6282
        %v6328 = vunpack.c.l.b16 %v6283
        %v6329 = vunpack.c.l.b16 %v6284
        %v6330 = vunpack.c.l.b16 %v6285
        %v6331 = vpack.c.b16 %v6316, %v6315
        %v6332 = vpack.c.b16 %v6318, %v6317
        %v6333 = vpack.c.b16 %v6320, %v6319
        %v6334 = vpack.c.b16 %v6322, %v6321
        %v6335 = vpack.c.b16 %v6324, %v6323
        %v6336 = vpack.c.b16 %v6326, %v6325
        %v6337 = vpack.c.b16 %v6328, %v6327
        %v6338 = vpack.c.b16 %v6330, %v6329
        %6347 = vmatprep.subr.bf16.mxu0 0
        %6348 = vmatpush1.bf16.msra.mxu0 %v6331
        %6349 = vmatprep.subr.bf16.mxu0 0
        %6350 = vmatpush1.bf16.msra.mxu0 %v6332
        %6351 = vmatprep.subr.bf16.mxu0 0
        %6352 = vmatpush1.bf16.msra.mxu0 %v6333
        %6353 = vmatprep.subr.bf16.mxu0 0
        %6354 = vmatpush1.bf16.msra.mxu0 %v6334
        %6355 = vmatprep.subr.bf16.mxu0 0
        %6356 = vmatpush1.bf16.msra.mxu0 %v6335
        %6357 = vmatprep.subr.bf16.mxu0 0
        %6358 = vmatpush1.bf16.msra.mxu0 %v6336
        %6359 = vmatprep.subr.bf16.mxu0 0
        %6360 = vmatpush1.bf16.msra.mxu0 %v6337
        %6361 = vmatprep.subr.bf16.mxu0 0
        %6362 = vmatpush1.bf16.msra.mxu0 %v6338
        %6363 = vmatprep.subr.bf16.mxu0 0
        %6364 = vmatpush1.bf16.msra.mxu0 0
        %6365 = vmatprep.subr.bf16.mxu0 0
        %6366 = vmatpush1.bf16.msra.mxu0 0
        %6367 = vmatprep.subr.bf16.mxu0 0
        %6368 = vmatpush1.bf16.msra.mxu0 0
        %6369 = vmatprep.subr.bf16.mxu0 0
        %6370 = vmatpush1.bf16.msra.mxu0 0
        %6371 = vmatprep.subr.bf16.mxu0 0
        %6372 = vmatpush1.bf16.msra.mxu0 0
        %6373 = vmatprep.subr.bf16.mxu0 0
        %6374 = vmatpush1.bf16.msra.mxu0 0
        %6375 = vmatprep.subr.bf16.mxu0 0
        %6376 = vmatpush1.bf16.msra.mxu0 0
        %6377 = vmatprep.subr.bf16.mxu0 0
        %6378 = vmatpush1.bf16.msra.mxu0 0
        %6379 = vmatprep.mubr.bf16.mxu0 0
        %6380 = vmatmul.mubr.bf16.gmra.mrb[0].mxu0 %v6292
        %v6381 = vpop.f32.mrb[0].mxu0
        %v6382 = vadd.f32 0.0, %v6381
        %v6383 = vpop.f32.mrb[0].mxu0
        %v6384 = vpop.f32.mrb[0].mxu0
        %v6385 = vadd.f32 0.0, %v6384
        %v6386 = vpop.f32.mrb[0].mxu0
        %6387 = vmatprep.mubr.bf16.mxu0 0
        %6388 = vmatmul.mubr.bf16.gmra.mrb[0].mxu0 %v6296
        %v6389 = vpop.f32.mrb[0].mxu0
        %v6390 = vadd.f32 0.0, %v6389
        %v6391 = vpop.f32.mrb[0].mxu0
        %v6392 = vpop.f32.mrb[0].mxu0
        %v6393 = vadd.f32 0.0, %v6392
        %v6394 = vpop.f32.mrb[0].mxu0
        %6395 = vdwg.mxu0
        %v6396 = vadd.f32 %v6265, %v6382
        %v6397 = vadd.f32 %v6266, %v6385
        %v6398 = vadd.f32 %v6267, %v6390
        %v6399 = vadd.f32 %v6268, %v6393
        %v6400 = vpack.c.bf16 %v4340, %v4333
        %s6401 = scalar_lea.vmem [#allocation8], 1024
        %v6402 = vld [vmem:[%s6401] sm:$0xf]
        %v6403 = vld [vmem:[%s6401 + $0x4] sm:$0xf]
        %v6404 = vld [vmem:[%s6401 + $0x8] sm:$0xf]
        %v6405 = vld [vmem:[%s6401 + $0xc] sm:$0xf]
        %v6406 = vld [vmem:[%s6401 + $0x10] sm:$0xf]
        %v6407 = vld [vmem:[%s6401 + $0x14] sm:$0xf]
        %v6408 = vld [vmem:[%s6401 + $0x18] sm:$0xf]
        %v6409 = vld [vmem:[%s6401 + $0x1c] sm:$0xf]
        %v6410 = vld [vmem:[%s6401 + $0x20] sm:$0xf]
        %v6411 = vld [vmem:[%s6401 + $0x24] sm:$0xf]
        %v6412 = vld [vmem:[%s6401 + $0x28] sm:$0xf]
        %v6413 = vld [vmem:[%s6401 + $0x2c] sm:$0xf]
        %v6414 = vld [vmem:[%s6401 + $0x30] sm:$0xf]
        %v6415 = vld [vmem:[%s6401 + $0x34] sm:$0xf]
        %v6416 = vld [vmem:[%s6401 + $0x38] sm:$0xf]
        %v6417 = vld [vmem:[%s6401 + $0x3c] sm:$0xf]
        %v6434 = vunpack.c.l.b16 %v6402
        %v6435 = vunpack.c.l.b16 %v6403
        %v6436 = vunpack.c.l.b16 %v6404
        %v6437 = vunpack.c.l.b16 %v6405
        %v6438 = vunpack.c.l.b16 %v6406
        %v6439 = vunpack.c.l.b16 %v6407
        %v6440 = vunpack.c.l.b16 %v6408
        %v6441 = vunpack.c.l.b16 %v6409
        %v6442 = vunpack.c.l.b16 %v6410
        %v6443 = vunpack.c.l.b16 %v6411
        %v6444 = vunpack.c.l.b16 %v6412
        %v6445 = vunpack.c.l.b16 %v6413
        %v6446 = vunpack.c.l.b16 %v6414
        %v6447 = vunpack.c.l.b16 %v6415
        %v6448 = vunpack.c.l.b16 %v6416
        %v6449 = vunpack.c.l.b16 %v6417
        %v6450 = vpack.c.b16 %v6435, %v6434
        %v6451 = vpack.c.b16 %v6437, %v6436
        %v6452 = vpack.c.b16 %v6439, %v6438
        %v6453 = vpack.c.b16 %v6441, %v6440
        %v6454 = vpack.c.b16 %v6443, %v6442
        %v6455 = vpack.c.b16 %v6445, %v6444
        %v6456 = vpack.c.b16 %v6447, %v6446
        %v6457 = vpack.c.b16 %v6449, %v6448
        %6466 = vmatprep.subr.bf16.mxu0 0
        %6467 = vmatpush1.bf16.msra.mxu0 %v6450
        %6468 = vmatprep.subr.bf16.mxu0 0
        %6469 = vmatpush1.bf16.msra.mxu0 %v6451
        %6470 = vmatprep.subr.bf16.mxu0 0
        %6471 = vmatpush1.bf16.msra.mxu0 %v6452
        %6472 = vmatprep.subr.bf16.mxu0 0
        %6473 = vmatpush1.bf16.msra.mxu0 %v6453
        %6474 = vmatprep.subr.bf16.mxu0 0
        %6475 = vmatpush1.bf16.msra.mxu0 %v6454
        %6476 = vmatprep.subr.bf16.mxu0 0
        %6477 = vmatpush1.bf16.msra.mxu0 %v6455
        %6478 = vmatprep.subr.bf16.mxu0 0
        %6479 = vmatpush1.bf16.msra.mxu0 %v6456
        %6480 = vmatprep.subr.bf16.mxu0 0
        %6481 = vmatpush1.bf16.msra.mxu0 %v6457
        %6482 = vmatprep.subr.bf16.mxu0 0
        %6483 = vmatpush1.bf16.msra.mxu0 0
        %6484 = vmatprep.subr.bf16.mxu0 0
        %6485 = vmatpush1.bf16.msra.mxu0 0
        %6486 = vmatprep.subr.bf16.mxu0 0
        %6487 = vmatpush1.bf16.msra.mxu0 0
        %6488 = vmatprep.subr.bf16.mxu0 0
        %6489 = vmatpush1.bf16.msra.mxu0 0
        %6490 = vmatprep.subr.bf16.mxu0 0
        %6491 = vmatpush1.bf16.msra.mxu0 0
        %6492 = vmatprep.subr.bf16.mxu0 0
        %6493 = vmatpush1.bf16.msra.mxu0 0
        %6494 = vmatprep.subr.bf16.mxu0 0
        %6495 = vmatpush1.bf16.msra.mxu0 0
        %6496 = vmatprep.subr.bf16.mxu0 0
        %6497 = vmatpush1.bf16.msra.mxu0 0
        %6498 = vmatprep.mubr.bf16.mxu0 0
        %6499 = vmatmul.mubr.bf16.gmra.mrb[0].mxu0 %v4342
        %v6500 = vpop.f32.mrb[0].mxu0
        %v6501 = vadd.f32 0.0, %v6500
        %v6502 = vpop.f32.mrb[0].mxu0
        %v6503 = vpop.f32.mrb[0].mxu0
        %v6504 = vadd.f32 0.0, %v6503
        %v6505 = vpop.f32.mrb[0].mxu0
        %6506 = vmatprep.mubr.bf16.mxu0 0
        %6507 = vmatmul.mubr.bf16.gmra.mrb[0].mxu0 %v6400
        %v6508 = vpop.f32.mrb[0].mxu0
        %v6509 = vadd.f32 0.0, %v6508
        %v6510 = vpop.f32.mrb[0].mxu0
        %v6511 = vpop.f32.mrb[0].mxu0
        %v6512 = vadd.f32 0.0, %v6511
        %v6513 = vpop.f32.mrb[0].mxu0
        %6514 = vdwg.mxu0
        %v6515 = vadd.f32 %v6396, %v6501
        %v6516 = vadd.f32 %v6397, %v6504
        %v6517 = vadd.f32 %v6398, %v6509
        %v6518 = vadd.f32 %v6399, %v6512
        %s6519 = scalar_lea.vmem [#allocation8], 1088
        %v6520 = vld [vmem:[%s6519] sm:$0xf]
        %v6521 = vld [vmem:[%s6519 + $0x4] sm:$0xf]
        %v6522 = vld [vmem:[%s6519 + $0x8] sm:$0xf]
        %v6523 = vld [vmem:[%s6519 + $0xc] sm:$0xf]
        %v6524 = vld [vmem:[%s6519 + $0x10] sm:$0xf]
        %v6525 = vld [vmem:[%s6519 + $0x14] sm:$0xf]
        %v6526 = vld [vmem:[%s6519 + $0x18] sm:$0xf]
        %v6527 = vld [vmem:[%s6519 + $0x1c] sm:$0xf]
        %v6528 = vld [vmem:[%s6519 + $0x20] sm:$0xf]
        %v6529 = vld [vmem:[%s6519 + $0x24] sm:$0xf]
        %v6530 = vld [vmem:[%s6519 + $0x28] sm:$0xf]
        %v6531 = vld [vmem:[%s6519 + $0x2c] sm:$0xf]
        %v6532 = vld [vmem:[%s6519 + $0x30] sm:$0xf]
        %v6533 = vld [vmem:[%s6519 + $0x34] sm:$0xf]
        %v6534 = vld [vmem:[%s6519 + $0x38] sm:$0xf]
        %v6535 = vld [vmem:[%s6519 + $0x3c] sm:$0xf]
        %v6537 = vshll.u32 %v6400, 16
        %v6539 = vrot.slane %v6537, 1
        %v6540 = vsel %vm357, %v4391, %v6539
        %v6541 = vshrl.u32 %v6400, 16
        %v6543 = vor.u32 %v6541, %v6539
        %v6544 = vsel %vm357, %v6543, %v2535
        %v6563 = vunpack.c.l.b16 %v6520
        %v6564 = vunpack.c.l.b16 %v6521
        %v6565 = vunpack.c.l.b16 %v6522
        %v6566 = vunpack.c.l.b16 %v6523
        %v6567 = vunpack.c.l.b16 %v6524
        %v6568 = vunpack.c.l.b16 %v6525
        %v6569 = vunpack.c.l.b16 %v6526
        %v6570 = vunpack.c.l.b16 %v6527
        %v6571 = vunpack.c.l.b16 %v6528
        %v6572 = vunpack.c.l.b16 %v6529
        %v6573 = vunpack.c.l.b16 %v6530
        %v6574 = vunpack.c.l.b16 %v6531
        %v6575 = vunpack.c.l.b16 %v6532
        %v6576 = vunpack.c.l.b16 %v6533
        %v6577 = vunpack.c.l.b16 %v6534
        %v6578 = vunpack.c.l.b16 %v6535
        %v6579 = vpack.c.b16 %v6564, %v6563
        %v6580 = vpack.c.b16 %v6566, %v6565
        %v6581 = vpack.c.b16 %v6568, %v6567
        %v6582 = vpack.c.b16 %v6570, %v6569
        %v6583 = vpack.c.b16 %v6572, %v6571
        %v6584 = vpack.c.b16 %v6574, %v6573
        %v6585 = vpack.c.b16 %v6576, %v6575
        %v6586 = vpack.c.b16 %v6578, %v6577
        %6595 = vmatprep.subr.bf16.mxu0 0
        %6596 = vmatpush1.bf16.msra.mxu0 %v6579
        %6597 = vmatprep.subr.bf16.mxu0 0
        %6598 = vmatpush1.bf16.msra.mxu0 %v6580
        %6599 = vmatprep.subr.bf16.mxu0 0
        %6600 = vmatpush1.bf16.msra.mxu0 %v6581
        %6601 = vmatprep.subr.bf16.mxu0 0
        %6602 = vmatpush1.bf16.msra.mxu0 %v6582
        %6603 = vmatprep.subr.bf16.mxu0 0
        %6604 = vmatpush1.bf16.msra.mxu0 %v6583
        %6605 = vmatprep.subr.bf16.mxu0 0
        %6606 = vmatpush1.bf16.msra.mxu0 %v6584
        %6607 = vmatprep.subr.bf16.mxu0 0
        %6608 = vmatpush1.bf16.msra.mxu0 %v6585
        %6609 = vmatprep.subr.bf16.mxu0 0
        %6610 = vmatpush1.bf16.msra.mxu0 %v6586
        %6611 = vmatprep.subr.bf16.mxu0 0
        %6612 = vmatpush1.bf16.msra.mxu0 0
        %6613 = vmatprep.subr.bf16.mxu0 0
        %6614 = vmatpush1.bf16.msra.mxu0 0
        %6615 = vmatprep.subr.bf16.mxu0 0
        %6616 = vmatpush1.bf16.msra.mxu0 0
        %6617 = vmatprep.subr.bf16.mxu0 0
        %6618 = vmatpush1.bf16.msra.mxu0 0
        %6619 = vmatprep.subr.bf16.mxu0 0
        %6620 = vmatpush1.bf16.msra.mxu0 0
        %6621 = vmatprep.subr.bf16.mxu0 0
        %6622 = vmatpush1.bf16.msra.mxu0 0
        %6623 = vmatprep.subr.bf16.mxu0 0
        %6624 = vmatpush1.bf16.msra.mxu0 0
        %6625 = vmatprep.subr.bf16.mxu0 0
        %6626 = vmatpush1.bf16.msra.mxu0 0
        %6627 = vmatprep.mubr.bf16.mxu0 0
        %6628 = vmatmul.mubr.bf16.gmra.mrb[0].mxu0 %v6540
        %v6629 = vpop.f32.mrb[0].mxu0
        %v6630 = vadd.f32 0.0, %v6629
        %v6631 = vpop.f32.mrb[0].mxu0
        %v6632 = vpop.f32.mrb[0].mxu0
        %v6633 = vadd.f32 0.0, %v6632
        %v6634 = vpop.f32.mrb[0].mxu0
        %6635 = vmatprep.mubr.bf16.mxu0 0
        %6636 = vmatmul.mubr.bf16.gmra.mrb[0].mxu0 %v6544
        %v6637 = vpop.f32.mrb[0].mxu0
        %v6638 = vadd.f32 0.0, %v6637
        %v6639 = vpop.f32.mrb[0].mxu0
        %v6640 = vpop.f32.mrb[0].mxu0
        %v6641 = vadd.f32 0.0, %v6640
        %v6642 = vpop.f32.mrb[0].mxu0
        %6643 = vdwg.mxu0
        %v6644 = vadd.f32 %v6515, %v6630
        %v6645 = vadd.f32 %v6516, %v6633
        %v6646 = vadd.f32 %v6517, %v6638
        %v6647 = vadd.f32 %v6518, %v6641
        %s6648 = scalar_lea.vmem [#allocation8], 1152
        %v6649 = vld [vmem:[%s6648] sm:$0xf]
        %v6650 = vld [vmem:[%s6648 + $0x4] sm:$0xf]
        %v6651 = vld [vmem:[%s6648 + $0x8] sm:$0xf]
        %v6652 = vld [vmem:[%s6648 + $0xc] sm:$0xf]
        %v6653 = vld [vmem:[%s6648 + $0x10] sm:$0xf]
        %v6654 = vld [vmem:[%s6648 + $0x14] sm:$0xf]
        %v6655 = vld [vmem:[%s6648 + $0x18] sm:$0xf]
        %v6656 = vld [vmem:[%s6648 + $0x1c] sm:$0xf]
        %v6657 = vld [vmem:[%s6648 + $0x20] sm:$0xf]
        %v6658 = vld [vmem:[%s6648 + $0x24] sm:$0xf]
        %v6659 = vld [vmem:[%s6648 + $0x28] sm:$0xf]
        %v6660 = vld [vmem:[%s6648 + $0x2c] sm:$0xf]
        %v6661 = vld [vmem:[%s6648 + $0x30] sm:$0xf]
        %v6662 = vld [vmem:[%s6648 + $0x34] sm:$0xf]
        %v6663 = vld [vmem:[%s6648 + $0x38] sm:$0xf]
        %v6664 = vld [vmem:[%s6648 + $0x3c] sm:$0xf]
        %v6666 = vrot.slane %v6400, 1
        %v6667 = vsel %vm594, %v4614, %v6666
        %v6668 = vsel %vm594, %v6666, %v2661
        %v6687 = vunpack.c.l.b16 %v6649
        %v6688 = vunpack.c.l.b16 %v6650
        %v6689 = vunpack.c.l.b16 %v6651
        %v6690 = vunpack.c.l.b16 %v6652
        %v6691 = vunpack.c.l.b16 %v6653
        %v6692 = vunpack.c.l.b16 %v6654
        %v6693 = vunpack.c.l.b16 %v6655
        %v6694 = vunpack.c.l.b16 %v6656
        %v6695 = vunpack.c.l.b16 %v6657
        %v6696 = vunpack.c.l.b16 %v6658
        %v6697 = vunpack.c.l.b16 %v6659
        %v6698 = vunpack.c.l.b16 %v6660
        %v6699 = vunpack.c.l.b16 %v6661
        %v6700 = vunpack.c.l.b16 %v6662
        %v6701 = vunpack.c.l.b16 %v6663
        %v6702 = vunpack.c.l.b16 %v6664
        %v6703 = vpack.c.b16 %v6688, %v6687
        %v6704 = vpack.c.b16 %v6690, %v6689
        %v6705 = vpack.c.b16 %v6692, %v6691
        %v6706 = vpack.c.b16 %v6694, %v6693
        %v6707 = vpack.c.b16 %v6696, %v6695
        %v6708 = vpack.c.b16 %v6698, %v6697
        %v6709 = vpack.c.b16 %v6700, %v6699
        %v6710 = vpack.c.b16 %v6702, %v6701
        %6719 = vmatprep.subr.bf16.mxu0 0
        %6720 = vmatpush1.bf16.msra.mxu0 %v6703
        %6721 = vmatprep.subr.bf16.mxu0 0
        %6722 = vmatpush1.bf16.msra.mxu0 %v6704
        %6723 = vmatprep.subr.bf16.mxu0 0
        %6724 = vmatpush1.bf16.msra.mxu0 %v6705
        %6725 = vmatprep.subr.bf16.mxu0 0
        %6726 = vmatpush1.bf16.msra.mxu0 %v6706
        %6727 = vmatprep.subr.bf16.mxu0 0
        %6728 = vmatpush1.bf16.msra.mxu0 %v6707
        %6729 = vmatprep.subr.bf16.mxu0 0
        %6730 = vmatpush1.bf16.msra.mxu0 %v6708
        %6731 = vmatprep.subr.bf16.mxu0 0
        %6732 = vmatpush1.bf16.msra.mxu0 %v6709
        %6733 = vmatprep.subr.bf16.mxu0 0
        %6734 = vmatpush1.bf16.msra.mxu0 %v6710
        %6735 = vmatprep.subr.bf16.mxu0 0
        %6736 = vmatpush1.bf16.msra.mxu0 0
        %6737 = vmatprep.subr.bf16.mxu0 0
        %6738 = vmatpush1.bf16.msra.mxu0 0
        %6739 = vmatprep.subr.bf16.mxu0 0
        %6740 = vmatpush1.bf16.msra.mxu0 0
        %6741 = vmatprep.subr.bf16.mxu0 0
        %6742 = vmatpush1.bf16.msra.mxu0 0
        %6743 = vmatprep.subr.bf16.mxu0 0
        %6744 = vmatpush1.bf16.msra.mxu0 0
        %6745 = vmatprep.subr.bf16.mxu0 0
        %6746 = vmatpush1.bf16.msra.mxu0 0
        %6747 = vmatprep.subr.bf16.mxu0 0
        %6748 = vmatpush1.bf16.msra.mxu0 0
        %6749 = vmatprep.subr.bf16.mxu0 0
        %6750 = vmatpush1.bf16.msra.mxu0 0
        %6751 = vmatprep.mubr.bf16.mxu0 0
        %6752 = vmatmul.mubr.bf16.gmra.mrb[0].mxu0 %v6667
        %v6753 = vpop.f32.mrb[0].mxu0
        %v6754 = vadd.f32 0.0, %v6753
        %v6755 = vpop.f32.mrb[0].mxu0
        %v6756 = vpop.f32.mrb[0].mxu0
        %v6757 = vadd.f32 0.0, %v6756
        %v6758 = vpop.f32.mrb[0].mxu0
        %6759 = vmatprep.mubr.bf16.mxu0 0
        %6760 = vmatmul.mubr.bf16.gmra.mrb[0].mxu0 %v6668
        %v6761 = vpop.f32.mrb[0].mxu0
        %v6762 = vadd.f32 0.0, %v6761
        %v6763 = vpop.f32.mrb[0].mxu0
        %v6764 = vpop.f32.mrb[0].mxu0
        %v6765 = vadd.f32 0.0, %v6764
        %v6766 = vpop.f32.mrb[0].mxu0
        %6767 = vdwg.mxu0
        %v6768 = vadd.f32 %v6644, %v6754
        %v6769 = vadd.f32 %v6645, %v6757
        %v6770 = vadd.f32 %v6646, %v6762
        %v6771 = vadd.f32 %v6647, %v6765
        %s6772 = scalar_lea.vmem [#allocation8], 1216
        %v6773 = vld [vmem:[%s6772] sm:$0xf]
        %v6774 = vld [vmem:[%s6772 + $0x4] sm:$0xf]
        %v6775 = vld [vmem:[%s6772 + $0x8] sm:$0xf]
        %v6776 = vld [vmem:[%s6772 + $0xc] sm:$0xf]
        %v6777 = vld [vmem:[%s6772 + $0x10] sm:$0xf]
        %v6778 = vld [vmem:[%s6772 + $0x14] sm:$0xf]
        %v6779 = vld [vmem:[%s6772 + $0x18] sm:$0xf]
        %v6780 = vld [vmem:[%s6772 + $0x1c] sm:$0xf]
        %v6781 = vld [vmem:[%s6772 + $0x20] sm:$0xf]
        %v6782 = vld [vmem:[%s6772 + $0x24] sm:$0xf]
        %v6783 = vld [vmem:[%s6772 + $0x28] sm:$0xf]
        %v6784 = vld [vmem:[%s6772 + $0x2c] sm:$0xf]
        %v6785 = vld [vmem:[%s6772 + $0x30] sm:$0xf]
        %v6786 = vld [vmem:[%s6772 + $0x34] sm:$0xf]
        %v6787 = vld [vmem:[%s6772 + $0x38] sm:$0xf]
        %v6788 = vld [vmem:[%s6772 + $0x3c] sm:$0xf]
        %v6789 = vrot.slane %v6541, 1
        %v6790 = vrot.slane %v6537, 2
        %v6791 = vor.u32 %v6789, %v6790
        %v6792 = vsel %vm720, %v4743, %v6791
        %v6793 = vsel %vm720, %v6791, %v2791
        %v6812 = vunpack.c.l.b16 %v6773
        %v6813 = vunpack.c.l.b16 %v6774
        %v6814 = vunpack.c.l.b16 %v6775
        %v6815 = vunpack.c.l.b16 %v6776
        %v6816 = vunpack.c.l.b16 %v6777
        %v6817 = vunpack.c.l.b16 %v6778
        %v6818 = vunpack.c.l.b16 %v6779
        %v6819 = vunpack.c.l.b16 %v6780
        %v6820 = vunpack.c.l.b16 %v6781
        %v6821 = vunpack.c.l.b16 %v6782
        %v6822 = vunpack.c.l.b16 %v6783
        %v6823 = vunpack.c.l.b16 %v6784
        %v6824 = vunpack.c.l.b16 %v6785
        %v6825 = vunpack.c.l.b16 %v6786
        %v6826 = vunpack.c.l.b16 %v6787
        %v6827 = vunpack.c.l.b16 %v6788
        %v6828 = vpack.c.b16 %v6813, %v6812
        %v6829 = vpack.c.b16 %v6815, %v6814
        %v6830 = vpack.c.b16 %v6817, %v6816
        %v6831 = vpack.c.b16 %v6819, %v6818
        %v6832 = vpack.c.b16 %v6821, %v6820
        %v6833 = vpack.c.b16 %v6823, %v6822
        %v6834 = vpack.c.b16 %v6825, %v6824
        %v6835 = vpack.c.b16 %v6827, %v6826
        %6844 = vmatprep.subr.bf16.mxu0 0
        %6845 = vmatpush1.bf16.msra.mxu0 %v6828
        %6846 = vmatprep.subr.bf16.mxu0 0
        %6847 = vmatpush1.bf16.msra.mxu0 %v6829
        %6848 = vmatprep.subr.bf16.mxu0 0
        %6849 = vmatpush1.bf16.msra.mxu0 %v6830
        %6850 = vmatprep.subr.bf16.mxu0 0
        %6851 = vmatpush1.bf16.msra.mxu0 %v6831
        %6852 = vmatprep.subr.bf16.mxu0 0
        %6853 = vmatpush1.bf16.msra.mxu0 %v6832
        %6854 = vmatprep.subr.bf16.mxu0 0
        %6855 = vmatpush1.bf16.msra.mxu0 %v6833
        %6856 = vmatprep.subr.bf16.mxu0 0
        %6857 = vmatpush1.bf16.msra.mxu0 %v6834
        %6858 = vmatprep.subr.bf16.mxu0 0
        %6859 = vmatpush1.bf16.msra.mxu0 %v6835
        %6860 = vmatprep.subr.bf16.mxu0 0
        %6861 = vmatpush1.bf16.msra.mxu0 0
        %6862 = vmatprep.subr.bf16.mxu0 0
        %6863 = vmatpush1.bf16.msra.mxu0 0
        %6864 = vmatprep.subr.bf16.mxu0 0
        %6865 = vmatpush1.bf16.msra.mxu0 0
        %6866 = vmatprep.subr.bf16.mxu0 0
        %6867 = vmatpush1.bf16.msra.mxu0 0
        %6868 = vmatprep.subr.bf16.mxu0 0
        %6869 = vmatpush1.bf16.msra.mxu0 0
        %6870 = vmatprep.subr.bf16.mxu0 0
        %6871 = vmatpush1.bf16.msra.mxu0 0
        %6872 = vmatprep.subr.bf16.mxu0 0
        %6873 = vmatpush1.bf16.msra.mxu0 0
        %6874 = vmatprep.subr.bf16.mxu0 0
        %6875 = vmatpush1.bf16.msra.mxu0 0
        %6876 = vmatprep.mubr.bf16.mxu0 0
        %6877 = vmatmul.mubr.bf16.gmra.mrb[0].mxu0 %v6792
        %v6878 = vpop.f32.mrb[0].mxu0
        %v6879 = vadd.f32 0.0, %v6878
        %v6880 = vpop.f32.mrb[0].mxu0
        %v6881 = vpop.f32.mrb[0].mxu0
        %v6882 = vadd.f32 0.0, %v6881
        %v6883 = vpop.f32.mrb[0].mxu0
        %6884 = vmatprep.mubr.bf16.mxu0 0
        %6885 = vmatmul.mubr.bf16.gmra.mrb[0].mxu0 %v6793
        %v6886 = vpop.f32.mrb[0].mxu0
        %v6887 = vadd.f32 0.0, %v6886
        %v6888 = vpop.f32.mrb[0].mxu0
        %v6889 = vpop.f32.mrb[0].mxu0
        %v6890 = vadd.f32 0.0, %v6889
        %v6891 = vpop.f32.mrb[0].mxu0
        %6892 = vdwg.mxu0
        %v6893 = vadd.f32 %v6768, %v6879
        %v6894 = vadd.f32 %v6769, %v6882
        %v6895 = vadd.f32 %v6770, %v6887
        %v6896 = vadd.f32 %v6771, %v6890
        %s6897 = scalar_lea.vmem [#allocation8], 1280
        %v6898 = vld [vmem:[%s6897] sm:$0xf]
        %v6899 = vld [vmem:[%s6897 + $0x4] sm:$0xf]
        %v6900 = vld [vmem:[%s6897 + $0x8] sm:$0xf]
        %v6901 = vld [vmem:[%s6897 + $0xc] sm:$0xf]
        %v6902 = vld [vmem:[%s6897 + $0x10] sm:$0xf]
        %v6903 = vld [vmem:[%s6897 + $0x14] sm:$0xf]
        %v6904 = vld [vmem:[%s6897 + $0x18] sm:$0xf]
        %v6905 = vld [vmem:[%s6897 + $0x1c] sm:$0xf]
        %v6906 = vld [vmem:[%s6897 + $0x20] sm:$0xf]
        %v6907 = vld [vmem:[%s6897 + $0x24] sm:$0xf]
        %v6908 = vld [vmem:[%s6897 + $0x28] sm:$0xf]
        %v6909 = vld [vmem:[%s6897 + $0x2c] sm:$0xf]
        %v6910 = vld [vmem:[%s6897 + $0x30] sm:$0xf]
        %v6911 = vld [vmem:[%s6897 + $0x34] sm:$0xf]
        %v6912 = vld [vmem:[%s6897 + $0x38] sm:$0xf]
        %v6913 = vld [vmem:[%s6897 + $0x3c] sm:$0xf]
        %v6914 = vrot.slane %v6400, 2
        %v6915 = vsel %vm854, %v4872, %v6914
        %v6916 = vsel %vm854, %v6914, %v2915
        %v6935 = vunpack.c.l.b16 %v6898
        %v6936 = vunpack.c.l.b16 %v6899
        %v6937 = vunpack.c.l.b16 %v6900
        %v6938 = vunpack.c.l.b16 %v6901
        %v6939 = vunpack.c.l.b16 %v6902
        %v6940 = vunpack.c.l.b16 %v6903
        %v6941 = vunpack.c.l.b16 %v6904
        %v6942 = vunpack.c.l.b16 %v6905
        %v6943 = vunpack.c.l.b16 %v6906
        %v6944 = vunpack.c.l.b16 %v6907
        %v6945 = vunpack.c.l.b16 %v6908
        %v6946 = vunpack.c.l.b16 %v6909
        %v6947 = vunpack.c.l.b16 %v6910
        %v6948 = vunpack.c.l.b16 %v6911
        %v6949 = vunpack.c.l.b16 %v6912
        %v6950 = vunpack.c.l.b16 %v6913
        %v6951 = vpack.c.b16 %v6936, %v6935
        %v6952 = vpack.c.b16 %v6938, %v6937
        %v6953 = vpack.c.b16 %v6940, %v6939
        %v6954 = vpack.c.b16 %v6942, %v6941
        %v6955 = vpack.c.b16 %v6944, %v6943
        %v6956 = vpack.c.b16 %v6946, %v6945
        %v6957 = vpack.c.b16 %v6948, %v6947
        %v6958 = vpack.c.b16 %v6950, %v6949
        %6967 = vmatprep.subr.bf16.mxu0 0
        %6968 = vmatpush1.bf16.msra.mxu0 %v6951
        %6969 = vmatprep.subr.bf16.mxu0 0
        %6970 = vmatpush1.bf16.msra.mxu0 %v6952
        %6971 = vmatprep.subr.bf16.mxu0 0
        %6972 = vmatpush1.bf16.msra.mxu0 %v6953
        %6973 = vmatprep.subr.bf16.mxu0 0
        %6974 = vmatpush1.bf16.msra.mxu0 %v6954
        %6975 = vmatprep.subr.bf16.mxu0 0
        %6976 = vmatpush1.bf16.msra.mxu0 %v6955
        %6977 = vmatprep.subr.bf16.mxu0 0
        %6978 = vmatpush1.bf16.msra.mxu0 %v6956
        %6979 = vmatprep.subr.bf16.mxu0 0
        %6980 = vmatpush1.bf16.msra.mxu0 %v6957
        %6981 = vmatprep.subr.bf16.mxu0 0
        %6982 = vmatpush1.bf16.msra.mxu0 %v6958
        %6983 = vmatprep.subr.bf16.mxu0 0
        %6984 = vmatpush1.bf16.msra.mxu0 0
        %6985 = vmatprep.subr.bf16.mxu0 0
        %6986 = vmatpush1.bf16.msra.mxu0 0
        %6987 = vmatprep.subr.bf16.mxu0 0
        %6988 = vmatpush1.bf16.msra.mxu0 0
        %6989 = vmatprep.subr.bf16.mxu0 0
        %6990 = vmatpush1.bf16.msra.mxu0 0
        %6991 = vmatprep.subr.bf16.mxu0 0
        %6992 = vmatpush1.bf16.msra.mxu0 0
        %6993 = vmatprep.subr.bf16.mxu0 0
        %6994 = vmatpush1.bf16.msra.mxu0 0
        %6995 = vmatprep.subr.bf16.mxu0 0
        %6996 = vmatpush1.bf16.msra.mxu0 0
        %6997 = vmatprep.subr.bf16.mxu0 0
        %6998 = vmatpush1.bf16.msra.mxu0 0
        %6999 = vmatprep.mubr.bf16.mxu0 0
        %7000 = vmatmul.mubr.bf16.gmra.mrb[0].mxu0 %v6915
        %v7001 = vpop.f32.mrb[0].mxu0
        %v7002 = vadd.f32 0.0, %v7001
        %v7003 = vpop.f32.mrb[0].mxu0
        %v7004 = vpop.f32.mrb[0].mxu0
        %v7005 = vadd.f32 0.0, %v7004
        %v7006 = vpop.f32.mrb[0].mxu0
        %7007 = vmatprep.mubr.bf16.mxu0 0
        %7008 = vmatmul.mubr.bf16.gmra.mrb[0].mxu0 %v6916
        %v7009 = vpop.f32.mrb[0].mxu0
        %v7010 = vadd.f32 0.0, %v7009
        %v7011 = vpop.f32.mrb[0].mxu0
        %v7012 = vpop.f32.mrb[0].mxu0
        %v7013 = vadd.f32 0.0, %v7012
        %v7014 = vpop.f32.mrb[0].mxu0
        %7015 = vdwg.mxu0
        %v7016 = vadd.f32 %v6893, %v7002
        %v7017 = vadd.f32 %v6894, %v7005
        %v7018 = vadd.f32 %v6895, %v7010
        %v7019 = vadd.f32 %v6896, %v7013
        %s7020 = scalar_lea.vmem [#allocation8], 1344
        %v7021 = vld [vmem:[%s7020] sm:$0xf]
        %v7022 = vld [vmem:[%s7020 + $0x4] sm:$0xf]
        %v7023 = vld [vmem:[%s7020 + $0x8] sm:$0xf]
        %v7024 = vld [vmem:[%s7020 + $0xc] sm:$0xf]
        %v7025 = vld [vmem:[%s7020 + $0x10] sm:$0xf]
        %v7026 = vld [vmem:[%s7020 + $0x14] sm:$0xf]
        %v7027 = vld [vmem:[%s7020 + $0x18] sm:$0xf]
        %v7028 = vld [vmem:[%s7020 + $0x1c] sm:$0xf]
        %v7029 = vld [vmem:[%s7020 + $0x20] sm:$0xf]
        %v7030 = vld [vmem:[%s7020 + $0x24] sm:$0xf]
        %v7031 = vld [vmem:[%s7020 + $0x28] sm:$0xf]
        %v7032 = vld [vmem:[%s7020 + $0x2c] sm:$0xf]
        %v7033 = vld [vmem:[%s7020 + $0x30] sm:$0xf]
        %v7034 = vld [vmem:[%s7020 + $0x34] sm:$0xf]
        %v7035 = vld [vmem:[%s7020 + $0x38] sm:$0xf]
        %v7036 = vld [vmem:[%s7020 + $0x3c] sm:$0xf]
        %v7037 = vrot.slane %v6541, 2
        %v7038 = vrot.slane %v6537, 3
        %v7039 = vor.u32 %v7037, %v7038
        %v7040 = vsel %vm980, %v5001, %v7039
        %v7041 = vsel %vm980, %v7039, %v3043
        %v7060 = vunpack.c.l.b16 %v7021
        %v7061 = vunpack.c.l.b16 %v7022
        %v7062 = vunpack.c.l.b16 %v7023
        %v7063 = vunpack.c.l.b16 %v7024
        %v7064 = vunpack.c.l.b16 %v7025
        %v7065 = vunpack.c.l.b16 %v7026
        %v7066 = vunpack.c.l.b16 %v7027
        %v7067 = vunpack.c.l.b16 %v7028
        %v7068 = vunpack.c.l.b16 %v7029
        %v7069 = vunpack.c.l.b16 %v7030
        %v7070 = vunpack.c.l.b16 %v7031
        %v7071 = vunpack.c.l.b16 %v7032
        %v7072 = vunpack.c.l.b16 %v7033
        %v7073 = vunpack.c.l.b16 %v7034
        %v7074 = vunpack.c.l.b16 %v7035
        %v7075 = vunpack.c.l.b16 %v7036
        %v7076 = vpack.c.b16 %v7061, %v7060
        %v7077 = vpack.c.b16 %v7063, %v7062
        %v7078 = vpack.c.b16 %v7065, %v7064
        %v7079 = vpack.c.b16 %v7067, %v7066
        %v7080 = vpack.c.b16 %v7069, %v7068
        %v7081 = vpack.c.b16 %v7071, %v7070
        %v7082 = vpack.c.b16 %v7073, %v7072
        %v7083 = vpack.c.b16 %v7075, %v7074
        %7092 = vmatprep.subr.bf16.mxu0 0
        %7093 = vmatpush1.bf16.msra.mxu0 %v7076
        %7094 = vmatprep.subr.bf16.mxu0 0
        %7095 = vmatpush1.bf16.msra.mxu0 %v7077
        %7096 = vmatprep.subr.bf16.mxu0 0
        %7097 = vmatpush1.bf16.msra.mxu0 %v7078
        %7098 = vmatprep.subr.bf16.mxu0 0
        %7099 = vmatpush1.bf16.msra.mxu0 %v7079
        %7100 = vmatprep.subr.bf16.mxu0 0
        %7101 = vmatpush1.bf16.msra.mxu0 %v7080
        %7102 = vmatprep.subr.bf16.mxu0 0
        %7103 = vmatpush1.bf16.msra.mxu0 %v7081
        %7104 = vmatprep.subr.bf16.mxu0 0
        %7105 = vmatpush1.bf16.msra.mxu0 %v7082
        %7106 = vmatprep.subr.bf16.mxu0 0
        %7107 = vmatpush1.bf16.msra.mxu0 %v7083
        %7108 = vmatprep.subr.bf16.mxu0 0
        %7109 = vmatpush1.bf16.msra.mxu0 0
        %7110 = vmatprep.subr.bf16.mxu0 0
        %7111 = vmatpush1.bf16.msra.mxu0 0
        %7112 = vmatprep.subr.bf16.mxu0 0
        %7113 = vmatpush1.bf16.msra.mxu0 0
        %7114 = vmatprep.subr.bf16.mxu0 0
        %7115 = vmatpush1.bf16.msra.mxu0 0
        %7116 = vmatprep.subr.bf16.mxu0 0
        %7117 = vmatpush1.bf16.msra.mxu0 0
        %7118 = vmatprep.subr.bf16.mxu0 0
        %7119 = vmatpush1.bf16.msra.mxu0 0
        %7120 = vmatprep.subr.bf16.mxu0 0
        %7121 = vmatpush1.bf16.msra.mxu0 0
        %7122 = vmatprep.subr.bf16.mxu0 0
        %7123 = vmatpush1.bf16.msra.mxu0 0
        %7124 = vmatprep.mubr.bf16.mxu0 0
        %7125 = vmatmul.mubr.bf16.gmra.mrb[0].mxu0 %v7040
        %v7126 = vpop.f32.mrb[0].mxu0
        %v7127 = vadd.f32 0.0, %v7126
        %v7128 = vpop.f32.mrb[0].mxu0
        %v7129 = vpop.f32.mrb[0].mxu0
        %v7130 = vadd.f32 0.0, %v7129
        %v7131 = vpop.f32.mrb[0].mxu0
        %7132 = vmatprep.mubr.bf16.mxu0 0
        %7133 = vmatmul.mubr.bf16.gmra.mrb[0].mxu0 %v7041
        %v7134 = vpop.f32.mrb[0].mxu0
        %v7135 = vadd.f32 0.0, %v7134
        %v7136 = vpop.f32.mrb[0].mxu0
        %v7137 = vpop.f32.mrb[0].mxu0
        %v7138 = vadd.f32 0.0, %v7137
        %v7139 = vpop.f32.mrb[0].mxu0
        %7140 = vdwg.mxu0
        %v7141 = vadd.f32 %v7016, %v7127
        %v7142 = vadd.f32 %v7017, %v7130
        %v7143 = vadd.f32 %v7018, %v7135
        %v7144 = vadd.f32 %v7019, %v7138
        %s7145 = scalar_lea.vmem [#allocation8], 1408
        %v7146 = vld [vmem:[%s7145] sm:$0xf]
        %v7147 = vld [vmem:[%s7145 + $0x4] sm:$0xf]
        %v7148 = vld [vmem:[%s7145 + $0x8] sm:$0xf]
        %v7149 = vld [vmem:[%s7145 + $0xc] sm:$0xf]
        %v7150 = vld [vmem:[%s7145 + $0x10] sm:$0xf]
        %v7151 = vld [vmem:[%s7145 + $0x14] sm:$0xf]
        %v7152 = vld [vmem:[%s7145 + $0x18] sm:$0xf]
        %v7153 = vld [vmem:[%s7145 + $0x1c] sm:$0xf]
        %v7154 = vld [vmem:[%s7145 + $0x20] sm:$0xf]
        %v7155 = vld [vmem:[%s7145 + $0x24] sm:$0xf]
        %v7156 = vld [vmem:[%s7145 + $0x28] sm:$0xf]
        %v7157 = vld [vmem:[%s7145 + $0x2c] sm:$0xf]
        %v7158 = vld [vmem:[%s7145 + $0x30] sm:$0xf]
        %v7159 = vld [vmem:[%s7145 + $0x34] sm:$0xf]
        %v7160 = vld [vmem:[%s7145 + $0x38] sm:$0xf]
        %v7161 = vld [vmem:[%s7145 + $0x3c] sm:$0xf]
        %v7162 = vrot.slane %v6400, 3
        %v7163 = vsel %vm1112, %v5128, %v7162
        %v7164 = vsel %vm1112, %v7162, %v3167
        %v7183 = vunpack.c.l.b16 %v7146
        %v7184 = vunpack.c.l.b16 %v7147
        %v7185 = vunpack.c.l.b16 %v7148
        %v7186 = vunpack.c.l.b16 %v7149
        %v7187 = vunpack.c.l.b16 %v7150
        %v7188 = vunpack.c.l.b16 %v7151
        %v7189 = vunpack.c.l.b16 %v7152
        %v7190 = vunpack.c.l.b16 %v7153
        %v7191 = vunpack.c.l.b16 %v7154
        %v7192 = vunpack.c.l.b16 %v7155
        %v7193 = vunpack.c.l.b16 %v7156
        %v7194 = vunpack.c.l.b16 %v7157
        %v7195 = vunpack.c.l.b16 %v7158
        %v7196 = vunpack.c.l.b16 %v7159
        %v7197 = vunpack.c.l.b16 %v7160
        %v7198 = vunpack.c.l.b16 %v7161
        %v7199 = vpack.c.b16 %v7184, %v7183
        %v7200 = vpack.c.b16 %v7186, %v7185
        %v7201 = vpack.c.b16 %v7188, %v7187
        %v7202 = vpack.c.b16 %v7190, %v7189
        %v7203 = vpack.c.b16 %v7192, %v7191
        %v7204 = vpack.c.b16 %v7194, %v7193
        %v7205 = vpack.c.b16 %v7196, %v7195
        %v7206 = vpack.c.b16 %v7198, %v7197
        %7215 = vmatprep.subr.bf16.mxu0 0
        %7216 = vmatpush1.bf16.msra.mxu0 %v7199
        %7217 = vmatprep.subr.bf16.mxu0 0
        %7218 = vmatpush1.bf16.msra.mxu0 %v7200
        %7219 = vmatprep.subr.bf16.mxu0 0
        %7220 = vmatpush1.bf16.msra.mxu0 %v7201
        %7221 = vmatprep.subr.bf16.mxu0 0
        %7222 = vmatpush1.bf16.msra.mxu0 %v7202
        %7223 = vmatprep.subr.bf16.mxu0 0
        %7224 = vmatpush1.bf16.msra.mxu0 %v7203
        %7225 = vmatprep.subr.bf16.mxu0 0
        %7226 = vmatpush1.bf16.msra.mxu0 %v7204
        %7227 = vmatprep.subr.bf16.mxu0 0
        %7228 = vmatpush1.bf16.msra.mxu0 %v7205
        %7229 = vmatprep.subr.bf16.mxu0 0
        %7230 = vmatpush1.bf16.msra.mxu0 %v7206
        %7231 = vmatprep.subr.bf16.mxu0 0
        %7232 = vmatpush1.bf16.msra.mxu0 0
        %7233 = vmatprep.subr.bf16.mxu0 0
        %7234 = vmatpush1.bf16.msra.mxu0 0
        %7235 = vmatprep.subr.bf16.mxu0 0
        %7236 = vmatpush1.bf16.msra.mxu0 0
        %7237 = vmatprep.subr.bf16.mxu0 0
        %7238 = vmatpush1.bf16.msra.mxu0 0
        %7239 = vmatprep.subr.bf16.mxu0 0
        %7240 = vmatpush1.bf16.msra.mxu0 0
        %7241 = vmatprep.subr.bf16.mxu0 0
        %7242 = vmatpush1.bf16.msra.mxu0 0
        %7243 = vmatprep.subr.bf16.mxu0 0
        %7244 = vmatpush1.bf16.msra.mxu0 0
        %7245 = vmatprep.subr.bf16.mxu0 0
        %7246 = vmatpush1.bf16.msra.mxu0 0
        %7247 = vmatprep.mubr.bf16.mxu0 0
        %7248 = vmatmul.mubr.bf16.gmra.mrb[0].mxu0 %v7163
        %v7249 = vpop.f32.mrb[0].mxu0
        %v7250 = vadd.f32 0.0, %v7249
        %v7251 = vpop.f32.mrb[0].mxu0
        %v7252 = vpop.f32.mrb[0].mxu0
        %v7253 = vadd.f32 0.0, %v7252
        %v7254 = vpop.f32.mrb[0].mxu0
        %7255 = vmatprep.mubr.bf16.mxu0 0
        %7256 = vmatmul.mubr.bf16.gmra.mrb[0].mxu0 %v7164
        %v7257 = vpop.f32.mrb[0].mxu0
        %v7258 = vadd.f32 0.0, %v7257
        %v7259 = vpop.f32.mrb[0].mxu0
        %v7260 = vpop.f32.mrb[0].mxu0
        %v7261 = vadd.f32 0.0, %v7260
        %v7262 = vpop.f32.mrb[0].mxu0
        %7263 = vdwg.mxu0
        %v7264 = vadd.f32 %v7141, %v7250
        %v7265 = vadd.f32 %v7142, %v7253
        %v7266 = vadd.f32 %v7143, %v7258
        %v7267 = vadd.f32 %v7144, %v7261
        %s7268 = scalar_lea.vmem [#allocation8], 1472
        %v7269 = vld [vmem:[%s7268] sm:$0xf]
        %v7270 = vld [vmem:[%s7268 + $0x4] sm:$0xf]
        %v7271 = vld [vmem:[%s7268 + $0x8] sm:$0xf]
        %v7272 = vld [vmem:[%s7268 + $0xc] sm:$0xf]
        %v7273 = vld [vmem:[%s7268 + $0x10] sm:$0xf]
        %v7274 = vld [vmem:[%s7268 + $0x14] sm:$0xf]
        %v7275 = vld [vmem:[%s7268 + $0x18] sm:$0xf]
        %v7276 = vld [vmem:[%s7268 + $0x1c] sm:$0xf]
        %v7277 = vld [vmem:[%s7268 + $0x20] sm:$0xf]
        %v7278 = vld [vmem:[%s7268 + $0x24] sm:$0xf]
        %v7279 = vld [vmem:[%s7268 + $0x28] sm:$0xf]
        %v7280 = vld [vmem:[%s7268 + $0x2c] sm:$0xf]
        %v7281 = vld [vmem:[%s7268 + $0x30] sm:$0xf]
        %v7282 = vld [vmem:[%s7268 + $0x34] sm:$0xf]
        %v7283 = vld [vmem:[%s7268 + $0x38] sm:$0xf]
        %v7284 = vld [vmem:[%s7268 + $0x3c] sm:$0xf]
        %v7285 = vrot.slane %v6541, 3
        %v7286 = vrot.slane %v6537, 4
        %v7287 = vor.u32 %v7285, %v7286
        %v7288 = vsel %vm1238, %v5257, %v7287
        %v7289 = vsel %vm1238, %v7287, %v3295
        %v7308 = vunpack.c.l.b16 %v7269
        %v7309 = vunpack.c.l.b16 %v7270
        %v7310 = vunpack.c.l.b16 %v7271
        %v7311 = vunpack.c.l.b16 %v7272
        %v7312 = vunpack.c.l.b16 %v7273
        %v7313 = vunpack.c.l.b16 %v7274
        %v7314 = vunpack.c.l.b16 %v7275
        %v7315 = vunpack.c.l.b16 %v7276
        %v7316 = vunpack.c.l.b16 %v7277
        %v7317 = vunpack.c.l.b16 %v7278
        %v7318 = vunpack.c.l.b16 %v7279
        %v7319 = vunpack.c.l.b16 %v7280
        %v7320 = vunpack.c.l.b16 %v7281
        %v7321 = vunpack.c.l.b16 %v7282
        %v7322 = vunpack.c.l.b16 %v7283
        %v7323 = vunpack.c.l.b16 %v7284
        %v7324 = vpack.c.b16 %v7309, %v7308
        %v7325 = vpack.c.b16 %v7311, %v7310
        %v7326 = vpack.c.b16 %v7313, %v7312
        %v7327 = vpack.c.b16 %v7315, %v7314
        %v7328 = vpack.c.b16 %v7317, %v7316
        %v7329 = vpack.c.b16 %v7319, %v7318
        %v7330 = vpack.c.b16 %v7321, %v7320
        %v7331 = vpack.c.b16 %v7323, %v7322
        %7340 = vmatprep.subr.bf16.mxu0 0
        %7341 = vmatpush1.bf16.msra.mxu0 %v7324
        %7342 = vmatprep.subr.bf16.mxu0 0
        %7343 = vmatpush1.bf16.msra.mxu0 %v7325
        %7344 = vmatprep.subr.bf16.mxu0 0
        %7345 = vmatpush1.bf16.msra.mxu0 %v7326
        %7346 = vmatprep.subr.bf16.mxu0 0
        %7347 = vmatpush1.bf16.msra.mxu0 %v7327
        %7348 = vmatprep.subr.bf16.mxu0 0
        %7349 = vmatpush1.bf16.msra.mxu0 %v7328
        %7350 = vmatprep.subr.bf16.mxu0 0
        %7351 = vmatpush1.bf16.msra.mxu0 %v7329
        %7352 = vmatprep.subr.bf16.mxu0 0
        %7353 = vmatpush1.bf16.msra.mxu0 %v7330
        %7354 = vmatprep.subr.bf16.mxu0 0
        %7355 = vmatpush1.bf16.msra.mxu0 %v7331
        %7356 = vmatprep.subr.bf16.mxu0 0
        %7357 = vmatpush1.bf16.msra.mxu0 0
        %7358 = vmatprep.subr.bf16.mxu0 0
        %7359 = vmatpush1.bf16.msra.mxu0 0
        %7360 = vmatprep.subr.bf16.mxu0 0
        %7361 = vmatpush1.bf16.msra.mxu0 0
        %7362 = vmatprep.subr.bf16.mxu0 0
        %7363 = vmatpush1.bf16.msra.mxu0 0
        %7364 = vmatprep.subr.bf16.mxu0 0
        %7365 = vmatpush1.bf16.msra.mxu0 0
        %7366 = vmatprep.subr.bf16.mxu0 0
        %7367 = vmatpush1.bf16.msra.mxu0 0
        %7368 = vmatprep.subr.bf16.mxu0 0
        %7369 = vmatpush1.bf16.msra.mxu0 0
        %7370 = vmatprep.subr.bf16.mxu0 0
        %7371 = vmatpush1.bf16.msra.mxu0 0
        %7372 = vmatprep.mubr.bf16.mxu0 0
        %7373 = vmatmul.mubr.bf16.gmra.mrb[0].mxu0 %v7288
        %v7374 = vpop.f32.mrb[0].mxu0
        %v7375 = vadd.f32 0.0, %v7374
        %v7376 = vpop.f32.mrb[0].mxu0
        %v7377 = vpop.f32.mrb[0].mxu0
        %v7378 = vadd.f32 0.0, %v7377
        %v7379 = vpop.f32.mrb[0].mxu0
        %7380 = vmatprep.mubr.bf16.mxu0 0
        %7381 = vmatmul.mubr.bf16.gmra.mrb[0].mxu0 %v7289
        %v7382 = vpop.f32.mrb[0].mxu0
        %v7383 = vadd.f32 0.0, %v7382
        %v7384 = vpop.f32.mrb[0].mxu0
        %v7385 = vpop.f32.mrb[0].mxu0
        %v7386 = vadd.f32 0.0, %v7385
        %v7387 = vpop.f32.mrb[0].mxu0
        %7388 = vdwg.mxu0
        %v7389 = vadd.f32 %v7264, %v7375
        %v7390 = vadd.f32 %v7265, %v7378
        %v7391 = vadd.f32 %v7266, %v7383
        %v7392 = vadd.f32 %v7267, %v7386
        %v7393 = vpack.c.bf16 0.0, %v4340
        %s7394 = scalar_lea.vmem [#allocation8], 1536
        %v7395 = vld [vmem:[%s7394] sm:$0xf]
        %v7396 = vld [vmem:[%s7394 + $0x4] sm:$0xf]
        %v7397 = vld [vmem:[%s7394 + $0x8] sm:$0xf]
        %v7398 = vld [vmem:[%s7394 + $0xc] sm:$0xf]
        %v7399 = vld [vmem:[%s7394 + $0x10] sm:$0xf]
        %v7400 = vld [vmem:[%s7394 + $0x14] sm:$0xf]
        %v7401 = vld [vmem:[%s7394 + $0x18] sm:$0xf]
        %v7402 = vld [vmem:[%s7394 + $0x1c] sm:$0xf]
        %v7403 = vld [vmem:[%s7394 + $0x20] sm:$0xf]
        %v7404 = vld [vmem:[%s7394 + $0x24] sm:$0xf]
        %v7405 = vld [vmem:[%s7394 + $0x28] sm:$0xf]
        %v7406 = vld [vmem:[%s7394 + $0x2c] sm:$0xf]
        %v7407 = vld [vmem:[%s7394 + $0x30] sm:$0xf]
        %v7408 = vld [vmem:[%s7394 + $0x34] sm:$0xf]
        %v7409 = vld [vmem:[%s7394 + $0x38] sm:$0xf]
        %v7410 = vld [vmem:[%s7394 + $0x3c] sm:$0xf]
        %v7427 = vunpack.c.l.b16 %v7395
        %v7428 = vunpack.c.l.b16 %v7396
        %v7429 = vunpack.c.l.b16 %v7397
        %v7430 = vunpack.c.l.b16 %v7398
        %v7431 = vunpack.c.l.b16 %v7399
        %v7432 = vunpack.c.l.b16 %v7400
        %v7433 = vunpack.c.l.b16 %v7401
        %v7434 = vunpack.c.l.b16 %v7402
        %v7435 = vunpack.c.l.b16 %v7403
        %v7436 = vunpack.c.l.b16 %v7404
        %v7437 = vunpack.c.l.b16 %v7405
        %v7438 = vunpack.c.l.b16 %v7406
        %v7439 = vunpack.c.l.b16 %v7407
        %v7440 = vunpack.c.l.b16 %v7408
        %v7441 = vunpack.c.l.b16 %v7409
        %v7442 = vunpack.c.l.b16 %v7410
        %v7443 = vpack.c.b16 %v7428, %v7427
        %v7444 = vpack.c.b16 %v7430, %v7429
        %v7445 = vpack.c.b16 %v7432, %v7431
        %v7446 = vpack.c.b16 %v7434, %v7433
        %v7447 = vpack.c.b16 %v7436, %v7435
        %v7448 = vpack.c.b16 %v7438, %v7437
        %v7449 = vpack.c.b16 %v7440, %v7439
        %v7450 = vpack.c.b16 %v7442, %v7441
        %7459 = vmatprep.subr.bf16.mxu0 0
        %7460 = vmatpush1.bf16.msra.mxu0 %v7443
        %7461 = vmatprep.subr.bf16.mxu0 0
        %7462 = vmatpush1.bf16.msra.mxu0 %v7444
        %7463 = vmatprep.subr.bf16.mxu0 0
        %7464 = vmatpush1.bf16.msra.mxu0 %v7445
        %7465 = vmatprep.subr.bf16.mxu0 0
        %7466 = vmatpush1.bf16.msra.mxu0 %v7446
        %7467 = vmatprep.subr.bf16.mxu0 0
        %7468 = vmatpush1.bf16.msra.mxu0 %v7447
        %7469 = vmatprep.subr.bf16.mxu0 0
        %7470 = vmatpush1.bf16.msra.mxu0 %v7448
        %7471 = vmatprep.subr.bf16.mxu0 0
        %7472 = vmatpush1.bf16.msra.mxu0 %v7449
        %7473 = vmatprep.subr.bf16.mxu0 0
        %7474 = vmatpush1.bf16.msra.mxu0 %v7450
        %7475 = vmatprep.subr.bf16.mxu0 0
        %7476 = vmatpush1.bf16.msra.mxu0 0
        %7477 = vmatprep.subr.bf16.mxu0 0
        %7478 = vmatpush1.bf16.msra.mxu0 0
        %7479 = vmatprep.subr.bf16.mxu0 0
        %7480 = vmatpush1.bf16.msra.mxu0 0
        %7481 = vmatprep.subr.bf16.mxu0 0
        %7482 = vmatpush1.bf16.msra.mxu0 0
        %7483 = vmatprep.subr.bf16.mxu0 0
        %7484 = vmatpush1.bf16.msra.mxu0 0
        %7485 = vmatprep.subr.bf16.mxu0 0
        %7486 = vmatpush1.bf16.msra.mxu0 0
        %7487 = vmatprep.subr.bf16.mxu0 0
        %7488 = vmatpush1.bf16.msra.mxu0 0
        %7489 = vmatprep.subr.bf16.mxu0 0
        %7490 = vmatpush1.bf16.msra.mxu0 0
        %7491 = vmatprep.mubr.bf16.mxu0 0
        %7492 = vmatmul.mubr.bf16.gmra.mrb[0].mxu0 %v5367
        %v7493 = vpop.f32.mrb[0].mxu0
        %v7494 = vadd.f32 0.0, %v7493
        %v7495 = vpop.f32.mrb[0].mxu0
        %v7496 = vpop.f32.mrb[0].mxu0
        %v7497 = vadd.f32 0.0, %v7496
        %v7498 = vpop.f32.mrb[0].mxu0
        %7499 = vmatprep.mubr.bf16.mxu0 0
        %7500 = vmatmul.mubr.bf16.gmra.mrb[0].mxu0 %v7393
        %v7501 = vpop.f32.mrb[0].mxu0
        %v7502 = vadd.f32 0.0, %v7501
        %v7503 = vpop.f32.mrb[0].mxu0
        %v7504 = vpop.f32.mrb[0].mxu0
        %v7505 = vadd.f32 0.0, %v7504
        %v7506 = vpop.f32.mrb[0].mxu0
        %7507 = vdwg.mxu0
        %v7508 = vadd.f32 %v7389, %v7494
        %v7509 = vadd.f32 %v7390, %v7497
        %v7510 = vadd.f32 %v7391, %v7502
        %v7511 = vadd.f32 %v7392, %v7505
        %s7512 = scalar_lea.vmem [#allocation8], 1600
        %v7513 = vld [vmem:[%s7512] sm:$0xf]
        %v7514 = vld [vmem:[%s7512 + $0x4] sm:$0xf]
        %v7515 = vld [vmem:[%s7512 + $0x8] sm:$0xf]
        %v7516 = vld [vmem:[%s7512 + $0xc] sm:$0xf]
        %v7517 = vld [vmem:[%s7512 + $0x10] sm:$0xf]
        %v7518 = vld [vmem:[%s7512 + $0x14] sm:$0xf]
        %v7519 = vld [vmem:[%s7512 + $0x18] sm:$0xf]
        %v7520 = vld [vmem:[%s7512 + $0x1c] sm:$0xf]
        %v7521 = vld [vmem:[%s7512 + $0x20] sm:$0xf]
        %v7522 = vld [vmem:[%s7512 + $0x24] sm:$0xf]
        %v7523 = vld [vmem:[%s7512 + $0x28] sm:$0xf]
        %v7524 = vld [vmem:[%s7512 + $0x2c] sm:$0xf]
        %v7525 = vld [vmem:[%s7512 + $0x30] sm:$0xf]
        %v7526 = vld [vmem:[%s7512 + $0x34] sm:$0xf]
        %v7527 = vld [vmem:[%s7512 + $0x38] sm:$0xf]
        %v7528 = vld [vmem:[%s7512 + $0x3c] sm:$0xf]
        %v7530 = vshll.u32 %v7393, 16
        %v7532 = vrot.slane %v7530, 1
        %v7533 = vsel %vm357, %v5518, %v7532
        %v7534 = vshrl.u32 %v7393, 16
        %v7536 = vor.u32 %v7534, %v7532
        %v7537 = vsel %vm357, %v7536, %v2535
        %v7556 = vunpack.c.l.b16 %v7513
        %v7557 = vunpack.c.l.b16 %v7514
        %v7558 = vunpack.c.l.b16 %v7515
        %v7559 = vunpack.c.l.b16 %v7516
        %v7560 = vunpack.c.l.b16 %v7517
        %v7561 = vunpack.c.l.b16 %v7518
        %v7562 = vunpack.c.l.b16 %v7519
        %v7563 = vunpack.c.l.b16 %v7520
        %v7564 = vunpack.c.l.b16 %v7521
        %v7565 = vunpack.c.l.b16 %v7522
        %v7566 = vunpack.c.l.b16 %v7523
        %v7567 = vunpack.c.l.b16 %v7524
        %v7568 = vunpack.c.l.b16 %v7525
        %v7569 = vunpack.c.l.b16 %v7526
        %v7570 = vunpack.c.l.b16 %v7527
        %v7571 = vunpack.c.l.b16 %v7528
        %v7572 = vpack.c.b16 %v7557, %v7556
        %v7573 = vpack.c.b16 %v7559, %v7558
        %v7574 = vpack.c.b16 %v7561, %v7560
        %v7575 = vpack.c.b16 %v7563, %v7562
        %v7576 = vpack.c.b16 %v7565, %v7564
        %v7577 = vpack.c.b16 %v7567, %v7566
        %v7578 = vpack.c.b16 %v7569, %v7568
        %v7579 = vpack.c.b16 %v7571, %v7570
        %7588 = vmatprep.subr.bf16.mxu0 0
        %7589 = vmatpush1.bf16.msra.mxu0 %v7572
        %7590 = vmatprep.subr.bf16.mxu0 0
        %7591 = vmatpush1.bf16.msra.mxu0 %v7573
        %7592 = vmatprep.subr.bf16.mxu0 0
        %7593 = vmatpush1.bf16.msra.mxu0 %v7574
        %7594 = vmatprep.subr.bf16.mxu0 0
        %7595 = vmatpush1.bf16.msra.mxu0 %v7575
        %7596 = vmatprep.subr.bf16.mxu0 0
        %7597 = vmatpush1.bf16.msra.mxu0 %v7576
        %7598 = vmatprep.subr.bf16.mxu0 0
        %7599 = vmatpush1.bf16.msra.mxu0 %v7577
        %7600 = vmatprep.subr.bf16.mxu0 0
        %7601 = vmatpush1.bf16.msra.mxu0 %v7578
        %7602 = vmatprep.subr.bf16.mxu0 0
        %7603 = vmatpush1.bf16.msra.mxu0 %v7579
        %7604 = vmatprep.subr.bf16.mxu0 0
        %7605 = vmatpush1.bf16.msra.mxu0 0
        %7606 = vmatprep.subr.bf16.mxu0 0
        %7607 = vmatpush1.bf16.msra.mxu0 0
        %7608 = vmatprep.subr.bf16.mxu0 0
        %7609 = vmatpush1.bf16.msra.mxu0 0
        %7610 = vmatprep.subr.bf16.mxu0 0
        %7611 = vmatpush1.bf16.msra.mxu0 0
        %7612 = vmatprep.subr.bf16.mxu0 0
        %7613 = vmatpush1.bf16.msra.mxu0 0
        %7614 = vmatprep.subr.bf16.mxu0 0
        %7615 = vmatpush1.bf16.msra.mxu0 0
        %7616 = vmatprep.subr.bf16.mxu0 0
        %7617 = vmatpush1.bf16.msra.mxu0 0
        %7618 = vmatprep.subr.bf16.mxu0 0
        %7619 = vmatpush1.bf16.msra.mxu0 0
        %7620 = vmatprep.mubr.bf16.mxu0 0
        %7621 = vmatmul.mubr.bf16.gmra.mrb[0].mxu0 %v7533
        %v7622 = vpop.f32.mrb[0].mxu0
        %v7623 = vadd.f32 0.0, %v7622
        %v7624 = vpop.f32.mrb[0].mxu0
        %v7625 = vpop.f32.mrb[0].mxu0
        %v7626 = vadd.f32 0.0, %v7625
        %v7627 = vpop.f32.mrb[0].mxu0
        %7628 = vmatprep.mubr.bf16.mxu0 0
        %7629 = vmatmul.mubr.bf16.gmra.mrb[0].mxu0 %v7537
        %v7630 = vpop.f32.mrb[0].mxu0
        %v7631 = vadd.f32 0.0, %v7630
        %v7632 = vpop.f32.mrb[0].mxu0
        %v7633 = vpop.f32.mrb[0].mxu0
        %v7634 = vadd.f32 0.0, %v7633
        %v7635 = vpop.f32.mrb[0].mxu0
        %7636 = vdwg.mxu0
        %v7637 = vadd.f32 %v7508, %v7623
        %v7638 = vadd.f32 %v7509, %v7626
        %v7639 = vadd.f32 %v7510, %v7631
        %v7640 = vadd.f32 %v7511, %v7634
        %s7641 = scalar_lea.vmem [#allocation8], 1664
        %v7642 = vld [vmem:[%s7641] sm:$0xf]
        %v7643 = vld [vmem:[%s7641 + $0x4] sm:$0xf]
        %v7644 = vld [vmem:[%s7641 + $0x8] sm:$0xf]
        %v7645 = vld [vmem:[%s7641 + $0xc] sm:$0xf]
        %v7646 = vld [vmem:[%s7641 + $0x10] sm:$0xf]
        %v7647 = vld [vmem:[%s7641 + $0x14] sm:$0xf]
        %v7648 = vld [vmem:[%s7641 + $0x18] sm:$0xf]
        %v7649 = vld [vmem:[%s7641 + $0x1c] sm:$0xf]
        %v7650 = vld [vmem:[%s7641 + $0x20] sm:$0xf]
        %v7651 = vld [vmem:[%s7641 + $0x24] sm:$0xf]
        %v7652 = vld [vmem:[%s7641 + $0x28] sm:$0xf]
        %v7653 = vld [vmem:[%s7641 + $0x2c] sm:$0xf]
        %v7654 = vld [vmem:[%s7641 + $0x30] sm:$0xf]
        %v7655 = vld [vmem:[%s7641 + $0x34] sm:$0xf]
        %v7656 = vld [vmem:[%s7641 + $0x38] sm:$0xf]
        %v7657 = vld [vmem:[%s7641 + $0x3c] sm:$0xf]
        %v7659 = vrot.slane %v7393, 1
        %v7660 = vsel %vm594, %v5648, %v7659
        %v7661 = vsel %vm594, %v7659, %v2661
        %v7680 = vunpack.c.l.b16 %v7642
        %v7681 = vunpack.c.l.b16 %v7643
        %v7682 = vunpack.c.l.b16 %v7644
        %v7683 = vunpack.c.l.b16 %v7645
        %v7684 = vunpack.c.l.b16 %v7646
        %v7685 = vunpack.c.l.b16 %v7647
        %v7686 = vunpack.c.l.b16 %v7648
        %v7687 = vunpack.c.l.b16 %v7649
        %v7688 = vunpack.c.l.b16 %v7650
        %v7689 = vunpack.c.l.b16 %v7651
        %v7690 = vunpack.c.l.b16 %v7652
        %v7691 = vunpack.c.l.b16 %v7653
        %v7692 = vunpack.c.l.b16 %v7654
        %v7693 = vunpack.c.l.b16 %v7655
        %v7694 = vunpack.c.l.b16 %v7656
        %v7695 = vunpack.c.l.b16 %v7657
        %v7696 = vpack.c.b16 %v7681, %v7680
        %v7697 = vpack.c.b16 %v7683, %v7682
        %v7698 = vpack.c.b16 %v7685, %v7684
        %v7699 = vpack.c.b16 %v7687, %v7686
        %v7700 = vpack.c.b16 %v7689, %v7688
        %v7701 = vpack.c.b16 %v7691, %v7690
        %v7702 = vpack.c.b16 %v7693, %v7692
        %v7703 = vpack.c.b16 %v7695, %v7694
        %7712 = vmatprep.subr.bf16.mxu0 0
        %7713 = vmatpush1.bf16.msra.mxu0 %v7696
        %7714 = vmatprep.subr.bf16.mxu0 0
        %7715 = vmatpush1.bf16.msra.mxu0 %v7697
        %7716 = vmatprep.subr.bf16.mxu0 0
        %7717 = vmatpush1.bf16.msra.mxu0 %v7698
        %7718 = vmatprep.subr.bf16.mxu0 0
        %7719 = vmatpush1.bf16.msra.mxu0 %v7699
        %7720 = vmatprep.subr.bf16.mxu0 0
        %7721 = vmatpush1.bf16.msra.mxu0 %v7700
        %7722 = vmatprep.subr.bf16.mxu0 0
        %7723 = vmatpush1.bf16.msra.mxu0 %v7701
        %7724 = vmatprep.subr.bf16.mxu0 0
        %7725 = vmatpush1.bf16.msra.mxu0 %v7702
        %7726 = vmatprep.subr.bf16.mxu0 0
        %7727 = vmatpush1.bf16.msra.mxu0 %v7703
        %7728 = vmatprep.subr.bf16.mxu0 0
        %7729 = vmatpush1.bf16.msra.mxu0 0
        %7730 = vmatprep.subr.bf16.mxu0 0
        %7731 = vmatpush1.bf16.msra.mxu0 0
        %7732 = vmatprep.subr.bf16.mxu0 0
        %7733 = vmatpush1.bf16.msra.mxu0 0
        %7734 = vmatprep.subr.bf16.mxu0 0
        %7735 = vmatpush1.bf16.msra.mxu0 0
        %7736 = vmatprep.subr.bf16.mxu0 0
        %7737 = vmatpush1.bf16.msra.mxu0 0
        %7738 = vmatprep.subr.bf16.mxu0 0
        %7739 = vmatpush1.bf16.msra.mxu0 0
        %7740 = vmatprep.subr.bf16.mxu0 0
        %7741 = vmatpush1.bf16.msra.mxu0 0
        %7742 = vmatprep.subr.bf16.mxu0 0
        %7743 = vmatpush1.bf16.msra.mxu0 0
        %7744 = vmatprep.mubr.bf16.mxu0 0
        %7745 = vmatmul.mubr.bf16.gmra.mrb[0].mxu0 %v7660
        %v7746 = vpop.f32.mrb[0].mxu0
        %v7747 = vadd.f32 0.0, %v7746
        %v7748 = vpop.f32.mrb[0].mxu0
        %v7749 = vpop.f32.mrb[0].mxu0
        %v7750 = vadd.f32 0.0, %v7749
        %v7751 = vpop.f32.mrb[0].mxu0
        %7752 = vmatprep.mubr.bf16.mxu0 0
        %7753 = vmatmul.mubr.bf16.gmra.mrb[0].mxu0 %v7661
        %v7754 = vpop.f32.mrb[0].mxu0
        %v7755 = vadd.f32 0.0, %v7754
        %v7756 = vpop.f32.mrb[0].mxu0
        %v7757 = vpop.f32.mrb[0].mxu0
        %v7758 = vadd.f32 0.0, %v7757
        %v7759 = vpop.f32.mrb[0].mxu0
        %7760 = vdwg.mxu0
        %v7761 = vadd.f32 %v7637, %v7747
        %v7762 = vadd.f32 %v7638, %v7750
        %v7763 = vadd.f32 %v7639, %v7755
        %v7764 = vadd.f32 %v7640, %v7758
        %s7765 = scalar_lea.vmem [#allocation8], 1728
        %v7766 = vld [vmem:[%s7765] sm:$0xf]
        %v7767 = vld [vmem:[%s7765 + $0x4] sm:$0xf]
        %v7768 = vld [vmem:[%s7765 + $0x8] sm:$0xf]
        %v7769 = vld [vmem:[%s7765 + $0xc] sm:$0xf]
        %v7770 = vld [vmem:[%s7765 + $0x10] sm:$0xf]
        %v7771 = vld [vmem:[%s7765 + $0x14] sm:$0xf]
        %v7772 = vld [vmem:[%s7765 + $0x18] sm:$0xf]
        %v7773 = vld [vmem:[%s7765 + $0x1c] sm:$0xf]
        %v7774 = vld [vmem:[%s7765 + $0x20] sm:$0xf]
        %v7775 = vld [vmem:[%s7765 + $0x24] sm:$0xf]
        %v7776 = vld [vmem:[%s7765 + $0x28] sm:$0xf]
        %v7777 = vld [vmem:[%s7765 + $0x2c] sm:$0xf]
        %v7778 = vld [vmem:[%s7765 + $0x30] sm:$0xf]
        %v7779 = vld [vmem:[%s7765 + $0x34] sm:$0xf]
        %v7780 = vld [vmem:[%s7765 + $0x38] sm:$0xf]
        %v7781 = vld [vmem:[%s7765 + $0x3c] sm:$0xf]
        %v7782 = vrot.slane %v7534, 1
        %v7783 = vrot.slane %v7530, 2
        %v7784 = vor.u32 %v7782, %v7783
        %v7785 = vsel %vm720, %v5777, %v7784
        %v7786 = vsel %vm720, %v7784, %v2791
        %v7805 = vunpack.c.l.b16 %v7766
        %v7806 = vunpack.c.l.b16 %v7767
        %v7807 = vunpack.c.l.b16 %v7768
        %v7808 = vunpack.c.l.b16 %v7769
        %v7809 = vunpack.c.l.b16 %v7770
        %v7810 = vunpack.c.l.b16 %v7771
        %v7811 = vunpack.c.l.b16 %v7772
        %v7812 = vunpack.c.l.b16 %v7773
        %v7813 = vunpack.c.l.b16 %v7774
        %v7814 = vunpack.c.l.b16 %v7775
        %v7815 = vunpack.c.l.b16 %v7776
        %v7816 = vunpack.c.l.b16 %v7777
        %v7817 = vunpack.c.l.b16 %v7778
        %v7818 = vunpack.c.l.b16 %v7779
        %v7819 = vunpack.c.l.b16 %v7780
        %v7820 = vunpack.c.l.b16 %v7781
        %v7821 = vpack.c.b16 %v7806, %v7805
        %v7822 = vpack.c.b16 %v7808, %v7807
        %v7823 = vpack.c.b16 %v7810, %v7809
        %v7824 = vpack.c.b16 %v7812, %v7811
        %v7825 = vpack.c.b16 %v7814, %v7813
        %v7826 = vpack.c.b16 %v7816, %v7815
        %v7827 = vpack.c.b16 %v7818, %v7817
        %v7828 = vpack.c.b16 %v7820, %v7819
        %7837 = vmatprep.subr.bf16.mxu0 0
        %7838 = vmatpush1.bf16.msra.mxu0 %v7821
        %7839 = vmatprep.subr.bf16.mxu0 0
        %7840 = vmatpush1.bf16.msra.mxu0 %v7822
        %7841 = vmatprep.subr.bf16.mxu0 0
        %7842 = vmatpush1.bf16.msra.mxu0 %v7823
        %7843 = vmatprep.subr.bf16.mxu0 0
        %7844 = vmatpush1.bf16.msra.mxu0 %v7824
        %7845 = vmatprep.subr.bf16.mxu0 0
        %7846 = vmatpush1.bf16.msra.mxu0 %v7825
        %7847 = vmatprep.subr.bf16.mxu0 0
        %7848 = vmatpush1.bf16.msra.mxu0 %v7826
        %7849 = vmatprep.subr.bf16.mxu0 0
        %7850 = vmatpush1.bf16.msra.mxu0 %v7827
        %7851 = vmatprep.subr.bf16.mxu0 0
        %7852 = vmatpush1.bf16.msra.mxu0 %v7828
        %7853 = vmatprep.subr.bf16.mxu0 0
        %7854 = vmatpush1.bf16.msra.mxu0 0
        %7855 = vmatprep.subr.bf16.mxu0 0
        %7856 = vmatpush1.bf16.msra.mxu0 0
        %7857 = vmatprep.subr.bf16.mxu0 0
        %7858 = vmatpush1.bf16.msra.mxu0 0
        %7859 = vmatprep.subr.bf16.mxu0 0
        %7860 = vmatpush1.bf16.msra.mxu0 0
        %7861 = vmatprep.subr.bf16.mxu0 0
        %7862 = vmatpush1.bf16.msra.mxu0 0
        %7863 = vmatprep.subr.bf16.mxu0 0
        %7864 = vmatpush1.bf16.msra.mxu0 0
        %7865 = vmatprep.subr.bf16.mxu0 0
        %7866 = vmatpush1.bf16.msra.mxu0 0
        %7867 = vmatprep.subr.bf16.mxu0 0
        %7868 = vmatpush1.bf16.msra.mxu0 0
        %7869 = vmatprep.mubr.bf16.mxu0 0
        %7870 = vmatmul.mubr.bf16.gmra.mrb[0].mxu0 %v7785
        %v7871 = vpop.f32.mrb[0].mxu0
        %v7872 = vadd.f32 0.0, %v7871
        %v7873 = vpop.f32.mrb[0].mxu0
        %v7874 = vpop.f32.mrb[0].mxu0
        %v7875 = vadd.f32 0.0, %v7874
        %v7876 = vpop.f32.mrb[0].mxu0
        %7877 = vmatprep.mubr.bf16.mxu0 0
        %7878 = vmatmul.mubr.bf16.gmra.mrb[0].mxu0 %v7786
        %v7879 = vpop.f32.mrb[0].mxu0
        %v7880 = vadd.f32 0.0, %v7879
        %v7881 = vpop.f32.mrb[0].mxu0
        %v7882 = vpop.f32.mrb[0].mxu0
        %v7883 = vadd.f32 0.0, %v7882
        %v7884 = vpop.f32.mrb[0].mxu0
        %7885 = vdwg.mxu0
        %v7886 = vadd.f32 %v7761, %v7872
        %v7887 = vadd.f32 %v7762, %v7875
        %v7888 = vadd.f32 %v7763, %v7880
        %v7889 = vadd.f32 %v7764, %v7883
        %s7890 = scalar_lea.vmem [#allocation8], 1792
        %v7891 = vld [vmem:[%s7890] sm:$0xf]
        %v7892 = vld [vmem:[%s7890 + $0x4] sm:$0xf]
        %v7893 = vld [vmem:[%s7890 + $0x8] sm:$0xf]
        %v7894 = vld [vmem:[%s7890 + $0xc] sm:$0xf]
        %v7895 = vld [vmem:[%s7890 + $0x10] sm:$0xf]
        %v7896 = vld [vmem:[%s7890 + $0x14] sm:$0xf]
        %v7897 = vld [vmem:[%s7890 + $0x18] sm:$0xf]
        %v7898 = vld [vmem:[%s7890 + $0x1c] sm:$0xf]
        %v7899 = vld [vmem:[%s7890 + $0x20] sm:$0xf]
        %v7900 = vld [vmem:[%s7890 + $0x24] sm:$0xf]
        %v7901 = vld [vmem:[%s7890 + $0x28] sm:$0xf]
        %v7902 = vld [vmem:[%s7890 + $0x2c] sm:$0xf]
        %v7903 = vld [vmem:[%s7890 + $0x30] sm:$0xf]
        %v7904 = vld [vmem:[%s7890 + $0x34] sm:$0xf]
        %v7905 = vld [vmem:[%s7890 + $0x38] sm:$0xf]
        %v7906 = vld [vmem:[%s7890 + $0x3c] sm:$0xf]
        %v7907 = vrot.slane %v7393, 2
        %v7908 = vsel %vm854, %v5906, %v7907
        %v7909 = vsel %vm854, %v7907, %v2915
        %v7928 = vunpack.c.l.b16 %v7891
        %v7929 = vunpack.c.l.b16 %v7892
        %v7930 = vunpack.c.l.b16 %v7893
        %v7931 = vunpack.c.l.b16 %v7894
        %v7932 = vunpack.c.l.b16 %v7895
        %v7933 = vunpack.c.l.b16 %v7896
        %v7934 = vunpack.c.l.b16 %v7897
        %v7935 = vunpack.c.l.b16 %v7898
        %v7936 = vunpack.c.l.b16 %v7899
        %v7937 = vunpack.c.l.b16 %v7900
        %v7938 = vunpack.c.l.b16 %v7901
        %v7939 = vunpack.c.l.b16 %v7902
        %v7940 = vunpack.c.l.b16 %v7903
        %v7941 = vunpack.c.l.b16 %v7904
        %v7942 = vunpack.c.l.b16 %v7905
        %v7943 = vunpack.c.l.b16 %v7906
        %v7944 = vpack.c.b16 %v7929, %v7928
        %v7945 = vpack.c.b16 %v7931, %v7930
        %v7946 = vpack.c.b16 %v7933, %v7932
        %v7947 = vpack.c.b16 %v7935, %v7934
        %v7948 = vpack.c.b16 %v7937, %v7936
        %v7949 = vpack.c.b16 %v7939, %v7938
        %v7950 = vpack.c.b16 %v7941, %v7940
        %v7951 = vpack.c.b16 %v7943, %v7942
        %7960 = vmatprep.subr.bf16.mxu0 0
        %7961 = vmatpush1.bf16.msra.mxu0 %v7944
        %7962 = vmatprep.subr.bf16.mxu0 0
        %7963 = vmatpush1.bf16.msra.mxu0 %v7945
        %7964 = vmatprep.subr.bf16.mxu0 0
        %7965 = vmatpush1.bf16.msra.mxu0 %v7946
        %7966 = vmatprep.subr.bf16.mxu0 0
        %7967 = vmatpush1.bf16.msra.mxu0 %v7947
        %7968 = vmatprep.subr.bf16.mxu0 0
        %7969 = vmatpush1.bf16.msra.mxu0 %v7948
        %7970 = vmatprep.subr.bf16.mxu0 0
        %7971 = vmatpush1.bf16.msra.mxu0 %v7949
        %7972 = vmatprep.subr.bf16.mxu0 0
        %7973 = vmatpush1.bf16.msra.mxu0 %v7950
        %7974 = vmatprep.subr.bf16.mxu0 0
        %7975 = vmatpush1.bf16.msra.mxu0 %v7951
        %7976 = vmatprep.subr.bf16.mxu0 0
        %7977 = vmatpush1.bf16.msra.mxu0 0
        %7978 = vmatprep.subr.bf16.mxu0 0
        %7979 = vmatpush1.bf16.msra.mxu0 0
        %7980 = vmatprep.subr.bf16.mxu0 0
        %7981 = vmatpush1.bf16.msra.mxu0 0
        %7982 = vmatprep.subr.bf16.mxu0 0
        %7983 = vmatpush1.bf16.msra.mxu0 0
        %7984 = vmatprep.subr.bf16.mxu0 0
        %7985 = vmatpush1.bf16.msra.mxu0 0
        %7986 = vmatprep.subr.bf16.mxu0 0
        %7987 = vmatpush1.bf16.msra.mxu0 0
        %7988 = vmatprep.subr.bf16.mxu0 0
        %7989 = vmatpush1.bf16.msra.mxu0 0
        %7990 = vmatprep.subr.bf16.mxu0 0
        %7991 = vmatpush1.bf16.msra.mxu0 0
        %7992 = vmatprep.mubr.bf16.mxu0 0
        %7993 = vmatmul.mubr.bf16.gmra.mrb[0].mxu0 %v7908
        %v7994 = vpop.f32.mrb[0].mxu0
        %v7995 = vadd.f32 0.0, %v7994
        %v7996 = vpop.f32.mrb[0].mxu0
        %v7997 = vpop.f32.mrb[0].mxu0
        %v7998 = vadd.f32 0.0, %v7997
        %v7999 = vpop.f32.mrb[0].mxu0
        %8000 = vmatprep.mubr.bf16.mxu0 0
        %8001 = vmatmul.mubr.bf16.gmra.mrb[0].mxu0 %v7909
        %v8002 = vpop.f32.mrb[0].mxu0
        %v8003 = vadd.f32 0.0, %v8002
        %v8004 = vpop.f32.mrb[0].mxu0
        %v8005 = vpop.f32.mrb[0].mxu0
        %v8006 = vadd.f32 0.0, %v8005
        %v8007 = vpop.f32.mrb[0].mxu0
        %8008 = vdwg.mxu0
        %v8009 = vadd.f32 %v7886, %v7995
        %v8010 = vadd.f32 %v7887, %v7998
        %v8011 = vadd.f32 %v7888, %v8003
        %v8012 = vadd.f32 %v7889, %v8006
        %s8013 = scalar_lea.vmem [#allocation8], 1856
        %v8014 = vld [vmem:[%s8013] sm:$0xf]
        %v8015 = vld [vmem:[%s8013 + $0x4] sm:$0xf]
        %v8016 = vld [vmem:[%s8013 + $0x8] sm:$0xf]
        %v8017 = vld [vmem:[%s8013 + $0xc] sm:$0xf]
        %v8018 = vld [vmem:[%s8013 + $0x10] sm:$0xf]
        %v8019 = vld [vmem:[%s8013 + $0x14] sm:$0xf]
        %v8020 = vld [vmem:[%s8013 + $0x18] sm:$0xf]
        %v8021 = vld [vmem:[%s8013 + $0x1c] sm:$0xf]
        %v8022 = vld [vmem:[%s8013 + $0x20] sm:$0xf]
        %v8023 = vld [vmem:[%s8013 + $0x24] sm:$0xf]
        %v8024 = vld [vmem:[%s8013 + $0x28] sm:$0xf]
        %v8025 = vld [vmem:[%s8013 + $0x2c] sm:$0xf]
        %v8026 = vld [vmem:[%s8013 + $0x30] sm:$0xf]
        %v8027 = vld [vmem:[%s8013 + $0x34] sm:$0xf]
        %v8028 = vld [vmem:[%s8013 + $0x38] sm:$0xf]
        %v8029 = vld [vmem:[%s8013 + $0x3c] sm:$0xf]
        %v8030 = vrot.slane %v7534, 2
        %v8031 = vrot.slane %v7530, 3
        %v8032 = vor.u32 %v8030, %v8031
        %v8033 = vsel %vm980, %v6035, %v8032
        %v8034 = vsel %vm980, %v8032, %v3043
        %v8053 = vunpack.c.l.b16 %v8014
        %v8054 = vunpack.c.l.b16 %v8015
        %v8055 = vunpack.c.l.b16 %v8016
        %v8056 = vunpack.c.l.b16 %v8017
        %v8057 = vunpack.c.l.b16 %v8018
        %v8058 = vunpack.c.l.b16 %v8019
        %v8059 = vunpack.c.l.b16 %v8020
        %v8060 = vunpack.c.l.b16 %v8021
        %v8061 = vunpack.c.l.b16 %v8022
        %v8062 = vunpack.c.l.b16 %v8023
        %v8063 = vunpack.c.l.b16 %v8024
        %v8064 = vunpack.c.l.b16 %v8025
        %v8065 = vunpack.c.l.b16 %v8026
        %v8066 = vunpack.c.l.b16 %v8027
        %v8067 = vunpack.c.l.b16 %v8028
        %v8068 = vunpack.c.l.b16 %v8029
        %v8069 = vpack.c.b16 %v8054, %v8053
        %v8070 = vpack.c.b16 %v8056, %v8055
        %v8071 = vpack.c.b16 %v8058, %v8057
        %v8072 = vpack.c.b16 %v8060, %v8059
        %v8073 = vpack.c.b16 %v8062, %v8061
        %v8074 = vpack.c.b16 %v8064, %v8063
        %v8075 = vpack.c.b16 %v8066, %v8065
        %v8076 = vpack.c.b16 %v8068, %v8067
        %8085 = vmatprep.subr.bf16.mxu0 0
        %8086 = vmatpush1.bf16.msra.mxu0 %v8069
        %8087 = vmatprep.subr.bf16.mxu0 0
        %8088 = vmatpush1.bf16.msra.mxu0 %v8070
        %8089 = vmatprep.subr.bf16.mxu0 0
        %8090 = vmatpush1.bf16.msra.mxu0 %v8071
        %8091 = vmatprep.subr.bf16.mxu0 0
        %8092 = vmatpush1.bf16.msra.mxu0 %v8072
        %8093 = vmatprep.subr.bf16.mxu0 0
        %8094 = vmatpush1.bf16.msra.mxu0 %v8073
        %8095 = vmatprep.subr.bf16.mxu0 0
        %8096 = vmatpush1.bf16.msra.mxu0 %v8074
        %8097 = vmatprep.subr.bf16.mxu0 0
        %8098 = vmatpush1.bf16.msra.mxu0 %v8075
        %8099 = vmatprep.subr.bf16.mxu0 0
        %8100 = vmatpush1.bf16.msra.mxu0 %v8076
        %8101 = vmatprep.subr.bf16.mxu0 0
        %8102 = vmatpush1.bf16.msra.mxu0 0
        %8103 = vmatprep.subr.bf16.mxu0 0
        %8104 = vmatpush1.bf16.msra.mxu0 0
        %8105 = vmatprep.subr.bf16.mxu0 0
        %8106 = vmatpush1.bf16.msra.mxu0 0
        %8107 = vmatprep.subr.bf16.mxu0 0
        %8108 = vmatpush1.bf16.msra.mxu0 0
        %8109 = vmatprep.subr.bf16.mxu0 0
        %8110 = vmatpush1.bf16.msra.mxu0 0
        %8111 = vmatprep.subr.bf16.mxu0 0
        %8112 = vmatpush1.bf16.msra.mxu0 0
        %8113 = vmatprep.subr.bf16.mxu0 0
        %8114 = vmatpush1.bf16.msra.mxu0 0
        %8115 = vmatprep.subr.bf16.mxu0 0
        %8116 = vmatpush1.bf16.msra.mxu0 0
        %8117 = vmatprep.mubr.bf16.mxu0 0
        %8118 = vmatmul.mubr.bf16.gmra.mrb[0].mxu0 %v8033
        %v8119 = vpop.f32.mrb[0].mxu0
        %v8120 = vadd.f32 0.0, %v8119
        %v8121 = vpop.f32.mrb[0].mxu0
        %v8122 = vpop.f32.mrb[0].mxu0
        %v8123 = vadd.f32 0.0, %v8122
        %v8124 = vpop.f32.mrb[0].mxu0
        %8125 = vmatprep.mubr.bf16.mxu0 0
        %8126 = vmatmul.mubr.bf16.gmra.mrb[0].mxu0 %v8034
        %v8127 = vpop.f32.mrb[0].mxu0
        %v8128 = vadd.f32 0.0, %v8127
        %v8129 = vpop.f32.mrb[0].mxu0
        %v8130 = vpop.f32.mrb[0].mxu0
        %v8131 = vadd.f32 0.0, %v8130
        %v8132 = vpop.f32.mrb[0].mxu0
        %8133 = vdwg.mxu0
        %v8134 = vadd.f32 %v8009, %v8120
        %v8135 = vadd.f32 %v8010, %v8123
        %v8136 = vadd.f32 %v8011, %v8128
        %v8137 = vadd.f32 %v8012, %v8131
        %s8138 = scalar_lea.vmem [#allocation8], 1920
        %v8139 = vld [vmem:[%s8138] sm:$0xf]
        %v8140 = vld [vmem:[%s8138 + $0x4] sm:$0xf]
        %v8141 = vld [vmem:[%s8138 + $0x8] sm:$0xf]
        %v8142 = vld [vmem:[%s8138 + $0xc] sm:$0xf]
        %v8143 = vld [vmem:[%s8138 + $0x10] sm:$0xf]
        %v8144 = vld [vmem:[%s8138 + $0x14] sm:$0xf]
        %v8145 = vld [vmem:[%s8138 + $0x18] sm:$0xf]
        %v8146 = vld [vmem:[%s8138 + $0x1c] sm:$0xf]
        %v8147 = vld [vmem:[%s8138 + $0x20] sm:$0xf]
        %v8148 = vld [vmem:[%s8138 + $0x24] sm:$0xf]
        %v8149 = vld [vmem:[%s8138 + $0x28] sm:$0xf]
        %v8150 = vld [vmem:[%s8138 + $0x2c] sm:$0xf]
        %v8151 = vld [vmem:[%s8138 + $0x30] sm:$0xf]
        %v8152 = vld [vmem:[%s8138 + $0x34] sm:$0xf]
        %v8153 = vld [vmem:[%s8138 + $0x38] sm:$0xf]
        %v8154 = vld [vmem:[%s8138 + $0x3c] sm:$0xf]
        %v8155 = vrot.slane %v7393, 3
        %v8156 = vsel %vm1112, %v6162, %v8155
        %v8157 = vsel %vm1112, %v8155, %v3167
        %v8176 = vunpack.c.l.b16 %v8139
        %v8177 = vunpack.c.l.b16 %v8140
        %v8178 = vunpack.c.l.b16 %v8141
        %v8179 = vunpack.c.l.b16 %v8142
        %v8180 = vunpack.c.l.b16 %v8143
        %v8181 = vunpack.c.l.b16 %v8144
        %v8182 = vunpack.c.l.b16 %v8145
        %v8183 = vunpack.c.l.b16 %v8146
        %v8184 = vunpack.c.l.b16 %v8147
        %v8185 = vunpack.c.l.b16 %v8148
        %v8186 = vunpack.c.l.b16 %v8149
        %v8187 = vunpack.c.l.b16 %v8150
        %v8188 = vunpack.c.l.b16 %v8151
        %v8189 = vunpack.c.l.b16 %v8152
        %v8190 = vunpack.c.l.b16 %v8153
        %v8191 = vunpack.c.l.b16 %v8154
        %v8192 = vpack.c.b16 %v8177, %v8176
        %v8193 = vpack.c.b16 %v8179, %v8178
        %v8194 = vpack.c.b16 %v8181, %v8180
        %v8195 = vpack.c.b16 %v8183, %v8182
        %v8196 = vpack.c.b16 %v8185, %v8184
        %v8197 = vpack.c.b16 %v8187, %v8186
        %v8198 = vpack.c.b16 %v8189, %v8188
        %v8199 = vpack.c.b16 %v8191, %v8190
        %8208 = vmatprep.subr.bf16.mxu0 0
        %8209 = vmatpush1.bf16.msra.mxu0 %v8192
        %8210 = vmatprep.subr.bf16.mxu0 0
        %8211 = vmatpush1.bf16.msra.mxu0 %v8193
        %8212 = vmatprep.subr.bf16.mxu0 0
        %8213 = vmatpush1.bf16.msra.mxu0 %v8194
        %8214 = vmatprep.subr.bf16.mxu0 0
        %8215 = vmatpush1.bf16.msra.mxu0 %v8195
        %8216 = vmatprep.subr.bf16.mxu0 0
        %8217 = vmatpush1.bf16.msra.mxu0 %v8196
        %8218 = vmatprep.subr.bf16.mxu0 0
        %8219 = vmatpush1.bf16.msra.mxu0 %v8197
        %8220 = vmatprep.subr.bf16.mxu0 0
        %8221 = vmatpush1.bf16.msra.mxu0 %v8198
        %8222 = vmatprep.subr.bf16.mxu0 0
        %8223 = vmatpush1.bf16.msra.mxu0 %v8199
        %8224 = vmatprep.subr.bf16.mxu0 0
        %8225 = vmatpush1.bf16.msra.mxu0 0
        %8226 = vmatprep.subr.bf16.mxu0 0
        %8227 = vmatpush1.bf16.msra.mxu0 0
        %8228 = vmatprep.subr.bf16.mxu0 0
        %8229 = vmatpush1.bf16.msra.mxu0 0
        %8230 = vmatprep.subr.bf16.mxu0 0
        %8231 = vmatpush1.bf16.msra.mxu0 0
        %8232 = vmatprep.subr.bf16.mxu0 0
        %8233 = vmatpush1.bf16.msra.mxu0 0
        %8234 = vmatprep.subr.bf16.mxu0 0
        %8235 = vmatpush1.bf16.msra.mxu0 0
        %8236 = vmatprep.subr.bf16.mxu0 0
        %8237 = vmatpush1.bf16.msra.mxu0 0
        %8238 = vmatprep.subr.bf16.mxu0 0
        %8239 = vmatpush1.bf16.msra.mxu0 0
        %8240 = vmatprep.mubr.bf16.mxu0 0
        %8241 = vmatmul.mubr.bf16.gmra.mrb[0].mxu0 %v8156
        %v8242 = vpop.f32.mrb[0].mxu0
        %v8243 = vadd.f32 0.0, %v8242
        %v8244 = vpop.f32.mrb[0].mxu0
        %v8245 = vpop.f32.mrb[0].mxu0
        %v8246 = vadd.f32 0.0, %v8245
        %v8247 = vpop.f32.mrb[0].mxu0
        %8248 = vmatprep.mubr.bf16.mxu0 0
        %8249 = vmatmul.mubr.bf16.gmra.mrb[0].mxu0 %v8157
        %v8250 = vpop.f32.mrb[0].mxu0
        %v8251 = vadd.f32 0.0, %v8250
        %v8252 = vpop.f32.mrb[0].mxu0
        %v8253 = vpop.f32.mrb[0].mxu0
        %v8254 = vadd.f32 0.0, %v8253
        %v8255 = vpop.f32.mrb[0].mxu0
        %8256 = vdwg.mxu0
        %v8257 = vadd.f32 %v8134, %v8243
        %v8258 = vadd.f32 %v8135, %v8246
        %v8259 = vadd.f32 %v8136, %v8251
        %v8260 = vadd.f32 %v8137, %v8254
        %v8261 = vld [vmem:[#allocation10] sm:$0x1]
        %v8263 = vlaneseq
        %v8264 = vshrl.u32 %v8263, 7
        %v8265 = vsub.s32 0, %v8264
        %v8266 = vrot.slane %v8261, %v8265
        %v8268 = vadd.f32 %v8257, %v8266
        %v8269 = vadd.f32 %v8258, %v8266
        %v8270 = vadd.f32 %v8259, %v8266
        %v8271 = vadd.f32 %v8260, %v8266
        %v8272 = vmax.f32 %v8268, 0.0
        %v8273 = vmax.f32 %v8269, 0.0
        %v8274 = vmax.f32 %v8270, 0.0
        %v8275 = vmax.f32 %v8271, 0.0
        %v8276 = vand.u32 2147483647, %v8268
        %v8277 = vand.u32 2147483647, %v8269
        %v8278 = vand.u32 2147483647, %v8270
        %v8279 = vand.u32 2147483647, %v8271
        %v8280 = vsub.f32 0.0, %v8276
        %v8281 = vsub.f32 0.0, %v8277
        %v8282 = vsub.f32 0.0, %v8278
        %v8283 = vsub.f32 0.0, %v8279
        %v8284 = vmul.f32 %v8280, 1.442695
        %v8285 = vpow.pop %v8284
        %v8286 = vmul.f32 %v8281, 1.442695
        %v8287 = vpow.pop %v8286
        %v8288 = vmul.f32 %v8282, 1.442695
        %v8289 = vpow.pop %v8288
        %v8290 = vmul.f32 %v8283, 1.442695
        %v8291 = vpow.pop %v8290
        %v8292 = vadd.f32 %v8285, 1.0
        %v8293 = vadd.f32 %v8287, 1.0
        %v8294 = vadd.f32 %v8289, 1.0
        %v8295 = vadd.f32 %v8291, 1.0
        %v8296 = vlog2.pop %v8292
        %v8297 = vmul.f32 %v8296, 0.6931472
        %v8298 = vlog2.pop %v8293
        %v8299 = vmul.f32 %v8298, 0.6931472
        %v8300 = vlog2.pop %v8294
        %v8301 = vmul.f32 %v8300, 0.6931472
        %v8302 = vlog2.pop %v8295
        %v8303 = vmul.f32 %v8302, 0.6931472
        %v8304 = vadd.f32 %v8272, %v8297
        %v8305 = vadd.f32 %v8273, %v8299
        %v8306 = vadd.f32 %v8274, %v8301
        %v8307 = vadd.f32 %v8275, %v8303
        %v8308 = vtanh.pop %v8304
        %v8309 = vtanh.pop %v8305
        %v8310 = vtanh.pop %v8306
        %v8311 = vtanh.pop %v8307
        %v8312 = vmul.f32 %v8268, %v8308
        %v8313 = vmul.f32 %v8269, %v8309
        %v8314 = vmul.f32 %v8270, %v8310
        %v8315 = vmul.f32 %v8271, %v8311
        %8316 = vst [vmem:[%s296] sm:$0xff] %v8312
        %8317 = vst [vmem:[%s296 + $0x8] sm:$0xff] %v8313
        %8318 = vst [vmem:[%s296 + $0x10] sm:$0xff] %v8314
        %8319 = vst [vmem:[%s296 + $0x18] sm:$0xff] %v8315
        %s8320 = sand.u32 %s142, 1
        %s8321 = scalar_lea.sflag [#allocation4], %s8320
        %s8322 = sand.u32 %s142, 1
        %s8323 = smul.addr %s8322, 32
        %s8324 = scalar_lea.vmem [#allocation11], %s8323
        // Predicated region
        $region61: #{tpu_custom_call.1} parent=39 // pred_check
          %p8325 = pneg %p152
        $region62: #{tpu_custom_call.1} parent=39 // pred_check_branch
          %8327 = sbr.rel (%p8325) target = $region64
        $region63: #{tpu_custom_call.1} parent=39 // pred_region
          %s8329 = ssub.s32 512, 512
          %8330 = vsyncadd %s8321, %s8329
          %s8331 = smul.addr %s24, 4
          %s8332 = smul.addr %s8331, 128
          %s8333 = scalar_lea.hbm %s5, %s8332
          %s8334 = sshll.u32 %s8324, 4
          %s8335 = int_to_ptr.vmem [resolvable:$true] %s8334
          %8340 = dma.vmem_to_hbm [thread:$0]  %s8335, 512, %s8333, %s8321, 128, 128, 8
        $region64: #{tpu_custom_call.1} parent=39 // pred_fallthru
          _
      $region40: #{tpu_custom_call.1} parent=5 // pred_fallthru
        _
      %p8341 = scmp.le.s32.totalorder 2, %s19
      // Predicated region
      $region65: #{tpu_custom_call.1} parent=5 // pred_check
        %p8342 = pneg %p8341
      $region66: #{tpu_custom_call.1} parent=5 // pred_check_branch
        %8344 = sbr.rel (%p8342) target = $region68
      $region67: #{tpu_custom_call.1} parent=5 // pred_region
        %s8345 = ssub.s32 %s19, 2
        // Predicated region
        $region69: #{tpu_custom_call.1} parent=67 // pred_check
          %p8346 = pneg %p158
        $region70: #{tpu_custom_call.1} parent=67 // pred_check_branch
          %8348 = sbr.rel (%p8346) target = $region72
        $region71: #{tpu_custom_call.1} parent=67 // pred_region
          %s8349 = sand.u32 %s143, 1
          %s8350 = scalar_lea.sflag [#allocation4], %s8349
          %s8351 = sand.u32 %s143, 1
          %s8352 = smul.addr %s8351, 32
          %s8353 = scalar_lea.vmem [#allocation11], %s8352
          %8354 = dma.done %s8350, 512
        $region72: #{tpu_custom_call.1} parent=67 // pred_fallthru
          _
      $region68: #{tpu_custom_call.1} parent=5 // pred_fallthru
        _
    $region6: #{tpu_custom_call.1} parent=1 // loop_footer
      %s23 = sadd.s32 1, %s19
    $region7: #{tpu_custom_call.1} parent=1 // loop_footer_branch
      %18 = sbr.rel target = $region3
    $region8: #{tpu_custom_call.1} parent=1 // loop_exit
      _
    %8355 = vsyncpa [#allocation3], 1
    %s8356 = scalar_lea.sflag [#allocation3], 1
    %8357 = vsyncpa %s8356, 1
    %8358 = vsyncpa [#allocation6], 1
    %8359 = vsyncpa [#allocation9], 1
    %8360 = vsyncpa [#allocation4], 1
    %s8361 = scalar_lea.sflag [#allocation4], 1
    %8362 = vsyncpa %s8361, 1

</llo_original>
